<compile_context>
chip_gen: v6e
topology: v6e:2x2x1
jax: 0.10.0
libtpu: 0.0.40
codegen_flags: <defaults>
</compile_context>

<pallas_src>
import functools

import jax
import jax.numpy as jnp
from jax.experimental import pallas as pl
from jax.experimental.pallas import tpu as pltpu

H_IN = W_IN = 28          # forward implies 28x28 input (10 * 13 * 13 fc input)
C_OUT = 10
KH = KW = 3
H_CONV = H_IN - KH + 1    # 26
W_CONV = W_IN - KW + 1    # 26
H_POOL = H_CONV // 2      # 13
W_POOL = W_CONV // 2      # 13
FC_IN = C_OUT * H_POOL * W_POOL   # 1690
FC_OUT = 10

LANE_TILE = 256                   # images per grid step (lane dimension)
W_HALF = W_IN // 2                # 14: even / odd input-column planes
GROUP = 16                        # sublane-aligned rows per (channel, pooled-row)
K_PER_CH = H_POOL * GROUP         # 208: per-channel FC contraction length
N_W = KH * KW                     # 9 conv taps per channel


def _pick_compute_dtype():
    """bf16 conv/pool datapath on bf16-native VPUs (v6e/v7x); f32 elsewhere."""
    try:
        kind = jax.devices()[0].device_kind.lower()
    except Exception:
        return jnp.float32
    if ("v6" in kind) or ("v7" in kind) or ("7x" in kind):
        return jnp.bfloat16
    return jnp.float32


def fused_cnn_kernel(xe_ref, xo_ref, cw_ref, fw_ref, fb_ref, o_ref, pooled_ref,
                     *, weights_in_smem):
    """conv(3x3) + ReLU + maxpool(2x2) + fc for one batch tile (B images in lanes).

    xe_ref / xo_ref : (28, 14, B)  even / odd input columns, batch in lanes
    cw_ref          : weights_in_smem: (100,) f32 SMEM, [c*10 + tap], tap 9 = bias
                      else            : (10, 10, 16, B) VMEM, lane/sublane-replicated
    fw_ref          : (10, 10, 208)  fc weight, per-channel permuted + zero-padded
    fb_ref          : (10, 1)        fc bias (f32)
    o_ref           : (10, B)        logits (transposed), batch in lanes
    pooled_ref      : (208, B)       per-channel pooled activations (pad rows 0)
    """
    lanes = o_ref.shape[-1]
    zpad = jnp.zeros((GROUP - W_POOL, lanes), pooled_ref.dtype)

    def get_weights(c):
        if weights_in_smem:
            # f32 path: plain scalar weights from SMEM (zero register pressure).
            taps = [cw_ref[c * (N_W + 1) + i] for i in range(N_W)]
            bias = cw_ref[c * (N_W + 1) + N_W]
        else:
            # bf16 path: weights arrive pre-broadcast over (16, B); slice to
            # (13, B) operands so the inner muls need no broadcasting at all.
            taps = [cw_ref[c, i, 0:W_POOL, :] for i in range(N_W)]
            bias = cw_ref[c, N_W, 0:W_POOL, :]
        return taps, bias

    def channel_body(c, logits_acc):
        taps, bias = get_weights(c)
        for h in range(H_POOL):
            row_max = []
            for r_off in range(2):                    # the two conv rows of this pool row
                row = 2 * h + r_off
                acc_e = None                          # conv at even cols 2m,  (13, B)
                acc_o = None                          # conv at odd  cols 2m+1,(13, B)
                for kh in range(KH):
                    a = xe_ref[row + kh, 0:W_POOL, :]           # x[.., 2m]
                    b = xo_ref[row + kh, 0:W_POOL, :]           # x[.., 2m+1]
                    cc = xe_ref[row + kh, 1:W_POOL + 1, :]      # x[.., 2m+2]
                    d = xo_ref[row + kh, 1:W_POOL + 1, :]       # x[.., 2m+3]
                    w0 = taps[kh * KW + 0]
                    w1 = taps[kh * KW + 1]
                    w2 = taps[kh * KW + 2]
                    t_e = w0 * a + w1 * b + w2 * cc
                    t_o = w0 * b + w1 * cc + w2 * d
                    acc_e = t_e if acc_e is None else acc_e + t_e
                    acc_o = t_o if acc_o is None else acc_o + t_o
                row_max.append(jnp.maximum(acc_e, acc_o))       # pool over W
            pooled = jnp.maximum(row_max[0], row_max[1])        # pool over H
            # bias + ReLU after the pool (exact: both are monotone pointwise)
            pooled = jnp.maximum(pooled + bias, 0.0)            # (13, B)
            # Aligned, zero-padded (16, B) store: pad rows are written every
            # step, so no scratch init and no masked partial stores.
            pooled_ref[h * GROUP:(h + 1) * GROUP, :] = jnp.concatenate(
                [pooled, zpad], axis=0)

        # Per-channel FC contribution on the MXU, accumulated in f32.
        contrib = jnp.dot(fw_ref[c], pooled_ref[...],
                          preferred_element_type=jnp.float32)
        return logits_acc + contrib

    logits = jax.lax.fori_loop(
        0, C_OUT, channel_body, jnp.zeros((FC_OUT, lanes), jnp.float32))
    o_ref[...] = logits + fb_ref[...]


def simple_cnn_forward(x, conv_w, conv_b, fc_w, fc_b, compute_dtype=None):
    if compute_dtype is None:
        compute_dtype = _pick_compute_dtype()
    cdtype = compute_dtype
    use_smem_weights = (cdtype == jnp.float32)

    n = x.shape[0]
    n_pad = pl.cdiv(n, LANE_TILE) * LANE_TILE

    # NCHW -> (H, W, N): batch into the lane dimension, padded to the lane tile.
    xt = jnp.transpose(x[:, 0, :, :], (1, 2, 0)).astype(cdtype)   # (28, 28, n)
    if n_pad != n:
        xt = jnp.pad(xt, ((0, 0), (0, 0), (0, n_pad - n)))
    x_even = xt[:, 0::2, :]                                       # (28, 14, n_pad)
    x_odd = xt[:, 1::2, :]                                        # (28, 14, n_pad)

    # conv weights + bias, one row of 10 values per channel (tap 9 = bias).
    w_flat = jnp.concatenate(
        [conv_w.reshape(C_OUT, N_W), conv_b.reshape(C_OUT, 1)], axis=1)  # (10, 10)

    if use_smem_weights:
        cw_arg = w_flat.reshape(-1).astype(jnp.float32)            # (100,) SMEM scalars
        cw_spec = pl.BlockSpec(memory_space=pltpu.MemorySpace.SMEM)
    else:
        # bf16 path: replicate each weight over (16 sublanes, LANE_TILE lanes)
        # in the wrapper so the kernel only does plain slices (no scalar
        # converts, no in-kernel broadcasts).  ~0.8 MiB, fetched once.
        cw_arg = jnp.broadcast_to(
            w_flat.astype(cdtype)[:, :, None, None],
            (C_OUT, N_W + 1, GROUP, LANE_TILE))
        cw_spec = pl.BlockSpec((C_OUT, N_W + 1, GROUP, LANE_TILE),
                               lambda i: (0, 0, 0, 0))

    # fc weight: (10, 1690) with k = c*169 + h*13 + w -> per-channel kernel
    # layout k' = h*16 + w (zeros in the 3 pad columns of every group of 16).
    fw4 = jnp.pad(fc_w.reshape(FC_OUT, C_OUT, H_POOL, W_POOL),
                  ((0, 0), (0, 0), (0, 0), (0, GROUP - W_POOL)))
    fw_k = jnp.transpose(fw4, (1, 0, 2, 3)).reshape(C_OUT, FC_OUT, K_PER_CH)
    fw_k = fw_k.astype(cdtype)
    fb = fc_b.reshape(FC_OUT, 1).astype(jnp.float32)

    kernel = functools.partial(fused_cnn_kernel,
                               weights_in_smem=use_smem_weights)

    out_t = pl.pallas_call(
        kernel,
        out_shape=jax.ShapeDtypeStruct((FC_OUT, n_pad), jnp.float32),
        grid=(n_pad // LANE_TILE,),
        in_specs=[
            pl.BlockSpec((H_IN, W_HALF, LANE_TILE), lambda i: (0, 0, i)),
            pl.BlockSpec((H_IN, W_HALF, LANE_TILE), lambda i: (0, 0, i)),
            cw_spec,
            pl.BlockSpec((C_OUT, FC_OUT, K_PER_CH), lambda i: (0, 0, 0)),
            pl.BlockSpec((FC_OUT, 1), lambda i: (0, 0)),
        ],
        out_specs=pl.BlockSpec((FC_OUT, LANE_TILE), lambda i: (0, i)),
        scratch_shapes=[
            pltpu.VMEM((K_PER_CH, LANE_TILE), cdtype),
        ],
        compiler_params=pltpu.CompilerParams(
            dimension_semantics=("parallel",)),
    )(x_even, x_odd, cw_arg, fw_k, fb)

    # (10, n_pad) -> (n, 10): drop the padded batch lanes.
    return out_t.T[:n]


def reference_forward(x, conv_w, conv_b, fc_w, fc_b):
    y = jax.lax.conv_general_dilated(
        x, conv_w, window_strides=(1, 1), padding="VALID",
        dimension_numbers=("NCHW", "OIHW", "NCHW"),
        precision=jax.lax.Precision.HIGHEST)
    y = y + conv_b.reshape(1, -1, 1, 1)
    y = jnp.maximum(y, 0.0)
    y = jax.lax.reduce_window(y, -jnp.inf, jax.lax.max,
                              (1, 1, 2, 2), (1, 1, 2, 2), "VALID")
    y = y.reshape(x.shape[0], -1)
    return jnp.dot(y, fc_w.T, precision=jax.lax.Precision.HIGHEST) + fc_b


if __name__ == "__main__":
    key = jax.random.PRNGKey(0)
    k1, k2, k3, k4, k5 = jax.random.split(key, 5)
    N = 2
    x = jax.random.normal(k1, (N, 1, H_IN, W_IN), dtype=jnp.float32)
    conv_w = jax.random.normal(k2, (C_OUT, 1, KH, KW), dtype=jnp.float32) * 0.2
    conv_b = jax.random.normal(k3, (C_OUT,), dtype=jnp.float32) * 0.1
    fc_w = jax.random.normal(k4, (FC_OUT, FC_IN), dtype=jnp.float32) * 0.02
    fc_b = jax.random.normal(k5, (FC_OUT,), dtype=jnp.float32) * 0.1

    fwd = jax.jit(simple_cnn_forward)
    out = jax.block_until_ready(fwd(x, conv_w, conv_b, fc_w, fc_b))

    ref = reference_forward(x, conv_w, conv_b, fc_w, fc_b)
    # bf16 conv/pool datapath (v6e/v7x) gets a slightly wider tolerance.
    tol = 2e-2 if _pick_compute_dtype() == jnp.bfloat16 else 1e-2
    assert out.shape == (N, FC_OUT)
    assert jnp.allclose(out, ref, rtol=tol, atol=tol), (out, ref)
    print("KERNEL_OK")
</pallas_src>

<mosaic_0001>
module attributes {stable_mosaic.version = 11 : i64} {
  func.func @fused_cnn_kernel(%arg0: i32, %arg1: memref<28x14x256xf32, #tpu.memory_space<vmem>>, %arg2: memref<28x14x256xf32, #tpu.memory_space<vmem>>, %arg3: memref<100xf32, #tpu.memory_space<smem>>, %arg4: memref<10x10x208xf32, #tpu.memory_space<vmem>>, %arg5: memref<10x1xf32, #tpu.memory_space<vmem>>, %arg6: memref<10x256xf32, #tpu.memory_space<vmem>>, %arg7: memref<208x256xf32, #tpu.memory_space<vmem>>) attributes {dimension_semantics = [#tpu.dimension_semantics<parallel>], iteration_bounds = array<i64: 1>, scalar_prefetch = 0 : i64, scratch_operands = 1 : i64, tpu.core_type = #tpu.core_type<tc>, window_params = [{transform_indices = @transform_0, window_bounds = array<i64: 28, 14, 256>}, {transform_indices = @transform_1, window_bounds = array<i64: 28, 14, 256>}, {transform_indices = @transform_2, window_bounds = array<i64: 100>}, {pipeline_mode = #tpu.pipeline_mode<synchronous>, transform_indices = @transform_3, window_bounds = array<i64: 10, 10, 208>}, {pipeline_mode = #tpu.pipeline_mode<synchronous>, transform_indices = @transform_4, window_bounds = array<i64: 10, 1>}, {transform_indices = @transform_5, window_bounds = array<i64: 10, 256>}]} {
    %cst = arith.constant 0.000000e+00 : f32
    %0 = vector.broadcast %cst : f32 to vector<3x256xf32>
    %cst_0 = arith.constant 0.000000e+00 : f32
    %1 = vector.broadcast %cst_0 : f32 to vector<10x256xf32>
    %c0_i32 = arith.constant 0 : i32
    %c10_i32 = arith.constant 10 : i32
    %2 = arith.addi %c0_i32, %c10_i32 : i32
    %c1_i32 = arith.constant 1 : i32
    %3 = scf.for %arg8 = %c0_i32 to %2 step %c1_i32 iter_args(%arg9 = %1) -> (vector<10x256xf32>)  : i32 {
      %c10_i32_5 = arith.constant 10 : i32
      %8 = arith.muli %arg8, %c10_i32_5 : i32
      %c0_i32_6 = arith.constant 0 : i32
      %9 = arith.addi %8, %c0_i32_6 : i32
      %10 = arith.index_cast %9 : i32 to index
      %11 = memref.load %arg3[%10] : memref<100xf32, #tpu.memory_space<smem>>
      %c10_i32_7 = arith.constant 10 : i32
      %12 = arith.muli %arg8, %c10_i32_7 : i32
      %c1_i32_8 = arith.constant 1 : i32
      %13 = arith.addi %12, %c1_i32_8 : i32
      %14 = arith.index_cast %13 : i32 to index
      %15 = memref.load %arg3[%14] : memref<100xf32, #tpu.memory_space<smem>>
      %c10_i32_9 = arith.constant 10 : i32
      %16 = arith.muli %arg8, %c10_i32_9 : i32
      %c2_i32 = arith.constant 2 : i32
      %17 = arith.addi %16, %c2_i32 : i32
      %18 = arith.index_cast %17 : i32 to index
      %19 = memref.load %arg3[%18] : memref<100xf32, #tpu.memory_space<smem>>
      %c10_i32_10 = arith.constant 10 : i32
      %20 = arith.muli %arg8, %c10_i32_10 : i32
      %c3_i32 = arith.constant 3 : i32
      %21 = arith.addi %20, %c3_i32 : i32
      %22 = arith.index_cast %21 : i32 to index
      %23 = memref.load %arg3[%22] : memref<100xf32, #tpu.memory_space<smem>>
      %c10_i32_11 = arith.constant 10 : i32
      %24 = arith.muli %arg8, %c10_i32_11 : i32
      %c4_i32 = arith.constant 4 : i32
      %25 = arith.addi %24, %c4_i32 : i32
      %26 = arith.index_cast %25 : i32 to index
      %27 = memref.load %arg3[%26] : memref<100xf32, #tpu.memory_space<smem>>
      %c10_i32_12 = arith.constant 10 : i32
      %28 = arith.muli %arg8, %c10_i32_12 : i32
      %c5_i32 = arith.constant 5 : i32
      %29 = arith.addi %28, %c5_i32 : i32
      %30 = arith.index_cast %29 : i32 to index
      %31 = memref.load %arg3[%30] : memref<100xf32, #tpu.memory_space<smem>>
      %c10_i32_13 = arith.constant 10 : i32
      %32 = arith.muli %arg8, %c10_i32_13 : i32
      %c6_i32 = arith.constant 6 : i32
      %33 = arith.addi %32, %c6_i32 : i32
      %34 = arith.index_cast %33 : i32 to index
      %35 = memref.load %arg3[%34] : memref<100xf32, #tpu.memory_space<smem>>
      %c10_i32_14 = arith.constant 10 : i32
      %36 = arith.muli %arg8, %c10_i32_14 : i32
      %c7_i32 = arith.constant 7 : i32
      %37 = arith.addi %36, %c7_i32 : i32
      %38 = arith.index_cast %37 : i32 to index
      %39 = memref.load %arg3[%38] : memref<100xf32, #tpu.memory_space<smem>>
      %c10_i32_15 = arith.constant 10 : i32
      %40 = arith.muli %arg8, %c10_i32_15 : i32
      %c8_i32 = arith.constant 8 : i32
      %41 = arith.addi %40, %c8_i32 : i32
      %42 = arith.index_cast %41 : i32 to index
      %43 = memref.load %arg3[%42] : memref<100xf32, #tpu.memory_space<smem>>
      %c10_i32_16 = arith.constant 10 : i32
      %44 = arith.muli %arg8, %c10_i32_16 : i32
      %c9_i32 = arith.constant 9 : i32
      %45 = arith.addi %44, %c9_i32 : i32
      %46 = arith.index_cast %45 : i32 to index
      %47 = memref.load %arg3[%46] : memref<100xf32, #tpu.memory_space<smem>>
      %c0_17 = arith.constant 0 : index
      %c0_18 = arith.constant 0 : index
      %c0_19 = arith.constant 0 : index
      %48 = vector.load %arg1[%c0_17, %c0_18, %c0_19] : memref<28x14x256xf32, #tpu.memory_space<vmem>>, vector<1x13x256xf32>
      %49 = vector.shape_cast %48 : vector<1x13x256xf32> to vector<13x256xf32>
      %c0_20 = arith.constant 0 : index
      %c0_21 = arith.constant 0 : index
      %c0_22 = arith.constant 0 : index
      %50 = vector.load %arg2[%c0_20, %c0_21, %c0_22] : memref<28x14x256xf32, #tpu.memory_space<vmem>>, vector<1x13x256xf32>
      %51 = vector.shape_cast %50 : vector<1x13x256xf32> to vector<13x256xf32>
      %c0_23 = arith.constant 0 : index
      %c1 = arith.constant 1 : index
      %c0_24 = arith.constant 0 : index
      %52 = vector.load %arg1[%c0_23, %c1, %c0_24] : memref<28x14x256xf32, #tpu.memory_space<vmem>>, vector<1x13x256xf32>
      %53 = vector.shape_cast %52 : vector<1x13x256xf32> to vector<13x256xf32>
      %c0_25 = arith.constant 0 : index
      %c1_26 = arith.constant 1 : index
      %c0_27 = arith.constant 0 : index
      %54 = vector.load %arg2[%c0_25, %c1_26, %c0_27] : memref<28x14x256xf32, #tpu.memory_space<vmem>>, vector<1x13x256xf32>
      %55 = vector.shape_cast %54 : vector<1x13x256xf32> to vector<13x256xf32>
      %56 = vector.broadcast %11 : f32 to vector<13x256xf32>
      %57 = arith.mulf %56, %49 : vector<13x256xf32>
      %58 = vector.broadcast %15 : f32 to vector<13x256xf32>
      %59 = arith.mulf %58, %51 : vector<13x256xf32>
      %60 = arith.addf %57, %59 : vector<13x256xf32>
      %61 = vector.broadcast %19 : f32 to vector<13x256xf32>
      %62 = arith.mulf %61, %53 : vector<13x256xf32>
      %63 = arith.addf %60, %62 : vector<13x256xf32>
      %64 = vector.broadcast %11 : f32 to vector<13x256xf32>
      %65 = arith.mulf %64, %51 : vector<13x256xf32>
      %66 = vector.broadcast %15 : f32 to vector<13x256xf32>
      %67 = arith.mulf %66, %53 : vector<13x256xf32>
      %68 = arith.addf %65, %67 : vector<13x256xf32>
      %69 = vector.broadcast %19 : f32 to vector<13x256xf32>
      %70 = arith.mulf %69, %55 : vector<13x256xf32>
      %71 = arith.addf %68, %70 : vector<13x256xf32>
      %c1_28 = arith.constant 1 : index
      %c0_29 = arith.constant 0 : index
      %c0_30 = arith.constant 0 : index
      %72 = vector.load %arg1[%c1_28, %c0_29, %c0_30] : memref<28x14x256xf32, #tpu.memory_space<vmem>>, vector<1x13x256xf32>
      %73 = vector.shape_cast %72 : vector<1x13x256xf32> to vector<13x256xf32>
      %c1_31 = arith.constant 1 : index
      %c0_32 = arith.constant 0 : index
      %c0_33 = arith.constant 0 : index
      %74 = vector.load %arg2[%c1_31, %c0_32, %c0_33] : memref<28x14x256xf32, #tpu.memory_space<vmem>>, vector<1x13x256xf32>
      %75 = vector.shape_cast %74 : vector<1x13x256xf32> to vector<13x256xf32>
      %c1_34 = arith.constant 1 : index
      %c1_35 = arith.constant 1 : index
      %c0_36 = arith.constant 0 : index
      %76 = vector.load %arg1[%c1_34, %c1_35, %c0_36] : memref<28x14x256xf32, #tpu.memory_space<vmem>>, vector<1x13x256xf32>
      %77 = vector.shape_cast %76 : vector<1x13x256xf32> to vector<13x256xf32>
      %c1_37 = arith.constant 1 : index
      %c1_38 = arith.constant 1 : index
      %c0_39 = arith.constant 0 : index
      %78 = vector.load %arg2[%c1_37, %c1_38, %c0_39] : memref<28x14x256xf32, #tpu.memory_space<vmem>>, vector<1x13x256xf32>
      %79 = vector.shape_cast %78 : vector<1x13x256xf32> to vector<13x256xf32>
      %80 = vector.broadcast %23 : f32 to vector<13x256xf32>
      %81 = arith.mulf %80, %73 : vector<13x256xf32>
      %82 = vector.broadcast %27 : f32 to vector<13x256xf32>
      %83 = arith.mulf %82, %75 : vector<13x256xf32>
      %84 = arith.addf %81, %83 : vector<13x256xf32>
      %85 = vector.broadcast %31 : f32 to vector<13x256xf32>
      %86 = arith.mulf %85, %77 : vector<13x256xf32>
      %87 = arith.addf %84, %86 : vector<13x256xf32>
      %88 = vector.broadcast %23 : f32 to vector<13x256xf32>
      %89 = arith.mulf %88, %75 : vector<13x256xf32>
      %90 = vector.broadcast %27 : f32 to vector<13x256xf32>
      %91 = arith.mulf %90, %77 : vector<13x256xf32>
      %92 = arith.addf %89, %91 : vector<13x256xf32>
      %93 = vector.broadcast %31 : f32 to vector<13x256xf32>
      %94 = arith.mulf %93, %79 : vector<13x256xf32>
      %95 = arith.addf %92, %94 : vector<13x256xf32>
      %96 = arith.addf %63, %87 : vector<13x256xf32>
      %97 = arith.addf %71, %95 : vector<13x256xf32>
      %c2 = arith.constant 2 : index
      %c0_40 = arith.constant 0 : index
      %c0_41 = arith.constant 0 : index
      %98 = vector.load %arg1[%c2, %c0_40, %c0_41] : memref<28x14x256xf32, #tpu.memory_space<vmem>>, vector<1x13x256xf32>
      %99 = vector.shape_cast %98 : vector<1x13x256xf32> to vector<13x256xf32>
      %c2_42 = arith.constant 2 : index
      %c0_43 = arith.constant 0 : index
      %c0_44 = arith.constant 0 : index
      %100 = vector.load %arg2[%c2_42, %c0_43, %c0_44] : memref<28x14x256xf32, #tpu.memory_space<vmem>>, vector<1x13x256xf32>
      %101 = vector.shape_cast %100 : vector<1x13x256xf32> to vector<13x256xf32>
      %c2_45 = arith.constant 2 : index
      %c1_46 = arith.constant 1 : index
      %c0_47 = arith.constant 0 : index
      %102 = vector.load %arg1[%c2_45, %c1_46, %c0_47] : memref<28x14x256xf32, #tpu.memory_space<vmem>>, vector<1x13x256xf32>
      %103 = vector.shape_cast %102 : vector<1x13x256xf32> to vector<13x256xf32>
      %c2_48 = arith.constant 2 : index
      %c1_49 = arith.constant 1 : index
      %c0_50 = arith.constant 0 : index
      %104 = vector.load %arg2[%c2_48, %c1_49, %c0_50] : memref<28x14x256xf32, #tpu.memory_space<vmem>>, vector<1x13x256xf32>
      %105 = vector.shape_cast %104 : vector<1x13x256xf32> to vector<13x256xf32>
      %106 = vector.broadcast %35 : f32 to vector<13x256xf32>
      %107 = arith.mulf %106, %99 : vector<13x256xf32>
      %108 = vector.broadcast %39 : f32 to vector<13x256xf32>
      %109 = arith.mulf %108, %101 : vector<13x256xf32>
      %110 = arith.addf %107, %109 : vector<13x256xf32>
      %111 = vector.broadcast %43 : f32 to vector<13x256xf32>
      %112 = arith.mulf %111, %103 : vector<13x256xf32>
      %113 = arith.addf %110, %112 : vector<13x256xf32>
      %114 = vector.broadcast %35 : f32 to vector<13x256xf32>
      %115 = arith.mulf %114, %101 : vector<13x256xf32>
      %116 = vector.broadcast %39 : f32 to vector<13x256xf32>
      %117 = arith.mulf %116, %103 : vector<13x256xf32>
      %118 = arith.addf %115, %117 : vector<13x256xf32>
      %119 = vector.broadcast %43 : f32 to vector<13x256xf32>
      %120 = arith.mulf %119, %105 : vector<13x256xf32>
      %121 = arith.addf %118, %120 : vector<13x256xf32>
      %122 = arith.addf %96, %113 : vector<13x256xf32>
      %123 = arith.addf %97, %121 : vector<13x256xf32>
      %124 = arith.maximumf %122, %123 : vector<13x256xf32>
      %c1_51 = arith.constant 1 : index
      %c0_52 = arith.constant 0 : index
      %c0_53 = arith.constant 0 : index
      %125 = vector.load %arg1[%c1_51, %c0_52, %c0_53] : memref<28x14x256xf32, #tpu.memory_space<vmem>>, vector<1x13x256xf32>
      %126 = vector.shape_cast %125 : vector<1x13x256xf32> to vector<13x256xf32>
      %c1_54 = arith.constant 1 : index
      %c0_55 = arith.constant 0 : index
      %c0_56 = arith.constant 0 : index
      %127 = vector.load %arg2[%c1_54, %c0_55, %c0_56] : memref<28x14x256xf32, #tpu.memory_space<vmem>>, vector<1x13x256xf32>
      %128 = vector.shape_cast %127 : vector<1x13x256xf32> to vector<13x256xf32>
      %c1_57 = arith.constant 1 : index
      %c1_58 = arith.constant 1 : index
      %c0_59 = arith.constant 0 : index
      %129 = vector.load %arg1[%c1_57, %c1_58, %c0_59] : memref<28x14x256xf32, #tpu.memory_space<vmem>>, vector<1x13x256xf32>
      %130 = vector.shape_cast %129 : vector<1x13x256xf32> to vector<13x256xf32>
      %c1_60 = arith.constant 1 : index
      %c1_61 = arith.constant 1 : index
      %c0_62 = arith.constant 0 : index
      %131 = vector.load %arg2[%c1_60, %c1_61, %c0_62] : memref<28x14x256xf32, #tpu.memory_space<vmem>>, vector<1x13x256xf32>
      %132 = vector.shape_cast %131 : vector<1x13x256xf32> to vector<13x256xf32>
      %133 = vector.broadcast %11 : f32 to vector<13x256xf32>
      %134 = arith.mulf %133, %126 : vector<13x256xf32>
      %135 = vector.broadcast %15 : f32 to vector<13x256xf32>
      %136 = arith.mulf %135, %128 : vector<13x256xf32>
      %137 = arith.addf %134, %136 : vector<13x256xf32>
      %138 = vector.broadcast %19 : f32 to vector<13x256xf32>
      %139 = arith.mulf %138, %130 : vector<13x256xf32>
      %140 = arith.addf %137, %139 : vector<13x256xf32>
      %141 = vector.broadcast %11 : f32 to vector<13x256xf32>
      %142 = arith.mulf %141, %128 : vector<13x256xf32>
      %143 = vector.broadcast %15 : f32 to vector<13x256xf32>
      %144 = arith.mulf %143, %130 : vector<13x256xf32>
      %145 = arith.addf %142, %144 : vector<13x256xf32>
      %146 = vector.broadcast %19 : f32 to vector<13x256xf32>
      %147 = arith.mulf %146, %132 : vector<13x256xf32>
      %148 = arith.addf %145, %147 : vector<13x256xf32>
      %c2_63 = arith.constant 2 : index
      %c0_64 = arith.constant 0 : index
      %c0_65 = arith.constant 0 : index
      %149 = vector.load %arg1[%c2_63, %c0_64, %c0_65] : memref<28x14x256xf32, #tpu.memory_space<vmem>>, vector<1x13x256xf32>
      %150 = vector.shape_cast %149 : vector<1x13x256xf32> to vector<13x256xf32>
      %c2_66 = arith.constant 2 : index
      %c0_67 = arith.constant 0 : index
      %c0_68 = arith.constant 0 : index
      %151 = vector.load %arg2[%c2_66, %c0_67, %c0_68] : memref<28x14x256xf32, #tpu.memory_space<vmem>>, vector<1x13x256xf32>
      %152 = vector.shape_cast %151 : vector<1x13x256xf32> to vector<13x256xf32>
      %c2_69 = arith.constant 2 : index
      %c1_70 = arith.constant 1 : index
      %c0_71 = arith.constant 0 : index
      %153 = vector.load %arg1[%c2_69, %c1_70, %c0_71] : memref<28x14x256xf32, #tpu.memory_space<vmem>>, vector<1x13x256xf32>
      %154 = vector.shape_cast %153 : vector<1x13x256xf32> to vector<13x256xf32>
      %c2_72 = arith.constant 2 : index
      %c1_73 = arith.constant 1 : index
      %c0_74 = arith.constant 0 : index
      %155 = vector.load %arg2[%c2_72, %c1_73, %c0_74] : memref<28x14x256xf32, #tpu.memory_space<vmem>>, vector<1x13x256xf32>
      %156 = vector.shape_cast %155 : vector<1x13x256xf32> to vector<13x256xf32>
      %157 = vector.broadcast %23 : f32 to vector<13x256xf32>
      %158 = arith.mulf %157, %150 : vector<13x256xf32>
      %159 = vector.broadcast %27 : f32 to vector<13x256xf32>
      %160 = arith.mulf %159, %152 : vector<13x256xf32>
      %161 = arith.addf %158, %160 : vector<13x256xf32>
      %162 = vector.broadcast %31 : f32 to vector<13x256xf32>
      %163 = arith.mulf %162, %154 : vector<13x256xf32>
      %164 = arith.addf %161, %163 : vector<13x256xf32>
      %165 = vector.broadcast %23 : f32 to vector<13x256xf32>
      %166 = arith.mulf %165, %152 : vector<13x256xf32>
      %167 = vector.broadcast %27 : f32 to vector<13x256xf32>
      %168 = arith.mulf %167, %154 : vector<13x256xf32>
      %169 = arith.addf %166, %168 : vector<13x256xf32>
      %170 = vector.broadcast %31 : f32 to vector<13x256xf32>
      %171 = arith.mulf %170, %156 : vector<13x256xf32>
      %172 = arith.addf %169, %171 : vector<13x256xf32>
      %173 = arith.addf %140, %164 : vector<13x256xf32>
      %174 = arith.addf %148, %172 : vector<13x256xf32>
      %c3 = arith.constant 3 : index
      %c0_75 = arith.constant 0 : index
      %c0_76 = arith.constant 0 : index
      %175 = vector.load %arg1[%c3, %c0_75, %c0_76] : memref<28x14x256xf32, #tpu.memory_space<vmem>>, vector<1x13x256xf32>
      %176 = vector.shape_cast %175 : vector<1x13x256xf32> to vector<13x256xf32>
      %c3_77 = arith.constant 3 : index
      %c0_78 = arith.constant 0 : index
      %c0_79 = arith.constant 0 : index
      %177 = vector.load %arg2[%c3_77, %c0_78, %c0_79] : memref<28x14x256xf32, #tpu.memory_space<vmem>>, vector<1x13x256xf32>
      %178 = vector.shape_cast %177 : vector<1x13x256xf32> to vector<13x256xf32>
      %c3_80 = arith.constant 3 : index
      %c1_81 = arith.constant 1 : index
      %c0_82 = arith.constant 0 : index
      %179 = vector.load %arg1[%c3_80, %c1_81, %c0_82] : memref<28x14x256xf32, #tpu.memory_space<vmem>>, vector<1x13x256xf32>
      %180 = vector.shape_cast %179 : vector<1x13x256xf32> to vector<13x256xf32>
      %c3_83 = arith.constant 3 : index
      %c1_84 = arith.constant 1 : index
      %c0_85 = arith.constant 0 : index
      %181 = vector.load %arg2[%c3_83, %c1_84, %c0_85] : memref<28x14x256xf32, #tpu.memory_space<vmem>>, vector<1x13x256xf32>
      %182 = vector.shape_cast %181 : vector<1x13x256xf32> to vector<13x256xf32>
      %183 = vector.broadcast %35 : f32 to vector<13x256xf32>
      %184 = arith.mulf %183, %176 : vector<13x256xf32>
      %185 = vector.broadcast %39 : f32 to vector<13x256xf32>
      %186 = arith.mulf %185, %178 : vector<13x256xf32>
      %187 = arith.addf %184, %186 : vector<13x256xf32>
      %188 = vector.broadcast %43 : f32 to vector<13x256xf32>
      %189 = arith.mulf %188, %180 : vector<13x256xf32>
      %190 = arith.addf %187, %189 : vector<13x256xf32>
      %191 = vector.broadcast %35 : f32 to vector<13x256xf32>
      %192 = arith.mulf %191, %178 : vector<13x256xf32>
      %193 = vector.broadcast %39 : f32 to vector<13x256xf32>
      %194 = arith.mulf %193, %180 : vector<13x256xf32>
      %195 = arith.addf %192, %194 : vector<13x256xf32>
      %196 = vector.broadcast %43 : f32 to vector<13x256xf32>
      %197 = arith.mulf %196, %182 : vector<13x256xf32>
      %198 = arith.addf %195, %197 : vector<13x256xf32>
      %199 = arith.addf %173, %190 : vector<13x256xf32>
      %200 = arith.addf %174, %198 : vector<13x256xf32>
      %201 = arith.maximumf %199, %200 : vector<13x256xf32>
      %202 = arith.maximumf %124, %201 : vector<13x256xf32>
      %203 = vector.broadcast %47 : f32 to vector<13x256xf32>
      %204 = arith.addf %202, %203 : vector<13x256xf32>
      %cst_86 = arith.constant 0.000000e+00 : f32
      %205 = vector.broadcast %cst_86 : f32 to vector<13x256xf32>
      %206 = arith.maximumf %204, %205 : vector<13x256xf32>
      %207 = tpu.concatenate %206, %0 in 0 : vector<13x256xf32>, vector<3x256xf32> -> vector<16x256xf32>
      %c0_87 = arith.constant 0 : index
      %c0_88 = arith.constant 0 : index
      %208 = vector.load %arg7[%c0_87, %c0_88] : memref<208x256xf32, #tpu.memory_space<vmem>>, vector<16x256xf32>
      tpu.vector_store %arg7[%c0_87, %c0_88], %207 {strides = array<i32>} : memref<208x256xf32, #tpu.memory_space<vmem>>, vector<16x256xf32>,
      %c2_89 = arith.constant 2 : index
      %c0_90 = arith.constant 0 : index
      %c0_91 = arith.constant 0 : index
      %209 = vector.load %arg1[%c2_89, %c0_90, %c0_91] : memref<28x14x256xf32, #tpu.memory_space<vmem>>, vector<1x13x256xf32>
      %210 = vector.shape_cast %209 : vector<1x13x256xf32> to vector<13x256xf32>
      %c2_92 = arith.constant 2 : index
      %c0_93 = arith.constant 0 : index
      %c0_94 = arith.constant 0 : index
      %211 = vector.load %arg2[%c2_92, %c0_93, %c0_94] : memref<28x14x256xf32, #tpu.memory_space<vmem>>, vector<1x13x256xf32>
      %212 = vector.shape_cast %211 : vector<1x13x256xf32> to vector<13x256xf32>
      %c2_95 = arith.constant 2 : index
      %c1_96 = arith.constant 1 : index
      %c0_97 = arith.constant 0 : index
      %213 = vector.load %arg1[%c2_95, %c1_96, %c0_97] : memref<28x14x256xf32, #tpu.memory_space<vmem>>, vector<1x13x256xf32>
      %214 = vector.shape_cast %213 : vector<1x13x256xf32> to vector<13x256xf32>
      %c2_98 = arith.constant 2 : index
      %c1_99 = arith.constant 1 : index
      %c0_100 = arith.constant 0 : index
      %215 = vector.load %arg2[%c2_98, %c1_99, %c0_100] : memref<28x14x256xf32, #tpu.memory_space<vmem>>, vector<1x13x256xf32>
      %216 = vector.shape_cast %215 : vector<1x13x256xf32> to vector<13x256xf32>
      %217 = vector.broadcast %11 : f32 to vector<13x256xf32>
      %218 = arith.mulf %217, %210 : vector<13x256xf32>
      %219 = vector.broadcast %15 : f32 to vector<13x256xf32>
      %220 = arith.mulf %219, %212 : vector<13x256xf32>
      %221 = arith.addf %218, %220 : vector<13x256xf32>
      %222 = vector.broadcast %19 : f32 to vector<13x256xf32>
      %223 = arith.mulf %222, %214 : vector<13x256xf32>
      %224 = arith.addf %221, %223 : vector<13x256xf32>
      %225 = vector.broadcast %11 : f32 to vector<13x256xf32>
      %226 = arith.mulf %225, %212 : vector<13x256xf32>
      %227 = vector.broadcast %15 : f32 to vector<13x256xf32>
      %228 = arith.mulf %227, %214 : vector<13x256xf32>
      %229 = arith.addf %226, %228 : vector<13x256xf32>
      %230 = vector.broadcast %19 : f32 to vector<13x256xf32>
      %231 = arith.mulf %230, %216 : vector<13x256xf32>
      %232 = arith.addf %229, %231 : vector<13x256xf32>
      %c3_101 = arith.constant 3 : index
      %c0_102 = arith.constant 0 : index
      %c0_103 = arith.constant 0 : index
      %233 = vector.load %arg1[%c3_101, %c0_102, %c0_103] : memref<28x14x256xf32, #tpu.memory_space<vmem>>, vector<1x13x256xf32>
      %234 = vector.shape_cast %233 : vector<1x13x256xf32> to vector<13x256xf32>
      %c3_104 = arith.constant 3 : index
      %c0_105 = arith.constant 0 : index
      %c0_106 = arith.constant 0 : index
      %235 = vector.load %arg2[%c3_104, %c0_105, %c0_106] : memref<28x14x256xf32, #tpu.memory_space<vmem>>, vector<1x13x256xf32>
      %236 = vector.shape_cast %235 : vector<1x13x256xf32> to vector<13x256xf32>
      %c3_107 = arith.constant 3 : index
      %c1_108 = arith.constant 1 : index
      %c0_109 = arith.constant 0 : index
      %237 = vector.load %arg1[%c3_107, %c1_108, %c0_109] : memref<28x14x256xf32, #tpu.memory_space<vmem>>, vector<1x13x256xf32>
      %238 = vector.shape_cast %237 : vector<1x13x256xf32> to vector<13x256xf32>
      %c3_110 = arith.constant 3 : index
      %c1_111 = arith.constant 1 : index
      %c0_112 = arith.constant 0 : index
      %239 = vector.load %arg2[%c3_110, %c1_111, %c0_112] : memref<28x14x256xf32, #tpu.memory_space<vmem>>, vector<1x13x256xf32>
      %240 = vector.shape_cast %239 : vector<1x13x256xf32> to vector<13x256xf32>
      %241 = vector.broadcast %23 : f32 to vector<13x256xf32>
      %242 = arith.mulf %241, %234 : vector<13x256xf32>
      %243 = vector.broadcast %27 : f32 to vector<13x256xf32>
      %244 = arith.mulf %243, %236 : vector<13x256xf32>
      %245 = arith.addf %242, %244 : vector<13x256xf32>
      %246 = vector.broadcast %31 : f32 to vector<13x256xf32>
      %247 = arith.mulf %246, %238 : vector<13x256xf32>
      %248 = arith.addf %245, %247 : vector<13x256xf32>
      %249 = vector.broadcast %23 : f32 to vector<13x256xf32>
      %250 = arith.mulf %249, %236 : vector<13x256xf32>
      %251 = vector.broadcast %27 : f32 to vector<13x256xf32>
      %252 = arith.mulf %251, %238 : vector<13x256xf32>
      %253 = arith.addf %250, %252 : vector<13x256xf32>
      %254 = vector.broadcast %31 : f32 to vector<13x256xf32>
      %255 = arith.mulf %254, %240 : vector<13x256xf32>
      %256 = arith.addf %253, %255 : vector<13x256xf32>
      %257 = arith.addf %224, %248 : vector<13x256xf32>
      %258 = arith.addf %232, %256 : vector<13x256xf32>
      %c4 = arith.constant 4 : index
      %c0_113 = arith.constant 0 : index
      %c0_114 = arith.constant 0 : index
      %259 = vector.load %arg1[%c4, %c0_113, %c0_114] : memref<28x14x256xf32, #tpu.memory_space<vmem>>, vector<1x13x256xf32>
      %260 = vector.shape_cast %259 : vector<1x13x256xf32> to vector<13x256xf32>
      %c4_115 = arith.constant 4 : index
      %c0_116 = arith.constant 0 : index
      %c0_117 = arith.constant 0 : index
      %261 = vector.load %arg2[%c4_115, %c0_116, %c0_117] : memref<28x14x256xf32, #tpu.memory_space<vmem>>, vector<1x13x256xf32>
      %262 = vector.shape_cast %261 : vector<1x13x256xf32> to vector<13x256xf32>
      %c4_118 = arith.constant 4 : index
      %c1_119 = arith.constant 1 : index
      %c0_120 = arith.constant 0 : index
      %263 = vector.load %arg1[%c4_118, %c1_119, %c0_120] : memref<28x14x256xf32, #tpu.memory_space<vmem>>, vector<1x13x256xf32>
      %264 = vector.shape_cast %263 : vector<1x13x256xf32> to vector<13x256xf32>
      %c4_121 = arith.constant 4 : index
      %c1_122 = arith.constant 1 : index
      %c0_123 = arith.constant 0 : index
      %265 = vector.load %arg2[%c4_121, %c1_122, %c0_123] : memref<28x14x256xf32, #tpu.memory_space<vmem>>, vector<1x13x256xf32>
      %266 = vector.shape_cast %265 : vector<1x13x256xf32> to vector<13x256xf32>
      %267 = vector.broadcast %35 : f32 to vector<13x256xf32>
      %268 = arith.mulf %267, %260 : vector<13x256xf32>
      %269 = vector.broadcast %39 : f32 to vector<13x256xf32>
      %270 = arith.mulf %269, %262 : vector<13x256xf32>
      %271 = arith.addf %268, %270 : vector<13x256xf32>
      %272 = vector.broadcast %43 : f32 to vector<13x256xf32>
      %273 = arith.mulf %272, %264 : vector<13x256xf32>
      %274 = arith.addf %271, %273 : vector<13x256xf32>
      %275 = vector.broadcast %35 : f32 to vector<13x256xf32>
      %276 = arith.mulf %275, %262 : vector<13x256xf32>
      %277 = vector.broadcast %39 : f32 to vector<13x256xf32>
      %278 = arith.mulf %277, %264 : vector<13x256xf32>
      %279 = arith.addf %276, %278 : vector<13x256xf32>
      %280 = vector.broadcast %43 : f32 to vector<13x256xf32>
      %281 = arith.mulf %280, %266 : vector<13x256xf32>
      %282 = arith.addf %279, %281 : vector<13x256xf32>
      %283 = arith.addf %257, %274 : vector<13x256xf32>
      %284 = arith.addf %258, %282 : vector<13x256xf32>
      %285 = arith.maximumf %283, %284 : vector<13x256xf32>
      %c3_124 = arith.constant 3 : index
      %c0_125 = arith.constant 0 : index
      %c0_126 = arith.constant 0 : index
      %286 = vector.load %arg1[%c3_124, %c0_125, %c0_126] : memref<28x14x256xf32, #tpu.memory_space<vmem>>, vector<1x13x256xf32>
      %287 = vector.shape_cast %286 : vector<1x13x256xf32> to vector<13x256xf32>
      %c3_127 = arith.constant 3 : index
      %c0_128 = arith.constant 0 : index
      %c0_129 = arith.constant 0 : index
      %288 = vector.load %arg2[%c3_127, %c0_128, %c0_129] : memref<28x14x256xf32, #tpu.memory_space<vmem>>, vector<1x13x256xf32>
      %289 = vector.shape_cast %288 : vector<1x13x256xf32> to vector<13x256xf32>
      %c3_130 = arith.constant 3 : index
      %c1_131 = arith.constant 1 : index
      %c0_132 = arith.constant 0 : index
      %290 = vector.load %arg1[%c3_130, %c1_131, %c0_132] : memref<28x14x256xf32, #tpu.memory_space<vmem>>, vector<1x13x256xf32>
      %291 = vector.shape_cast %290 : vector<1x13x256xf32> to vector<13x256xf32>
      %c3_133 = arith.constant 3 : index
      %c1_134 = arith.constant 1 : index
      %c0_135 = arith.constant 0 : index
      %292 = vector.load %arg2[%c3_133, %c1_134, %c0_135] : memref<28x14x256xf32, #tpu.memory_space<vmem>>, vector<1x13x256xf32>
      %293 = vector.shape_cast %292 : vector<1x13x256xf32> to vector<13x256xf32>
      %294 = vector.broadcast %11 : f32 to vector<13x256xf32>
      %295 = arith.mulf %294, %287 : vector<13x256xf32>
      %296 = vector.broadcast %15 : f32 to vector<13x256xf32>
      %297 = arith.mulf %296, %289 : vector<13x256xf32>
      %298 = arith.addf %295, %297 : vector<13x256xf32>
      %299 = vector.broadcast %19 : f32 to vector<13x256xf32>
      %300 = arith.mulf %299, %291 : vector<13x256xf32>
      %301 = arith.addf %298, %300 : vector<13x256xf32>
      %302 = vector.broadcast %11 : f32 to vector<13x256xf32>
      %303 = arith.mulf %302, %289 : vector<13x256xf32>
      %304 = vector.broadcast %15 : f32 to vector<13x256xf32>
      %305 = arith.mulf %304, %291 : vector<13x256xf32>
      %306 = arith.addf %303, %305 : vector<13x256xf32>
      %307 = vector.broadcast %19 : f32 to vector<13x256xf32>
      %308 = arith.mulf %307, %293 : vector<13x256xf32>
      %309 = arith.addf %306, %308 : vector<13x256xf32>
      %c4_136 = arith.constant 4 : index
      %c0_137 = arith.constant 0 : index
      %c0_138 = arith.constant 0 : index
      %310 = vector.load %arg1[%c4_136, %c0_137, %c0_138] : memref<28x14x256xf32, #tpu.memory_space<vmem>>, vector<1x13x256xf32>
      %311 = vector.shape_cast %310 : vector<1x13x256xf32> to vector<13x256xf32>
      %c4_139 = arith.constant 4 : index
      %c0_140 = arith.constant 0 : index
      %c0_141 = arith.constant 0 : index
      %312 = vector.load %arg2[%c4_139, %c0_140, %c0_141] : memref<28x14x256xf32, #tpu.memory_space<vmem>>, vector<1x13x256xf32>
      %313 = vector.shape_cast %312 : vector<1x13x256xf32> to vector<13x256xf32>
      %c4_142 = arith.constant 4 : index
      %c1_143 = arith.constant 1 : index
      %c0_144 = arith.constant 0 : index
      %314 = vector.load %arg1[%c4_142, %c1_143, %c0_144] : memref<28x14x256xf32, #tpu.memory_space<vmem>>, vector<1x13x256xf32>
      %315 = vector.shape_cast %314 : vector<1x13x256xf32> to vector<13x256xf32>
      %c4_145 = arith.constant 4 : index
      %c1_146 = arith.constant 1 : index
      %c0_147 = arith.constant 0 : index
      %316 = vector.load %arg2[%c4_145, %c1_146, %c0_147] : memref<28x14x256xf32, #tpu.memory_space<vmem>>, vector<1x13x256xf32>
      %317 = vector.shape_cast %316 : vector<1x13x256xf32> to vector<13x256xf32>
      %318 = vector.broadcast %23 : f32 to vector<13x256xf32>
      %319 = arith.mulf %318, %311 : vector<13x256xf32>
      %320 = vector.broadcast %27 : f32 to vector<13x256xf32>
      %321 = arith.mulf %320, %313 : vector<13x256xf32>
      %322 = arith.addf %319, %321 : vector<13x256xf32>
      %323 = vector.broadcast %31 : f32 to vector<13x256xf32>
      %324 = arith.mulf %323, %315 : vector<13x256xf32>
      %325 = arith.addf %322, %324 : vector<13x256xf32>
      %326 = vector.broadcast %23 : f32 to vector<13x256xf32>
      %327 = arith.mulf %326, %313 : vector<13x256xf32>
      %328 = vector.broadcast %27 : f32 to vector<13x256xf32>
      %329 = arith.mulf %328, %315 : vector<13x256xf32>
      %330 = arith.addf %327, %329 : vector<13x256xf32>
      %331 = vector.broadcast %31 : f32 to vector<13x256xf32>
      %332 = arith.mulf %331, %317 : vector<13x256xf32>
      %333 = arith.addf %330, %332 : vector<13x256xf32>
      %334 = arith.addf %301, %325 : vector<13x256xf32>
      %335 = arith.addf %309, %333 : vector<13x256xf32>
      %c5 = arith.constant 5 : index
      %c0_148 = arith.constant 0 : index
      %c0_149 = arith.constant 0 : index
      %336 = vector.load %arg1[%c5, %c0_148, %c0_149] : memref<28x14x256xf32, #tpu.memory_space<vmem>>, vector<1x13x256xf32>
      %337 = vector.shape_cast %336 : vector<1x13x256xf32> to vector<13x256xf32>
      %c5_150 = arith.constant 5 : index
      %c0_151 = arith.constant 0 : index
      %c0_152 = arith.constant 0 : index
      %338 = vector.load %arg2[%c5_150, %c0_151, %c0_152] : memref<28x14x256xf32, #tpu.memory_space<vmem>>, vector<1x13x256xf32>
      %339 = vector.shape_cast %338 : vector<1x13x256xf32> to vector<13x256xf32>
      %c5_153 = arith.constant 5 : index
      %c1_154 = arith.constant 1 : index
      %c0_155 = arith.constant 0 : index
      %340 = vector.load %arg1[%c5_153, %c1_154, %c0_155] : memref<28x14x256xf32, #tpu.memory_space<vmem>>, vector<1x13x256xf32>
      %341 = vector.shape_cast %340 : vector<1x13x256xf32> to vector<13x256xf32>
      %c5_156 = arith.constant 5 : index
      %c1_157 = arith.constant 1 : index
      %c0_158 = arith.constant 0 : index
      %342 = vector.load %arg2[%c5_156, %c1_157, %c0_158] : memref<28x14x256xf32, #tpu.memory_space<vmem>>, vector<1x13x256xf32>
      %343 = vector.shape_cast %342 : vector<1x13x256xf32> to vector<13x256xf32>
      %344 = vector.broadcast %35 : f32 to vector<13x256xf32>
      %345 = arith.mulf %344, %337 : vector<13x256xf32>
      %346 = vector.broadcast %39 : f32 to vector<13x256xf32>
      %347 = arith.mulf %346, %339 : vector<13x256xf32>
      %348 = arith.addf %345, %347 : vector<13x256xf32>
      %349 = vector.broadcast %43 : f32 to vector<13x256xf32>
      %350 = arith.mulf %349, %341 : vector<13x256xf32>
      %351 = arith.addf %348, %350 : vector<13x256xf32>
      %352 = vector.broadcast %35 : f32 to vector<13x256xf32>
      %353 = arith.mulf %352, %339 : vector<13x256xf32>
      %354 = vector.broadcast %39 : f32 to vector<13x256xf32>
      %355 = arith.mulf %354, %341 : vector<13x256xf32>
      %356 = arith.addf %353, %355 : vector<13x256xf32>
      %357 = vector.broadcast %43 : f32 to vector<13x256xf32>
      %358 = arith.mulf %357, %343 : vector<13x256xf32>
      %359 = arith.addf %356, %358 : vector<13x256xf32>
      %360 = arith.addf %334, %351 : vector<13x256xf32>
      %361 = arith.addf %335, %359 : vector<13x256xf32>
      %362 = arith.maximumf %360, %361 : vector<13x256xf32>
      %363 = arith.maximumf %285, %362 : vector<13x256xf32>
      %364 = vector.broadcast %47 : f32 to vector<13x256xf32>
      %365 = arith.addf %363, %364 : vector<13x256xf32>
      %cst_159 = arith.constant 0.000000e+00 : f32
      %366 = vector.broadcast %cst_159 : f32 to vector<13x256xf32>
      %367 = arith.maximumf %365, %366 : vector<13x256xf32>
      %368 = tpu.concatenate %367, %0 in 0 : vector<13x256xf32>, vector<3x256xf32> -> vector<16x256xf32>
      %c16 = arith.constant 16 : index
      %c0_160 = arith.constant 0 : index
      %369 = vector.load %arg7[%c16, %c0_160] : memref<208x256xf32, #tpu.memory_space<vmem>>, vector<16x256xf32>
      tpu.vector_store %arg7[%c16, %c0_160], %368 {strides = array<i32>} : memref<208x256xf32, #tpu.memory_space<vmem>>, vector<16x256xf32>,
      %c4_161 = arith.constant 4 : index
      %c0_162 = arith.constant 0 : index
      %c0_163 = arith.constant 0 : index
      %370 = vector.load %arg1[%c4_161, %c0_162, %c0_163] : memref<28x14x256xf32, #tpu.memory_space<vmem>>, vector<1x13x256xf32>
      %371 = vector.shape_cast %370 : vector<1x13x256xf32> to vector<13x256xf32>
      %c4_164 = arith.constant 4 : index
      %c0_165 = arith.constant 0 : index
      %c0_166 = arith.constant 0 : index
      %372 = vector.load %arg2[%c4_164, %c0_165, %c0_166] : memref<28x14x256xf32, #tpu.memory_space<vmem>>, vector<1x13x256xf32>
      %373 = vector.shape_cast %372 : vector<1x13x256xf32> to vector<13x256xf32>
      %c4_167 = arith.constant 4 : index
      %c1_168 = arith.constant 1 : index
      %c0_169 = arith.constant 0 : index
      %374 = vector.load %arg1[%c4_167, %c1_168, %c0_169] : memref<28x14x256xf32, #tpu.memory_space<vmem>>, vector<1x13x256xf32>
      %375 = vector.shape_cast %374 : vector<1x13x256xf32> to vector<13x256xf32>
      %c4_170 = arith.constant 4 : index
      %c1_171 = arith.constant 1 : index
      %c0_172 = arith.constant 0 : index
      %376 = vector.load %arg2[%c4_170, %c1_171, %c0_172] : memref<28x14x256xf32, #tpu.memory_space<vmem>>, vector<1x13x256xf32>
      %377 = vector.shape_cast %376 : vector<1x13x256xf32> to vector<13x256xf32>
      %378 = vector.broadcast %11 : f32 to vector<13x256xf32>
      %379 = arith.mulf %378, %371 : vector<13x256xf32>
      %380 = vector.broadcast %15 : f32 to vector<13x256xf32>
      %381 = arith.mulf %380, %373 : vector<13x256xf32>
      %382 = arith.addf %379, %381 : vector<13x256xf32>
      %383 = vector.broadcast %19 : f32 to vector<13x256xf32>
      %384 = arith.mulf %383, %375 : vector<13x256xf32>
      %385 = arith.addf %382, %384 : vector<13x256xf32>
      %386 = vector.broadcast %11 : f32 to vector<13x256xf32>
      %387 = arith.mulf %386, %373 : vector<13x256xf32>
      %388 = vector.broadcast %15 : f32 to vector<13x256xf32>
      %389 = arith.mulf %388, %375 : vector<13x256xf32>
      %390 = arith.addf %387, %389 : vector<13x256xf32>
      %391 = vector.broadcast %19 : f32 to vector<13x256xf32>
      %392 = arith.mulf %391, %377 : vector<13x256xf32>
      %393 = arith.addf %390, %392 : vector<13x256xf32>
      %c5_173 = arith.constant 5 : index
      %c0_174 = arith.constant 0 : index
      %c0_175 = arith.constant 0 : index
      %394 = vector.load %arg1[%c5_173, %c0_174, %c0_175] : memref<28x14x256xf32, #tpu.memory_space<vmem>>, vector<1x13x256xf32>
      %395 = vector.shape_cast %394 : vector<1x13x256xf32> to vector<13x256xf32>
      %c5_176 = arith.constant 5 : index
      %c0_177 = arith.constant 0 : index
      %c0_178 = arith.constant 0 : index
      %396 = vector.load %arg2[%c5_176, %c0_177, %c0_178] : memref<28x14x256xf32, #tpu.memory_space<vmem>>, vector<1x13x256xf32>
      %397 = vector.shape_cast %396 : vector<1x13x256xf32> to vector<13x256xf32>
      %c5_179 = arith.constant 5 : index
      %c1_180 = arith.constant 1 : index
      %c0_181 = arith.constant 0 : index
      %398 = vector.load %arg1[%c5_179, %c1_180, %c0_181] : memref<28x14x256xf32, #tpu.memory_space<vmem>>, vector<1x13x256xf32>
      %399 = vector.shape_cast %398 : vector<1x13x256xf32> to vector<13x256xf32>
      %c5_182 = arith.constant 5 : index
      %c1_183 = arith.constant 1 : index
      %c0_184 = arith.constant 0 : index
      %400 = vector.load %arg2[%c5_182, %c1_183, %c0_184] : memref<28x14x256xf32, #tpu.memory_space<vmem>>, vector<1x13x256xf32>
      %401 = vector.shape_cast %400 : vector<1x13x256xf32> to vector<13x256xf32>
      %402 = vector.broadcast %23 : f32 to vector<13x256xf32>
      %403 = arith.mulf %402, %395 : vector<13x256xf32>
      %404 = vector.broadcast %27 : f32 to vector<13x256xf32>
      %405 = arith.mulf %404, %397 : vector<13x256xf32>
      %406 = arith.addf %403, %405 : vector<13x256xf32>
      %407 = vector.broadcast %31 : f32 to vector<13x256xf32>
      %408 = arith.mulf %407, %399 : vector<13x256xf32>
      %409 = arith.addf %406, %408 : vector<13x256xf32>
      %410 = vector.broadcast %23 : f32 to vector<13x256xf32>
      %411 = arith.mulf %410, %397 : vector<13x256xf32>
      %412 = vector.broadcast %27 : f32 to vector<13x256xf32>
      %413 = arith.mulf %412, %399 : vector<13x256xf32>
      %414 = arith.addf %411, %413 : vector<13x256xf32>
      %415 = vector.broadcast %31 : f32 to vector<13x256xf32>
      %416 = arith.mulf %415, %401 : vector<13x256xf32>
      %417 = arith.addf %414, %416 : vector<13x256xf32>
      %418 = arith.addf %385, %409 : vector<13x256xf32>
      %419 = arith.addf %393, %417 : vector<13x256xf32>
      %c6 = arith.constant 6 : index
      %c0_185 = arith.constant 0 : index
      %c0_186 = arith.constant 0 : index
      %420 = vector.load %arg1[%c6, %c0_185, %c0_186] : memref<28x14x256xf32, #tpu.memory_space<vmem>>, vector<1x13x256xf32>
      %421 = vector.shape_cast %420 : vector<1x13x256xf32> to vector<13x256xf32>
      %c6_187 = arith.constant 6 : index
      %c0_188 = arith.constant 0 : index
      %c0_189 = arith.constant 0 : index
      %422 = vector.load %arg2[%c6_187, %c0_188, %c0_189] : memref<28x14x256xf32, #tpu.memory_space<vmem>>, vector<1x13x256xf32>
      %423 = vector.shape_cast %422 : vector<1x13x256xf32> to vector<13x256xf32>
      %c6_190 = arith.constant 6 : index
      %c1_191 = arith.constant 1 : index
      %c0_192 = arith.constant 0 : index
      %424 = vector.load %arg1[%c6_190, %c1_191, %c0_192] : memref<28x14x256xf32, #tpu.memory_space<vmem>>, vector<1x13x256xf32>
      %425 = vector.shape_cast %424 : vector<1x13x256xf32> to vector<13x256xf32>
      %c6_193 = arith.constant 6 : index
      %c1_194 = arith.constant 1 : index
      %c0_195 = arith.constant 0 : index
      %426 = vector.load %arg2[%c6_193, %c1_194, %c0_195] : memref<28x14x256xf32, #tpu.memory_space<vmem>>, vector<1x13x256xf32>
      %427 = vector.shape_cast %426 : vector<1x13x256xf32> to vector<13x256xf32>
      %428 = vector.broadcast %35 : f32 to vector<13x256xf32>
      %429 = arith.mulf %428, %421 : vector<13x256xf32>
      %430 = vector.broadcast %39 : f32 to vector<13x256xf32>
      %431 = arith.mulf %430, %423 : vector<13x256xf32>
      %432 = arith.addf %429, %431 : vector<13x256xf32>
      %433 = vector.broadcast %43 : f32 to vector<13x256xf32>
      %434 = arith.mulf %433, %425 : vector<13x256xf32>
      %435 = arith.addf %432, %434 : vector<13x256xf32>
      %436 = vector.broadcast %35 : f32 to vector<13x256xf32>
      %437 = arith.mulf %436, %423 : vector<13x256xf32>
      %438 = vector.broadcast %39 : f32 to vector<13x256xf32>
      %439 = arith.mulf %438, %425 : vector<13x256xf32>
      %440 = arith.addf %437, %439 : vector<13x256xf32>
      %441 = vector.broadcast %43 : f32 to vector<13x256xf32>
      %442 = arith.mulf %441, %427 : vector<13x256xf32>
      %443 = arith.addf %440, %442 : vector<13x256xf32>
      %444 = arith.addf %418, %435 : vector<13x256xf32>
      %445 = arith.addf %419, %443 : vector<13x256xf32>
      %446 = arith.maximumf %444, %445 : vector<13x256xf32>
      %c5_196 = arith.constant 5 : index
      %c0_197 = arith.constant 0 : index
      %c0_198 = arith.constant 0 : index
      %447 = vector.load %arg1[%c5_196, %c0_197, %c0_198] : memref<28x14x256xf32, #tpu.memory_space<vmem>>, vector<1x13x256xf32>
      %448 = vector.shape_cast %447 : vector<1x13x256xf32> to vector<13x256xf32>
      %c5_199 = arith.constant 5 : index
      %c0_200 = arith.constant 0 : index
      %c0_201 = arith.constant 0 : index
      %449 = vector.load %arg2[%c5_199, %c0_200, %c0_201] : memref<28x14x256xf32, #tpu.memory_space<vmem>>, vector<1x13x256xf32>
      %450 = vector.shape_cast %449 : vector<1x13x256xf32> to vector<13x256xf32>
      %c5_202 = arith.constant 5 : index
      %c1_203 = arith.constant 1 : index
      %c0_204 = arith.constant 0 : index
      %451 = vector.load %arg1[%c5_202, %c1_203, %c0_204] : memref<28x14x256xf32, #tpu.memory_space<vmem>>, vector<1x13x256xf32>
      %452 = vector.shape_cast %451 : vector<1x13x256xf32> to vector<13x256xf32>
      %c5_205 = arith.constant 5 : index
      %c1_206 = arith.constant 1 : index
      %c0_207 = arith.constant 0 : index
      %453 = vector.load %arg2[%c5_205, %c1_206, %c0_207] : memref<28x14x256xf32, #tpu.memory_space<vmem>>, vector<1x13x256xf32>
      %454 = vector.shape_cast %453 : vector<1x13x256xf32> to vector<13x256xf32>
      %455 = vector.broadcast %11 : f32 to vector<13x256xf32>
      %456 = arith.mulf %455, %448 : vector<13x256xf32>
      %457 = vector.broadcast %15 : f32 to vector<13x256xf32>
      %458 = arith.mulf %457, %450 : vector<13x256xf32>
      %459 = arith.addf %456, %458 : vector<13x256xf32>
      %460 = vector.broadcast %19 : f32 to vector<13x256xf32>
      %461 = arith.mulf %460, %452 : vector<13x256xf32>
      %462 = arith.addf %459, %461 : vector<13x256xf32>
      %463 = vector.broadcast %11 : f32 to vector<13x256xf32>
      %464 = arith.mulf %463, %450 : vector<13x256xf32>
      %465 = vector.broadcast %15 : f32 to vector<13x256xf32>
      %466 = arith.mulf %465, %452 : vector<13x256xf32>
      %467 = arith.addf %464, %466 : vector<13x256xf32>
      %468 = vector.broadcast %19 : f32 to vector<13x256xf32>
      %469 = arith.mulf %468, %454 : vector<13x256xf32>
      %470 = arith.addf %467, %469 : vector<13x256xf32>
      %c6_208 = arith.constant 6 : index
      %c0_209 = arith.constant 0 : index
      %c0_210 = arith.constant 0 : index
      %471 = vector.load %arg1[%c6_208, %c0_209, %c0_210] : memref<28x14x256xf32, #tpu.memory_space<vmem>>, vector<1x13x256xf32>
      %472 = vector.shape_cast %471 : vector<1x13x256xf32> to vector<13x256xf32>
      %c6_211 = arith.constant 6 : index
      %c0_212 = arith.constant 0 : index
      %c0_213 = arith.constant 0 : index
      %473 = vector.load %arg2[%c6_211, %c0_212, %c0_213] : memref<28x14x256xf32, #tpu.memory_space<vmem>>, vector<1x13x256xf32>
      %474 = vector.shape_cast %473 : vector<1x13x256xf32> to vector<13x256xf32>
      %c6_214 = arith.constant 6 : index
      %c1_215 = arith.constant 1 : index
      %c0_216 = arith.constant 0 : index
      %475 = vector.load %arg1[%c6_214, %c1_215, %c0_216] : memref<28x14x256xf32, #tpu.memory_space<vmem>>, vector<1x13x256xf32>
      %476 = vector.shape_cast %475 : vector<1x13x256xf32> to vector<13x256xf32>
      %c6_217 = arith.constant 6 : index
      %c1_218 = arith.constant 1 : index
      %c0_219 = arith.constant 0 : index
      %477 = vector.load %arg2[%c6_217, %c1_218, %c0_219] : memref<28x14x256xf32, #tpu.memory_space<vmem>>, vector<1x13x256xf32>
      %478 = vector.shape_cast %477 : vector<1x13x256xf32> to vector<13x256xf32>
      %479 = vector.broadcast %23 : f32 to vector<13x256xf32>
      %480 = arith.mulf %479, %472 : vector<13x256xf32>
      %481 = vector.broadcast %27 : f32 to vector<13x256xf32>
      %482 = arith.mulf %481, %474 : vector<13x256xf32>
      %483 = arith.addf %480, %482 : vector<13x256xf32>
      %484 = vector.broadcast %31 : f32 to vector<13x256xf32>
      %485 = arith.mulf %484, %476 : vector<13x256xf32>
      %486 = arith.addf %483, %485 : vector<13x256xf32>
      %487 = vector.broadcast %23 : f32 to vector<13x256xf32>
      %488 = arith.mulf %487, %474 : vector<13x256xf32>
      %489 = vector.broadcast %27 : f32 to vector<13x256xf32>
      %490 = arith.mulf %489, %476 : vector<13x256xf32>
      %491 = arith.addf %488, %490 : vector<13x256xf32>
      %492 = vector.broadcast %31 : f32 to vector<13x256xf32>
      %493 = arith.mulf %492, %478 : vector<13x256xf32>
      %494 = arith.addf %491, %493 : vector<13x256xf32>
      %495 = arith.addf %462, %486 : vector<13x256xf32>
      %496 = arith.addf %470, %494 : vector<13x256xf32>
      %c7 = arith.constant 7 : index
      %c0_220 = arith.constant 0 : index
      %c0_221 = arith.constant 0 : index
      %497 = vector.load %arg1[%c7, %c0_220, %c0_221] : memref<28x14x256xf32, #tpu.memory_space<vmem>>, vector<1x13x256xf32>
      %498 = vector.shape_cast %497 : vector<1x13x256xf32> to vector<13x256xf32>
      %c7_222 = arith.constant 7 : index
      %c0_223 = arith.constant 0 : index
      %c0_224 = arith.constant 0 : index
      %499 = vector.load %arg2[%c7_222, %c0_223, %c0_224] : memref<28x14x256xf32, #tpu.memory_space<vmem>>, vector<1x13x256xf32>
      %500 = vector.shape_cast %499 : vector<1x13x256xf32> to vector<13x256xf32>
      %c7_225 = arith.constant 7 : index
      %c1_226 = arith.constant 1 : index
      %c0_227 = arith.constant 0 : index
      %501 = vector.load %arg1[%c7_225, %c1_226, %c0_227] : memref<28x14x256xf32, #tpu.memory_space<vmem>>, vector<1x13x256xf32>
      %502 = vector.shape_cast %501 : vector<1x13x256xf32> to vector<13x256xf32>
      %c7_228 = arith.constant 7 : index
      %c1_229 = arith.constant 1 : index
      %c0_230 = arith.constant 0 : index
      %503 = vector.load %arg2[%c7_228, %c1_229, %c0_230] : memref<28x14x256xf32, #tpu.memory_space<vmem>>, vector<1x13x256xf32>
      %504 = vector.shape_cast %503 : vector<1x13x256xf32> to vector<13x256xf32>
      %505 = vector.broadcast %35 : f32 to vector<13x256xf32>
      %506 = arith.mulf %505, %498 : vector<13x256xf32>
      %507 = vector.broadcast %39 : f32 to vector<13x256xf32>
      %508 = arith.mulf %507, %500 : vector<13x256xf32>
      %509 = arith.addf %506, %508 : vector<13x256xf32>
      %510 = vector.broadcast %43 : f32 to vector<13x256xf32>
      %511 = arith.mulf %510, %502 : vector<13x256xf32>
      %512 = arith.addf %509, %511 : vector<13x256xf32>
      %513 = vector.broadcast %35 : f32 to vector<13x256xf32>
      %514 = arith.mulf %513, %500 : vector<13x256xf32>
      %515 = vector.broadcast %39 : f32 to vector<13x256xf32>
      %516 = arith.mulf %515, %502 : vector<13x256xf32>
      %517 = arith.addf %514, %516 : vector<13x256xf32>
      %518 = vector.broadcast %43 : f32 to vector<13x256xf32>
      %519 = arith.mulf %518, %504 : vector<13x256xf32>
      %520 = arith.addf %517, %519 : vector<13x256xf32>
      %521 = arith.addf %495, %512 : vector<13x256xf32>
      %522 = arith.addf %496, %520 : vector<13x256xf32>
      %523 = arith.maximumf %521, %522 : vector<13x256xf32>
      %524 = arith.maximumf %446, %523 : vector<13x256xf32>
      %525 = vector.broadcast %47 : f32 to vector<13x256xf32>
      %526 = arith.addf %524, %525 : vector<13x256xf32>
      %cst_231 = arith.constant 0.000000e+00 : f32
      %527 = vector.broadcast %cst_231 : f32 to vector<13x256xf32>
      %528 = arith.maximumf %526, %527 : vector<13x256xf32>
      %529 = tpu.concatenate %528, %0 in 0 : vector<13x256xf32>, vector<3x256xf32> -> vector<16x256xf32>
      %c32 = arith.constant 32 : index
      %c0_232 = arith.constant 0 : index
      %530 = vector.load %arg7[%c32, %c0_232] : memref<208x256xf32, #tpu.memory_space<vmem>>, vector<16x256xf32>
      tpu.vector_store %arg7[%c32, %c0_232], %529 {strides = array<i32>} : memref<208x256xf32, #tpu.memory_space<vmem>>, vector<16x256xf32>,
      %c6_233 = arith.constant 6 : index
      %c0_234 = arith.constant 0 : index
      %c0_235 = arith.constant 0 : index
      %531 = vector.load %arg1[%c6_233, %c0_234, %c0_235] : memref<28x14x256xf32, #tpu.memory_space<vmem>>, vector<1x13x256xf32>
      %532 = vector.shape_cast %531 : vector<1x13x256xf32> to vector<13x256xf32>
      %c6_236 = arith.constant 6 : index
      %c0_237 = arith.constant 0 : index
      %c0_238 = arith.constant 0 : index
      %533 = vector.load %arg2[%c6_236, %c0_237, %c0_238] : memref<28x14x256xf32, #tpu.memory_space<vmem>>, vector<1x13x256xf32>
      %534 = vector.shape_cast %533 : vector<1x13x256xf32> to vector<13x256xf32>
      %c6_239 = arith.constant 6 : index
      %c1_240 = arith.constant 1 : index
      %c0_241 = arith.constant 0 : index
      %535 = vector.load %arg1[%c6_239, %c1_240, %c0_241] : memref<28x14x256xf32, #tpu.memory_space<vmem>>, vector<1x13x256xf32>
      %536 = vector.shape_cast %535 : vector<1x13x256xf32> to vector<13x256xf32>
      %c6_242 = arith.constant 6 : index
      %c1_243 = arith.constant 1 : index
      %c0_244 = arith.constant 0 : index
      %537 = vector.load %arg2[%c6_242, %c1_243, %c0_244] : memref<28x14x256xf32, #tpu.memory_space<vmem>>, vector<1x13x256xf32>
      %538 = vector.shape_cast %537 : vector<1x13x256xf32> to vector<13x256xf32>
      %539 = vector.broadcast %11 : f32 to vector<13x256xf32>
      %540 = arith.mulf %539, %532 : vector<13x256xf32>
      %541 = vector.broadcast %15 : f32 to vector<13x256xf32>
      %542 = arith.mulf %541, %534 : vector<13x256xf32>
      %543 = arith.addf %540, %542 : vector<13x256xf32>
      %544 = vector.broadcast %19 : f32 to vector<13x256xf32>
      %545 = arith.mulf %544, %536 : vector<13x256xf32>
      %546 = arith.addf %543, %545 : vector<13x256xf32>
      %547 = vector.broadcast %11 : f32 to vector<13x256xf32>
      %548 = arith.mulf %547, %534 : vector<13x256xf32>
      %549 = vector.broadcast %15 : f32 to vector<13x256xf32>
      %550 = arith.mulf %549, %536 : vector<13x256xf32>
      %551 = arith.addf %548, %550 : vector<13x256xf32>
      %552 = vector.broadcast %19 : f32 to vector<13x256xf32>
      %553 = arith.mulf %552, %538 : vector<13x256xf32>
      %554 = arith.addf %551, %553 : vector<13x256xf32>
      %c7_245 = arith.constant 7 : index
      %c0_246 = arith.constant 0 : index
      %c0_247 = arith.constant 0 : index
      %555 = vector.load %arg1[%c7_245, %c0_246, %c0_247] : memref<28x14x256xf32, #tpu.memory_space<vmem>>, vector<1x13x256xf32>
      %556 = vector.shape_cast %555 : vector<1x13x256xf32> to vector<13x256xf32>
      %c7_248 = arith.constant 7 : index
      %c0_249 = arith.constant 0 : index
      %c0_250 = arith.constant 0 : index
      %557 = vector.load %arg2[%c7_248, %c0_249, %c0_250] : memref<28x14x256xf32, #tpu.memory_space<vmem>>, vector<1x13x256xf32>
      %558 = vector.shape_cast %557 : vector<1x13x256xf32> to vector<13x256xf32>
      %c7_251 = arith.constant 7 : index
      %c1_252 = arith.constant 1 : index
      %c0_253 = arith.constant 0 : index
      %559 = vector.load %arg1[%c7_251, %c1_252, %c0_253] : memref<28x14x256xf32, #tpu.memory_space<vmem>>, vector<1x13x256xf32>
      %560 = vector.shape_cast %559 : vector<1x13x256xf32> to vector<13x256xf32>
      %c7_254 = arith.constant 7 : index
      %c1_255 = arith.constant 1 : index
      %c0_256 = arith.constant 0 : index
      %561 = vector.load %arg2[%c7_254, %c1_255, %c0_256] : memref<28x14x256xf32, #tpu.memory_space<vmem>>, vector<1x13x256xf32>
      %562 = vector.shape_cast %561 : vector<1x13x256xf32> to vector<13x256xf32>
      %563 = vector.broadcast %23 : f32 to vector<13x256xf32>
      %564 = arith.mulf %563, %556 : vector<13x256xf32>
      %565 = vector.broadcast %27 : f32 to vector<13x256xf32>
      %566 = arith.mulf %565, %558 : vector<13x256xf32>
      %567 = arith.addf %564, %566 : vector<13x256xf32>
      %568 = vector.broadcast %31 : f32 to vector<13x256xf32>
      %569 = arith.mulf %568, %560 : vector<13x256xf32>
      %570 = arith.addf %567, %569 : vector<13x256xf32>
      %571 = vector.broadcast %23 : f32 to vector<13x256xf32>
      %572 = arith.mulf %571, %558 : vector<13x256xf32>
      %573 = vector.broadcast %27 : f32 to vector<13x256xf32>
      %574 = arith.mulf %573, %560 : vector<13x256xf32>
      %575 = arith.addf %572, %574 : vector<13x256xf32>
      %576 = vector.broadcast %31 : f32 to vector<13x256xf32>
      %577 = arith.mulf %576, %562 : vector<13x256xf32>
      %578 = arith.addf %575, %577 : vector<13x256xf32>
      %579 = arith.addf %546, %570 : vector<13x256xf32>
      %580 = arith.addf %554, %578 : vector<13x256xf32>
      %c8 = arith.constant 8 : index
      %c0_257 = arith.constant 0 : index
      %c0_258 = arith.constant 0 : index
      %581 = vector.load %arg1[%c8, %c0_257, %c0_258] : memref<28x14x256xf32, #tpu.memory_space<vmem>>, vector<1x13x256xf32>
      %582 = vector.shape_cast %581 : vector<1x13x256xf32> to vector<13x256xf32>
      %c8_259 = arith.constant 8 : index
      %c0_260 = arith.constant 0 : index
      %c0_261 = arith.constant 0 : index
      %583 = vector.load %arg2[%c8_259, %c0_260, %c0_261] : memref<28x14x256xf32, #tpu.memory_space<vmem>>, vector<1x13x256xf32>
      %584 = vector.shape_cast %583 : vector<1x13x256xf32> to vector<13x256xf32>
      %c8_262 = arith.constant 8 : index
      %c1_263 = arith.constant 1 : index
      %c0_264 = arith.constant 0 : index
      %585 = vector.load %arg1[%c8_262, %c1_263, %c0_264] : memref<28x14x256xf32, #tpu.memory_space<vmem>>, vector<1x13x256xf32>
      %586 = vector.shape_cast %585 : vector<1x13x256xf32> to vector<13x256xf32>
      %c8_265 = arith.constant 8 : index
      %c1_266 = arith.constant 1 : index
      %c0_267 = arith.constant 0 : index
      %587 = vector.load %arg2[%c8_265, %c1_266, %c0_267] : memref<28x14x256xf32, #tpu.memory_space<vmem>>, vector<1x13x256xf32>
      %588 = vector.shape_cast %587 : vector<1x13x256xf32> to vector<13x256xf32>
      %589 = vector.broadcast %35 : f32 to vector<13x256xf32>
      %590 = arith.mulf %589, %582 : vector<13x256xf32>
      %591 = vector.broadcast %39 : f32 to vector<13x256xf32>
      %592 = arith.mulf %591, %584 : vector<13x256xf32>
      %593 = arith.addf %590, %592 : vector<13x256xf32>
      %594 = vector.broadcast %43 : f32 to vector<13x256xf32>
      %595 = arith.mulf %594, %586 : vector<13x256xf32>
      %596 = arith.addf %593, %595 : vector<13x256xf32>
      %597 = vector.broadcast %35 : f32 to vector<13x256xf32>
      %598 = arith.mulf %597, %584 : vector<13x256xf32>
      %599 = vector.broadcast %39 : f32 to vector<13x256xf32>
      %600 = arith.mulf %599, %586 : vector<13x256xf32>
      %601 = arith.addf %598, %600 : vector<13x256xf32>
      %602 = vector.broadcast %43 : f32 to vector<13x256xf32>
      %603 = arith.mulf %602, %588 : vector<13x256xf32>
      %604 = arith.addf %601, %603 : vector<13x256xf32>
      %605 = arith.addf %579, %596 : vector<13x256xf32>
      %606 = arith.addf %580, %604 : vector<13x256xf32>
      %607 = arith.maximumf %605, %606 : vector<13x256xf32>
      %c7_268 = arith.constant 7 : index
      %c0_269 = arith.constant 0 : index
      %c0_270 = arith.constant 0 : index
      %608 = vector.load %arg1[%c7_268, %c0_269, %c0_270] : memref<28x14x256xf32, #tpu.memory_space<vmem>>, vector<1x13x256xf32>
      %609 = vector.shape_cast %608 : vector<1x13x256xf32> to vector<13x256xf32>
      %c7_271 = arith.constant 7 : index
      %c0_272 = arith.constant 0 : index
      %c0_273 = arith.constant 0 : index
      %610 = vector.load %arg2[%c7_271, %c0_272, %c0_273] : memref<28x14x256xf32, #tpu.memory_space<vmem>>, vector<1x13x256xf32>
      %611 = vector.shape_cast %610 : vector<1x13x256xf32> to vector<13x256xf32>
      %c7_274 = arith.constant 7 : index
      %c1_275 = arith.constant 1 : index
      %c0_276 = arith.constant 0 : index
      %612 = vector.load %arg1[%c7_274, %c1_275, %c0_276] : memref<28x14x256xf32, #tpu.memory_space<vmem>>, vector<1x13x256xf32>
      %613 = vector.shape_cast %612 : vector<1x13x256xf32> to vector<13x256xf32>
      %c7_277 = arith.constant 7 : index
      %c1_278 = arith.constant 1 : index
      %c0_279 = arith.constant 0 : index
      %614 = vector.load %arg2[%c7_277, %c1_278, %c0_279] : memref<28x14x256xf32, #tpu.memory_space<vmem>>, vector<1x13x256xf32>
      %615 = vector.shape_cast %614 : vector<1x13x256xf32> to vector<13x256xf32>
      %616 = vector.broadcast %11 : f32 to vector<13x256xf32>
      %617 = arith.mulf %616, %609 : vector<13x256xf32>
      %618 = vector.broadcast %15 : f32 to vector<13x256xf32>
      %619 = arith.mulf %618, %611 : vector<13x256xf32>
      %620 = arith.addf %617, %619 : vector<13x256xf32>
      %621 = vector.broadcast %19 : f32 to vector<13x256xf32>
      %622 = arith.mulf %621, %613 : vector<13x256xf32>
      %623 = arith.addf %620, %622 : vector<13x256xf32>
      %624 = vector.broadcast %11 : f32 to vector<13x256xf32>
      %625 = arith.mulf %624, %611 : vector<13x256xf32>
      %626 = vector.broadcast %15 : f32 to vector<13x256xf32>
      %627 = arith.mulf %626, %613 : vector<13x256xf32>
      %628 = arith.addf %625, %627 : vector<13x256xf32>
      %629 = vector.broadcast %19 : f32 to vector<13x256xf32>
      %630 = arith.mulf %629, %615 : vector<13x256xf32>
      %631 = arith.addf %628, %630 : vector<13x256xf32>
      %c8_280 = arith.constant 8 : index
      %c0_281 = arith.constant 0 : index
      %c0_282 = arith.constant 0 : index
      %632 = vector.load %arg1[%c8_280, %c0_281, %c0_282] : memref<28x14x256xf32, #tpu.memory_space<vmem>>, vector<1x13x256xf32>
      %633 = vector.shape_cast %632 : vector<1x13x256xf32> to vector<13x256xf32>
      %c8_283 = arith.constant 8 : index
      %c0_284 = arith.constant 0 : index
      %c0_285 = arith.constant 0 : index
      %634 = vector.load %arg2[%c8_283, %c0_284, %c0_285] : memref<28x14x256xf32, #tpu.memory_space<vmem>>, vector<1x13x256xf32>
      %635 = vector.shape_cast %634 : vector<1x13x256xf32> to vector<13x256xf32>
      %c8_286 = arith.constant 8 : index
      %c1_287 = arith.constant 1 : index
      %c0_288 = arith.constant 0 : index
      %636 = vector.load %arg1[%c8_286, %c1_287, %c0_288] : memref<28x14x256xf32, #tpu.memory_space<vmem>>, vector<1x13x256xf32>
      %637 = vector.shape_cast %636 : vector<1x13x256xf32> to vector<13x256xf32>
      %c8_289 = arith.constant 8 : index
      %c1_290 = arith.constant 1 : index
      %c0_291 = arith.constant 0 : index
      %638 = vector.load %arg2[%c8_289, %c1_290, %c0_291] : memref<28x14x256xf32, #tpu.memory_space<vmem>>, vector<1x13x256xf32>
      %639 = vector.shape_cast %638 : vector<1x13x256xf32> to vector<13x256xf32>
      %640 = vector.broadcast %23 : f32 to vector<13x256xf32>
      %641 = arith.mulf %640, %633 : vector<13x256xf32>
      %642 = vector.broadcast %27 : f32 to vector<13x256xf32>
      %643 = arith.mulf %642, %635 : vector<13x256xf32>
      %644 = arith.addf %641, %643 : vector<13x256xf32>
      %645 = vector.broadcast %31 : f32 to vector<13x256xf32>
      %646 = arith.mulf %645, %637 : vector<13x256xf32>
      %647 = arith.addf %644, %646 : vector<13x256xf32>
      %648 = vector.broadcast %23 : f32 to vector<13x256xf32>
      %649 = arith.mulf %648, %635 : vector<13x256xf32>
      %650 = vector.broadcast %27 : f32 to vector<13x256xf32>
      %651 = arith.mulf %650, %637 : vector<13x256xf32>
      %652 = arith.addf %649, %651 : vector<13x256xf32>
      %653 = vector.broadcast %31 : f32 to vector<13x256xf32>
      %654 = arith.mulf %653, %639 : vector<13x256xf32>
      %655 = arith.addf %652, %654 : vector<13x256xf32>
      %656 = arith.addf %623, %647 : vector<13x256xf32>
      %657 = arith.addf %631, %655 : vector<13x256xf32>
      %c9 = arith.constant 9 : index
      %c0_292 = arith.constant 0 : index
      %c0_293 = arith.constant 0 : index
      %658 = vector.load %arg1[%c9, %c0_292, %c0_293] : memref<28x14x256xf32, #tpu.memory_space<vmem>>, vector<1x13x256xf32>
      %659 = vector.shape_cast %658 : vector<1x13x256xf32> to vector<13x256xf32>
      %c9_294 = arith.constant 9 : index
      %c0_295 = arith.constant 0 : index
      %c0_296 = arith.constant 0 : index
      %660 = vector.load %arg2[%c9_294, %c0_295, %c0_296] : memref<28x14x256xf32, #tpu.memory_space<vmem>>, vector<1x13x256xf32>
      %661 = vector.shape_cast %660 : vector<1x13x256xf32> to vector<13x256xf32>
      %c9_297 = arith.constant 9 : index
      %c1_298 = arith.constant 1 : index
      %c0_299 = arith.constant 0 : index
      %662 = vector.load %arg1[%c9_297, %c1_298, %c0_299] : memref<28x14x256xf32, #tpu.memory_space<vmem>>, vector<1x13x256xf32>
      %663 = vector.shape_cast %662 : vector<1x13x256xf32> to vector<13x256xf32>
      %c9_300 = arith.constant 9 : index
      %c1_301 = arith.constant 1 : index
      %c0_302 = arith.constant 0 : index
      %664 = vector.load %arg2[%c9_300, %c1_301, %c0_302] : memref<28x14x256xf32, #tpu.memory_space<vmem>>, vector<1x13x256xf32>
      %665 = vector.shape_cast %664 : vector<1x13x256xf32> to vector<13x256xf32>
      %666 = vector.broadcast %35 : f32 to vector<13x256xf32>
      %667 = arith.mulf %666, %659 : vector<13x256xf32>
      %668 = vector.broadcast %39 : f32 to vector<13x256xf32>
      %669 = arith.mulf %668, %661 : vector<13x256xf32>
      %670 = arith.addf %667, %669 : vector<13x256xf32>
      %671 = vector.broadcast %43 : f32 to vector<13x256xf32>
      %672 = arith.mulf %671, %663 : vector<13x256xf32>
      %673 = arith.addf %670, %672 : vector<13x256xf32>
      %674 = vector.broadcast %35 : f32 to vector<13x256xf32>
      %675 = arith.mulf %674, %661 : vector<13x256xf32>
      %676 = vector.broadcast %39 : f32 to vector<13x256xf32>
      %677 = arith.mulf %676, %663 : vector<13x256xf32>
      %678 = arith.addf %675, %677 : vector<13x256xf32>
      %679 = vector.broadcast %43 : f32 to vector<13x256xf32>
      %680 = arith.mulf %679, %665 : vector<13x256xf32>
      %681 = arith.addf %678, %680 : vector<13x256xf32>
      %682 = arith.addf %656, %673 : vector<13x256xf32>
      %683 = arith.addf %657, %681 : vector<13x256xf32>
      %684 = arith.maximumf %682, %683 : vector<13x256xf32>
      %685 = arith.maximumf %607, %684 : vector<13x256xf32>
      %686 = vector.broadcast %47 : f32 to vector<13x256xf32>
      %687 = arith.addf %685, %686 : vector<13x256xf32>
      %cst_303 = arith.constant 0.000000e+00 : f32
      %688 = vector.broadcast %cst_303 : f32 to vector<13x256xf32>
      %689 = arith.maximumf %687, %688 : vector<13x256xf32>
      %690 = tpu.concatenate %689, %0 in 0 : vector<13x256xf32>, vector<3x256xf32> -> vector<16x256xf32>
      %c48 = arith.constant 48 : index
      %c0_304 = arith.constant 0 : index
      %691 = vector.load %arg7[%c48, %c0_304] : memref<208x256xf32, #tpu.memory_space<vmem>>, vector<16x256xf32>
      tpu.vector_store %arg7[%c48, %c0_304], %690 {strides = array<i32>} : memref<208x256xf32, #tpu.memory_space<vmem>>, vector<16x256xf32>,
      %c8_305 = arith.constant 8 : index
      %c0_306 = arith.constant 0 : index
      %c0_307 = arith.constant 0 : index
      %692 = vector.load %arg1[%c8_305, %c0_306, %c0_307] : memref<28x14x256xf32, #tpu.memory_space<vmem>>, vector<1x13x256xf32>
      %693 = vector.shape_cast %692 : vector<1x13x256xf32> to vector<13x256xf32>
      %c8_308 = arith.constant 8 : index
      %c0_309 = arith.constant 0 : index
      %c0_310 = arith.constant 0 : index
      %694 = vector.load %arg2[%c8_308, %c0_309, %c0_310] : memref<28x14x256xf32, #tpu.memory_space<vmem>>, vector<1x13x256xf32>
      %695 = vector.shape_cast %694 : vector<1x13x256xf32> to vector<13x256xf32>
      %c8_311 = arith.constant 8 : index
      %c1_312 = arith.constant 1 : index
      %c0_313 = arith.constant 0 : index
      %696 = vector.load %arg1[%c8_311, %c1_312, %c0_313] : memref<28x14x256xf32, #tpu.memory_space<vmem>>, vector<1x13x256xf32>
      %697 = vector.shape_cast %696 : vector<1x13x256xf32> to vector<13x256xf32>
      %c8_314 = arith.constant 8 : index
      %c1_315 = arith.constant 1 : index
      %c0_316 = arith.constant 0 : index
      %698 = vector.load %arg2[%c8_314, %c1_315, %c0_316] : memref<28x14x256xf32, #tpu.memory_space<vmem>>, vector<1x13x256xf32>
      %699 = vector.shape_cast %698 : vector<1x13x256xf32> to vector<13x256xf32>
      %700 = vector.broadcast %11 : f32 to vector<13x256xf32>
      %701 = arith.mulf %700, %693 : vector<13x256xf32>
      %702 = vector.broadcast %15 : f32 to vector<13x256xf32>
      %703 = arith.mulf %702, %695 : vector<13x256xf32>
      %704 = arith.addf %701, %703 : vector<13x256xf32>
      %705 = vector.broadcast %19 : f32 to vector<13x256xf32>
      %706 = arith.mulf %705, %697 : vector<13x256xf32>
      %707 = arith.addf %704, %706 : vector<13x256xf32>
      %708 = vector.broadcast %11 : f32 to vector<13x256xf32>
      %709 = arith.mulf %708, %695 : vector<13x256xf32>
      %710 = vector.broadcast %15 : f32 to vector<13x256xf32>
      %711 = arith.mulf %710, %697 : vector<13x256xf32>
      %712 = arith.addf %709, %711 : vector<13x256xf32>
      %713 = vector.broadcast %19 : f32 to vector<13x256xf32>
      %714 = arith.mulf %713, %699 : vector<13x256xf32>
      %715 = arith.addf %712, %714 : vector<13x256xf32>
      %c9_317 = arith.constant 9 : index
      %c0_318 = arith.constant 0 : index
      %c0_319 = arith.constant 0 : index
      %716 = vector.load %arg1[%c9_317, %c0_318, %c0_319] : memref<28x14x256xf32, #tpu.memory_space<vmem>>, vector<1x13x256xf32>
      %717 = vector.shape_cast %716 : vector<1x13x256xf32> to vector<13x256xf32>
      %c9_320 = arith.constant 9 : index
      %c0_321 = arith.constant 0 : index
      %c0_322 = arith.constant 0 : index
      %718 = vector.load %arg2[%c9_320, %c0_321, %c0_322] : memref<28x14x256xf32, #tpu.memory_space<vmem>>, vector<1x13x256xf32>
      %719 = vector.shape_cast %718 : vector<1x13x256xf32> to vector<13x256xf32>
      %c9_323 = arith.constant 9 : index
      %c1_324 = arith.constant 1 : index
      %c0_325 = arith.constant 0 : index
      %720 = vector.load %arg1[%c9_323, %c1_324, %c0_325] : memref<28x14x256xf32, #tpu.memory_space<vmem>>, vector<1x13x256xf32>
      %721 = vector.shape_cast %720 : vector<1x13x256xf32> to vector<13x256xf32>
      %c9_326 = arith.constant 9 : index
      %c1_327 = arith.constant 1 : index
      %c0_328 = arith.constant 0 : index
      %722 = vector.load %arg2[%c9_326, %c1_327, %c0_328] : memref<28x14x256xf32, #tpu.memory_space<vmem>>, vector<1x13x256xf32>
      %723 = vector.shape_cast %722 : vector<1x13x256xf32> to vector<13x256xf32>
      %724 = vector.broadcast %23 : f32 to vector<13x256xf32>
      %725 = arith.mulf %724, %717 : vector<13x256xf32>
      %726 = vector.broadcast %27 : f32 to vector<13x256xf32>
      %727 = arith.mulf %726, %719 : vector<13x256xf32>
      %728 = arith.addf %725, %727 : vector<13x256xf32>
      %729 = vector.broadcast %31 : f32 to vector<13x256xf32>
      %730 = arith.mulf %729, %721 : vector<13x256xf32>
      %731 = arith.addf %728, %730 : vector<13x256xf32>
      %732 = vector.broadcast %23 : f32 to vector<13x256xf32>
      %733 = arith.mulf %732, %719 : vector<13x256xf32>
      %734 = vector.broadcast %27 : f32 to vector<13x256xf32>
      %735 = arith.mulf %734, %721 : vector<13x256xf32>
      %736 = arith.addf %733, %735 : vector<13x256xf32>
      %737 = vector.broadcast %31 : f32 to vector<13x256xf32>
      %738 = arith.mulf %737, %723 : vector<13x256xf32>
      %739 = arith.addf %736, %738 : vector<13x256xf32>
      %740 = arith.addf %707, %731 : vector<13x256xf32>
      %741 = arith.addf %715, %739 : vector<13x256xf32>
      %c10 = arith.constant 10 : index
      %c0_329 = arith.constant 0 : index
      %c0_330 = arith.constant 0 : index
      %742 = vector.load %arg1[%c10, %c0_329, %c0_330] : memref<28x14x256xf32, #tpu.memory_space<vmem>>, vector<1x13x256xf32>
      %743 = vector.shape_cast %742 : vector<1x13x256xf32> to vector<13x256xf32>
      %c10_331 = arith.constant 10 : index
      %c0_332 = arith.constant 0 : index
      %c0_333 = arith.constant 0 : index
      %744 = vector.load %arg2[%c10_331, %c0_332, %c0_333] : memref<28x14x256xf32, #tpu.memory_space<vmem>>, vector<1x13x256xf32>
      %745 = vector.shape_cast %744 : vector<1x13x256xf32> to vector<13x256xf32>
      %c10_334 = arith.constant 10 : index
      %c1_335 = arith.constant 1 : index
      %c0_336 = arith.constant 0 : index
      %746 = vector.load %arg1[%c10_334, %c1_335, %c0_336] : memref<28x14x256xf32, #tpu.memory_space<vmem>>, vector<1x13x256xf32>
      %747 = vector.shape_cast %746 : vector<1x13x256xf32> to vector<13x256xf32>
      %c10_337 = arith.constant 10 : index
      %c1_338 = arith.constant 1 : index
      %c0_339 = arith.constant 0 : index
      %748 = vector.load %arg2[%c10_337, %c1_338, %c0_339] : memref<28x14x256xf32, #tpu.memory_space<vmem>>, vector<1x13x256xf32>
      %749 = vector.shape_cast %748 : vector<1x13x256xf32> to vector<13x256xf32>
      %750 = vector.broadcast %35 : f32 to vector<13x256xf32>
      %751 = arith.mulf %750, %743 : vector<13x256xf32>
      %752 = vector.broadcast %39 : f32 to vector<13x256xf32>
      %753 = arith.mulf %752, %745 : vector<13x256xf32>
      %754 = arith.addf %751, %753 : vector<13x256xf32>
      %755 = vector.broadcast %43 : f32 to vector<13x256xf32>
      %756 = arith.mulf %755, %747 : vector<13x256xf32>
      %757 = arith.addf %754, %756 : vector<13x256xf32>
      %758 = vector.broadcast %35 : f32 to vector<13x256xf32>
      %759 = arith.mulf %758, %745 : vector<13x256xf32>
      %760 = vector.broadcast %39 : f32 to vector<13x256xf32>
      %761 = arith.mulf %760, %747 : vector<13x256xf32>
      %762 = arith.addf %759, %761 : vector<13x256xf32>
      %763 = vector.broadcast %43 : f32 to vector<13x256xf32>
      %764 = arith.mulf %763, %749 : vector<13x256xf32>
      %765 = arith.addf %762, %764 : vector<13x256xf32>
      %766 = arith.addf %740, %757 : vector<13x256xf32>
      %767 = arith.addf %741, %765 : vector<13x256xf32>
      %768 = arith.maximumf %766, %767 : vector<13x256xf32>
      %c9_340 = arith.constant 9 : index
      %c0_341 = arith.constant 0 : index
      %c0_342 = arith.constant 0 : index
      %769 = vector.load %arg1[%c9_340, %c0_341, %c0_342] : memref<28x14x256xf32, #tpu.memory_space<vmem>>, vector<1x13x256xf32>
      %770 = vector.shape_cast %769 : vector<1x13x256xf32> to vector<13x256xf32>
      %c9_343 = arith.constant 9 : index
      %c0_344 = arith.constant 0 : index
      %c0_345 = arith.constant 0 : index
      %771 = vector.load %arg2[%c9_343, %c0_344, %c0_345] : memref<28x14x256xf32, #tpu.memory_space<vmem>>, vector<1x13x256xf32>
      %772 = vector.shape_cast %771 : vector<1x13x256xf32> to vector<13x256xf32>
      %c9_346 = arith.constant 9 : index
      %c1_347 = arith.constant 1 : index
      %c0_348 = arith.constant 0 : index
      %773 = vector.load %arg1[%c9_346, %c1_347, %c0_348] : memref<28x14x256xf32, #tpu.memory_space<vmem>>, vector<1x13x256xf32>
      %774 = vector.shape_cast %773 : vector<1x13x256xf32> to vector<13x256xf32>
      %c9_349 = arith.constant 9 : index
      %c1_350 = arith.constant 1 : index
      %c0_351 = arith.constant 0 : index
      %775 = vector.load %arg2[%c9_349, %c1_350, %c0_351] : memref<28x14x256xf32, #tpu.memory_space<vmem>>, vector<1x13x256xf32>
      %776 = vector.shape_cast %775 : vector<1x13x256xf32> to vector<13x256xf32>
      %777 = vector.broadcast %11 : f32 to vector<13x256xf32>
      %778 = arith.mulf %777, %770 : vector<13x256xf32>
      %779 = vector.broadcast %15 : f32 to vector<13x256xf32>
      %780 = arith.mulf %779, %772 : vector<13x256xf32>
      %781 = arith.addf %778, %780 : vector<13x256xf32>
      %782 = vector.broadcast %19 : f32 to vector<13x256xf32>
      %783 = arith.mulf %782, %774 : vector<13x256xf32>
      %784 = arith.addf %781, %783 : vector<13x256xf32>
      %785 = vector.broadcast %11 : f32 to vector<13x256xf32>
      %786 = arith.mulf %785, %772 : vector<13x256xf32>
      %787 = vector.broadcast %15 : f32 to vector<13x256xf32>
      %788 = arith.mulf %787, %774 : vector<13x256xf32>
      %789 = arith.addf %786, %788 : vector<13x256xf32>
      %790 = vector.broadcast %19 : f32 to vector<13x256xf32>
      %791 = arith.mulf %790, %776 : vector<13x256xf32>
      %792 = arith.addf %789, %791 : vector<13x256xf32>
      %c10_352 = arith.constant 10 : index
      %c0_353 = arith.constant 0 : index
      %c0_354 = arith.constant 0 : index
      %793 = vector.load %arg1[%c10_352, %c0_353, %c0_354] : memref<28x14x256xf32, #tpu.memory_space<vmem>>, vector<1x13x256xf32>
      %794 = vector.shape_cast %793 : vector<1x13x256xf32> to vector<13x256xf32>
      %c10_355 = arith.constant 10 : index
      %c0_356 = arith.constant 0 : index
      %c0_357 = arith.constant 0 : index
      %795 = vector.load %arg2[%c10_355, %c0_356, %c0_357] : memref<28x14x256xf32, #tpu.memory_space<vmem>>, vector<1x13x256xf32>
      %796 = vector.shape_cast %795 : vector<1x13x256xf32> to vector<13x256xf32>
      %c10_358 = arith.constant 10 : index
      %c1_359 = arith.constant 1 : index
      %c0_360 = arith.constant 0 : index
      %797 = vector.load %arg1[%c10_358, %c1_359, %c0_360] : memref<28x14x256xf32, #tpu.memory_space<vmem>>, vector<1x13x256xf32>
      %798 = vector.shape_cast %797 : vector<1x13x256xf32> to vector<13x256xf32>
      %c10_361 = arith.constant 10 : index
      %c1_362 = arith.constant 1 : index
      %c0_363 = arith.constant 0 : index
      %799 = vector.load %arg2[%c10_361, %c1_362, %c0_363] : memref<28x14x256xf32, #tpu.memory_space<vmem>>, vector<1x13x256xf32>
      %800 = vector.shape_cast %799 : vector<1x13x256xf32> to vector<13x256xf32>
      %801 = vector.broadcast %23 : f32 to vector<13x256xf32>
      %802 = arith.mulf %801, %794 : vector<13x256xf32>
      %803 = vector.broadcast %27 : f32 to vector<13x256xf32>
      %804 = arith.mulf %803, %796 : vector<13x256xf32>
      %805 = arith.addf %802, %804 : vector<13x256xf32>
      %806 = vector.broadcast %31 : f32 to vector<13x256xf32>
      %807 = arith.mulf %806, %798 : vector<13x256xf32>
      %808 = arith.addf %805, %807 : vector<13x256xf32>
      %809 = vector.broadcast %23 : f32 to vector<13x256xf32>
      %810 = arith.mulf %809, %796 : vector<13x256xf32>
      %811 = vector.broadcast %27 : f32 to vector<13x256xf32>
      %812 = arith.mulf %811, %798 : vector<13x256xf32>
      %813 = arith.addf %810, %812 : vector<13x256xf32>
      %814 = vector.broadcast %31 : f32 to vector<13x256xf32>
      %815 = arith.mulf %814, %800 : vector<13x256xf32>
      %816 = arith.addf %813, %815 : vector<13x256xf32>
      %817 = arith.addf %784, %808 : vector<13x256xf32>
      %818 = arith.addf %792, %816 : vector<13x256xf32>
      %c11 = arith.constant 11 : index
      %c0_364 = arith.constant 0 : index
      %c0_365 = arith.constant 0 : index
      %819 = vector.load %arg1[%c11, %c0_364, %c0_365] : memref<28x14x256xf32, #tpu.memory_space<vmem>>, vector<1x13x256xf32>
      %820 = vector.shape_cast %819 : vector<1x13x256xf32> to vector<13x256xf32>
      %c11_366 = arith.constant 11 : index
      %c0_367 = arith.constant 0 : index
      %c0_368 = arith.constant 0 : index
      %821 = vector.load %arg2[%c11_366, %c0_367, %c0_368] : memref<28x14x256xf32, #tpu.memory_space<vmem>>, vector<1x13x256xf32>
      %822 = vector.shape_cast %821 : vector<1x13x256xf32> to vector<13x256xf32>
      %c11_369 = arith.constant 11 : index
      %c1_370 = arith.constant 1 : index
      %c0_371 = arith.constant 0 : index
      %823 = vector.load %arg1[%c11_369, %c1_370, %c0_371] : memref<28x14x256xf32, #tpu.memory_space<vmem>>, vector<1x13x256xf32>
      %824 = vector.shape_cast %823 : vector<1x13x256xf32> to vector<13x256xf32>
      %c11_372 = arith.constant 11 : index
      %c1_373 = arith.constant 1 : index
      %c0_374 = arith.constant 0 : index
      %825 = vector.load %arg2[%c11_372, %c1_373, %c0_374] : memref<28x14x256xf32, #tpu.memory_space<vmem>>, vector<1x13x256xf32>
      %826 = vector.shape_cast %825 : vector<1x13x256xf32> to vector<13x256xf32>
      %827 = vector.broadcast %35 : f32 to vector<13x256xf32>
      %828 = arith.mulf %827, %820 : vector<13x256xf32>
      %829 = vector.broadcast %39 : f32 to vector<13x256xf32>
      %830 = arith.mulf %829, %822 : vector<13x256xf32>
      %831 = arith.addf %828, %830 : vector<13x256xf32>
      %832 = vector.broadcast %43 : f32 to vector<13x256xf32>
      %833 = arith.mulf %832, %824 : vector<13x256xf32>
      %834 = arith.addf %831, %833 : vector<13x256xf32>
      %835 = vector.broadcast %35 : f32 to vector<13x256xf32>
      %836 = arith.mulf %835, %822 : vector<13x256xf32>
      %837 = vector.broadcast %39 : f32 to vector<13x256xf32>
      %838 = arith.mulf %837, %824 : vector<13x256xf32>
      %839 = arith.addf %836, %838 : vector<13x256xf32>
      %840 = vector.broadcast %43 : f32 to vector<13x256xf32>
      %841 = arith.mulf %840, %826 : vector<13x256xf32>
      %842 = arith.addf %839, %841 : vector<13x256xf32>
      %843 = arith.addf %817, %834 : vector<13x256xf32>
      %844 = arith.addf %818, %842 : vector<13x256xf32>
      %845 = arith.maximumf %843, %844 : vector<13x256xf32>
      %846 = arith.maximumf %768, %845 : vector<13x256xf32>
      %847 = vector.broadcast %47 : f32 to vector<13x256xf32>
      %848 = arith.addf %846, %847 : vector<13x256xf32>
      %cst_375 = arith.constant 0.000000e+00 : f32
      %849 = vector.broadcast %cst_375 : f32 to vector<13x256xf32>
      %850 = arith.maximumf %848, %849 : vector<13x256xf32>
      %851 = tpu.concatenate %850, %0 in 0 : vector<13x256xf32>, vector<3x256xf32> -> vector<16x256xf32>
      %c64 = arith.constant 64 : index
      %c0_376 = arith.constant 0 : index
      %852 = vector.load %arg7[%c64, %c0_376] : memref<208x256xf32, #tpu.memory_space<vmem>>, vector<16x256xf32>
      tpu.vector_store %arg7[%c64, %c0_376], %851 {strides = array<i32>} : memref<208x256xf32, #tpu.memory_space<vmem>>, vector<16x256xf32>,
      %c10_377 = arith.constant 10 : index
      %c0_378 = arith.constant 0 : index
      %c0_379 = arith.constant 0 : index
      %853 = vector.load %arg1[%c10_377, %c0_378, %c0_379] : memref<28x14x256xf32, #tpu.memory_space<vmem>>, vector<1x13x256xf32>
      %854 = vector.shape_cast %853 : vector<1x13x256xf32> to vector<13x256xf32>
      %c10_380 = arith.constant 10 : index
      %c0_381 = arith.constant 0 : index
      %c0_382 = arith.constant 0 : index
      %855 = vector.load %arg2[%c10_380, %c0_381, %c0_382] : memref<28x14x256xf32, #tpu.memory_space<vmem>>, vector<1x13x256xf32>
      %856 = vector.shape_cast %855 : vector<1x13x256xf32> to vector<13x256xf32>
      %c10_383 = arith.constant 10 : index
      %c1_384 = arith.constant 1 : index
      %c0_385 = arith.constant 0 : index
      %857 = vector.load %arg1[%c10_383, %c1_384, %c0_385] : memref<28x14x256xf32, #tpu.memory_space<vmem>>, vector<1x13x256xf32>
      %858 = vector.shape_cast %857 : vector<1x13x256xf32> to vector<13x256xf32>
      %c10_386 = arith.constant 10 : index
      %c1_387 = arith.constant 1 : index
      %c0_388 = arith.constant 0 : index
      %859 = vector.load %arg2[%c10_386, %c1_387, %c0_388] : memref<28x14x256xf32, #tpu.memory_space<vmem>>, vector<1x13x256xf32>
      %860 = vector.shape_cast %859 : vector<1x13x256xf32> to vector<13x256xf32>
      %861 = vector.broadcast %11 : f32 to vector<13x256xf32>
      %862 = arith.mulf %861, %854 : vector<13x256xf32>
      %863 = vector.broadcast %15 : f32 to vector<13x256xf32>
      %864 = arith.mulf %863, %856 : vector<13x256xf32>
      %865 = arith.addf %862, %864 : vector<13x256xf32>
      %866 = vector.broadcast %19 : f32 to vector<13x256xf32>
      %867 = arith.mulf %866, %858 : vector<13x256xf32>
      %868 = arith.addf %865, %867 : vector<13x256xf32>
      %869 = vector.broadcast %11 : f32 to vector<13x256xf32>
      %870 = arith.mulf %869, %856 : vector<13x256xf32>
      %871 = vector.broadcast %15 : f32 to vector<13x256xf32>
      %872 = arith.mulf %871, %858 : vector<13x256xf32>
      %873 = arith.addf %870, %872 : vector<13x256xf32>
      %874 = vector.broadcast %19 : f32 to vector<13x256xf32>
      %875 = arith.mulf %874, %860 : vector<13x256xf32>
      %876 = arith.addf %873, %875 : vector<13x256xf32>
      %c11_389 = arith.constant 11 : index
      %c0_390 = arith.constant 0 : index
      %c0_391 = arith.constant 0 : index
      %877 = vector.load %arg1[%c11_389, %c0_390, %c0_391] : memref<28x14x256xf32, #tpu.memory_space<vmem>>, vector<1x13x256xf32>
      %878 = vector.shape_cast %877 : vector<1x13x256xf32> to vector<13x256xf32>
      %c11_392 = arith.constant 11 : index
      %c0_393 = arith.constant 0 : index
      %c0_394 = arith.constant 0 : index
      %879 = vector.load %arg2[%c11_392, %c0_393, %c0_394] : memref<28x14x256xf32, #tpu.memory_space<vmem>>, vector<1x13x256xf32>
      %880 = vector.shape_cast %879 : vector<1x13x256xf32> to vector<13x256xf32>
      %c11_395 = arith.constant 11 : index
      %c1_396 = arith.constant 1 : index
      %c0_397 = arith.constant 0 : index
      %881 = vector.load %arg1[%c11_395, %c1_396, %c0_397] : memref<28x14x256xf32, #tpu.memory_space<vmem>>, vector<1x13x256xf32>
      %882 = vector.shape_cast %881 : vector<1x13x256xf32> to vector<13x256xf32>
      %c11_398 = arith.constant 11 : index
      %c1_399 = arith.constant 1 : index
      %c0_400 = arith.constant 0 : index
      %883 = vector.load %arg2[%c11_398, %c1_399, %c0_400] : memref<28x14x256xf32, #tpu.memory_space<vmem>>, vector<1x13x256xf32>
      %884 = vector.shape_cast %883 : vector<1x13x256xf32> to vector<13x256xf32>
      %885 = vector.broadcast %23 : f32 to vector<13x256xf32>
      %886 = arith.mulf %885, %878 : vector<13x256xf32>
      %887 = vector.broadcast %27 : f32 to vector<13x256xf32>
      %888 = arith.mulf %887, %880 : vector<13x256xf32>
      %889 = arith.addf %886, %888 : vector<13x256xf32>
      %890 = vector.broadcast %31 : f32 to vector<13x256xf32>
      %891 = arith.mulf %890, %882 : vector<13x256xf32>
      %892 = arith.addf %889, %891 : vector<13x256xf32>
      %893 = vector.broadcast %23 : f32 to vector<13x256xf32>
      %894 = arith.mulf %893, %880 : vector<13x256xf32>
      %895 = vector.broadcast %27 : f32 to vector<13x256xf32>
      %896 = arith.mulf %895, %882 : vector<13x256xf32>
      %897 = arith.addf %894, %896 : vector<13x256xf32>
      %898 = vector.broadcast %31 : f32 to vector<13x256xf32>
      %899 = arith.mulf %898, %884 : vector<13x256xf32>
      %900 = arith.addf %897, %899 : vector<13x256xf32>
      %901 = arith.addf %868, %892 : vector<13x256xf32>
      %902 = arith.addf %876, %900 : vector<13x256xf32>
      %c12 = arith.constant 12 : index
      %c0_401 = arith.constant 0 : index
      %c0_402 = arith.constant 0 : index
      %903 = vector.load %arg1[%c12, %c0_401, %c0_402] : memref<28x14x256xf32, #tpu.memory_space<vmem>>, vector<1x13x256xf32>
      %904 = vector.shape_cast %903 : vector<1x13x256xf32> to vector<13x256xf32>
      %c12_403 = arith.constant 12 : index
      %c0_404 = arith.constant 0 : index
      %c0_405 = arith.constant 0 : index
      %905 = vector.load %arg2[%c12_403, %c0_404, %c0_405] : memref<28x14x256xf32, #tpu.memory_space<vmem>>, vector<1x13x256xf32>
      %906 = vector.shape_cast %905 : vector<1x13x256xf32> to vector<13x256xf32>
      %c12_406 = arith.constant 12 : index
      %c1_407 = arith.constant 1 : index
      %c0_408 = arith.constant 0 : index
      %907 = vector.load %arg1[%c12_406, %c1_407, %c0_408] : memref<28x14x256xf32, #tpu.memory_space<vmem>>, vector<1x13x256xf32>
      %908 = vector.shape_cast %907 : vector<1x13x256xf32> to vector<13x256xf32>
      %c12_409 = arith.constant 12 : index
      %c1_410 = arith.constant 1 : index
      %c0_411 = arith.constant 0 : index
      %909 = vector.load %arg2[%c12_409, %c1_410, %c0_411] : memref<28x14x256xf32, #tpu.memory_space<vmem>>, vector<1x13x256xf32>
      %910 = vector.shape_cast %909 : vector<1x13x256xf32> to vector<13x256xf32>
      %911 = vector.broadcast %35 : f32 to vector<13x256xf32>
      %912 = arith.mulf %911, %904 : vector<13x256xf32>
      %913 = vector.broadcast %39 : f32 to vector<13x256xf32>
      %914 = arith.mulf %913, %906 : vector<13x256xf32>
      %915 = arith.addf %912, %914 : vector<13x256xf32>
      %916 = vector.broadcast %43 : f32 to vector<13x256xf32>
      %917 = arith.mulf %916, %908 : vector<13x256xf32>
      %918 = arith.addf %915, %917 : vector<13x256xf32>
      %919 = vector.broadcast %35 : f32 to vector<13x256xf32>
      %920 = arith.mulf %919, %906 : vector<13x256xf32>
      %921 = vector.broadcast %39 : f32 to vector<13x256xf32>
      %922 = arith.mulf %921, %908 : vector<13x256xf32>
      %923 = arith.addf %920, %922 : vector<13x256xf32>
      %924 = vector.broadcast %43 : f32 to vector<13x256xf32>
      %925 = arith.mulf %924, %910 : vector<13x256xf32>
      %926 = arith.addf %923, %925 : vector<13x256xf32>
      %927 = arith.addf %901, %918 : vector<13x256xf32>
      %928 = arith.addf %902, %926 : vector<13x256xf32>
      %929 = arith.maximumf %927, %928 : vector<13x256xf32>
      %c11_412 = arith.constant 11 : index
      %c0_413 = arith.constant 0 : index
      %c0_414 = arith.constant 0 : index
      %930 = vector.load %arg1[%c11_412, %c0_413, %c0_414] : memref<28x14x256xf32, #tpu.memory_space<vmem>>, vector<1x13x256xf32>
      %931 = vector.shape_cast %930 : vector<1x13x256xf32> to vector<13x256xf32>
      %c11_415 = arith.constant 11 : index
      %c0_416 = arith.constant 0 : index
      %c0_417 = arith.constant 0 : index
      %932 = vector.load %arg2[%c11_415, %c0_416, %c0_417] : memref<28x14x256xf32, #tpu.memory_space<vmem>>, vector<1x13x256xf32>
      %933 = vector.shape_cast %932 : vector<1x13x256xf32> to vector<13x256xf32>
      %c11_418 = arith.constant 11 : index
      %c1_419 = arith.constant 1 : index
      %c0_420 = arith.constant 0 : index
      %934 = vector.load %arg1[%c11_418, %c1_419, %c0_420] : memref<28x14x256xf32, #tpu.memory_space<vmem>>, vector<1x13x256xf32>
      %935 = vector.shape_cast %934 : vector<1x13x256xf32> to vector<13x256xf32>
      %c11_421 = arith.constant 11 : index
      %c1_422 = arith.constant 1 : index
      %c0_423 = arith.constant 0 : index
      %936 = vector.load %arg2[%c11_421, %c1_422, %c0_423] : memref<28x14x256xf32, #tpu.memory_space<vmem>>, vector<1x13x256xf32>
      %937 = vector.shape_cast %936 : vector<1x13x256xf32> to vector<13x256xf32>
      %938 = vector.broadcast %11 : f32 to vector<13x256xf32>
      %939 = arith.mulf %938, %931 : vector<13x256xf32>
      %940 = vector.broadcast %15 : f32 to vector<13x256xf32>
      %941 = arith.mulf %940, %933 : vector<13x256xf32>
      %942 = arith.addf %939, %941 : vector<13x256xf32>
      %943 = vector.broadcast %19 : f32 to vector<13x256xf32>
      %944 = arith.mulf %943, %935 : vector<13x256xf32>
      %945 = arith.addf %942, %944 : vector<13x256xf32>
      %946 = vector.broadcast %11 : f32 to vector<13x256xf32>
      %947 = arith.mulf %946, %933 : vector<13x256xf32>
      %948 = vector.broadcast %15 : f32 to vector<13x256xf32>
      %949 = arith.mulf %948, %935 : vector<13x256xf32>
      %950 = arith.addf %947, %949 : vector<13x256xf32>
      %951 = vector.broadcast %19 : f32 to vector<13x256xf32>
      %952 = arith.mulf %951, %937 : vector<13x256xf32>
      %953 = arith.addf %950, %952 : vector<13x256xf32>
      %c12_424 = arith.constant 12 : index
      %c0_425 = arith.constant 0 : index
      %c0_426 = arith.constant 0 : index
      %954 = vector.load %arg1[%c12_424, %c0_425, %c0_426] : memref<28x14x256xf32, #tpu.memory_space<vmem>>, vector<1x13x256xf32>
      %955 = vector.shape_cast %954 : vector<1x13x256xf32> to vector<13x256xf32>
      %c12_427 = arith.constant 12 : index
      %c0_428 = arith.constant 0 : index
      %c0_429 = arith.constant 0 : index
      %956 = vector.load %arg2[%c12_427, %c0_428, %c0_429] : memref<28x14x256xf32, #tpu.memory_space<vmem>>, vector<1x13x256xf32>
      %957 = vector.shape_cast %956 : vector<1x13x256xf32> to vector<13x256xf32>
      %c12_430 = arith.constant 12 : index
      %c1_431 = arith.constant 1 : index
      %c0_432 = arith.constant 0 : index
      %958 = vector.load %arg1[%c12_430, %c1_431, %c0_432] : memref<28x14x256xf32, #tpu.memory_space<vmem>>, vector<1x13x256xf32>
      %959 = vector.shape_cast %958 : vector<1x13x256xf32> to vector<13x256xf32>
      %c12_433 = arith.constant 12 : index
      %c1_434 = arith.constant 1 : index
      %c0_435 = arith.constant 0 : index
      %960 = vector.load %arg2[%c12_433, %c1_434, %c0_435] : memref<28x14x256xf32, #tpu.memory_space<vmem>>, vector<1x13x256xf32>
      %961 = vector.shape_cast %960 : vector<1x13x256xf32> to vector<13x256xf32>
      %962 = vector.broadcast %23 : f32 to vector<13x256xf32>
      %963 = arith.mulf %962, %955 : vector<13x256xf32>
      %964 = vector.broadcast %27 : f32 to vector<13x256xf32>
      %965 = arith.mulf %964, %957 : vector<13x256xf32>
      %966 = arith.addf %963, %965 : vector<13x256xf32>
      %967 = vector.broadcast %31 : f32 to vector<13x256xf32>
      %968 = arith.mulf %967, %959 : vector<13x256xf32>
      %969 = arith.addf %966, %968 : vector<13x256xf32>
      %970 = vector.broadcast %23 : f32 to vector<13x256xf32>
      %971 = arith.mulf %970, %957 : vector<13x256xf32>
      %972 = vector.broadcast %27 : f32 to vector<13x256xf32>
      %973 = arith.mulf %972, %959 : vector<13x256xf32>
      %974 = arith.addf %971, %973 : vector<13x256xf32>
      %975 = vector.broadcast %31 : f32 to vector<13x256xf32>
      %976 = arith.mulf %975, %961 : vector<13x256xf32>
      %977 = arith.addf %974, %976 : vector<13x256xf32>
      %978 = arith.addf %945, %969 : vector<13x256xf32>
      %979 = arith.addf %953, %977 : vector<13x256xf32>
      %c13 = arith.constant 13 : index
      %c0_436 = arith.constant 0 : index
      %c0_437 = arith.constant 0 : index
      %980 = vector.load %arg1[%c13, %c0_436, %c0_437] : memref<28x14x256xf32, #tpu.memory_space<vmem>>, vector<1x13x256xf32>
      %981 = vector.shape_cast %980 : vector<1x13x256xf32> to vector<13x256xf32>
      %c13_438 = arith.constant 13 : index
      %c0_439 = arith.constant 0 : index
      %c0_440 = arith.constant 0 : index
      %982 = vector.load %arg2[%c13_438, %c0_439, %c0_440] : memref<28x14x256xf32, #tpu.memory_space<vmem>>, vector<1x13x256xf32>
      %983 = vector.shape_cast %982 : vector<1x13x256xf32> to vector<13x256xf32>
      %c13_441 = arith.constant 13 : index
      %c1_442 = arith.constant 1 : index
      %c0_443 = arith.constant 0 : index
      %984 = vector.load %arg1[%c13_441, %c1_442, %c0_443] : memref<28x14x256xf32, #tpu.memory_space<vmem>>, vector<1x13x256xf32>
      %985 = vector.shape_cast %984 : vector<1x13x256xf32> to vector<13x256xf32>
      %c13_444 = arith.constant 13 : index
      %c1_445 = arith.constant 1 : index
      %c0_446 = arith.constant 0 : index
      %986 = vector.load %arg2[%c13_444, %c1_445, %c0_446] : memref<28x14x256xf32, #tpu.memory_space<vmem>>, vector<1x13x256xf32>
      %987 = vector.shape_cast %986 : vector<1x13x256xf32> to vector<13x256xf32>
      %988 = vector.broadcast %35 : f32 to vector<13x256xf32>
      %989 = arith.mulf %988, %981 : vector<13x256xf32>
      %990 = vector.broadcast %39 : f32 to vector<13x256xf32>
      %991 = arith.mulf %990, %983 : vector<13x256xf32>
      %992 = arith.addf %989, %991 : vector<13x256xf32>
      %993 = vector.broadcast %43 : f32 to vector<13x256xf32>
      %994 = arith.mulf %993, %985 : vector<13x256xf32>
      %995 = arith.addf %992, %994 : vector<13x256xf32>
      %996 = vector.broadcast %35 : f32 to vector<13x256xf32>
      %997 = arith.mulf %996, %983 : vector<13x256xf32>
      %998 = vector.broadcast %39 : f32 to vector<13x256xf32>
      %999 = arith.mulf %998, %985 : vector<13x256xf32>
      %1000 = arith.addf %997, %999 : vector<13x256xf32>
      %1001 = vector.broadcast %43 : f32 to vector<13x256xf32>
      %1002 = arith.mulf %1001, %987 : vector<13x256xf32>
      %1003 = arith.addf %1000, %1002 : vector<13x256xf32>
      %1004 = arith.addf %978, %995 : vector<13x256xf32>
      %1005 = arith.addf %979, %1003 : vector<13x256xf32>
      %1006 = arith.maximumf %1004, %1005 : vector<13x256xf32>
      %1007 = arith.maximumf %929, %1006 : vector<13x256xf32>
      %1008 = vector.broadcast %47 : f32 to vector<13x256xf32>
      %1009 = arith.addf %1007, %1008 : vector<13x256xf32>
      %cst_447 = arith.constant 0.000000e+00 : f32
      %1010 = vector.broadcast %cst_447 : f32 to vector<13x256xf32>
      %1011 = arith.maximumf %1009, %1010 : vector<13x256xf32>
      %1012 = tpu.concatenate %1011, %0 in 0 : vector<13x256xf32>, vector<3x256xf32> -> vector<16x256xf32>
      %c80 = arith.constant 80 : index
      %c0_448 = arith.constant 0 : index
      %1013 = vector.load %arg7[%c80, %c0_448] : memref<208x256xf32, #tpu.memory_space<vmem>>, vector<16x256xf32>
      tpu.vector_store %arg7[%c80, %c0_448], %1012 {strides = array<i32>} : memref<208x256xf32, #tpu.memory_space<vmem>>, vector<16x256xf32>,
      %c12_449 = arith.constant 12 : index
      %c0_450 = arith.constant 0 : index
      %c0_451 = arith.constant 0 : index
      %1014 = vector.load %arg1[%c12_449, %c0_450, %c0_451] : memref<28x14x256xf32, #tpu.memory_space<vmem>>, vector<1x13x256xf32>
      %1015 = vector.shape_cast %1014 : vector<1x13x256xf32> to vector<13x256xf32>
      %c12_452 = arith.constant 12 : index
      %c0_453 = arith.constant 0 : index
      %c0_454 = arith.constant 0 : index
      %1016 = vector.load %arg2[%c12_452, %c0_453, %c0_454] : memref<28x14x256xf32, #tpu.memory_space<vmem>>, vector<1x13x256xf32>
      %1017 = vector.shape_cast %1016 : vector<1x13x256xf32> to vector<13x256xf32>
      %c12_455 = arith.constant 12 : index
      %c1_456 = arith.constant 1 : index
      %c0_457 = arith.constant 0 : index
      %1018 = vector.load %arg1[%c12_455, %c1_456, %c0_457] : memref<28x14x256xf32, #tpu.memory_space<vmem>>, vector<1x13x256xf32>
      %1019 = vector.shape_cast %1018 : vector<1x13x256xf32> to vector<13x256xf32>
      %c12_458 = arith.constant 12 : index
      %c1_459 = arith.constant 1 : index
      %c0_460 = arith.constant 0 : index
      %1020 = vector.load %arg2[%c12_458, %c1_459, %c0_460] : memref<28x14x256xf32, #tpu.memory_space<vmem>>, vector<1x13x256xf32>
      %1021 = vector.shape_cast %1020 : vector<1x13x256xf32> to vector<13x256xf32>
      %1022 = vector.broadcast %11 : f32 to vector<13x256xf32>
      %1023 = arith.mulf %1022, %1015 : vector<13x256xf32>
      %1024 = vector.broadcast %15 : f32 to vector<13x256xf32>
      %1025 = arith.mulf %1024, %1017 : vector<13x256xf32>
      %1026 = arith.addf %1023, %1025 : vector<13x256xf32>
      %1027 = vector.broadcast %19 : f32 to vector<13x256xf32>
      %1028 = arith.mulf %1027, %1019 : vector<13x256xf32>
      %1029 = arith.addf %1026, %1028 : vector<13x256xf32>
      %1030 = vector.broadcast %11 : f32 to vector<13x256xf32>
      %1031 = arith.mulf %1030, %1017 : vector<13x256xf32>
      %1032 = vector.broadcast %15 : f32 to vector<13x256xf32>
      %1033 = arith.mulf %1032, %1019 : vector<13x256xf32>
      %1034 = arith.addf %1031, %1033 : vector<13x256xf32>
      %1035 = vector.broadcast %19 : f32 to vector<13x256xf32>
      %1036 = arith.mulf %1035, %1021 : vector<13x256xf32>
      %1037 = arith.addf %1034, %1036 : vector<13x256xf32>
      %c13_461 = arith.constant 13 : index
      %c0_462 = arith.constant 0 : index
      %c0_463 = arith.constant 0 : index
      %1038 = vector.load %arg1[%c13_461, %c0_462, %c0_463] : memref<28x14x256xf32, #tpu.memory_space<vmem>>, vector<1x13x256xf32>
      %1039 = vector.shape_cast %1038 : vector<1x13x256xf32> to vector<13x256xf32>
      %c13_464 = arith.constant 13 : index
      %c0_465 = arith.constant 0 : index
      %c0_466 = arith.constant 0 : index
      %1040 = vector.load %arg2[%c13_464, %c0_465, %c0_466] : memref<28x14x256xf32, #tpu.memory_space<vmem>>, vector<1x13x256xf32>
      %1041 = vector.shape_cast %1040 : vector<1x13x256xf32> to vector<13x256xf32>
      %c13_467 = arith.constant 13 : index
      %c1_468 = arith.constant 1 : index
      %c0_469 = arith.constant 0 : index
      %1042 = vector.load %arg1[%c13_467, %c1_468, %c0_469] : memref<28x14x256xf32, #tpu.memory_space<vmem>>, vector<1x13x256xf32>
      %1043 = vector.shape_cast %1042 : vector<1x13x256xf32> to vector<13x256xf32>
      %c13_470 = arith.constant 13 : index
      %c1_471 = arith.constant 1 : index
      %c0_472 = arith.constant 0 : index
      %1044 = vector.load %arg2[%c13_470, %c1_471, %c0_472] : memref<28x14x256xf32, #tpu.memory_space<vmem>>, vector<1x13x256xf32>
      %1045 = vector.shape_cast %1044 : vector<1x13x256xf32> to vector<13x256xf32>
      %1046 = vector.broadcast %23 : f32 to vector<13x256xf32>
      %1047 = arith.mulf %1046, %1039 : vector<13x256xf32>
      %1048 = vector.broadcast %27 : f32 to vector<13x256xf32>
      %1049 = arith.mulf %1048, %1041 : vector<13x256xf32>
      %1050 = arith.addf %1047, %1049 : vector<13x256xf32>
      %1051 = vector.broadcast %31 : f32 to vector<13x256xf32>
      %1052 = arith.mulf %1051, %1043 : vector<13x256xf32>
      %1053 = arith.addf %1050, %1052 : vector<13x256xf32>
      %1054 = vector.broadcast %23 : f32 to vector<13x256xf32>
      %1055 = arith.mulf %1054, %1041 : vector<13x256xf32>
      %1056 = vector.broadcast %27 : f32 to vector<13x256xf32>
      %1057 = arith.mulf %1056, %1043 : vector<13x256xf32>
      %1058 = arith.addf %1055, %1057 : vector<13x256xf32>
      %1059 = vector.broadcast %31 : f32 to vector<13x256xf32>
      %1060 = arith.mulf %1059, %1045 : vector<13x256xf32>
      %1061 = arith.addf %1058, %1060 : vector<13x256xf32>
      %1062 = arith.addf %1029, %1053 : vector<13x256xf32>
      %1063 = arith.addf %1037, %1061 : vector<13x256xf32>
      %c14 = arith.constant 14 : index
      %c0_473 = arith.constant 0 : index
      %c0_474 = arith.constant 0 : index
      %1064 = vector.load %arg1[%c14, %c0_473, %c0_474] : memref<28x14x256xf32, #tpu.memory_space<vmem>>, vector<1x13x256xf32>
      %1065 = vector.shape_cast %1064 : vector<1x13x256xf32> to vector<13x256xf32>
      %c14_475 = arith.constant 14 : index
      %c0_476 = arith.constant 0 : index
      %c0_477 = arith.constant 0 : index
      %1066 = vector.load %arg2[%c14_475, %c0_476, %c0_477] : memref<28x14x256xf32, #tpu.memory_space<vmem>>, vector<1x13x256xf32>
      %1067 = vector.shape_cast %1066 : vector<1x13x256xf32> to vector<13x256xf32>
      %c14_478 = arith.constant 14 : index
      %c1_479 = arith.constant 1 : index
      %c0_480 = arith.constant 0 : index
      %1068 = vector.load %arg1[%c14_478, %c1_479, %c0_480] : memref<28x14x256xf32, #tpu.memory_space<vmem>>, vector<1x13x256xf32>
      %1069 = vector.shape_cast %1068 : vector<1x13x256xf32> to vector<13x256xf32>
      %c14_481 = arith.constant 14 : index
      %c1_482 = arith.constant 1 : index
      %c0_483 = arith.constant 0 : index
      %1070 = vector.load %arg2[%c14_481, %c1_482, %c0_483] : memref<28x14x256xf32, #tpu.memory_space<vmem>>, vector<1x13x256xf32>
      %1071 = vector.shape_cast %1070 : vector<1x13x256xf32> to vector<13x256xf32>
      %1072 = vector.broadcast %35 : f32 to vector<13x256xf32>
      %1073 = arith.mulf %1072, %1065 : vector<13x256xf32>
      %1074 = vector.broadcast %39 : f32 to vector<13x256xf32>
      %1075 = arith.mulf %1074, %1067 : vector<13x256xf32>
      %1076 = arith.addf %1073, %1075 : vector<13x256xf32>
      %1077 = vector.broadcast %43 : f32 to vector<13x256xf32>
      %1078 = arith.mulf %1077, %1069 : vector<13x256xf32>
      %1079 = arith.addf %1076, %1078 : vector<13x256xf32>
      %1080 = vector.broadcast %35 : f32 to vector<13x256xf32>
      %1081 = arith.mulf %1080, %1067 : vector<13x256xf32>
      %1082 = vector.broadcast %39 : f32 to vector<13x256xf32>
      %1083 = arith.mulf %1082, %1069 : vector<13x256xf32>
      %1084 = arith.addf %1081, %1083 : vector<13x256xf32>
      %1085 = vector.broadcast %43 : f32 to vector<13x256xf32>
      %1086 = arith.mulf %1085, %1071 : vector<13x256xf32>
      %1087 = arith.addf %1084, %1086 : vector<13x256xf32>
      %1088 = arith.addf %1062, %1079 : vector<13x256xf32>
      %1089 = arith.addf %1063, %1087 : vector<13x256xf32>
      %1090 = arith.maximumf %1088, %1089 : vector<13x256xf32>
      %c13_484 = arith.constant 13 : index
      %c0_485 = arith.constant 0 : index
      %c0_486 = arith.constant 0 : index
      %1091 = vector.load %arg1[%c13_484, %c0_485, %c0_486] : memref<28x14x256xf32, #tpu.memory_space<vmem>>, vector<1x13x256xf32>
      %1092 = vector.shape_cast %1091 : vector<1x13x256xf32> to vector<13x256xf32>
      %c13_487 = arith.constant 13 : index
      %c0_488 = arith.constant 0 : index
      %c0_489 = arith.constant 0 : index
      %1093 = vector.load %arg2[%c13_487, %c0_488, %c0_489] : memref<28x14x256xf32, #tpu.memory_space<vmem>>, vector<1x13x256xf32>
      %1094 = vector.shape_cast %1093 : vector<1x13x256xf32> to vector<13x256xf32>
      %c13_490 = arith.constant 13 : index
      %c1_491 = arith.constant 1 : index
      %c0_492 = arith.constant 0 : index
      %1095 = vector.load %arg1[%c13_490, %c1_491, %c0_492] : memref<28x14x256xf32, #tpu.memory_space<vmem>>, vector<1x13x256xf32>
      %1096 = vector.shape_cast %1095 : vector<1x13x256xf32> to vector<13x256xf32>
      %c13_493 = arith.constant 13 : index
      %c1_494 = arith.constant 1 : index
      %c0_495 = arith.constant 0 : index
      %1097 = vector.load %arg2[%c13_493, %c1_494, %c0_495] : memref<28x14x256xf32, #tpu.memory_space<vmem>>, vector<1x13x256xf32>
      %1098 = vector.shape_cast %1097 : vector<1x13x256xf32> to vector<13x256xf32>
      %1099 = vector.broadcast %11 : f32 to vector<13x256xf32>
      %1100 = arith.mulf %1099, %1092 : vector<13x256xf32>
      %1101 = vector.broadcast %15 : f32 to vector<13x256xf32>
      %1102 = arith.mulf %1101, %1094 : vector<13x256xf32>
      %1103 = arith.addf %1100, %1102 : vector<13x256xf32>
      %1104 = vector.broadcast %19 : f32 to vector<13x256xf32>
      %1105 = arith.mulf %1104, %1096 : vector<13x256xf32>
      %1106 = arith.addf %1103, %1105 : vector<13x256xf32>
      %1107 = vector.broadcast %11 : f32 to vector<13x256xf32>
      %1108 = arith.mulf %1107, %1094 : vector<13x256xf32>
      %1109 = vector.broadcast %15 : f32 to vector<13x256xf32>
      %1110 = arith.mulf %1109, %1096 : vector<13x256xf32>
      %1111 = arith.addf %1108, %1110 : vector<13x256xf32>
      %1112 = vector.broadcast %19 : f32 to vector<13x256xf32>
      %1113 = arith.mulf %1112, %1098 : vector<13x256xf32>
      %1114 = arith.addf %1111, %1113 : vector<13x256xf32>
      %c14_496 = arith.constant 14 : index
      %c0_497 = arith.constant 0 : index
      %c0_498 = arith.constant 0 : index
      %1115 = vector.load %arg1[%c14_496, %c0_497, %c0_498] : memref<28x14x256xf32, #tpu.memory_space<vmem>>, vector<1x13x256xf32>
      %1116 = vector.shape_cast %1115 : vector<1x13x256xf32> to vector<13x256xf32>
      %c14_499 = arith.constant 14 : index
      %c0_500 = arith.constant 0 : index
      %c0_501 = arith.constant 0 : index
      %1117 = vector.load %arg2[%c14_499, %c0_500, %c0_501] : memref<28x14x256xf32, #tpu.memory_space<vmem>>, vector<1x13x256xf32>
      %1118 = vector.shape_cast %1117 : vector<1x13x256xf32> to vector<13x256xf32>
      %c14_502 = arith.constant 14 : index
      %c1_503 = arith.constant 1 : index
      %c0_504 = arith.constant 0 : index
      %1119 = vector.load %arg1[%c14_502, %c1_503, %c0_504] : memref<28x14x256xf32, #tpu.memory_space<vmem>>, vector<1x13x256xf32>
      %1120 = vector.shape_cast %1119 : vector<1x13x256xf32> to vector<13x256xf32>
      %c14_505 = arith.constant 14 : index
      %c1_506 = arith.constant 1 : index
      %c0_507 = arith.constant 0 : index
      %1121 = vector.load %arg2[%c14_505, %c1_506, %c0_507] : memref<28x14x256xf32, #tpu.memory_space<vmem>>, vector<1x13x256xf32>
      %1122 = vector.shape_cast %1121 : vector<1x13x256xf32> to vector<13x256xf32>
      %1123 = vector.broadcast %23 : f32 to vector<13x256xf32>
      %1124 = arith.mulf %1123, %1116 : vector<13x256xf32>
      %1125 = vector.broadcast %27 : f32 to vector<13x256xf32>
      %1126 = arith.mulf %1125, %1118 : vector<13x256xf32>
      %1127 = arith.addf %1124, %1126 : vector<13x256xf32>
      %1128 = vector.broadcast %31 : f32 to vector<13x256xf32>
      %1129 = arith.mulf %1128, %1120 : vector<13x256xf32>
      %1130 = arith.addf %1127, %1129 : vector<13x256xf32>
      %1131 = vector.broadcast %23 : f32 to vector<13x256xf32>
      %1132 = arith.mulf %1131, %1118 : vector<13x256xf32>
      %1133 = vector.broadcast %27 : f32 to vector<13x256xf32>
      %1134 = arith.mulf %1133, %1120 : vector<13x256xf32>
      %1135 = arith.addf %1132, %1134 : vector<13x256xf32>
      %1136 = vector.broadcast %31 : f32 to vector<13x256xf32>
      %1137 = arith.mulf %1136, %1122 : vector<13x256xf32>
      %1138 = arith.addf %1135, %1137 : vector<13x256xf32>
      %1139 = arith.addf %1106, %1130 : vector<13x256xf32>
      %1140 = arith.addf %1114, %1138 : vector<13x256xf32>
      %c15 = arith.constant 15 : index
      %c0_508 = arith.constant 0 : index
      %c0_509 = arith.constant 0 : index
      %1141 = vector.load %arg1[%c15, %c0_508, %c0_509] : memref<28x14x256xf32, #tpu.memory_space<vmem>>, vector<1x13x256xf32>
      %1142 = vector.shape_cast %1141 : vector<1x13x256xf32> to vector<13x256xf32>
      %c15_510 = arith.constant 15 : index
      %c0_511 = arith.constant 0 : index
      %c0_512 = arith.constant 0 : index
      %1143 = vector.load %arg2[%c15_510, %c0_511, %c0_512] : memref<28x14x256xf32, #tpu.memory_space<vmem>>, vector<1x13x256xf32>
      %1144 = vector.shape_cast %1143 : vector<1x13x256xf32> to vector<13x256xf32>
      %c15_513 = arith.constant 15 : index
      %c1_514 = arith.constant 1 : index
      %c0_515 = arith.constant 0 : index
      %1145 = vector.load %arg1[%c15_513, %c1_514, %c0_515] : memref<28x14x256xf32, #tpu.memory_space<vmem>>, vector<1x13x256xf32>
      %1146 = vector.shape_cast %1145 : vector<1x13x256xf32> to vector<13x256xf32>
      %c15_516 = arith.constant 15 : index
      %c1_517 = arith.constant 1 : index
      %c0_518 = arith.constant 0 : index
      %1147 = vector.load %arg2[%c15_516, %c1_517, %c0_518] : memref<28x14x256xf32, #tpu.memory_space<vmem>>, vector<1x13x256xf32>
      %1148 = vector.shape_cast %1147 : vector<1x13x256xf32> to vector<13x256xf32>
      %1149 = vector.broadcast %35 : f32 to vector<13x256xf32>
      %1150 = arith.mulf %1149, %1142 : vector<13x256xf32>
      %1151 = vector.broadcast %39 : f32 to vector<13x256xf32>
      %1152 = arith.mulf %1151, %1144 : vector<13x256xf32>
      %1153 = arith.addf %1150, %1152 : vector<13x256xf32>
      %1154 = vector.broadcast %43 : f32 to vector<13x256xf32>
      %1155 = arith.mulf %1154, %1146 : vector<13x256xf32>
      %1156 = arith.addf %1153, %1155 : vector<13x256xf32>
      %1157 = vector.broadcast %35 : f32 to vector<13x256xf32>
      %1158 = arith.mulf %1157, %1144 : vector<13x256xf32>
      %1159 = vector.broadcast %39 : f32 to vector<13x256xf32>
      %1160 = arith.mulf %1159, %1146 : vector<13x256xf32>
      %1161 = arith.addf %1158, %1160 : vector<13x256xf32>
      %1162 = vector.broadcast %43 : f32 to vector<13x256xf32>
      %1163 = arith.mulf %1162, %1148 : vector<13x256xf32>
      %1164 = arith.addf %1161, %1163 : vector<13x256xf32>
      %1165 = arith.addf %1139, %1156 : vector<13x256xf32>
      %1166 = arith.addf %1140, %1164 : vector<13x256xf32>
      %1167 = arith.maximumf %1165, %1166 : vector<13x256xf32>
      %1168 = arith.maximumf %1090, %1167 : vector<13x256xf32>
      %1169 = vector.broadcast %47 : f32 to vector<13x256xf32>
      %1170 = arith.addf %1168, %1169 : vector<13x256xf32>
      %cst_519 = arith.constant 0.000000e+00 : f32
      %1171 = vector.broadcast %cst_519 : f32 to vector<13x256xf32>
      %1172 = arith.maximumf %1170, %1171 : vector<13x256xf32>
      %1173 = tpu.concatenate %1172, %0 in 0 : vector<13x256xf32>, vector<3x256xf32> -> vector<16x256xf32>
      %c96 = arith.constant 96 : index
      %c0_520 = arith.constant 0 : index
      %1174 = vector.load %arg7[%c96, %c0_520] : memref<208x256xf32, #tpu.memory_space<vmem>>, vector<16x256xf32>
      tpu.vector_store %arg7[%c96, %c0_520], %1173 {strides = array<i32>} : memref<208x256xf32, #tpu.memory_space<vmem>>, vector<16x256xf32>,
      %c14_521 = arith.constant 14 : index
      %c0_522 = arith.constant 0 : index
      %c0_523 = arith.constant 0 : index
      %1175 = vector.load %arg1[%c14_521, %c0_522, %c0_523] : memref<28x14x256xf32, #tpu.memory_space<vmem>>, vector<1x13x256xf32>
      %1176 = vector.shape_cast %1175 : vector<1x13x256xf32> to vector<13x256xf32>
      %c14_524 = arith.constant 14 : index
      %c0_525 = arith.constant 0 : index
      %c0_526 = arith.constant 0 : index
      %1177 = vector.load %arg2[%c14_524, %c0_525, %c0_526] : memref<28x14x256xf32, #tpu.memory_space<vmem>>, vector<1x13x256xf32>
      %1178 = vector.shape_cast %1177 : vector<1x13x256xf32> to vector<13x256xf32>
      %c14_527 = arith.constant 14 : index
      %c1_528 = arith.constant 1 : index
      %c0_529 = arith.constant 0 : index
      %1179 = vector.load %arg1[%c14_527, %c1_528, %c0_529] : memref<28x14x256xf32, #tpu.memory_space<vmem>>, vector<1x13x256xf32>
      %1180 = vector.shape_cast %1179 : vector<1x13x256xf32> to vector<13x256xf32>
      %c14_530 = arith.constant 14 : index
      %c1_531 = arith.constant 1 : index
      %c0_532 = arith.constant 0 : index
      %1181 = vector.load %arg2[%c14_530, %c1_531, %c0_532] : memref<28x14x256xf32, #tpu.memory_space<vmem>>, vector<1x13x256xf32>
      %1182 = vector.shape_cast %1181 : vector<1x13x256xf32> to vector<13x256xf32>
      %1183 = vector.broadcast %11 : f32 to vector<13x256xf32>
      %1184 = arith.mulf %1183, %1176 : vector<13x256xf32>
      %1185 = vector.broadcast %15 : f32 to vector<13x256xf32>
      %1186 = arith.mulf %1185, %1178 : vector<13x256xf32>
      %1187 = arith.addf %1184, %1186 : vector<13x256xf32>
      %1188 = vector.broadcast %19 : f32 to vector<13x256xf32>
      %1189 = arith.mulf %1188, %1180 : vector<13x256xf32>
      %1190 = arith.addf %1187, %1189 : vector<13x256xf32>
      %1191 = vector.broadcast %11 : f32 to vector<13x256xf32>
      %1192 = arith.mulf %1191, %1178 : vector<13x256xf32>
      %1193 = vector.broadcast %15 : f32 to vector<13x256xf32>
      %1194 = arith.mulf %1193, %1180 : vector<13x256xf32>
      %1195 = arith.addf %1192, %1194 : vector<13x256xf32>
      %1196 = vector.broadcast %19 : f32 to vector<13x256xf32>
      %1197 = arith.mulf %1196, %1182 : vector<13x256xf32>
      %1198 = arith.addf %1195, %1197 : vector<13x256xf32>
      %c15_533 = arith.constant 15 : index
      %c0_534 = arith.constant 0 : index
      %c0_535 = arith.constant 0 : index
      %1199 = vector.load %arg1[%c15_533, %c0_534, %c0_535] : memref<28x14x256xf32, #tpu.memory_space<vmem>>, vector<1x13x256xf32>
      %1200 = vector.shape_cast %1199 : vector<1x13x256xf32> to vector<13x256xf32>
      %c15_536 = arith.constant 15 : index
      %c0_537 = arith.constant 0 : index
      %c0_538 = arith.constant 0 : index
      %1201 = vector.load %arg2[%c15_536, %c0_537, %c0_538] : memref<28x14x256xf32, #tpu.memory_space<vmem>>, vector<1x13x256xf32>
      %1202 = vector.shape_cast %1201 : vector<1x13x256xf32> to vector<13x256xf32>
      %c15_539 = arith.constant 15 : index
      %c1_540 = arith.constant 1 : index
      %c0_541 = arith.constant 0 : index
      %1203 = vector.load %arg1[%c15_539, %c1_540, %c0_541] : memref<28x14x256xf32, #tpu.memory_space<vmem>>, vector<1x13x256xf32>
      %1204 = vector.shape_cast %1203 : vector<1x13x256xf32> to vector<13x256xf32>
      %c15_542 = arith.constant 15 : index
      %c1_543 = arith.constant 1 : index
      %c0_544 = arith.constant 0 : index
      %1205 = vector.load %arg2[%c15_542, %c1_543, %c0_544] : memref<28x14x256xf32, #tpu.memory_space<vmem>>, vector<1x13x256xf32>
      %1206 = vector.shape_cast %1205 : vector<1x13x256xf32> to vector<13x256xf32>
      %1207 = vector.broadcast %23 : f32 to vector<13x256xf32>
      %1208 = arith.mulf %1207, %1200 : vector<13x256xf32>
      %1209 = vector.broadcast %27 : f32 to vector<13x256xf32>
      %1210 = arith.mulf %1209, %1202 : vector<13x256xf32>
      %1211 = arith.addf %1208, %1210 : vector<13x256xf32>
      %1212 = vector.broadcast %31 : f32 to vector<13x256xf32>
      %1213 = arith.mulf %1212, %1204 : vector<13x256xf32>
      %1214 = arith.addf %1211, %1213 : vector<13x256xf32>
      %1215 = vector.broadcast %23 : f32 to vector<13x256xf32>
      %1216 = arith.mulf %1215, %1202 : vector<13x256xf32>
      %1217 = vector.broadcast %27 : f32 to vector<13x256xf32>
      %1218 = arith.mulf %1217, %1204 : vector<13x256xf32>
      %1219 = arith.addf %1216, %1218 : vector<13x256xf32>
      %1220 = vector.broadcast %31 : f32 to vector<13x256xf32>
      %1221 = arith.mulf %1220, %1206 : vector<13x256xf32>
      %1222 = arith.addf %1219, %1221 : vector<13x256xf32>
      %1223 = arith.addf %1190, %1214 : vector<13x256xf32>
      %1224 = arith.addf %1198, %1222 : vector<13x256xf32>
      %c16_545 = arith.constant 16 : index
      %c0_546 = arith.constant 0 : index
      %c0_547 = arith.constant 0 : index
      %1225 = vector.load %arg1[%c16_545, %c0_546, %c0_547] : memref<28x14x256xf32, #tpu.memory_space<vmem>>, vector<1x13x256xf32>
      %1226 = vector.shape_cast %1225 : vector<1x13x256xf32> to vector<13x256xf32>
      %c16_548 = arith.constant 16 : index
      %c0_549 = arith.constant 0 : index
      %c0_550 = arith.constant 0 : index
      %1227 = vector.load %arg2[%c16_548, %c0_549, %c0_550] : memref<28x14x256xf32, #tpu.memory_space<vmem>>, vector<1x13x256xf32>
      %1228 = vector.shape_cast %1227 : vector<1x13x256xf32> to vector<13x256xf32>
      %c16_551 = arith.constant 16 : index
      %c1_552 = arith.constant 1 : index
      %c0_553 = arith.constant 0 : index
      %1229 = vector.load %arg1[%c16_551, %c1_552, %c0_553] : memref<28x14x256xf32, #tpu.memory_space<vmem>>, vector<1x13x256xf32>
      %1230 = vector.shape_cast %1229 : vector<1x13x256xf32> to vector<13x256xf32>
      %c16_554 = arith.constant 16 : index
      %c1_555 = arith.constant 1 : index
      %c0_556 = arith.constant 0 : index
      %1231 = vector.load %arg2[%c16_554, %c1_555, %c0_556] : memref<28x14x256xf32, #tpu.memory_space<vmem>>, vector<1x13x256xf32>
      %1232 = vector.shape_cast %1231 : vector<1x13x256xf32> to vector<13x256xf32>
      %1233 = vector.broadcast %35 : f32 to vector<13x256xf32>
      %1234 = arith.mulf %1233, %1226 : vector<13x256xf32>
      %1235 = vector.broadcast %39 : f32 to vector<13x256xf32>
      %1236 = arith.mulf %1235, %1228 : vector<13x256xf32>
      %1237 = arith.addf %1234, %1236 : vector<13x256xf32>
      %1238 = vector.broadcast %43 : f32 to vector<13x256xf32>
      %1239 = arith.mulf %1238, %1230 : vector<13x256xf32>
      %1240 = arith.addf %1237, %1239 : vector<13x256xf32>
      %1241 = vector.broadcast %35 : f32 to vector<13x256xf32>
      %1242 = arith.mulf %1241, %1228 : vector<13x256xf32>
      %1243 = vector.broadcast %39 : f32 to vector<13x256xf32>
      %1244 = arith.mulf %1243, %1230 : vector<13x256xf32>
      %1245 = arith.addf %1242, %1244 : vector<13x256xf32>
      %1246 = vector.broadcast %43 : f32 to vector<13x256xf32>
      %1247 = arith.mulf %1246, %1232 : vector<13x256xf32>
      %1248 = arith.addf %1245, %1247 : vector<13x256xf32>
      %1249 = arith.addf %1223, %1240 : vector<13x256xf32>
      %1250 = arith.addf %1224, %1248 : vector<13x256xf32>
      %1251 = arith.maximumf %1249, %1250 : vector<13x256xf32>
      %c15_557 = arith.constant 15 : index
      %c0_558 = arith.constant 0 : index
      %c0_559 = arith.constant 0 : index
      %1252 = vector.load %arg1[%c15_557, %c0_558, %c0_559] : memref<28x14x256xf32, #tpu.memory_space<vmem>>, vector<1x13x256xf32>
      %1253 = vector.shape_cast %1252 : vector<1x13x256xf32> to vector<13x256xf32>
      %c15_560 = arith.constant 15 : index
      %c0_561 = arith.constant 0 : index
      %c0_562 = arith.constant 0 : index
      %1254 = vector.load %arg2[%c15_560, %c0_561, %c0_562] : memref<28x14x256xf32, #tpu.memory_space<vmem>>, vector<1x13x256xf32>
      %1255 = vector.shape_cast %1254 : vector<1x13x256xf32> to vector<13x256xf32>
      %c15_563 = arith.constant 15 : index
      %c1_564 = arith.constant 1 : index
      %c0_565 = arith.constant 0 : index
      %1256 = vector.load %arg1[%c15_563, %c1_564, %c0_565] : memref<28x14x256xf32, #tpu.memory_space<vmem>>, vector<1x13x256xf32>
      %1257 = vector.shape_cast %1256 : vector<1x13x256xf32> to vector<13x256xf32>
      %c15_566 = arith.constant 15 : index
      %c1_567 = arith.constant 1 : index
      %c0_568 = arith.constant 0 : index
      %1258 = vector.load %arg2[%c15_566, %c1_567, %c0_568] : memref<28x14x256xf32, #tpu.memory_space<vmem>>, vector<1x13x256xf32>
      %1259 = vector.shape_cast %1258 : vector<1x13x256xf32> to vector<13x256xf32>
      %1260 = vector.broadcast %11 : f32 to vector<13x256xf32>
      %1261 = arith.mulf %1260, %1253 : vector<13x256xf32>
      %1262 = vector.broadcast %15 : f32 to vector<13x256xf32>
      %1263 = arith.mulf %1262, %1255 : vector<13x256xf32>
      %1264 = arith.addf %1261, %1263 : vector<13x256xf32>
      %1265 = vector.broadcast %19 : f32 to vector<13x256xf32>
      %1266 = arith.mulf %1265, %1257 : vector<13x256xf32>
      %1267 = arith.addf %1264, %1266 : vector<13x256xf32>
      %1268 = vector.broadcast %11 : f32 to vector<13x256xf32>
      %1269 = arith.mulf %1268, %1255 : vector<13x256xf32>
      %1270 = vector.broadcast %15 : f32 to vector<13x256xf32>
      %1271 = arith.mulf %1270, %1257 : vector<13x256xf32>
      %1272 = arith.addf %1269, %1271 : vector<13x256xf32>
      %1273 = vector.broadcast %19 : f32 to vector<13x256xf32>
      %1274 = arith.mulf %1273, %1259 : vector<13x256xf32>
      %1275 = arith.addf %1272, %1274 : vector<13x256xf32>
      %c16_569 = arith.constant 16 : index
      %c0_570 = arith.constant 0 : index
      %c0_571 = arith.constant 0 : index
      %1276 = vector.load %arg1[%c16_569, %c0_570, %c0_571] : memref<28x14x256xf32, #tpu.memory_space<vmem>>, vector<1x13x256xf32>
      %1277 = vector.shape_cast %1276 : vector<1x13x256xf32> to vector<13x256xf32>
      %c16_572 = arith.constant 16 : index
      %c0_573 = arith.constant 0 : index
      %c0_574 = arith.constant 0 : index
      %1278 = vector.load %arg2[%c16_572, %c0_573, %c0_574] : memref<28x14x256xf32, #tpu.memory_space<vmem>>, vector<1x13x256xf32>
      %1279 = vector.shape_cast %1278 : vector<1x13x256xf32> to vector<13x256xf32>
      %c16_575 = arith.constant 16 : index
      %c1_576 = arith.constant 1 : index
      %c0_577 = arith.constant 0 : index
      %1280 = vector.load %arg1[%c16_575, %c1_576, %c0_577] : memref<28x14x256xf32, #tpu.memory_space<vmem>>, vector<1x13x256xf32>
      %1281 = vector.shape_cast %1280 : vector<1x13x256xf32> to vector<13x256xf32>
      %c16_578 = arith.constant 16 : index
      %c1_579 = arith.constant 1 : index
      %c0_580 = arith.constant 0 : index
      %1282 = vector.load %arg2[%c16_578, %c1_579, %c0_580] : memref<28x14x256xf32, #tpu.memory_space<vmem>>, vector<1x13x256xf32>
      %1283 = vector.shape_cast %1282 : vector<1x13x256xf32> to vector<13x256xf32>
      %1284 = vector.broadcast %23 : f32 to vector<13x256xf32>
      %1285 = arith.mulf %1284, %1277 : vector<13x256xf32>
      %1286 = vector.broadcast %27 : f32 to vector<13x256xf32>
      %1287 = arith.mulf %1286, %1279 : vector<13x256xf32>
      %1288 = arith.addf %1285, %1287 : vector<13x256xf32>
      %1289 = vector.broadcast %31 : f32 to vector<13x256xf32>
      %1290 = arith.mulf %1289, %1281 : vector<13x256xf32>
      %1291 = arith.addf %1288, %1290 : vector<13x256xf32>
      %1292 = vector.broadcast %23 : f32 to vector<13x256xf32>
      %1293 = arith.mulf %1292, %1279 : vector<13x256xf32>
      %1294 = vector.broadcast %27 : f32 to vector<13x256xf32>
      %1295 = arith.mulf %1294, %1281 : vector<13x256xf32>
      %1296 = arith.addf %1293, %1295 : vector<13x256xf32>
      %1297 = vector.broadcast %31 : f32 to vector<13x256xf32>
      %1298 = arith.mulf %1297, %1283 : vector<13x256xf32>
      %1299 = arith.addf %1296, %1298 : vector<13x256xf32>
      %1300 = arith.addf %1267, %1291 : vector<13x256xf32>
      %1301 = arith.addf %1275, %1299 : vector<13x256xf32>
      %c17 = arith.constant 17 : index
      %c0_581 = arith.constant 0 : index
      %c0_582 = arith.constant 0 : index
      %1302 = vector.load %arg1[%c17, %c0_581, %c0_582] : memref<28x14x256xf32, #tpu.memory_space<vmem>>, vector<1x13x256xf32>
      %1303 = vector.shape_cast %1302 : vector<1x13x256xf32> to vector<13x256xf32>
      %c17_583 = arith.constant 17 : index
      %c0_584 = arith.constant 0 : index
      %c0_585 = arith.constant 0 : index
      %1304 = vector.load %arg2[%c17_583, %c0_584, %c0_585] : memref<28x14x256xf32, #tpu.memory_space<vmem>>, vector<1x13x256xf32>
      %1305 = vector.shape_cast %1304 : vector<1x13x256xf32> to vector<13x256xf32>
      %c17_586 = arith.constant 17 : index
      %c1_587 = arith.constant 1 : index
      %c0_588 = arith.constant 0 : index
      %1306 = vector.load %arg1[%c17_586, %c1_587, %c0_588] : memref<28x14x256xf32, #tpu.memory_space<vmem>>, vector<1x13x256xf32>
      %1307 = vector.shape_cast %1306 : vector<1x13x256xf32> to vector<13x256xf32>
      %c17_589 = arith.constant 17 : index
      %c1_590 = arith.constant 1 : index
      %c0_591 = arith.constant 0 : index
      %1308 = vector.load %arg2[%c17_589, %c1_590, %c0_591] : memref<28x14x256xf32, #tpu.memory_space<vmem>>, vector<1x13x256xf32>
      %1309 = vector.shape_cast %1308 : vector<1x13x256xf32> to vector<13x256xf32>
      %1310 = vector.broadcast %35 : f32 to vector<13x256xf32>
      %1311 = arith.mulf %1310, %1303 : vector<13x256xf32>
      %1312 = vector.broadcast %39 : f32 to vector<13x256xf32>
      %1313 = arith.mulf %1312, %1305 : vector<13x256xf32>
      %1314 = arith.addf %1311, %1313 : vector<13x256xf32>
      %1315 = vector.broadcast %43 : f32 to vector<13x256xf32>
      %1316 = arith.mulf %1315, %1307 : vector<13x256xf32>
      %1317 = arith.addf %1314, %1316 : vector<13x256xf32>
      %1318 = vector.broadcast %35 : f32 to vector<13x256xf32>
      %1319 = arith.mulf %1318, %1305 : vector<13x256xf32>
      %1320 = vector.broadcast %39 : f32 to vector<13x256xf32>
      %1321 = arith.mulf %1320, %1307 : vector<13x256xf32>
      %1322 = arith.addf %1319, %1321 : vector<13x256xf32>
      %1323 = vector.broadcast %43 : f32 to vector<13x256xf32>
      %1324 = arith.mulf %1323, %1309 : vector<13x256xf32>
      %1325 = arith.addf %1322, %1324 : vector<13x256xf32>
      %1326 = arith.addf %1300, %1317 : vector<13x256xf32>
      %1327 = arith.addf %1301, %1325 : vector<13x256xf32>
      %1328 = arith.maximumf %1326, %1327 : vector<13x256xf32>
      %1329 = arith.maximumf %1251, %1328 : vector<13x256xf32>
      %1330 = vector.broadcast %47 : f32 to vector<13x256xf32>
      %1331 = arith.addf %1329, %1330 : vector<13x256xf32>
      %cst_592 = arith.constant 0.000000e+00 : f32
      %1332 = vector.broadcast %cst_592 : f32 to vector<13x256xf32>
      %1333 = arith.maximumf %1331, %1332 : vector<13x256xf32>
      %1334 = tpu.concatenate %1333, %0 in 0 : vector<13x256xf32>, vector<3x256xf32> -> vector<16x256xf32>
      %c112 = arith.constant 112 : index
      %c0_593 = arith.constant 0 : index
      %1335 = vector.load %arg7[%c112, %c0_593] : memref<208x256xf32, #tpu.memory_space<vmem>>, vector<16x256xf32>
      tpu.vector_store %arg7[%c112, %c0_593], %1334 {strides = array<i32>} : memref<208x256xf32, #tpu.memory_space<vmem>>, vector<16x256xf32>,
      %c16_594 = arith.constant 16 : index
      %c0_595 = arith.constant 0 : index
      %c0_596 = arith.constant 0 : index
      %1336 = vector.load %arg1[%c16_594, %c0_595, %c0_596] : memref<28x14x256xf32, #tpu.memory_space<vmem>>, vector<1x13x256xf32>
      %1337 = vector.shape_cast %1336 : vector<1x13x256xf32> to vector<13x256xf32>
      %c16_597 = arith.constant 16 : index
      %c0_598 = arith.constant 0 : index
      %c0_599 = arith.constant 0 : index
      %1338 = vector.load %arg2[%c16_597, %c0_598, %c0_599] : memref<28x14x256xf32, #tpu.memory_space<vmem>>, vector<1x13x256xf32>
      %1339 = vector.shape_cast %1338 : vector<1x13x256xf32> to vector<13x256xf32>
      %c16_600 = arith.constant 16 : index
      %c1_601 = arith.constant 1 : index
      %c0_602 = arith.constant 0 : index
      %1340 = vector.load %arg1[%c16_600, %c1_601, %c0_602] : memref<28x14x256xf32, #tpu.memory_space<vmem>>, vector<1x13x256xf32>
      %1341 = vector.shape_cast %1340 : vector<1x13x256xf32> to vector<13x256xf32>
      %c16_603 = arith.constant 16 : index
      %c1_604 = arith.constant 1 : index
      %c0_605 = arith.constant 0 : index
      %1342 = vector.load %arg2[%c16_603, %c1_604, %c0_605] : memref<28x14x256xf32, #tpu.memory_space<vmem>>, vector<1x13x256xf32>
      %1343 = vector.shape_cast %1342 : vector<1x13x256xf32> to vector<13x256xf32>
      %1344 = vector.broadcast %11 : f32 to vector<13x256xf32>
      %1345 = arith.mulf %1344, %1337 : vector<13x256xf32>
      %1346 = vector.broadcast %15 : f32 to vector<13x256xf32>
      %1347 = arith.mulf %1346, %1339 : vector<13x256xf32>
      %1348 = arith.addf %1345, %1347 : vector<13x256xf32>
      %1349 = vector.broadcast %19 : f32 to vector<13x256xf32>
      %1350 = arith.mulf %1349, %1341 : vector<13x256xf32>
      %1351 = arith.addf %1348, %1350 : vector<13x256xf32>
      %1352 = vector.broadcast %11 : f32 to vector<13x256xf32>
      %1353 = arith.mulf %1352, %1339 : vector<13x256xf32>
      %1354 = vector.broadcast %15 : f32 to vector<13x256xf32>
      %1355 = arith.mulf %1354, %1341 : vector<13x256xf32>
      %1356 = arith.addf %1353, %1355 : vector<13x256xf32>
      %1357 = vector.broadcast %19 : f32 to vector<13x256xf32>
      %1358 = arith.mulf %1357, %1343 : vector<13x256xf32>
      %1359 = arith.addf %1356, %1358 : vector<13x256xf32>
      %c17_606 = arith.constant 17 : index
      %c0_607 = arith.constant 0 : index
      %c0_608 = arith.constant 0 : index
      %1360 = vector.load %arg1[%c17_606, %c0_607, %c0_608] : memref<28x14x256xf32, #tpu.memory_space<vmem>>, vector<1x13x256xf32>
      %1361 = vector.shape_cast %1360 : vector<1x13x256xf32> to vector<13x256xf32>
      %c17_609 = arith.constant 17 : index
      %c0_610 = arith.constant 0 : index
      %c0_611 = arith.constant 0 : index
      %1362 = vector.load %arg2[%c17_609, %c0_610, %c0_611] : memref<28x14x256xf32, #tpu.memory_space<vmem>>, vector<1x13x256xf32>
      %1363 = vector.shape_cast %1362 : vector<1x13x256xf32> to vector<13x256xf32>
      %c17_612 = arith.constant 17 : index
      %c1_613 = arith.constant 1 : index
      %c0_614 = arith.constant 0 : index
      %1364 = vector.load %arg1[%c17_612, %c1_613, %c0_614] : memref<28x14x256xf32, #tpu.memory_space<vmem>>, vector<1x13x256xf32>
      %1365 = vector.shape_cast %1364 : vector<1x13x256xf32> to vector<13x256xf32>
      %c17_615 = arith.constant 17 : index
      %c1_616 = arith.constant 1 : index
      %c0_617 = arith.constant 0 : index
      %1366 = vector.load %arg2[%c17_615, %c1_616, %c0_617] : memref<28x14x256xf32, #tpu.memory_space<vmem>>, vector<1x13x256xf32>
      %1367 = vector.shape_cast %1366 : vector<1x13x256xf32> to vector<13x256xf32>
      %1368 = vector.broadcast %23 : f32 to vector<13x256xf32>
      %1369 = arith.mulf %1368, %1361 : vector<13x256xf32>
      %1370 = vector.broadcast %27 : f32 to vector<13x256xf32>
      %1371 = arith.mulf %1370, %1363 : vector<13x256xf32>
      %1372 = arith.addf %1369, %1371 : vector<13x256xf32>
      %1373 = vector.broadcast %31 : f32 to vector<13x256xf32>
      %1374 = arith.mulf %1373, %1365 : vector<13x256xf32>
      %1375 = arith.addf %1372, %1374 : vector<13x256xf32>
      %1376 = vector.broadcast %23 : f32 to vector<13x256xf32>
      %1377 = arith.mulf %1376, %1363 : vector<13x256xf32>
      %1378 = vector.broadcast %27 : f32 to vector<13x256xf32>
      %1379 = arith.mulf %1378, %1365 : vector<13x256xf32>
      %1380 = arith.addf %1377, %1379 : vector<13x256xf32>
      %1381 = vector.broadcast %31 : f32 to vector<13x256xf32>
      %1382 = arith.mulf %1381, %1367 : vector<13x256xf32>
      %1383 = arith.addf %1380, %1382 : vector<13x256xf32>
      %1384 = arith.addf %1351, %1375 : vector<13x256xf32>
      %1385 = arith.addf %1359, %1383 : vector<13x256xf32>
      %c18 = arith.constant 18 : index
      %c0_618 = arith.constant 0 : index
      %c0_619 = arith.constant 0 : index
      %1386 = vector.load %arg1[%c18, %c0_618, %c0_619] : memref<28x14x256xf32, #tpu.memory_space<vmem>>, vector<1x13x256xf32>
      %1387 = vector.shape_cast %1386 : vector<1x13x256xf32> to vector<13x256xf32>
      %c18_620 = arith.constant 18 : index
      %c0_621 = arith.constant 0 : index
      %c0_622 = arith.constant 0 : index
      %1388 = vector.load %arg2[%c18_620, %c0_621, %c0_622] : memref<28x14x256xf32, #tpu.memory_space<vmem>>, vector<1x13x256xf32>
      %1389 = vector.shape_cast %1388 : vector<1x13x256xf32> to vector<13x256xf32>
      %c18_623 = arith.constant 18 : index
      %c1_624 = arith.constant 1 : index
      %c0_625 = arith.constant 0 : index
      %1390 = vector.load %arg1[%c18_623, %c1_624, %c0_625] : memref<28x14x256xf32, #tpu.memory_space<vmem>>, vector<1x13x256xf32>
      %1391 = vector.shape_cast %1390 : vector<1x13x256xf32> to vector<13x256xf32>
      %c18_626 = arith.constant 18 : index
      %c1_627 = arith.constant 1 : index
      %c0_628 = arith.constant 0 : index
      %1392 = vector.load %arg2[%c18_626, %c1_627, %c0_628] : memref<28x14x256xf32, #tpu.memory_space<vmem>>, vector<1x13x256xf32>
      %1393 = vector.shape_cast %1392 : vector<1x13x256xf32> to vector<13x256xf32>
      %1394 = vector.broadcast %35 : f32 to vector<13x256xf32>
      %1395 = arith.mulf %1394, %1387 : vector<13x256xf32>
      %1396 = vector.broadcast %39 : f32 to vector<13x256xf32>
      %1397 = arith.mulf %1396, %1389 : vector<13x256xf32>
      %1398 = arith.addf %1395, %1397 : vector<13x256xf32>
      %1399 = vector.broadcast %43 : f32 to vector<13x256xf32>
      %1400 = arith.mulf %1399, %1391 : vector<13x256xf32>
      %1401 = arith.addf %1398, %1400 : vector<13x256xf32>
      %1402 = vector.broadcast %35 : f32 to vector<13x256xf32>
      %1403 = arith.mulf %1402, %1389 : vector<13x256xf32>
      %1404 = vector.broadcast %39 : f32 to vector<13x256xf32>
      %1405 = arith.mulf %1404, %1391 : vector<13x256xf32>
      %1406 = arith.addf %1403, %1405 : vector<13x256xf32>
      %1407 = vector.broadcast %43 : f32 to vector<13x256xf32>
      %1408 = arith.mulf %1407, %1393 : vector<13x256xf32>
      %1409 = arith.addf %1406, %1408 : vector<13x256xf32>
      %1410 = arith.addf %1384, %1401 : vector<13x256xf32>
      %1411 = arith.addf %1385, %1409 : vector<13x256xf32>
      %1412 = arith.maximumf %1410, %1411 : vector<13x256xf32>
      %c17_629 = arith.constant 17 : index
      %c0_630 = arith.constant 0 : index
      %c0_631 = arith.constant 0 : index
      %1413 = vector.load %arg1[%c17_629, %c0_630, %c0_631] : memref<28x14x256xf32, #tpu.memory_space<vmem>>, vector<1x13x256xf32>
      %1414 = vector.shape_cast %1413 : vector<1x13x256xf32> to vector<13x256xf32>
      %c17_632 = arith.constant 17 : index
      %c0_633 = arith.constant 0 : index
      %c0_634 = arith.constant 0 : index
      %1415 = vector.load %arg2[%c17_632, %c0_633, %c0_634] : memref<28x14x256xf32, #tpu.memory_space<vmem>>, vector<1x13x256xf32>
      %1416 = vector.shape_cast %1415 : vector<1x13x256xf32> to vector<13x256xf32>
      %c17_635 = arith.constant 17 : index
      %c1_636 = arith.constant 1 : index
      %c0_637 = arith.constant 0 : index
      %1417 = vector.load %arg1[%c17_635, %c1_636, %c0_637] : memref<28x14x256xf32, #tpu.memory_space<vmem>>, vector<1x13x256xf32>
      %1418 = vector.shape_cast %1417 : vector<1x13x256xf32> to vector<13x256xf32>
      %c17_638 = arith.constant 17 : index
      %c1_639 = arith.constant 1 : index
      %c0_640 = arith.constant 0 : index
      %1419 = vector.load %arg2[%c17_638, %c1_639, %c0_640] : memref<28x14x256xf32, #tpu.memory_space<vmem>>, vector<1x13x256xf32>
      %1420 = vector.shape_cast %1419 : vector<1x13x256xf32> to vector<13x256xf32>
      %1421 = vector.broadcast %11 : f32 to vector<13x256xf32>
      %1422 = arith.mulf %1421, %1414 : vector<13x256xf32>
      %1423 = vector.broadcast %15 : f32 to vector<13x256xf32>
      %1424 = arith.mulf %1423, %1416 : vector<13x256xf32>
      %1425 = arith.addf %1422, %1424 : vector<13x256xf32>
      %1426 = vector.broadcast %19 : f32 to vector<13x256xf32>
      %1427 = arith.mulf %1426, %1418 : vector<13x256xf32>
      %1428 = arith.addf %1425, %1427 : vector<13x256xf32>
      %1429 = vector.broadcast %11 : f32 to vector<13x256xf32>
      %1430 = arith.mulf %1429, %1416 : vector<13x256xf32>
      %1431 = vector.broadcast %15 : f32 to vector<13x256xf32>
      %1432 = arith.mulf %1431, %1418 : vector<13x256xf32>
      %1433 = arith.addf %1430, %1432 : vector<13x256xf32>
      %1434 = vector.broadcast %19 : f32 to vector<13x256xf32>
      %1435 = arith.mulf %1434, %1420 : vector<13x256xf32>
      %1436 = arith.addf %1433, %1435 : vector<13x256xf32>
      %c18_641 = arith.constant 18 : index
      %c0_642 = arith.constant 0 : index
      %c0_643 = arith.constant 0 : index
      %1437 = vector.load %arg1[%c18_641, %c0_642, %c0_643] : memref<28x14x256xf32, #tpu.memory_space<vmem>>, vector<1x13x256xf32>
      %1438 = vector.shape_cast %1437 : vector<1x13x256xf32> to vector<13x256xf32>
      %c18_644 = arith.constant 18 : index
      %c0_645 = arith.constant 0 : index
      %c0_646 = arith.constant 0 : index
      %1439 = vector.load %arg2[%c18_644, %c0_645, %c0_646] : memref<28x14x256xf32, #tpu.memory_space<vmem>>, vector<1x13x256xf32>
      %1440 = vector.shape_cast %1439 : vector<1x13x256xf32> to vector<13x256xf32>
      %c18_647 = arith.constant 18 : index
      %c1_648 = arith.constant 1 : index
      %c0_649 = arith.constant 0 : index
      %1441 = vector.load %arg1[%c18_647, %c1_648, %c0_649] : memref<28x14x256xf32, #tpu.memory_space<vmem>>, vector<1x13x256xf32>
      %1442 = vector.shape_cast %1441 : vector<1x13x256xf32> to vector<13x256xf32>
      %c18_650 = arith.constant 18 : index
      %c1_651 = arith.constant 1 : index
      %c0_652 = arith.constant 0 : index
      %1443 = vector.load %arg2[%c18_650, %c1_651, %c0_652] : memref<28x14x256xf32, #tpu.memory_space<vmem>>, vector<1x13x256xf32>
      %1444 = vector.shape_cast %1443 : vector<1x13x256xf32> to vector<13x256xf32>
      %1445 = vector.broadcast %23 : f32 to vector<13x256xf32>
      %1446 = arith.mulf %1445, %1438 : vector<13x256xf32>
      %1447 = vector.broadcast %27 : f32 to vector<13x256xf32>
      %1448 = arith.mulf %1447, %1440 : vector<13x256xf32>
      %1449 = arith.addf %1446, %1448 : vector<13x256xf32>
      %1450 = vector.broadcast %31 : f32 to vector<13x256xf32>
      %1451 = arith.mulf %1450, %1442 : vector<13x256xf32>
      %1452 = arith.addf %1449, %1451 : vector<13x256xf32>
      %1453 = vector.broadcast %23 : f32 to vector<13x256xf32>
      %1454 = arith.mulf %1453, %1440 : vector<13x256xf32>
      %1455 = vector.broadcast %27 : f32 to vector<13x256xf32>
      %1456 = arith.mulf %1455, %1442 : vector<13x256xf32>
      %1457 = arith.addf %1454, %1456 : vector<13x256xf32>
      %1458 = vector.broadcast %31 : f32 to vector<13x256xf32>
      %1459 = arith.mulf %1458, %1444 : vector<13x256xf32>
      %1460 = arith.addf %1457, %1459 : vector<13x256xf32>
      %1461 = arith.addf %1428, %1452 : vector<13x256xf32>
      %1462 = arith.addf %1436, %1460 : vector<13x256xf32>
      %c19 = arith.constant 19 : index
      %c0_653 = arith.constant 0 : index
      %c0_654 = arith.constant 0 : index
      %1463 = vector.load %arg1[%c19, %c0_653, %c0_654] : memref<28x14x256xf32, #tpu.memory_space<vmem>>, vector<1x13x256xf32>
      %1464 = vector.shape_cast %1463 : vector<1x13x256xf32> to vector<13x256xf32>
      %c19_655 = arith.constant 19 : index
      %c0_656 = arith.constant 0 : index
      %c0_657 = arith.constant 0 : index
      %1465 = vector.load %arg2[%c19_655, %c0_656, %c0_657] : memref<28x14x256xf32, #tpu.memory_space<vmem>>, vector<1x13x256xf32>
      %1466 = vector.shape_cast %1465 : vector<1x13x256xf32> to vector<13x256xf32>
      %c19_658 = arith.constant 19 : index
      %c1_659 = arith.constant 1 : index
      %c0_660 = arith.constant 0 : index
      %1467 = vector.load %arg1[%c19_658, %c1_659, %c0_660] : memref<28x14x256xf32, #tpu.memory_space<vmem>>, vector<1x13x256xf32>
      %1468 = vector.shape_cast %1467 : vector<1x13x256xf32> to vector<13x256xf32>
      %c19_661 = arith.constant 19 : index
      %c1_662 = arith.constant 1 : index
      %c0_663 = arith.constant 0 : index
      %1469 = vector.load %arg2[%c19_661, %c1_662, %c0_663] : memref<28x14x256xf32, #tpu.memory_space<vmem>>, vector<1x13x256xf32>
      %1470 = vector.shape_cast %1469 : vector<1x13x256xf32> to vector<13x256xf32>
      %1471 = vector.broadcast %35 : f32 to vector<13x256xf32>
      %1472 = arith.mulf %1471, %1464 : vector<13x256xf32>
      %1473 = vector.broadcast %39 : f32 to vector<13x256xf32>
      %1474 = arith.mulf %1473, %1466 : vector<13x256xf32>
      %1475 = arith.addf %1472, %1474 : vector<13x256xf32>
      %1476 = vector.broadcast %43 : f32 to vector<13x256xf32>
      %1477 = arith.mulf %1476, %1468 : vector<13x256xf32>
      %1478 = arith.addf %1475, %1477 : vector<13x256xf32>
      %1479 = vector.broadcast %35 : f32 to vector<13x256xf32>
      %1480 = arith.mulf %1479, %1466 : vector<13x256xf32>
      %1481 = vector.broadcast %39 : f32 to vector<13x256xf32>
      %1482 = arith.mulf %1481, %1468 : vector<13x256xf32>
      %1483 = arith.addf %1480, %1482 : vector<13x256xf32>
      %1484 = vector.broadcast %43 : f32 to vector<13x256xf32>
      %1485 = arith.mulf %1484, %1470 : vector<13x256xf32>
      %1486 = arith.addf %1483, %1485 : vector<13x256xf32>
      %1487 = arith.addf %1461, %1478 : vector<13x256xf32>
      %1488 = arith.addf %1462, %1486 : vector<13x256xf32>
      %1489 = arith.maximumf %1487, %1488 : vector<13x256xf32>
      %1490 = arith.maximumf %1412, %1489 : vector<13x256xf32>
      %1491 = vector.broadcast %47 : f32 to vector<13x256xf32>
      %1492 = arith.addf %1490, %1491 : vector<13x256xf32>
      %cst_664 = arith.constant 0.000000e+00 : f32
      %1493 = vector.broadcast %cst_664 : f32 to vector<13x256xf32>
      %1494 = arith.maximumf %1492, %1493 : vector<13x256xf32>
      %1495 = tpu.concatenate %1494, %0 in 0 : vector<13x256xf32>, vector<3x256xf32> -> vector<16x256xf32>
      %c128 = arith.constant 128 : index
      %c0_665 = arith.constant 0 : index
      %1496 = vector.load %arg7[%c128, %c0_665] : memref<208x256xf32, #tpu.memory_space<vmem>>, vector<16x256xf32>
      tpu.vector_store %arg7[%c128, %c0_665], %1495 {strides = array<i32>} : memref<208x256xf32, #tpu.memory_space<vmem>>, vector<16x256xf32>,
      %c18_666 = arith.constant 18 : index
      %c0_667 = arith.constant 0 : index
      %c0_668 = arith.constant 0 : index
      %1497 = vector.load %arg1[%c18_666, %c0_667, %c0_668] : memref<28x14x256xf32, #tpu.memory_space<vmem>>, vector<1x13x256xf32>
      %1498 = vector.shape_cast %1497 : vector<1x13x256xf32> to vector<13x256xf32>
      %c18_669 = arith.constant 18 : index
      %c0_670 = arith.constant 0 : index
      %c0_671 = arith.constant 0 : index
      %1499 = vector.load %arg2[%c18_669, %c0_670, %c0_671] : memref<28x14x256xf32, #tpu.memory_space<vmem>>, vector<1x13x256xf32>
      %1500 = vector.shape_cast %1499 : vector<1x13x256xf32> to vector<13x256xf32>
      %c18_672 = arith.constant 18 : index
      %c1_673 = arith.constant 1 : index
      %c0_674 = arith.constant 0 : index
      %1501 = vector.load %arg1[%c18_672, %c1_673, %c0_674] : memref<28x14x256xf32, #tpu.memory_space<vmem>>, vector<1x13x256xf32>
      %1502 = vector.shape_cast %1501 : vector<1x13x256xf32> to vector<13x256xf32>
      %c18_675 = arith.constant 18 : index
      %c1_676 = arith.constant 1 : index
      %c0_677 = arith.constant 0 : index
      %1503 = vector.load %arg2[%c18_675, %c1_676, %c0_677] : memref<28x14x256xf32, #tpu.memory_space<vmem>>, vector<1x13x256xf32>
      %1504 = vector.shape_cast %1503 : vector<1x13x256xf32> to vector<13x256xf32>
      %1505 = vector.broadcast %11 : f32 to vector<13x256xf32>
      %1506 = arith.mulf %1505, %1498 : vector<13x256xf32>
      %1507 = vector.broadcast %15 : f32 to vector<13x256xf32>
      %1508 = arith.mulf %1507, %1500 : vector<13x256xf32>
      %1509 = arith.addf %1506, %1508 : vector<13x256xf32>
      %1510 = vector.broadcast %19 : f32 to vector<13x256xf32>
      %1511 = arith.mulf %1510, %1502 : vector<13x256xf32>
      %1512 = arith.addf %1509, %1511 : vector<13x256xf32>
      %1513 = vector.broadcast %11 : f32 to vector<13x256xf32>
      %1514 = arith.mulf %1513, %1500 : vector<13x256xf32>
      %1515 = vector.broadcast %15 : f32 to vector<13x256xf32>
      %1516 = arith.mulf %1515, %1502 : vector<13x256xf32>
      %1517 = arith.addf %1514, %1516 : vector<13x256xf32>
      %1518 = vector.broadcast %19 : f32 to vector<13x256xf32>
      %1519 = arith.mulf %1518, %1504 : vector<13x256xf32>
      %1520 = arith.addf %1517, %1519 : vector<13x256xf32>
      %c19_678 = arith.constant 19 : index
      %c0_679 = arith.constant 0 : index
      %c0_680 = arith.constant 0 : index
      %1521 = vector.load %arg1[%c19_678, %c0_679, %c0_680] : memref<28x14x256xf32, #tpu.memory_space<vmem>>, vector<1x13x256xf32>
      %1522 = vector.shape_cast %1521 : vector<1x13x256xf32> to vector<13x256xf32>
      %c19_681 = arith.constant 19 : index
      %c0_682 = arith.constant 0 : index
      %c0_683 = arith.constant 0 : index
      %1523 = vector.load %arg2[%c19_681, %c0_682, %c0_683] : memref<28x14x256xf32, #tpu.memory_space<vmem>>, vector<1x13x256xf32>
      %1524 = vector.shape_cast %1523 : vector<1x13x256xf32> to vector<13x256xf32>
      %c19_684 = arith.constant 19 : index
      %c1_685 = arith.constant 1 : index
      %c0_686 = arith.constant 0 : index
      %1525 = vector.load %arg1[%c19_684, %c1_685, %c0_686] : memref<28x14x256xf32, #tpu.memory_space<vmem>>, vector<1x13x256xf32>
      %1526 = vector.shape_cast %1525 : vector<1x13x256xf32> to vector<13x256xf32>
      %c19_687 = arith.constant 19 : index
      %c1_688 = arith.constant 1 : index
      %c0_689 = arith.constant 0 : index
      %1527 = vector.load %arg2[%c19_687, %c1_688, %c0_689] : memref<28x14x256xf32, #tpu.memory_space<vmem>>, vector<1x13x256xf32>
      %1528 = vector.shape_cast %1527 : vector<1x13x256xf32> to vector<13x256xf32>
      %1529 = vector.broadcast %23 : f32 to vector<13x256xf32>
      %1530 = arith.mulf %1529, %1522 : vector<13x256xf32>
      %1531 = vector.broadcast %27 : f32 to vector<13x256xf32>
      %1532 = arith.mulf %1531, %1524 : vector<13x256xf32>
      %1533 = arith.addf %1530, %1532 : vector<13x256xf32>
      %1534 = vector.broadcast %31 : f32 to vector<13x256xf32>
      %1535 = arith.mulf %1534, %1526 : vector<13x256xf32>
      %1536 = arith.addf %1533, %1535 : vector<13x256xf32>
      %1537 = vector.broadcast %23 : f32 to vector<13x256xf32>
      %1538 = arith.mulf %1537, %1524 : vector<13x256xf32>
      %1539 = vector.broadcast %27 : f32 to vector<13x256xf32>
      %1540 = arith.mulf %1539, %1526 : vector<13x256xf32>
      %1541 = arith.addf %1538, %1540 : vector<13x256xf32>
      %1542 = vector.broadcast %31 : f32 to vector<13x256xf32>
      %1543 = arith.mulf %1542, %1528 : vector<13x256xf32>
      %1544 = arith.addf %1541, %1543 : vector<13x256xf32>
      %1545 = arith.addf %1512, %1536 : vector<13x256xf32>
      %1546 = arith.addf %1520, %1544 : vector<13x256xf32>
      %c20 = arith.constant 20 : index
      %c0_690 = arith.constant 0 : index
      %c0_691 = arith.constant 0 : index
      %1547 = vector.load %arg1[%c20, %c0_690, %c0_691] : memref<28x14x256xf32, #tpu.memory_space<vmem>>, vector<1x13x256xf32>
      %1548 = vector.shape_cast %1547 : vector<1x13x256xf32> to vector<13x256xf32>
      %c20_692 = arith.constant 20 : index
      %c0_693 = arith.constant 0 : index
      %c0_694 = arith.constant 0 : index
      %1549 = vector.load %arg2[%c20_692, %c0_693, %c0_694] : memref<28x14x256xf32, #tpu.memory_space<vmem>>, vector<1x13x256xf32>
      %1550 = vector.shape_cast %1549 : vector<1x13x256xf32> to vector<13x256xf32>
      %c20_695 = arith.constant 20 : index
      %c1_696 = arith.constant 1 : index
      %c0_697 = arith.constant 0 : index
      %1551 = vector.load %arg1[%c20_695, %c1_696, %c0_697] : memref<28x14x256xf32, #tpu.memory_space<vmem>>, vector<1x13x256xf32>
      %1552 = vector.shape_cast %1551 : vector<1x13x256xf32> to vector<13x256xf32>
      %c20_698 = arith.constant 20 : index
      %c1_699 = arith.constant 1 : index
      %c0_700 = arith.constant 0 : index
      %1553 = vector.load %arg2[%c20_698, %c1_699, %c0_700] : memref<28x14x256xf32, #tpu.memory_space<vmem>>, vector<1x13x256xf32>
      %1554 = vector.shape_cast %1553 : vector<1x13x256xf32> to vector<13x256xf32>
      %1555 = vector.broadcast %35 : f32 to vector<13x256xf32>
      %1556 = arith.mulf %1555, %1548 : vector<13x256xf32>
      %1557 = vector.broadcast %39 : f32 to vector<13x256xf32>
      %1558 = arith.mulf %1557, %1550 : vector<13x256xf32>
      %1559 = arith.addf %1556, %1558 : vector<13x256xf32>
      %1560 = vector.broadcast %43 : f32 to vector<13x256xf32>
      %1561 = arith.mulf %1560, %1552 : vector<13x256xf32>
      %1562 = arith.addf %1559, %1561 : vector<13x256xf32>
      %1563 = vector.broadcast %35 : f32 to vector<13x256xf32>
      %1564 = arith.mulf %1563, %1550 : vector<13x256xf32>
      %1565 = vector.broadcast %39 : f32 to vector<13x256xf32>
      %1566 = arith.mulf %1565, %1552 : vector<13x256xf32>
      %1567 = arith.addf %1564, %1566 : vector<13x256xf32>
      %1568 = vector.broadcast %43 : f32 to vector<13x256xf32>
      %1569 = arith.mulf %1568, %1554 : vector<13x256xf32>
      %1570 = arith.addf %1567, %1569 : vector<13x256xf32>
      %1571 = arith.addf %1545, %1562 : vector<13x256xf32>
      %1572 = arith.addf %1546, %1570 : vector<13x256xf32>
      %1573 = arith.maximumf %1571, %1572 : vector<13x256xf32>
      %c19_701 = arith.constant 19 : index
      %c0_702 = arith.constant 0 : index
      %c0_703 = arith.constant 0 : index
      %1574 = vector.load %arg1[%c19_701, %c0_702, %c0_703] : memref<28x14x256xf32, #tpu.memory_space<vmem>>, vector<1x13x256xf32>
      %1575 = vector.shape_cast %1574 : vector<1x13x256xf32> to vector<13x256xf32>
      %c19_704 = arith.constant 19 : index
      %c0_705 = arith.constant 0 : index
      %c0_706 = arith.constant 0 : index
      %1576 = vector.load %arg2[%c19_704, %c0_705, %c0_706] : memref<28x14x256xf32, #tpu.memory_space<vmem>>, vector<1x13x256xf32>
      %1577 = vector.shape_cast %1576 : vector<1x13x256xf32> to vector<13x256xf32>
      %c19_707 = arith.constant 19 : index
      %c1_708 = arith.constant 1 : index
      %c0_709 = arith.constant 0 : index
      %1578 = vector.load %arg1[%c19_707, %c1_708, %c0_709] : memref<28x14x256xf32, #tpu.memory_space<vmem>>, vector<1x13x256xf32>
      %1579 = vector.shape_cast %1578 : vector<1x13x256xf32> to vector<13x256xf32>
      %c19_710 = arith.constant 19 : index
      %c1_711 = arith.constant 1 : index
      %c0_712 = arith.constant 0 : index
      %1580 = vector.load %arg2[%c19_710, %c1_711, %c0_712] : memref<28x14x256xf32, #tpu.memory_space<vmem>>, vector<1x13x256xf32>
      %1581 = vector.shape_cast %1580 : vector<1x13x256xf32> to vector<13x256xf32>
      %1582 = vector.broadcast %11 : f32 to vector<13x256xf32>
      %1583 = arith.mulf %1582, %1575 : vector<13x256xf32>
      %1584 = vector.broadcast %15 : f32 to vector<13x256xf32>
      %1585 = arith.mulf %1584, %1577 : vector<13x256xf32>
      %1586 = arith.addf %1583, %1585 : vector<13x256xf32>
      %1587 = vector.broadcast %19 : f32 to vector<13x256xf32>
      %1588 = arith.mulf %1587, %1579 : vector<13x256xf32>
      %1589 = arith.addf %1586, %1588 : vector<13x256xf32>
      %1590 = vector.broadcast %11 : f32 to vector<13x256xf32>
      %1591 = arith.mulf %1590, %1577 : vector<13x256xf32>
      %1592 = vector.broadcast %15 : f32 to vector<13x256xf32>
      %1593 = arith.mulf %1592, %1579 : vector<13x256xf32>
      %1594 = arith.addf %1591, %1593 : vector<13x256xf32>
      %1595 = vector.broadcast %19 : f32 to vector<13x256xf32>
      %1596 = arith.mulf %1595, %1581 : vector<13x256xf32>
      %1597 = arith.addf %1594, %1596 : vector<13x256xf32>
      %c20_713 = arith.constant 20 : index
      %c0_714 = arith.constant 0 : index
      %c0_715 = arith.constant 0 : index
      %1598 = vector.load %arg1[%c20_713, %c0_714, %c0_715] : memref<28x14x256xf32, #tpu.memory_space<vmem>>, vector<1x13x256xf32>
      %1599 = vector.shape_cast %1598 : vector<1x13x256xf32> to vector<13x256xf32>
      %c20_716 = arith.constant 20 : index
      %c0_717 = arith.constant 0 : index
      %c0_718 = arith.constant 0 : index
      %1600 = vector.load %arg2[%c20_716, %c0_717, %c0_718] : memref<28x14x256xf32, #tpu.memory_space<vmem>>, vector<1x13x256xf32>
      %1601 = vector.shape_cast %1600 : vector<1x13x256xf32> to vector<13x256xf32>
      %c20_719 = arith.constant 20 : index
      %c1_720 = arith.constant 1 : index
      %c0_721 = arith.constant 0 : index
      %1602 = vector.load %arg1[%c20_719, %c1_720, %c0_721] : memref<28x14x256xf32, #tpu.memory_space<vmem>>, vector<1x13x256xf32>
      %1603 = vector.shape_cast %1602 : vector<1x13x256xf32> to vector<13x256xf32>
      %c20_722 = arith.constant 20 : index
      %c1_723 = arith.constant 1 : index
      %c0_724 = arith.constant 0 : index
      %1604 = vector.load %arg2[%c20_722, %c1_723, %c0_724] : memref<28x14x256xf32, #tpu.memory_space<vmem>>, vector<1x13x256xf32>
      %1605 = vector.shape_cast %1604 : vector<1x13x256xf32> to vector<13x256xf32>
      %1606 = vector.broadcast %23 : f32 to vector<13x256xf32>
      %1607 = arith.mulf %1606, %1599 : vector<13x256xf32>
      %1608 = vector.broadcast %27 : f32 to vector<13x256xf32>
      %1609 = arith.mulf %1608, %1601 : vector<13x256xf32>
      %1610 = arith.addf %1607, %1609 : vector<13x256xf32>
      %1611 = vector.broadcast %31 : f32 to vector<13x256xf32>
      %1612 = arith.mulf %1611, %1603 : vector<13x256xf32>
      %1613 = arith.addf %1610, %1612 : vector<13x256xf32>
      %1614 = vector.broadcast %23 : f32 to vector<13x256xf32>
      %1615 = arith.mulf %1614, %1601 : vector<13x256xf32>
      %1616 = vector.broadcast %27 : f32 to vector<13x256xf32>
      %1617 = arith.mulf %1616, %1603 : vector<13x256xf32>
      %1618 = arith.addf %1615, %1617 : vector<13x256xf32>
      %1619 = vector.broadcast %31 : f32 to vector<13x256xf32>
      %1620 = arith.mulf %1619, %1605 : vector<13x256xf32>
      %1621 = arith.addf %1618, %1620 : vector<13x256xf32>
      %1622 = arith.addf %1589, %1613 : vector<13x256xf32>
      %1623 = arith.addf %1597, %1621 : vector<13x256xf32>
      %c21 = arith.constant 21 : index
      %c0_725 = arith.constant 0 : index
      %c0_726 = arith.constant 0 : index
      %1624 = vector.load %arg1[%c21, %c0_725, %c0_726] : memref<28x14x256xf32, #tpu.memory_space<vmem>>, vector<1x13x256xf32>
      %1625 = vector.shape_cast %1624 : vector<1x13x256xf32> to vector<13x256xf32>
      %c21_727 = arith.constant 21 : index
      %c0_728 = arith.constant 0 : index
      %c0_729 = arith.constant 0 : index
      %1626 = vector.load %arg2[%c21_727, %c0_728, %c0_729] : memref<28x14x256xf32, #tpu.memory_space<vmem>>, vector<1x13x256xf32>
      %1627 = vector.shape_cast %1626 : vector<1x13x256xf32> to vector<13x256xf32>
      %c21_730 = arith.constant 21 : index
      %c1_731 = arith.constant 1 : index
      %c0_732 = arith.constant 0 : index
      %1628 = vector.load %arg1[%c21_730, %c1_731, %c0_732] : memref<28x14x256xf32, #tpu.memory_space<vmem>>, vector<1x13x256xf32>
      %1629 = vector.shape_cast %1628 : vector<1x13x256xf32> to vector<13x256xf32>
      %c21_733 = arith.constant 21 : index
      %c1_734 = arith.constant 1 : index
      %c0_735 = arith.constant 0 : index
      %1630 = vector.load %arg2[%c21_733, %c1_734, %c0_735] : memref<28x14x256xf32, #tpu.memory_space<vmem>>, vector<1x13x256xf32>
      %1631 = vector.shape_cast %1630 : vector<1x13x256xf32> to vector<13x256xf32>
      %1632 = vector.broadcast %35 : f32 to vector<13x256xf32>
      %1633 = arith.mulf %1632, %1625 : vector<13x256xf32>
      %1634 = vector.broadcast %39 : f32 to vector<13x256xf32>
      %1635 = arith.mulf %1634, %1627 : vector<13x256xf32>
      %1636 = arith.addf %1633, %1635 : vector<13x256xf32>
      %1637 = vector.broadcast %43 : f32 to vector<13x256xf32>
      %1638 = arith.mulf %1637, %1629 : vector<13x256xf32>
      %1639 = arith.addf %1636, %1638 : vector<13x256xf32>
      %1640 = vector.broadcast %35 : f32 to vector<13x256xf32>
      %1641 = arith.mulf %1640, %1627 : vector<13x256xf32>
      %1642 = vector.broadcast %39 : f32 to vector<13x256xf32>
      %1643 = arith.mulf %1642, %1629 : vector<13x256xf32>
      %1644 = arith.addf %1641, %1643 : vector<13x256xf32>
      %1645 = vector.broadcast %43 : f32 to vector<13x256xf32>
      %1646 = arith.mulf %1645, %1631 : vector<13x256xf32>
      %1647 = arith.addf %1644, %1646 : vector<13x256xf32>
      %1648 = arith.addf %1622, %1639 : vector<13x256xf32>
      %1649 = arith.addf %1623, %1647 : vector<13x256xf32>
      %1650 = arith.maximumf %1648, %1649 : vector<13x256xf32>
      %1651 = arith.maximumf %1573, %1650 : vector<13x256xf32>
      %1652 = vector.broadcast %47 : f32 to vector<13x256xf32>
      %1653 = arith.addf %1651, %1652 : vector<13x256xf32>
      %cst_736 = arith.constant 0.000000e+00 : f32
      %1654 = vector.broadcast %cst_736 : f32 to vector<13x256xf32>
      %1655 = arith.maximumf %1653, %1654 : vector<13x256xf32>
      %1656 = tpu.concatenate %1655, %0 in 0 : vector<13x256xf32>, vector<3x256xf32> -> vector<16x256xf32>
      %c144 = arith.constant 144 : index
      %c0_737 = arith.constant 0 : index
      %1657 = vector.load %arg7[%c144, %c0_737] : memref<208x256xf32, #tpu.memory_space<vmem>>, vector<16x256xf32>
      tpu.vector_store %arg7[%c144, %c0_737], %1656 {strides = array<i32>} : memref<208x256xf32, #tpu.memory_space<vmem>>, vector<16x256xf32>,
      %c20_738 = arith.constant 20 : index
      %c0_739 = arith.constant 0 : index
      %c0_740 = arith.constant 0 : index
      %1658 = vector.load %arg1[%c20_738, %c0_739, %c0_740] : memref<28x14x256xf32, #tpu.memory_space<vmem>>, vector<1x13x256xf32>
      %1659 = vector.shape_cast %1658 : vector<1x13x256xf32> to vector<13x256xf32>
      %c20_741 = arith.constant 20 : index
      %c0_742 = arith.constant 0 : index
      %c0_743 = arith.constant 0 : index
      %1660 = vector.load %arg2[%c20_741, %c0_742, %c0_743] : memref<28x14x256xf32, #tpu.memory_space<vmem>>, vector<1x13x256xf32>
      %1661 = vector.shape_cast %1660 : vector<1x13x256xf32> to vector<13x256xf32>
      %c20_744 = arith.constant 20 : index
      %c1_745 = arith.constant 1 : index
      %c0_746 = arith.constant 0 : index
      %1662 = vector.load %arg1[%c20_744, %c1_745, %c0_746] : memref<28x14x256xf32, #tpu.memory_space<vmem>>, vector<1x13x256xf32>
      %1663 = vector.shape_cast %1662 : vector<1x13x256xf32> to vector<13x256xf32>
      %c20_747 = arith.constant 20 : index
      %c1_748 = arith.constant 1 : index
      %c0_749 = arith.constant 0 : index
      %1664 = vector.load %arg2[%c20_747, %c1_748, %c0_749] : memref<28x14x256xf32, #tpu.memory_space<vmem>>, vector<1x13x256xf32>
      %1665 = vector.shape_cast %1664 : vector<1x13x256xf32> to vector<13x256xf32>
      %1666 = vector.broadcast %11 : f32 to vector<13x256xf32>
      %1667 = arith.mulf %1666, %1659 : vector<13x256xf32>
      %1668 = vector.broadcast %15 : f32 to vector<13x256xf32>
      %1669 = arith.mulf %1668, %1661 : vector<13x256xf32>
      %1670 = arith.addf %1667, %1669 : vector<13x256xf32>
      %1671 = vector.broadcast %19 : f32 to vector<13x256xf32>
      %1672 = arith.mulf %1671, %1663 : vector<13x256xf32>
      %1673 = arith.addf %1670, %1672 : vector<13x256xf32>
      %1674 = vector.broadcast %11 : f32 to vector<13x256xf32>
      %1675 = arith.mulf %1674, %1661 : vector<13x256xf32>
      %1676 = vector.broadcast %15 : f32 to vector<13x256xf32>
      %1677 = arith.mulf %1676, %1663 : vector<13x256xf32>
      %1678 = arith.addf %1675, %1677 : vector<13x256xf32>
      %1679 = vector.broadcast %19 : f32 to vector<13x256xf32>
      %1680 = arith.mulf %1679, %1665 : vector<13x256xf32>
      %1681 = arith.addf %1678, %1680 : vector<13x256xf32>
      %c21_750 = arith.constant 21 : index
      %c0_751 = arith.constant 0 : index
      %c0_752 = arith.constant 0 : index
      %1682 = vector.load %arg1[%c21_750, %c0_751, %c0_752] : memref<28x14x256xf32, #tpu.memory_space<vmem>>, vector<1x13x256xf32>
      %1683 = vector.shape_cast %1682 : vector<1x13x256xf32> to vector<13x256xf32>
      %c21_753 = arith.constant 21 : index
      %c0_754 = arith.constant 0 : index
      %c0_755 = arith.constant 0 : index
      %1684 = vector.load %arg2[%c21_753, %c0_754, %c0_755] : memref<28x14x256xf32, #tpu.memory_space<vmem>>, vector<1x13x256xf32>
      %1685 = vector.shape_cast %1684 : vector<1x13x256xf32> to vector<13x256xf32>
      %c21_756 = arith.constant 21 : index
      %c1_757 = arith.constant 1 : index
      %c0_758 = arith.constant 0 : index
      %1686 = vector.load %arg1[%c21_756, %c1_757, %c0_758] : memref<28x14x256xf32, #tpu.memory_space<vmem>>, vector<1x13x256xf32>
      %1687 = vector.shape_cast %1686 : vector<1x13x256xf32> to vector<13x256xf32>
      %c21_759 = arith.constant 21 : index
      %c1_760 = arith.constant 1 : index
      %c0_761 = arith.constant 0 : index
      %1688 = vector.load %arg2[%c21_759, %c1_760, %c0_761] : memref<28x14x256xf32, #tpu.memory_space<vmem>>, vector<1x13x256xf32>
      %1689 = vector.shape_cast %1688 : vector<1x13x256xf32> to vector<13x256xf32>
      %1690 = vector.broadcast %23 : f32 to vector<13x256xf32>
      %1691 = arith.mulf %1690, %1683 : vector<13x256xf32>
      %1692 = vector.broadcast %27 : f32 to vector<13x256xf32>
      %1693 = arith.mulf %1692, %1685 : vector<13x256xf32>
      %1694 = arith.addf %1691, %1693 : vector<13x256xf32>
      %1695 = vector.broadcast %31 : f32 to vector<13x256xf32>
      %1696 = arith.mulf %1695, %1687 : vector<13x256xf32>
      %1697 = arith.addf %1694, %1696 : vector<13x256xf32>
      %1698 = vector.broadcast %23 : f32 to vector<13x256xf32>
      %1699 = arith.mulf %1698, %1685 : vector<13x256xf32>
      %1700 = vector.broadcast %27 : f32 to vector<13x256xf32>
      %1701 = arith.mulf %1700, %1687 : vector<13x256xf32>
      %1702 = arith.addf %1699, %1701 : vector<13x256xf32>
      %1703 = vector.broadcast %31 : f32 to vector<13x256xf32>
      %1704 = arith.mulf %1703, %1689 : vector<13x256xf32>
      %1705 = arith.addf %1702, %1704 : vector<13x256xf32>
      %1706 = arith.addf %1673, %1697 : vector<13x256xf32>
      %1707 = arith.addf %1681, %1705 : vector<13x256xf32>
      %c22 = arith.constant 22 : index
      %c0_762 = arith.constant 0 : index
      %c0_763 = arith.constant 0 : index
      %1708 = vector.load %arg1[%c22, %c0_762, %c0_763] : memref<28x14x256xf32, #tpu.memory_space<vmem>>, vector<1x13x256xf32>
      %1709 = vector.shape_cast %1708 : vector<1x13x256xf32> to vector<13x256xf32>
      %c22_764 = arith.constant 22 : index
      %c0_765 = arith.constant 0 : index
      %c0_766 = arith.constant 0 : index
      %1710 = vector.load %arg2[%c22_764, %c0_765, %c0_766] : memref<28x14x256xf32, #tpu.memory_space<vmem>>, vector<1x13x256xf32>
      %1711 = vector.shape_cast %1710 : vector<1x13x256xf32> to vector<13x256xf32>
      %c22_767 = arith.constant 22 : index
      %c1_768 = arith.constant 1 : index
      %c0_769 = arith.constant 0 : index
      %1712 = vector.load %arg1[%c22_767, %c1_768, %c0_769] : memref<28x14x256xf32, #tpu.memory_space<vmem>>, vector<1x13x256xf32>
      %1713 = vector.shape_cast %1712 : vector<1x13x256xf32> to vector<13x256xf32>
      %c22_770 = arith.constant 22 : index
      %c1_771 = arith.constant 1 : index
      %c0_772 = arith.constant 0 : index
      %1714 = vector.load %arg2[%c22_770, %c1_771, %c0_772] : memref<28x14x256xf32, #tpu.memory_space<vmem>>, vector<1x13x256xf32>
      %1715 = vector.shape_cast %1714 : vector<1x13x256xf32> to vector<13x256xf32>
      %1716 = vector.broadcast %35 : f32 to vector<13x256xf32>
      %1717 = arith.mulf %1716, %1709 : vector<13x256xf32>
      %1718 = vector.broadcast %39 : f32 to vector<13x256xf32>
      %1719 = arith.mulf %1718, %1711 : vector<13x256xf32>
      %1720 = arith.addf %1717, %1719 : vector<13x256xf32>
      %1721 = vector.broadcast %43 : f32 to vector<13x256xf32>
      %1722 = arith.mulf %1721, %1713 : vector<13x256xf32>
      %1723 = arith.addf %1720, %1722 : vector<13x256xf32>
      %1724 = vector.broadcast %35 : f32 to vector<13x256xf32>
      %1725 = arith.mulf %1724, %1711 : vector<13x256xf32>
      %1726 = vector.broadcast %39 : f32 to vector<13x256xf32>
      %1727 = arith.mulf %1726, %1713 : vector<13x256xf32>
      %1728 = arith.addf %1725, %1727 : vector<13x256xf32>
      %1729 = vector.broadcast %43 : f32 to vector<13x256xf32>
      %1730 = arith.mulf %1729, %1715 : vector<13x256xf32>
      %1731 = arith.addf %1728, %1730 : vector<13x256xf32>
      %1732 = arith.addf %1706, %1723 : vector<13x256xf32>
      %1733 = arith.addf %1707, %1731 : vector<13x256xf32>
      %1734 = arith.maximumf %1732, %1733 : vector<13x256xf32>
      %c21_773 = arith.constant 21 : index
      %c0_774 = arith.constant 0 : index
      %c0_775 = arith.constant 0 : index
      %1735 = vector.load %arg1[%c21_773, %c0_774, %c0_775] : memref<28x14x256xf32, #tpu.memory_space<vmem>>, vector<1x13x256xf32>
      %1736 = vector.shape_cast %1735 : vector<1x13x256xf32> to vector<13x256xf32>
      %c21_776 = arith.constant 21 : index
      %c0_777 = arith.constant 0 : index
      %c0_778 = arith.constant 0 : index
      %1737 = vector.load %arg2[%c21_776, %c0_777, %c0_778] : memref<28x14x256xf32, #tpu.memory_space<vmem>>, vector<1x13x256xf32>
      %1738 = vector.shape_cast %1737 : vector<1x13x256xf32> to vector<13x256xf32>
      %c21_779 = arith.constant 21 : index
      %c1_780 = arith.constant 1 : index
      %c0_781 = arith.constant 0 : index
      %1739 = vector.load %arg1[%c21_779, %c1_780, %c0_781] : memref<28x14x256xf32, #tpu.memory_space<vmem>>, vector<1x13x256xf32>
      %1740 = vector.shape_cast %1739 : vector<1x13x256xf32> to vector<13x256xf32>
      %c21_782 = arith.constant 21 : index
      %c1_783 = arith.constant 1 : index
      %c0_784 = arith.constant 0 : index
      %1741 = vector.load %arg2[%c21_782, %c1_783, %c0_784] : memref<28x14x256xf32, #tpu.memory_space<vmem>>, vector<1x13x256xf32>
      %1742 = vector.shape_cast %1741 : vector<1x13x256xf32> to vector<13x256xf32>
      %1743 = vector.broadcast %11 : f32 to vector<13x256xf32>
      %1744 = arith.mulf %1743, %1736 : vector<13x256xf32>
      %1745 = vector.broadcast %15 : f32 to vector<13x256xf32>
      %1746 = arith.mulf %1745, %1738 : vector<13x256xf32>
      %1747 = arith.addf %1744, %1746 : vector<13x256xf32>
      %1748 = vector.broadcast %19 : f32 to vector<13x256xf32>
      %1749 = arith.mulf %1748, %1740 : vector<13x256xf32>
      %1750 = arith.addf %1747, %1749 : vector<13x256xf32>
      %1751 = vector.broadcast %11 : f32 to vector<13x256xf32>
      %1752 = arith.mulf %1751, %1738 : vector<13x256xf32>
      %1753 = vector.broadcast %15 : f32 to vector<13x256xf32>
      %1754 = arith.mulf %1753, %1740 : vector<13x256xf32>
      %1755 = arith.addf %1752, %1754 : vector<13x256xf32>
      %1756 = vector.broadcast %19 : f32 to vector<13x256xf32>
      %1757 = arith.mulf %1756, %1742 : vector<13x256xf32>
      %1758 = arith.addf %1755, %1757 : vector<13x256xf32>
      %c22_785 = arith.constant 22 : index
      %c0_786 = arith.constant 0 : index
      %c0_787 = arith.constant 0 : index
      %1759 = vector.load %arg1[%c22_785, %c0_786, %c0_787] : memref<28x14x256xf32, #tpu.memory_space<vmem>>, vector<1x13x256xf32>
      %1760 = vector.shape_cast %1759 : vector<1x13x256xf32> to vector<13x256xf32>
      %c22_788 = arith.constant 22 : index
      %c0_789 = arith.constant 0 : index
      %c0_790 = arith.constant 0 : index
      %1761 = vector.load %arg2[%c22_788, %c0_789, %c0_790] : memref<28x14x256xf32, #tpu.memory_space<vmem>>, vector<1x13x256xf32>
      %1762 = vector.shape_cast %1761 : vector<1x13x256xf32> to vector<13x256xf32>
      %c22_791 = arith.constant 22 : index
      %c1_792 = arith.constant 1 : index
      %c0_793 = arith.constant 0 : index
      %1763 = vector.load %arg1[%c22_791, %c1_792, %c0_793] : memref<28x14x256xf32, #tpu.memory_space<vmem>>, vector<1x13x256xf32>
      %1764 = vector.shape_cast %1763 : vector<1x13x256xf32> to vector<13x256xf32>
      %c22_794 = arith.constant 22 : index
      %c1_795 = arith.constant 1 : index
      %c0_796 = arith.constant 0 : index
      %1765 = vector.load %arg2[%c22_794, %c1_795, %c0_796] : memref<28x14x256xf32, #tpu.memory_space<vmem>>, vector<1x13x256xf32>
      %1766 = vector.shape_cast %1765 : vector<1x13x256xf32> to vector<13x256xf32>
      %1767 = vector.broadcast %23 : f32 to vector<13x256xf32>
      %1768 = arith.mulf %1767, %1760 : vector<13x256xf32>
      %1769 = vector.broadcast %27 : f32 to vector<13x256xf32>
      %1770 = arith.mulf %1769, %1762 : vector<13x256xf32>
      %1771 = arith.addf %1768, %1770 : vector<13x256xf32>
      %1772 = vector.broadcast %31 : f32 to vector<13x256xf32>
      %1773 = arith.mulf %1772, %1764 : vector<13x256xf32>
      %1774 = arith.addf %1771, %1773 : vector<13x256xf32>
      %1775 = vector.broadcast %23 : f32 to vector<13x256xf32>
      %1776 = arith.mulf %1775, %1762 : vector<13x256xf32>
      %1777 = vector.broadcast %27 : f32 to vector<13x256xf32>
      %1778 = arith.mulf %1777, %1764 : vector<13x256xf32>
      %1779 = arith.addf %1776, %1778 : vector<13x256xf32>
      %1780 = vector.broadcast %31 : f32 to vector<13x256xf32>
      %1781 = arith.mulf %1780, %1766 : vector<13x256xf32>
      %1782 = arith.addf %1779, %1781 : vector<13x256xf32>
      %1783 = arith.addf %1750, %1774 : vector<13x256xf32>
      %1784 = arith.addf %1758, %1782 : vector<13x256xf32>
      %c23 = arith.constant 23 : index
      %c0_797 = arith.constant 0 : index
      %c0_798 = arith.constant 0 : index
      %1785 = vector.load %arg1[%c23, %c0_797, %c0_798] : memref<28x14x256xf32, #tpu.memory_space<vmem>>, vector<1x13x256xf32>
      %1786 = vector.shape_cast %1785 : vector<1x13x256xf32> to vector<13x256xf32>
      %c23_799 = arith.constant 23 : index
      %c0_800 = arith.constant 0 : index
      %c0_801 = arith.constant 0 : index
      %1787 = vector.load %arg2[%c23_799, %c0_800, %c0_801] : memref<28x14x256xf32, #tpu.memory_space<vmem>>, vector<1x13x256xf32>
      %1788 = vector.shape_cast %1787 : vector<1x13x256xf32> to vector<13x256xf32>
      %c23_802 = arith.constant 23 : index
      %c1_803 = arith.constant 1 : index
      %c0_804 = arith.constant 0 : index
      %1789 = vector.load %arg1[%c23_802, %c1_803, %c0_804] : memref<28x14x256xf32, #tpu.memory_space<vmem>>, vector<1x13x256xf32>
      %1790 = vector.shape_cast %1789 : vector<1x13x256xf32> to vector<13x256xf32>
      %c23_805 = arith.constant 23 : index
      %c1_806 = arith.constant 1 : index
      %c0_807 = arith.constant 0 : index
      %1791 = vector.load %arg2[%c23_805, %c1_806, %c0_807] : memref<28x14x256xf32, #tpu.memory_space<vmem>>, vector<1x13x256xf32>
      %1792 = vector.shape_cast %1791 : vector<1x13x256xf32> to vector<13x256xf32>
      %1793 = vector.broadcast %35 : f32 to vector<13x256xf32>
      %1794 = arith.mulf %1793, %1786 : vector<13x256xf32>
      %1795 = vector.broadcast %39 : f32 to vector<13x256xf32>
      %1796 = arith.mulf %1795, %1788 : vector<13x256xf32>
      %1797 = arith.addf %1794, %1796 : vector<13x256xf32>
      %1798 = vector.broadcast %43 : f32 to vector<13x256xf32>
      %1799 = arith.mulf %1798, %1790 : vector<13x256xf32>
      %1800 = arith.addf %1797, %1799 : vector<13x256xf32>
      %1801 = vector.broadcast %35 : f32 to vector<13x256xf32>
      %1802 = arith.mulf %1801, %1788 : vector<13x256xf32>
      %1803 = vector.broadcast %39 : f32 to vector<13x256xf32>
      %1804 = arith.mulf %1803, %1790 : vector<13x256xf32>
      %1805 = arith.addf %1802, %1804 : vector<13x256xf32>
      %1806 = vector.broadcast %43 : f32 to vector<13x256xf32>
      %1807 = arith.mulf %1806, %1792 : vector<13x256xf32>
      %1808 = arith.addf %1805, %1807 : vector<13x256xf32>
      %1809 = arith.addf %1783, %1800 : vector<13x256xf32>
      %1810 = arith.addf %1784, %1808 : vector<13x256xf32>
      %1811 = arith.maximumf %1809, %1810 : vector<13x256xf32>
      %1812 = arith.maximumf %1734, %1811 : vector<13x256xf32>
      %1813 = vector.broadcast %47 : f32 to vector<13x256xf32>
      %1814 = arith.addf %1812, %1813 : vector<13x256xf32>
      %cst_808 = arith.constant 0.000000e+00 : f32
      %1815 = vector.broadcast %cst_808 : f32 to vector<13x256xf32>
      %1816 = arith.maximumf %1814, %1815 : vector<13x256xf32>
      %1817 = tpu.concatenate %1816, %0 in 0 : vector<13x256xf32>, vector<3x256xf32> -> vector<16x256xf32>
      %c160 = arith.constant 160 : index
      %c0_809 = arith.constant 0 : index
      %1818 = vector.load %arg7[%c160, %c0_809] : memref<208x256xf32, #tpu.memory_space<vmem>>, vector<16x256xf32>
      tpu.vector_store %arg7[%c160, %c0_809], %1817 {strides = array<i32>} : memref<208x256xf32, #tpu.memory_space<vmem>>, vector<16x256xf32>,
      %c22_810 = arith.constant 22 : index
      %c0_811 = arith.constant 0 : index
      %c0_812 = arith.constant 0 : index
      %1819 = vector.load %arg1[%c22_810, %c0_811, %c0_812] : memref<28x14x256xf32, #tpu.memory_space<vmem>>, vector<1x13x256xf32>
      %1820 = vector.shape_cast %1819 : vector<1x13x256xf32> to vector<13x256xf32>
      %c22_813 = arith.constant 22 : index
      %c0_814 = arith.constant 0 : index
      %c0_815 = arith.constant 0 : index
      %1821 = vector.load %arg2[%c22_813, %c0_814, %c0_815] : memref<28x14x256xf32, #tpu.memory_space<vmem>>, vector<1x13x256xf32>
      %1822 = vector.shape_cast %1821 : vector<1x13x256xf32> to vector<13x256xf32>
      %c22_816 = arith.constant 22 : index
      %c1_817 = arith.constant 1 : index
      %c0_818 = arith.constant 0 : index
      %1823 = vector.load %arg1[%c22_816, %c1_817, %c0_818] : memref<28x14x256xf32, #tpu.memory_space<vmem>>, vector<1x13x256xf32>
      %1824 = vector.shape_cast %1823 : vector<1x13x256xf32> to vector<13x256xf32>
      %c22_819 = arith.constant 22 : index
      %c1_820 = arith.constant 1 : index
      %c0_821 = arith.constant 0 : index
      %1825 = vector.load %arg2[%c22_819, %c1_820, %c0_821] : memref<28x14x256xf32, #tpu.memory_space<vmem>>, vector<1x13x256xf32>
      %1826 = vector.shape_cast %1825 : vector<1x13x256xf32> to vector<13x256xf32>
      %1827 = vector.broadcast %11 : f32 to vector<13x256xf32>
      %1828 = arith.mulf %1827, %1820 : vector<13x256xf32>
      %1829 = vector.broadcast %15 : f32 to vector<13x256xf32>
      %1830 = arith.mulf %1829, %1822 : vector<13x256xf32>
      %1831 = arith.addf %1828, %1830 : vector<13x256xf32>
      %1832 = vector.broadcast %19 : f32 to vector<13x256xf32>
      %1833 = arith.mulf %1832, %1824 : vector<13x256xf32>
      %1834 = arith.addf %1831, %1833 : vector<13x256xf32>
      %1835 = vector.broadcast %11 : f32 to vector<13x256xf32>
      %1836 = arith.mulf %1835, %1822 : vector<13x256xf32>
      %1837 = vector.broadcast %15 : f32 to vector<13x256xf32>
      %1838 = arith.mulf %1837, %1824 : vector<13x256xf32>
      %1839 = arith.addf %1836, %1838 : vector<13x256xf32>
      %1840 = vector.broadcast %19 : f32 to vector<13x256xf32>
      %1841 = arith.mulf %1840, %1826 : vector<13x256xf32>
      %1842 = arith.addf %1839, %1841 : vector<13x256xf32>
      %c23_822 = arith.constant 23 : index
      %c0_823 = arith.constant 0 : index
      %c0_824 = arith.constant 0 : index
      %1843 = vector.load %arg1[%c23_822, %c0_823, %c0_824] : memref<28x14x256xf32, #tpu.memory_space<vmem>>, vector<1x13x256xf32>
      %1844 = vector.shape_cast %1843 : vector<1x13x256xf32> to vector<13x256xf32>
      %c23_825 = arith.constant 23 : index
      %c0_826 = arith.constant 0 : index
      %c0_827 = arith.constant 0 : index
      %1845 = vector.load %arg2[%c23_825, %c0_826, %c0_827] : memref<28x14x256xf32, #tpu.memory_space<vmem>>, vector<1x13x256xf32>
      %1846 = vector.shape_cast %1845 : vector<1x13x256xf32> to vector<13x256xf32>
      %c23_828 = arith.constant 23 : index
      %c1_829 = arith.constant 1 : index
      %c0_830 = arith.constant 0 : index
      %1847 = vector.load %arg1[%c23_828, %c1_829, %c0_830] : memref<28x14x256xf32, #tpu.memory_space<vmem>>, vector<1x13x256xf32>
      %1848 = vector.shape_cast %1847 : vector<1x13x256xf32> to vector<13x256xf32>
      %c23_831 = arith.constant 23 : index
      %c1_832 = arith.constant 1 : index
      %c0_833 = arith.constant 0 : index
      %1849 = vector.load %arg2[%c23_831, %c1_832, %c0_833] : memref<28x14x256xf32, #tpu.memory_space<vmem>>, vector<1x13x256xf32>
      %1850 = vector.shape_cast %1849 : vector<1x13x256xf32> to vector<13x256xf32>
      %1851 = vector.broadcast %23 : f32 to vector<13x256xf32>
      %1852 = arith.mulf %1851, %1844 : vector<13x256xf32>
      %1853 = vector.broadcast %27 : f32 to vector<13x256xf32>
      %1854 = arith.mulf %1853, %1846 : vector<13x256xf32>
      %1855 = arith.addf %1852, %1854 : vector<13x256xf32>
      %1856 = vector.broadcast %31 : f32 to vector<13x256xf32>
      %1857 = arith.mulf %1856, %1848 : vector<13x256xf32>
      %1858 = arith.addf %1855, %1857 : vector<13x256xf32>
      %1859 = vector.broadcast %23 : f32 to vector<13x256xf32>
      %1860 = arith.mulf %1859, %1846 : vector<13x256xf32>
      %1861 = vector.broadcast %27 : f32 to vector<13x256xf32>
      %1862 = arith.mulf %1861, %1848 : vector<13x256xf32>
      %1863 = arith.addf %1860, %1862 : vector<13x256xf32>
      %1864 = vector.broadcast %31 : f32 to vector<13x256xf32>
      %1865 = arith.mulf %1864, %1850 : vector<13x256xf32>
      %1866 = arith.addf %1863, %1865 : vector<13x256xf32>
      %1867 = arith.addf %1834, %1858 : vector<13x256xf32>
      %1868 = arith.addf %1842, %1866 : vector<13x256xf32>
      %c24 = arith.constant 24 : index
      %c0_834 = arith.constant 0 : index
      %c0_835 = arith.constant 0 : index
      %1869 = vector.load %arg1[%c24, %c0_834, %c0_835] : memref<28x14x256xf32, #tpu.memory_space<vmem>>, vector<1x13x256xf32>
      %1870 = vector.shape_cast %1869 : vector<1x13x256xf32> to vector<13x256xf32>
      %c24_836 = arith.constant 24 : index
      %c0_837 = arith.constant 0 : index
      %c0_838 = arith.constant 0 : index
      %1871 = vector.load %arg2[%c24_836, %c0_837, %c0_838] : memref<28x14x256xf32, #tpu.memory_space<vmem>>, vector<1x13x256xf32>
      %1872 = vector.shape_cast %1871 : vector<1x13x256xf32> to vector<13x256xf32>
      %c24_839 = arith.constant 24 : index
      %c1_840 = arith.constant 1 : index
      %c0_841 = arith.constant 0 : index
      %1873 = vector.load %arg1[%c24_839, %c1_840, %c0_841] : memref<28x14x256xf32, #tpu.memory_space<vmem>>, vector<1x13x256xf32>
      %1874 = vector.shape_cast %1873 : vector<1x13x256xf32> to vector<13x256xf32>
      %c24_842 = arith.constant 24 : index
      %c1_843 = arith.constant 1 : index
      %c0_844 = arith.constant 0 : index
      %1875 = vector.load %arg2[%c24_842, %c1_843, %c0_844] : memref<28x14x256xf32, #tpu.memory_space<vmem>>, vector<1x13x256xf32>
      %1876 = vector.shape_cast %1875 : vector<1x13x256xf32> to vector<13x256xf32>
      %1877 = vector.broadcast %35 : f32 to vector<13x256xf32>
      %1878 = arith.mulf %1877, %1870 : vector<13x256xf32>
      %1879 = vector.broadcast %39 : f32 to vector<13x256xf32>
      %1880 = arith.mulf %1879, %1872 : vector<13x256xf32>
      %1881 = arith.addf %1878, %1880 : vector<13x256xf32>
      %1882 = vector.broadcast %43 : f32 to vector<13x256xf32>
      %1883 = arith.mulf %1882, %1874 : vector<13x256xf32>
      %1884 = arith.addf %1881, %1883 : vector<13x256xf32>
      %1885 = vector.broadcast %35 : f32 to vector<13x256xf32>
      %1886 = arith.mulf %1885, %1872 : vector<13x256xf32>
      %1887 = vector.broadcast %39 : f32 to vector<13x256xf32>
      %1888 = arith.mulf %1887, %1874 : vector<13x256xf32>
      %1889 = arith.addf %1886, %1888 : vector<13x256xf32>
      %1890 = vector.broadcast %43 : f32 to vector<13x256xf32>
      %1891 = arith.mulf %1890, %1876 : vector<13x256xf32>
      %1892 = arith.addf %1889, %1891 : vector<13x256xf32>
      %1893 = arith.addf %1867, %1884 : vector<13x256xf32>
      %1894 = arith.addf %1868, %1892 : vector<13x256xf32>
      %1895 = arith.maximumf %1893, %1894 : vector<13x256xf32>
      %c23_845 = arith.constant 23 : index
      %c0_846 = arith.constant 0 : index
      %c0_847 = arith.constant 0 : index
      %1896 = vector.load %arg1[%c23_845, %c0_846, %c0_847] : memref<28x14x256xf32, #tpu.memory_space<vmem>>, vector<1x13x256xf32>
      %1897 = vector.shape_cast %1896 : vector<1x13x256xf32> to vector<13x256xf32>
      %c23_848 = arith.constant 23 : index
      %c0_849 = arith.constant 0 : index
      %c0_850 = arith.constant 0 : index
      %1898 = vector.load %arg2[%c23_848, %c0_849, %c0_850] : memref<28x14x256xf32, #tpu.memory_space<vmem>>, vector<1x13x256xf32>
      %1899 = vector.shape_cast %1898 : vector<1x13x256xf32> to vector<13x256xf32>
      %c23_851 = arith.constant 23 : index
      %c1_852 = arith.constant 1 : index
      %c0_853 = arith.constant 0 : index
      %1900 = vector.load %arg1[%c23_851, %c1_852, %c0_853] : memref<28x14x256xf32, #tpu.memory_space<vmem>>, vector<1x13x256xf32>
      %1901 = vector.shape_cast %1900 : vector<1x13x256xf32> to vector<13x256xf32>
      %c23_854 = arith.constant 23 : index
      %c1_855 = arith.constant 1 : index
      %c0_856 = arith.constant 0 : index
      %1902 = vector.load %arg2[%c23_854, %c1_855, %c0_856] : memref<28x14x256xf32, #tpu.memory_space<vmem>>, vector<1x13x256xf32>
      %1903 = vector.shape_cast %1902 : vector<1x13x256xf32> to vector<13x256xf32>
      %1904 = vector.broadcast %11 : f32 to vector<13x256xf32>
      %1905 = arith.mulf %1904, %1897 : vector<13x256xf32>
      %1906 = vector.broadcast %15 : f32 to vector<13x256xf32>
      %1907 = arith.mulf %1906, %1899 : vector<13x256xf32>
      %1908 = arith.addf %1905, %1907 : vector<13x256xf32>
      %1909 = vector.broadcast %19 : f32 to vector<13x256xf32>
      %1910 = arith.mulf %1909, %1901 : vector<13x256xf32>
      %1911 = arith.addf %1908, %1910 : vector<13x256xf32>
      %1912 = vector.broadcast %11 : f32 to vector<13x256xf32>
      %1913 = arith.mulf %1912, %1899 : vector<13x256xf32>
      %1914 = vector.broadcast %15 : f32 to vector<13x256xf32>
      %1915 = arith.mulf %1914, %1901 : vector<13x256xf32>
      %1916 = arith.addf %1913, %1915 : vector<13x256xf32>
      %1917 = vector.broadcast %19 : f32 to vector<13x256xf32>
      %1918 = arith.mulf %1917, %1903 : vector<13x256xf32>
      %1919 = arith.addf %1916, %1918 : vector<13x256xf32>
      %c24_857 = arith.constant 24 : index
      %c0_858 = arith.constant 0 : index
      %c0_859 = arith.constant 0 : index
      %1920 = vector.load %arg1[%c24_857, %c0_858, %c0_859] : memref<28x14x256xf32, #tpu.memory_space<vmem>>, vector<1x13x256xf32>
      %1921 = vector.shape_cast %1920 : vector<1x13x256xf32> to vector<13x256xf32>
      %c24_860 = arith.constant 24 : index
      %c0_861 = arith.constant 0 : index
      %c0_862 = arith.constant 0 : index
      %1922 = vector.load %arg2[%c24_860, %c0_861, %c0_862] : memref<28x14x256xf32, #tpu.memory_space<vmem>>, vector<1x13x256xf32>
      %1923 = vector.shape_cast %1922 : vector<1x13x256xf32> to vector<13x256xf32>
      %c24_863 = arith.constant 24 : index
      %c1_864 = arith.constant 1 : index
      %c0_865 = arith.constant 0 : index
      %1924 = vector.load %arg1[%c24_863, %c1_864, %c0_865] : memref<28x14x256xf32, #tpu.memory_space<vmem>>, vector<1x13x256xf32>
      %1925 = vector.shape_cast %1924 : vector<1x13x256xf32> to vector<13x256xf32>
      %c24_866 = arith.constant 24 : index
      %c1_867 = arith.constant 1 : index
      %c0_868 = arith.constant 0 : index
      %1926 = vector.load %arg2[%c24_866, %c1_867, %c0_868] : memref<28x14x256xf32, #tpu.memory_space<vmem>>, vector<1x13x256xf32>
      %1927 = vector.shape_cast %1926 : vector<1x13x256xf32> to vector<13x256xf32>
      %1928 = vector.broadcast %23 : f32 to vector<13x256xf32>
      %1929 = arith.mulf %1928, %1921 : vector<13x256xf32>
      %1930 = vector.broadcast %27 : f32 to vector<13x256xf32>
      %1931 = arith.mulf %1930, %1923 : vector<13x256xf32>
      %1932 = arith.addf %1929, %1931 : vector<13x256xf32>
      %1933 = vector.broadcast %31 : f32 to vector<13x256xf32>
      %1934 = arith.mulf %1933, %1925 : vector<13x256xf32>
      %1935 = arith.addf %1932, %1934 : vector<13x256xf32>
      %1936 = vector.broadcast %23 : f32 to vector<13x256xf32>
      %1937 = arith.mulf %1936, %1923 : vector<13x256xf32>
      %1938 = vector.broadcast %27 : f32 to vector<13x256xf32>
      %1939 = arith.mulf %1938, %1925 : vector<13x256xf32>
      %1940 = arith.addf %1937, %1939 : vector<13x256xf32>
      %1941 = vector.broadcast %31 : f32 to vector<13x256xf32>
      %1942 = arith.mulf %1941, %1927 : vector<13x256xf32>
      %1943 = arith.addf %1940, %1942 : vector<13x256xf32>
      %1944 = arith.addf %1911, %1935 : vector<13x256xf32>
      %1945 = arith.addf %1919, %1943 : vector<13x256xf32>
      %c25 = arith.constant 25 : index
      %c0_869 = arith.constant 0 : index
      %c0_870 = arith.constant 0 : index
      %1946 = vector.load %arg1[%c25, %c0_869, %c0_870] : memref<28x14x256xf32, #tpu.memory_space<vmem>>, vector<1x13x256xf32>
      %1947 = vector.shape_cast %1946 : vector<1x13x256xf32> to vector<13x256xf32>
      %c25_871 = arith.constant 25 : index
      %c0_872 = arith.constant 0 : index
      %c0_873 = arith.constant 0 : index
      %1948 = vector.load %arg2[%c25_871, %c0_872, %c0_873] : memref<28x14x256xf32, #tpu.memory_space<vmem>>, vector<1x13x256xf32>
      %1949 = vector.shape_cast %1948 : vector<1x13x256xf32> to vector<13x256xf32>
      %c25_874 = arith.constant 25 : index
      %c1_875 = arith.constant 1 : index
      %c0_876 = arith.constant 0 : index
      %1950 = vector.load %arg1[%c25_874, %c1_875, %c0_876] : memref<28x14x256xf32, #tpu.memory_space<vmem>>, vector<1x13x256xf32>
      %1951 = vector.shape_cast %1950 : vector<1x13x256xf32> to vector<13x256xf32>
      %c25_877 = arith.constant 25 : index
      %c1_878 = arith.constant 1 : index
      %c0_879 = arith.constant 0 : index
      %1952 = vector.load %arg2[%c25_877, %c1_878, %c0_879] : memref<28x14x256xf32, #tpu.memory_space<vmem>>, vector<1x13x256xf32>
      %1953 = vector.shape_cast %1952 : vector<1x13x256xf32> to vector<13x256xf32>
      %1954 = vector.broadcast %35 : f32 to vector<13x256xf32>
      %1955 = arith.mulf %1954, %1947 : vector<13x256xf32>
      %1956 = vector.broadcast %39 : f32 to vector<13x256xf32>
      %1957 = arith.mulf %1956, %1949 : vector<13x256xf32>
      %1958 = arith.addf %1955, %1957 : vector<13x256xf32>
      %1959 = vector.broadcast %43 : f32 to vector<13x256xf32>
      %1960 = arith.mulf %1959, %1951 : vector<13x256xf32>
      %1961 = arith.addf %1958, %1960 : vector<13x256xf32>
      %1962 = vector.broadcast %35 : f32 to vector<13x256xf32>
      %1963 = arith.mulf %1962, %1949 : vector<13x256xf32>
      %1964 = vector.broadcast %39 : f32 to vector<13x256xf32>
      %1965 = arith.mulf %1964, %1951 : vector<13x256xf32>
      %1966 = arith.addf %1963, %1965 : vector<13x256xf32>
      %1967 = vector.broadcast %43 : f32 to vector<13x256xf32>
      %1968 = arith.mulf %1967, %1953 : vector<13x256xf32>
      %1969 = arith.addf %1966, %1968 : vector<13x256xf32>
      %1970 = arith.addf %1944, %1961 : vector<13x256xf32>
      %1971 = arith.addf %1945, %1969 : vector<13x256xf32>
      %1972 = arith.maximumf %1970, %1971 : vector<13x256xf32>
      %1973 = arith.maximumf %1895, %1972 : vector<13x256xf32>
      %1974 = vector.broadcast %47 : f32 to vector<13x256xf32>
      %1975 = arith.addf %1973, %1974 : vector<13x256xf32>
      %cst_880 = arith.constant 0.000000e+00 : f32
      %1976 = vector.broadcast %cst_880 : f32 to vector<13x256xf32>
      %1977 = arith.maximumf %1975, %1976 : vector<13x256xf32>
      %1978 = tpu.concatenate %1977, %0 in 0 : vector<13x256xf32>, vector<3x256xf32> -> vector<16x256xf32>
      %c176 = arith.constant 176 : index
      %c0_881 = arith.constant 0 : index
      %1979 = vector.load %arg7[%c176, %c0_881] : memref<208x256xf32, #tpu.memory_space<vmem>>, vector<16x256xf32>
      tpu.vector_store %arg7[%c176, %c0_881], %1978 {strides = array<i32>} : memref<208x256xf32, #tpu.memory_space<vmem>>, vector<16x256xf32>,
      %c24_882 = arith.constant 24 : index
      %c0_883 = arith.constant 0 : index
      %c0_884 = arith.constant 0 : index
      %1980 = vector.load %arg1[%c24_882, %c0_883, %c0_884] : memref<28x14x256xf32, #tpu.memory_space<vmem>>, vector<1x13x256xf32>
      %1981 = vector.shape_cast %1980 : vector<1x13x256xf32> to vector<13x256xf32>
      %c24_885 = arith.constant 24 : index
      %c0_886 = arith.constant 0 : index
      %c0_887 = arith.constant 0 : index
      %1982 = vector.load %arg2[%c24_885, %c0_886, %c0_887] : memref<28x14x256xf32, #tpu.memory_space<vmem>>, vector<1x13x256xf32>
      %1983 = vector.shape_cast %1982 : vector<1x13x256xf32> to vector<13x256xf32>
      %c24_888 = arith.constant 24 : index
      %c1_889 = arith.constant 1 : index
      %c0_890 = arith.constant 0 : index
      %1984 = vector.load %arg1[%c24_888, %c1_889, %c0_890] : memref<28x14x256xf32, #tpu.memory_space<vmem>>, vector<1x13x256xf32>
      %1985 = vector.shape_cast %1984 : vector<1x13x256xf32> to vector<13x256xf32>
      %c24_891 = arith.constant 24 : index
      %c1_892 = arith.constant 1 : index
      %c0_893 = arith.constant 0 : index
      %1986 = vector.load %arg2[%c24_891, %c1_892, %c0_893] : memref<28x14x256xf32, #tpu.memory_space<vmem>>, vector<1x13x256xf32>
      %1987 = vector.shape_cast %1986 : vector<1x13x256xf32> to vector<13x256xf32>
      %1988 = vector.broadcast %11 : f32 to vector<13x256xf32>
      %1989 = arith.mulf %1988, %1981 : vector<13x256xf32>
      %1990 = vector.broadcast %15 : f32 to vector<13x256xf32>
      %1991 = arith.mulf %1990, %1983 : vector<13x256xf32>
      %1992 = arith.addf %1989, %1991 : vector<13x256xf32>
      %1993 = vector.broadcast %19 : f32 to vector<13x256xf32>
      %1994 = arith.mulf %1993, %1985 : vector<13x256xf32>
      %1995 = arith.addf %1992, %1994 : vector<13x256xf32>
      %1996 = vector.broadcast %11 : f32 to vector<13x256xf32>
      %1997 = arith.mulf %1996, %1983 : vector<13x256xf32>
      %1998 = vector.broadcast %15 : f32 to vector<13x256xf32>
      %1999 = arith.mulf %1998, %1985 : vector<13x256xf32>
      %2000 = arith.addf %1997, %1999 : vector<13x256xf32>
      %2001 = vector.broadcast %19 : f32 to vector<13x256xf32>
      %2002 = arith.mulf %2001, %1987 : vector<13x256xf32>
      %2003 = arith.addf %2000, %2002 : vector<13x256xf32>
      %c25_894 = arith.constant 25 : index
      %c0_895 = arith.constant 0 : index
      %c0_896 = arith.constant 0 : index
      %2004 = vector.load %arg1[%c25_894, %c0_895, %c0_896] : memref<28x14x256xf32, #tpu.memory_space<vmem>>, vector<1x13x256xf32>
      %2005 = vector.shape_cast %2004 : vector<1x13x256xf32> to vector<13x256xf32>
      %c25_897 = arith.constant 25 : index
      %c0_898 = arith.constant 0 : index
      %c0_899 = arith.constant 0 : index
      %2006 = vector.load %arg2[%c25_897, %c0_898, %c0_899] : memref<28x14x256xf32, #tpu.memory_space<vmem>>, vector<1x13x256xf32>
      %2007 = vector.shape_cast %2006 : vector<1x13x256xf32> to vector<13x256xf32>
      %c25_900 = arith.constant 25 : index
      %c1_901 = arith.constant 1 : index
      %c0_902 = arith.constant 0 : index
      %2008 = vector.load %arg1[%c25_900, %c1_901, %c0_902] : memref<28x14x256xf32, #tpu.memory_space<vmem>>, vector<1x13x256xf32>
      %2009 = vector.shape_cast %2008 : vector<1x13x256xf32> to vector<13x256xf32>
      %c25_903 = arith.constant 25 : index
      %c1_904 = arith.constant 1 : index
      %c0_905 = arith.constant 0 : index
      %2010 = vector.load %arg2[%c25_903, %c1_904, %c0_905] : memref<28x14x256xf32, #tpu.memory_space<vmem>>, vector<1x13x256xf32>
      %2011 = vector.shape_cast %2010 : vector<1x13x256xf32> to vector<13x256xf32>
      %2012 = vector.broadcast %23 : f32 to vector<13x256xf32>
      %2013 = arith.mulf %2012, %2005 : vector<13x256xf32>
      %2014 = vector.broadcast %27 : f32 to vector<13x256xf32>
      %2015 = arith.mulf %2014, %2007 : vector<13x256xf32>
      %2016 = arith.addf %2013, %2015 : vector<13x256xf32>
      %2017 = vector.broadcast %31 : f32 to vector<13x256xf32>
      %2018 = arith.mulf %2017, %2009 : vector<13x256xf32>
      %2019 = arith.addf %2016, %2018 : vector<13x256xf32>
      %2020 = vector.broadcast %23 : f32 to vector<13x256xf32>
      %2021 = arith.mulf %2020, %2007 : vector<13x256xf32>
      %2022 = vector.broadcast %27 : f32 to vector<13x256xf32>
      %2023 = arith.mulf %2022, %2009 : vector<13x256xf32>
      %2024 = arith.addf %2021, %2023 : vector<13x256xf32>
      %2025 = vector.broadcast %31 : f32 to vector<13x256xf32>
      %2026 = arith.mulf %2025, %2011 : vector<13x256xf32>
      %2027 = arith.addf %2024, %2026 : vector<13x256xf32>
      %2028 = arith.addf %1995, %2019 : vector<13x256xf32>
      %2029 = arith.addf %2003, %2027 : vector<13x256xf32>
      %c26 = arith.constant 26 : index
      %c0_906 = arith.constant 0 : index
      %c0_907 = arith.constant 0 : index
      %2030 = vector.load %arg1[%c26, %c0_906, %c0_907] : memref<28x14x256xf32, #tpu.memory_space<vmem>>, vector<1x13x256xf32>
      %2031 = vector.shape_cast %2030 : vector<1x13x256xf32> to vector<13x256xf32>
      %c26_908 = arith.constant 26 : index
      %c0_909 = arith.constant 0 : index
      %c0_910 = arith.constant 0 : index
      %2032 = vector.load %arg2[%c26_908, %c0_909, %c0_910] : memref<28x14x256xf32, #tpu.memory_space<vmem>>, vector<1x13x256xf32>
      %2033 = vector.shape_cast %2032 : vector<1x13x256xf32> to vector<13x256xf32>
      %c26_911 = arith.constant 26 : index
      %c1_912 = arith.constant 1 : index
      %c0_913 = arith.constant 0 : index
      %2034 = vector.load %arg1[%c26_911, %c1_912, %c0_913] : memref<28x14x256xf32, #tpu.memory_space<vmem>>, vector<1x13x256xf32>
      %2035 = vector.shape_cast %2034 : vector<1x13x256xf32> to vector<13x256xf32>
      %c26_914 = arith.constant 26 : index
      %c1_915 = arith.constant 1 : index
      %c0_916 = arith.constant 0 : index
      %2036 = vector.load %arg2[%c26_914, %c1_915, %c0_916] : memref<28x14x256xf32, #tpu.memory_space<vmem>>, vector<1x13x256xf32>
      %2037 = vector.shape_cast %2036 : vector<1x13x256xf32> to vector<13x256xf32>
      %2038 = vector.broadcast %35 : f32 to vector<13x256xf32>
      %2039 = arith.mulf %2038, %2031 : vector<13x256xf32>
      %2040 = vector.broadcast %39 : f32 to vector<13x256xf32>
      %2041 = arith.mulf %2040, %2033 : vector<13x256xf32>
      %2042 = arith.addf %2039, %2041 : vector<13x256xf32>
      %2043 = vector.broadcast %43 : f32 to vector<13x256xf32>
      %2044 = arith.mulf %2043, %2035 : vector<13x256xf32>
      %2045 = arith.addf %2042, %2044 : vector<13x256xf32>
      %2046 = vector.broadcast %35 : f32 to vector<13x256xf32>
      %2047 = arith.mulf %2046, %2033 : vector<13x256xf32>
      %2048 = vector.broadcast %39 : f32 to vector<13x256xf32>
      %2049 = arith.mulf %2048, %2035 : vector<13x256xf32>
      %2050 = arith.addf %2047, %2049 : vector<13x256xf32>
      %2051 = vector.broadcast %43 : f32 to vector<13x256xf32>
      %2052 = arith.mulf %2051, %2037 : vector<13x256xf32>
      %2053 = arith.addf %2050, %2052 : vector<13x256xf32>
      %2054 = arith.addf %2028, %2045 : vector<13x256xf32>
      %2055 = arith.addf %2029, %2053 : vector<13x256xf32>
      %2056 = arith.maximumf %2054, %2055 : vector<13x256xf32>
      %c25_917 = arith.constant 25 : index
      %c0_918 = arith.constant 0 : index
      %c0_919 = arith.constant 0 : index
      %2057 = vector.load %arg1[%c25_917, %c0_918, %c0_919] : memref<28x14x256xf32, #tpu.memory_space<vmem>>, vector<1x13x256xf32>
      %2058 = vector.shape_cast %2057 : vector<1x13x256xf32> to vector<13x256xf32>
      %c25_920 = arith.constant 25 : index
      %c0_921 = arith.constant 0 : index
      %c0_922 = arith.constant 0 : index
      %2059 = vector.load %arg2[%c25_920, %c0_921, %c0_922] : memref<28x14x256xf32, #tpu.memory_space<vmem>>, vector<1x13x256xf32>
      %2060 = vector.shape_cast %2059 : vector<1x13x256xf32> to vector<13x256xf32>
      %c25_923 = arith.constant 25 : index
      %c1_924 = arith.constant 1 : index
      %c0_925 = arith.constant 0 : index
      %2061 = vector.load %arg1[%c25_923, %c1_924, %c0_925] : memref<28x14x256xf32, #tpu.memory_space<vmem>>, vector<1x13x256xf32>
      %2062 = vector.shape_cast %2061 : vector<1x13x256xf32> to vector<13x256xf32>
      %c25_926 = arith.constant 25 : index
      %c1_927 = arith.constant 1 : index
      %c0_928 = arith.constant 0 : index
      %2063 = vector.load %arg2[%c25_926, %c1_927, %c0_928] : memref<28x14x256xf32, #tpu.memory_space<vmem>>, vector<1x13x256xf32>
      %2064 = vector.shape_cast %2063 : vector<1x13x256xf32> to vector<13x256xf32>
      %2065 = vector.broadcast %11 : f32 to vector<13x256xf32>
      %2066 = arith.mulf %2065, %2058 : vector<13x256xf32>
      %2067 = vector.broadcast %15 : f32 to vector<13x256xf32>
      %2068 = arith.mulf %2067, %2060 : vector<13x256xf32>
      %2069 = arith.addf %2066, %2068 : vector<13x256xf32>
      %2070 = vector.broadcast %19 : f32 to vector<13x256xf32>
      %2071 = arith.mulf %2070, %2062 : vector<13x256xf32>
      %2072 = arith.addf %2069, %2071 : vector<13x256xf32>
      %2073 = vector.broadcast %11 : f32 to vector<13x256xf32>
      %2074 = arith.mulf %2073, %2060 : vector<13x256xf32>
      %2075 = vector.broadcast %15 : f32 to vector<13x256xf32>
      %2076 = arith.mulf %2075, %2062 : vector<13x256xf32>
      %2077 = arith.addf %2074, %2076 : vector<13x256xf32>
      %2078 = vector.broadcast %19 : f32 to vector<13x256xf32>
      %2079 = arith.mulf %2078, %2064 : vector<13x256xf32>
      %2080 = arith.addf %2077, %2079 : vector<13x256xf32>
      %c26_929 = arith.constant 26 : index
      %c0_930 = arith.constant 0 : index
      %c0_931 = arith.constant 0 : index
      %2081 = vector.load %arg1[%c26_929, %c0_930, %c0_931] : memref<28x14x256xf32, #tpu.memory_space<vmem>>, vector<1x13x256xf32>
      %2082 = vector.shape_cast %2081 : vector<1x13x256xf32> to vector<13x256xf32>
      %c26_932 = arith.constant 26 : index
      %c0_933 = arith.constant 0 : index
      %c0_934 = arith.constant 0 : index
      %2083 = vector.load %arg2[%c26_932, %c0_933, %c0_934] : memref<28x14x256xf32, #tpu.memory_space<vmem>>, vector<1x13x256xf32>
      %2084 = vector.shape_cast %2083 : vector<1x13x256xf32> to vector<13x256xf32>
      %c26_935 = arith.constant 26 : index
      %c1_936 = arith.constant 1 : index
      %c0_937 = arith.constant 0 : index
      %2085 = vector.load %arg1[%c26_935, %c1_936, %c0_937] : memref<28x14x256xf32, #tpu.memory_space<vmem>>, vector<1x13x256xf32>
      %2086 = vector.shape_cast %2085 : vector<1x13x256xf32> to vector<13x256xf32>
      %c26_938 = arith.constant 26 : index
      %c1_939 = arith.constant 1 : index
      %c0_940 = arith.constant 0 : index
      %2087 = vector.load %arg2[%c26_938, %c1_939, %c0_940] : memref<28x14x256xf32, #tpu.memory_space<vmem>>, vector<1x13x256xf32>
      %2088 = vector.shape_cast %2087 : vector<1x13x256xf32> to vector<13x256xf32>
      %2089 = vector.broadcast %23 : f32 to vector<13x256xf32>
      %2090 = arith.mulf %2089, %2082 : vector<13x256xf32>
      %2091 = vector.broadcast %27 : f32 to vector<13x256xf32>
      %2092 = arith.mulf %2091, %2084 : vector<13x256xf32>
      %2093 = arith.addf %2090, %2092 : vector<13x256xf32>
      %2094 = vector.broadcast %31 : f32 to vector<13x256xf32>
      %2095 = arith.mulf %2094, %2086 : vector<13x256xf32>
      %2096 = arith.addf %2093, %2095 : vector<13x256xf32>
      %2097 = vector.broadcast %23 : f32 to vector<13x256xf32>
      %2098 = arith.mulf %2097, %2084 : vector<13x256xf32>
      %2099 = vector.broadcast %27 : f32 to vector<13x256xf32>
      %2100 = arith.mulf %2099, %2086 : vector<13x256xf32>
      %2101 = arith.addf %2098, %2100 : vector<13x256xf32>
      %2102 = vector.broadcast %31 : f32 to vector<13x256xf32>
      %2103 = arith.mulf %2102, %2088 : vector<13x256xf32>
      %2104 = arith.addf %2101, %2103 : vector<13x256xf32>
      %2105 = arith.addf %2072, %2096 : vector<13x256xf32>
      %2106 = arith.addf %2080, %2104 : vector<13x256xf32>
      %c27 = arith.constant 27 : index
      %c0_941 = arith.constant 0 : index
      %c0_942 = arith.constant 0 : index
      %2107 = vector.load %arg1[%c27, %c0_941, %c0_942] : memref<28x14x256xf32, #tpu.memory_space<vmem>>, vector<1x13x256xf32>
      %2108 = vector.shape_cast %2107 : vector<1x13x256xf32> to vector<13x256xf32>
      %c27_943 = arith.constant 27 : index
      %c0_944 = arith.constant 0 : index
      %c0_945 = arith.constant 0 : index
      %2109 = vector.load %arg2[%c27_943, %c0_944, %c0_945] : memref<28x14x256xf32, #tpu.memory_space<vmem>>, vector<1x13x256xf32>
      %2110 = vector.shape_cast %2109 : vector<1x13x256xf32> to vector<13x256xf32>
      %c27_946 = arith.constant 27 : index
      %c1_947 = arith.constant 1 : index
      %c0_948 = arith.constant 0 : index
      %2111 = vector.load %arg1[%c27_946, %c1_947, %c0_948] : memref<28x14x256xf32, #tpu.memory_space<vmem>>, vector<1x13x256xf32>
      %2112 = vector.shape_cast %2111 : vector<1x13x256xf32> to vector<13x256xf32>
      %c27_949 = arith.constant 27 : index
      %c1_950 = arith.constant 1 : index
      %c0_951 = arith.constant 0 : index
      %2113 = vector.load %arg2[%c27_949, %c1_950, %c0_951] : memref<28x14x256xf32, #tpu.memory_space<vmem>>, vector<1x13x256xf32>
      %2114 = vector.shape_cast %2113 : vector<1x13x256xf32> to vector<13x256xf32>
      %2115 = vector.broadcast %35 : f32 to vector<13x256xf32>
      %2116 = arith.mulf %2115, %2108 : vector<13x256xf32>
      %2117 = vector.broadcast %39 : f32 to vector<13x256xf32>
      %2118 = arith.mulf %2117, %2110 : vector<13x256xf32>
      %2119 = arith.addf %2116, %2118 : vector<13x256xf32>
      %2120 = vector.broadcast %43 : f32 to vector<13x256xf32>
      %2121 = arith.mulf %2120, %2112 : vector<13x256xf32>
      %2122 = arith.addf %2119, %2121 : vector<13x256xf32>
      %2123 = vector.broadcast %35 : f32 to vector<13x256xf32>
      %2124 = arith.mulf %2123, %2110 : vector<13x256xf32>
      %2125 = vector.broadcast %39 : f32 to vector<13x256xf32>
      %2126 = arith.mulf %2125, %2112 : vector<13x256xf32>
      %2127 = arith.addf %2124, %2126 : vector<13x256xf32>
      %2128 = vector.broadcast %43 : f32 to vector<13x256xf32>
      %2129 = arith.mulf %2128, %2114 : vector<13x256xf32>
      %2130 = arith.addf %2127, %2129 : vector<13x256xf32>
      %2131 = arith.addf %2105, %2122 : vector<13x256xf32>
      %2132 = arith.addf %2106, %2130 : vector<13x256xf32>
      %2133 = arith.maximumf %2131, %2132 : vector<13x256xf32>
      %2134 = arith.maximumf %2056, %2133 : vector<13x256xf32>
      %2135 = vector.broadcast %47 : f32 to vector<13x256xf32>
      %2136 = arith.addf %2134, %2135 : vector<13x256xf32>
      %cst_952 = arith.constant 0.000000e+00 : f32
      %2137 = vector.broadcast %cst_952 : f32 to vector<13x256xf32>
      %2138 = arith.maximumf %2136, %2137 : vector<13x256xf32>
      %2139 = tpu.concatenate %2138, %0 in 0 : vector<13x256xf32>, vector<3x256xf32> -> vector<16x256xf32>
      %c192 = arith.constant 192 : index
      %c0_953 = arith.constant 0 : index
      %2140 = vector.load %arg7[%c192, %c0_953] : memref<208x256xf32, #tpu.memory_space<vmem>>, vector<16x256xf32>
      tpu.vector_store %arg7[%c192, %c0_953], %2139 {strides = array<i32>} : memref<208x256xf32, #tpu.memory_space<vmem>>, vector<16x256xf32>,
      %2141 = arith.index_cast %arg8 : i32 to index
      %c0_954 = arith.constant 0 : index
      %c0_955 = arith.constant 0 : index
      %2142 = vector.load %arg4[%2141, %c0_954, %c0_955] : memref<10x10x208xf32, #tpu.memory_space<vmem>>, vector<1x10x208xf32>
      %2143 = vector.shape_cast %2142 : vector<1x10x208xf32> to vector<10x208xf32>
      %c0_956 = arith.constant 0 : index
      %c0_957 = arith.constant 0 : index
      %2144 = vector.load %arg7[%c0_956, %c0_957] : memref<208x256xf32, #tpu.memory_space<vmem>>, vector<208x256xf32>
      %cst_958 = arith.constant dense<0.000000e+00> : vector<10x256xf32>
      %2145 = tpu.matmul %2143, %2144, %cst_958 {dimension_numbers = #tpu.dot_dimension_numbers<[1], [0], [0], [1], [0, 0, 1, 1], [], []>} : vector<10x208xf32>, vector<208x256xf32>, vector<10x256xf32> -> vector<10x256xf32>
      %2146 = arith.addf %arg9, %2145 : vector<10x256xf32>
      scf.yield %2146 : vector<10x256xf32>
    }
    %c10_i32_1 = arith.constant 10 : i32
    %c0 = arith.constant 0 : index
    %c0_2 = arith.constant 0 : index
    %4 = vector.load %arg5[%c0, %c0_2] : memref<10x1xf32, #tpu.memory_space<vmem>>, vector<10x1xf32>
    %5 = vector.broadcast %4 : vector<10x1xf32> to vector<10x256xf32>
    %6 = arith.addf %3, %5 : vector<10x256xf32>
    %c0_3 = arith.constant 0 : index
    %c0_4 = arith.constant 0 : index
    %7 = vector.load %arg6[%c0_3, %c0_4] : memref<10x256xf32, #tpu.memory_space<vmem>>, vector<10x256xf32>
    tpu.vector_store %arg6[%c0_3, %c0_4], %6 {strides = array<i32>} : memref<10x256xf32, #tpu.memory_space<vmem>>, vector<10x256xf32>,
    return
  }
  func.func @transform_0(%arg0: i32) -> (i32, i32, i32) {
    %c0_i32 = arith.constant 0 : i32
    %c0_i32_0 = arith.constant 0 : i32
    %c0_i32_1 = arith.constant 0 : i32
    return %c0_i32, %c0_i32_0, %arg0 : i32, i32, i32
  }
  func.func @transform_1(%arg0: i32) -> (i32, i32, i32) {
    %c0_i32 = arith.constant 0 : i32
    %c0_i32_0 = arith.constant 0 : i32
    %c0_i32_1 = arith.constant 0 : i32
    return %c0_i32, %c0_i32_0, %arg0 : i32, i32, i32
  }
  func.func @transform_2(%arg0: i32) -> i32 {
    %c0_i32 = arith.constant 0 : i32
    %c0_i32_0 = arith.constant 0 : i32
    return %c0_i32 : i32
  }
  func.func @transform_3(%arg0: i32) -> (i32, i32, i32) {
    %c0_i32 = arith.constant 0 : i32
    %c0_i32_0 = arith.constant 0 : i32
    %c0_i32_1 = arith.constant 0 : i32
    %c0_i32_2 = arith.constant 0 : i32
    return %c0_i32, %c0_i32_0, %c0_i32_1 : i32, i32, i32
  }
  func.func @transform_4(%arg0: i32) -> (i32, i32) {
    %c0_i32 = arith.constant 0 : i32
    %c0_i32_0 = arith.constant 0 : i32
    %c0_i32_1 = arith.constant 0 : i32
    return %c0_i32, %c0_i32_0 : i32, i32
  }
  func.func @transform_5(%arg0: i32) -> (i32, i32) {
    %c0_i32 = arith.constant 0 : i32
    %c0_i32_0 = arith.constant 0 : i32
    return %c0_i32, %arg0 : i32, i32
  }
}

</mosaic_0001>

<llo_original>
// kernel: simple_cnn_forward.1
$region0: #{simple_cnn_forward.1}
  #allocation0 [shape = 'u32[]', space=smem, size = 0x4, offset = 0x4, fixed_abs, tag = 'smem constant byte address 0x4 - core index']
  #allocation1 [shape = 'u32[144,128]{1,0:T(1,128)}', space=vmem, size = 0x12000, scoped, tag = 'internal scratch']
  #allocation2 [shape = 'f32[208,256]{1,0:T(8,128)}', space=vmem, size = 0x34000, scoped, tag = 'scratch operand']
  %s0 = inlined_call_operand.vmem [shape: f32[28,14,256], index: 0, kind: input, shape index: {}]
  %s1 = inlined_call_operand.vmem [shape: f32[28,14,256], index: 1, kind: input, shape index: {}]
  %s2 = inlined_call_operand.vmem [shape: f32[100], index: 2, kind: input, shape index: {}]
  %s3 = inlined_call_operand.vmem [shape: f32[10,10,208], index: 3, kind: input, shape index: {}]
  %s4 = inlined_call_operand.vmem [shape: f32[10,1], index: 4, kind: input, shape index: {}]
  %s5 = inlined_call_operand.vmem [shape: f32[10,256], index: 5, kind: output, shape index: {}]
  %s6 = sld [smem:[#allocation0]]
  $region41: #{simple_cnn_forward.1} parent=0
    _
  %s8 = ssub.s32 1, %s6
  %s9 = scalar_select 0, %s8, %s6
  $region1: #{simple_cnn_forward.1} parent=0
    #allocation3 [shape = 'u8[512]{0}', space=smem, size = 0x200, scoped, tag = 'input window, operand 2, single buffered']
    #allocation4 [shape = 's32[1]{0}', space=sflag, size = 0x4, scoped, tag = 'scoped memory for simple_cnn_forward.1']
    %10 = vsyncpa [#allocation4], 0
    // Predicated region
    $region2: #{simple_cnn_forward.1} parent=1 // pred_check
      _
    $region3: #{simple_cnn_forward.1} parent=1 // pred_check_branch
      %12 = sbr.rel (0) target = $region5
    $region4: #{simple_cnn_forward.1} parent=1 // pred_region
      _
    $region5: #{simple_cnn_forward.1} parent=1 // pred_fallthru
      _
    // Predicated region
    $region6: #{simple_cnn_forward.1} parent=1 // pred_check
      _
    $region7: #{simple_cnn_forward.1} parent=1 // pred_check_branch
      %14 = sbr.rel (0) target = $region9
    $region8: #{simple_cnn_forward.1} parent=1 // pred_region
      _
    $region9: #{simple_cnn_forward.1} parent=1 // pred_fallthru
      _
    // Predicated region
    $region10: #{simple_cnn_forward.1} parent=1 // pred_check
      _
    $region11: #{simple_cnn_forward.1} parent=1 // pred_check_branch
      %16 = sbr.rel (0) target = $region13
    $region12: #{simple_cnn_forward.1} parent=1 // pred_region
      %s18 = ssub.s32 16, 16
      %19 = vsyncadd [#allocation4], %s18
      %s21 = sshll.u32 %s2, 4
      %s22 = int_to_ptr.vmem [resolvable:$true] %s21
      %24 = dma.vmem_to_smem %s22, 16, [#allocation3], [#allocation4]
    $region13: #{simple_cnn_forward.1} parent=1 // pred_fallthru
      _
    // Predicated region
    $region14: #{simple_cnn_forward.1} parent=1 // pred_check
      _
    $region15: #{simple_cnn_forward.1} parent=1 // pred_check_branch
      %26 = sbr.rel (0) target = $region17
    $region16: #{simple_cnn_forward.1} parent=1 // pred_region
      _
    $region17: #{simple_cnn_forward.1} parent=1 // pred_fallthru
      _
    // Predicated region
    $region18: #{simple_cnn_forward.1} parent=1 // pred_check
      _
    $region19: #{simple_cnn_forward.1} parent=1 // pred_check_branch
      %28 = sbr.rel (0) target = $region21
    $region20: #{simple_cnn_forward.1} parent=1 // pred_region
      _
    $region21: #{simple_cnn_forward.1} parent=1 // pred_fallthru
      _
    // Predicated region
    $region22: #{simple_cnn_forward.1} parent=1 // pred_check
      _
    $region23: #{simple_cnn_forward.1} parent=1 // pred_check_branch
      %30 = sbr.rel (0) target = $region25
    $region24: #{simple_cnn_forward.1} parent=1 // pred_region
      %31 = dma.done [#allocation4], 16
    $region25: #{simple_cnn_forward.1} parent=1 // pred_fallthru
      _
    %32 = sfence
    loop: start=0, step=1, limit=10
    $region26: #{simple_cnn_forward.1} parent=1 // loop_pre_header
      _
    $region27: #{simple_cnn_forward.1} parent=1 // loop_header
      %s34 = sphi 0, %s38
      %p35 = scmp.ge.s32.totalorder %s34, 10
      %v39 = vphi 0.0, %v8254
      %v40 = vphi 0.0, %v8255
      %v41 = vphi 0.0, %v8256
      %v42 = vphi 0.0, %v8257
    $region28: #{simple_cnn_forward.1} parent=1 // loop_header_branch
      %37 = sbr.rel (%p35) target = $region32
    $region29: #{simple_cnn_forward.1} parent=1 // loop_body
      %s43 = smul.u32 %s34, 10
      %s44 = sld [smem:[#allocation3 + %s43]]
      %s45 = sadd.s32 %s43, 1
      %s46 = sld [smem:[#allocation3 + %s45]]
      %s47 = sadd.s32 %s43, 2
      %s48 = sld [smem:[#allocation3 + %s47]]
      %s49 = sadd.s32 %s43, 3
      %s50 = sld [smem:[#allocation3 + %s49]]
      %s51 = sadd.s32 %s43, 4
      %s52 = sld [smem:[#allocation3 + %s51]]
      %s53 = sadd.s32 %s43, 5
      %s54 = sld [smem:[#allocation3 + %s53]]
      %s55 = sadd.s32 %s43, 6
      %s56 = sld [smem:[#allocation3 + %s55]]
      %s57 = sadd.s32 %s43, 7
      %s58 = sld [smem:[#allocation3 + %s57]]
      %s59 = sadd.s32 %s43, 8
      %s60 = sld [smem:[#allocation3 + %s59]]
      %s61 = sadd.s32 %s43, 9
      %s62 = sld [smem:[#allocation3 + %s61]]
      %v63 = vld [vmem:[%s0] sm:$0xff]
      %v64 = vld [vmem:[%s0 + $0x8] sm:$0xff]
      %v65 = vld [vmem:[%s0 + $0x10] sm:$0x1f]
      %v66 = vld [vmem:[%s0 + $0x18] sm:$0x1f]
      %v67 = vld [vmem:[%s1] sm:$0xff]
      %v68 = vld [vmem:[%s1 + $0x8] sm:$0xff]
      %v69 = vld [vmem:[%s1 + $0x10] sm:$0x1f]
      %v70 = vld [vmem:[%s1 + $0x18] sm:$0x1f]
      %v71 = vld [vmem:[%s0] sm:$0xfe]
      %v72 = vld [vmem:[%s0 + $0x8] sm:$0xfe]
      %v73 = vld [vmem:[%s0 + $0x10] sm:$0x3f]
      %v74 = vld [vmem:[%s0 + $0x18] sm:$0x3f]
      %v75 = vld [vmem:[%s1] sm:$0xfe]
      %v76 = vld [vmem:[%s1 + $0x8] sm:$0xfe]
      %v77 = vld [vmem:[%s1 + $0x10] sm:$0x3f]
      %v78 = vld [vmem:[%s1 + $0x18] sm:$0x3f]
      %v79 = vstv %s44
      %v80 = vmul.f32 %v79, %v63
      %v81 = vmul.f32 %v79, %v64
      %v82 = vmul.f32 %v79, %v65
      %v83 = vmul.f32 %v79, %v66
      %v84 = vstv %s46
      %v85 = vmul.f32 %v84, %v67
      %v86 = vmul.f32 %v84, %v68
      %v87 = vmul.f32 %v84, %v69
      %v88 = vmul.f32 %v84, %v70
      %v89 = vadd.f32 %v80, %v85
      %v90 = vadd.f32 %v81, %v86
      %v91 = vadd.f32 %v82, %v87
      %v92 = vadd.f32 %v83, %v88
      %v93 = vstv %s48
      %v94 = vmul.f32 %v93, %v71
      %v95 = vmul.f32 %v93, %v72
      %v96 = vmul.f32 %v93, %v73
      %v97 = vmul.f32 %v93, %v74
      %vm102 = vcmask 1046528
      %v103 = vrot.slane %v94, 1
      %v104 = vrot.slane %v96, 1
      %v105 = vsel %vm102, %v103, %v104
      %v106 = vrot.slane %v95, 1
      %v107 = vrot.slane %v97, 1
      %v108 = vsel %vm102, %v106, %v107
      %v113 = vadd.f32 %v89, %v105
      %v114 = vadd.f32 %v90, %v108
      %v115 = vadd.f32 %v91, %v104
      %v116 = vadd.f32 %v92, %v107
      %v117 = vmul.f32 %v79, %v67
      %v118 = vmul.f32 %v79, %v68
      %v119 = vmul.f32 %v79, %v69
      %v120 = vmul.f32 %v79, %v70
      %v121 = vmul.f32 %v84, %v71
      %v122 = vmul.f32 %v84, %v72
      %v123 = vmul.f32 %v84, %v73
      %v124 = vmul.f32 %v84, %v74
      %v129 = vrot.slane %v121, 1
      %v130 = vrot.slane %v123, 1
      %v131 = vsel %vm102, %v129, %v130
      %v132 = vrot.slane %v122, 1
      %v133 = vrot.slane %v124, 1
      %v134 = vsel %vm102, %v132, %v133
      %v139 = vadd.f32 %v117, %v131
      %v140 = vadd.f32 %v118, %v134
      %v141 = vadd.f32 %v119, %v130
      %v142 = vadd.f32 %v120, %v133
      %v143 = vmul.f32 %v93, %v75
      %v144 = vmul.f32 %v93, %v76
      %v145 = vmul.f32 %v93, %v77
      %v146 = vmul.f32 %v93, %v78
      %v151 = vrot.slane %v143, 1
      %v152 = vrot.slane %v145, 1
      %v153 = vsel %vm102, %v151, %v152
      %v154 = vrot.slane %v144, 1
      %v155 = vrot.slane %v146, 1
      %v156 = vsel %vm102, %v154, %v155
      %v161 = vadd.f32 %v139, %v153
      %v162 = vadd.f32 %v140, %v156
      %v163 = vadd.f32 %v141, %v152
      %v164 = vadd.f32 %v142, %v155
      %s165 = scalar_lea.vmem %s0, 32
      %v166 = vld [vmem:[%s165] sm:$0xff]
      %v167 = vld [vmem:[%s165 + $0x8] sm:$0xff]
      %v168 = vld [vmem:[%s165 + $0x10] sm:$0x1f]
      %v169 = vld [vmem:[%s165 + $0x18] sm:$0x1f]
      %s170 = scalar_lea.vmem %s1, 32
      %v171 = vld [vmem:[%s170] sm:$0xff]
      %v172 = vld [vmem:[%s170 + $0x8] sm:$0xff]
      %v173 = vld [vmem:[%s170 + $0x10] sm:$0x1f]
      %v174 = vld [vmem:[%s170 + $0x18] sm:$0x1f]
      %v175 = vld [vmem:[%s165] sm:$0xfe]
      %v176 = vld [vmem:[%s165 + $0x8] sm:$0xfe]
      %v177 = vld [vmem:[%s165 + $0x10] sm:$0x3f]
      %v178 = vld [vmem:[%s165 + $0x18] sm:$0x3f]
      %v179 = vld [vmem:[%s170] sm:$0xfe]
      %v180 = vld [vmem:[%s170 + $0x8] sm:$0xfe]
      %v181 = vld [vmem:[%s170 + $0x10] sm:$0x3f]
      %v182 = vld [vmem:[%s170 + $0x18] sm:$0x3f]
      %v183 = vstv %s50
      %v184 = vmul.f32 %v183, %v166
      %v185 = vmul.f32 %v183, %v167
      %v186 = vmul.f32 %v183, %v168
      %v187 = vmul.f32 %v183, %v169
      %v188 = vstv %s52
      %v189 = vmul.f32 %v188, %v171
      %v190 = vmul.f32 %v188, %v172
      %v191 = vmul.f32 %v188, %v173
      %v192 = vmul.f32 %v188, %v174
      %v193 = vadd.f32 %v184, %v189
      %v194 = vadd.f32 %v185, %v190
      %v195 = vadd.f32 %v186, %v191
      %v196 = vadd.f32 %v187, %v192
      %v197 = vstv %s54
      %v198 = vmul.f32 %v197, %v175
      %v199 = vmul.f32 %v197, %v176
      %v200 = vmul.f32 %v197, %v177
      %v201 = vmul.f32 %v197, %v178
      %v206 = vrot.slane %v198, 1
      %v207 = vrot.slane %v200, 1
      %v208 = vsel %vm102, %v206, %v207
      %v209 = vrot.slane %v199, 1
      %v210 = vrot.slane %v201, 1
      %v211 = vsel %vm102, %v209, %v210
      %v216 = vadd.f32 %v193, %v208
      %v217 = vadd.f32 %v194, %v211
      %v218 = vadd.f32 %v195, %v207
      %v219 = vadd.f32 %v196, %v210
      %v220 = vmul.f32 %v183, %v171
      %v221 = vmul.f32 %v183, %v172
      %v222 = vmul.f32 %v183, %v173
      %v223 = vmul.f32 %v183, %v174
      %v224 = vmul.f32 %v188, %v175
      %v225 = vmul.f32 %v188, %v176
      %v226 = vmul.f32 %v188, %v177
      %v227 = vmul.f32 %v188, %v178
      %v232 = vrot.slane %v224, 1
      %v233 = vrot.slane %v226, 1
      %v234 = vsel %vm102, %v232, %v233
      %v235 = vrot.slane %v225, 1
      %v236 = vrot.slane %v227, 1
      %v237 = vsel %vm102, %v235, %v236
      %v242 = vadd.f32 %v220, %v234
      %v243 = vadd.f32 %v221, %v237
      %v244 = vadd.f32 %v222, %v233
      %v245 = vadd.f32 %v223, %v236
      %v246 = vmul.f32 %v197, %v179
      %v247 = vmul.f32 %v197, %v180
      %v248 = vmul.f32 %v197, %v181
      %v249 = vmul.f32 %v197, %v182
      %v254 = vrot.slane %v246, 1
      %v255 = vrot.slane %v248, 1
      %v256 = vsel %vm102, %v254, %v255
      %v257 = vrot.slane %v247, 1
      %v258 = vrot.slane %v249, 1
      %v259 = vsel %vm102, %v257, %v258
      %v264 = vadd.f32 %v242, %v256
      %v265 = vadd.f32 %v243, %v259
      %v266 = vadd.f32 %v244, %v255
      %v267 = vadd.f32 %v245, %v258
      %v268 = vadd.f32 %v113, %v216
      %v269 = vadd.f32 %v114, %v217
      %v270 = vadd.f32 %v115, %v218
      %v271 = vadd.f32 %v116, %v219
      %v272 = vadd.f32 %v161, %v264
      %v273 = vadd.f32 %v162, %v265
      %v274 = vadd.f32 %v163, %v266
      %v275 = vadd.f32 %v164, %v267
      %s276 = scalar_lea.vmem %s0, 64
      %v277 = vld [vmem:[%s276] sm:$0xff]
      %v278 = vld [vmem:[%s276 + $0x8] sm:$0xff]
      %v279 = vld [vmem:[%s276 + $0x10] sm:$0x1f]
      %v280 = vld [vmem:[%s276 + $0x18] sm:$0x1f]
      %s281 = scalar_lea.vmem %s1, 64
      %v282 = vld [vmem:[%s281] sm:$0xff]
      %v283 = vld [vmem:[%s281 + $0x8] sm:$0xff]
      %v284 = vld [vmem:[%s281 + $0x10] sm:$0x1f]
      %v285 = vld [vmem:[%s281 + $0x18] sm:$0x1f]
      %v286 = vld [vmem:[%s276] sm:$0xfe]
      %v287 = vld [vmem:[%s276 + $0x8] sm:$0xfe]
      %v288 = vld [vmem:[%s276 + $0x10] sm:$0x3f]
      %v289 = vld [vmem:[%s276 + $0x18] sm:$0x3f]
      %v290 = vld [vmem:[%s281] sm:$0xfe]
      %v291 = vld [vmem:[%s281 + $0x8] sm:$0xfe]
      %v292 = vld [vmem:[%s281 + $0x10] sm:$0x3f]
      %v293 = vld [vmem:[%s281 + $0x18] sm:$0x3f]
      %v294 = vstv %s56
      %v295 = vmul.f32 %v294, %v277
      %v296 = vmul.f32 %v294, %v278
      %v297 = vmul.f32 %v294, %v279
      %v298 = vmul.f32 %v294, %v280
      %v299 = vstv %s58
      %v300 = vmul.f32 %v299, %v282
      %v301 = vmul.f32 %v299, %v283
      %v302 = vmul.f32 %v299, %v284
      %v303 = vmul.f32 %v299, %v285
      %v304 = vadd.f32 %v295, %v300
      %v305 = vadd.f32 %v296, %v301
      %v306 = vadd.f32 %v297, %v302
      %v307 = vadd.f32 %v298, %v303
      %v308 = vstv %s60
      %v309 = vmul.f32 %v308, %v286
      %v310 = vmul.f32 %v308, %v287
      %v311 = vmul.f32 %v308, %v288
      %v312 = vmul.f32 %v308, %v289
      %v317 = vrot.slane %v309, 1
      %v318 = vrot.slane %v311, 1
      %v319 = vsel %vm102, %v317, %v318
      %v320 = vrot.slane %v310, 1
      %v321 = vrot.slane %v312, 1
      %v322 = vsel %vm102, %v320, %v321
      %v327 = vadd.f32 %v304, %v319
      %v328 = vadd.f32 %v305, %v322
      %v329 = vadd.f32 %v306, %v318
      %v330 = vadd.f32 %v307, %v321
      %v331 = vmul.f32 %v294, %v282
      %v332 = vmul.f32 %v294, %v283
      %v333 = vmul.f32 %v294, %v284
      %v334 = vmul.f32 %v294, %v285
      %v335 = vmul.f32 %v299, %v286
      %v336 = vmul.f32 %v299, %v287
      %v337 = vmul.f32 %v299, %v288
      %v338 = vmul.f32 %v299, %v289
      %v343 = vrot.slane %v335, 1
      %v344 = vrot.slane %v337, 1
      %v345 = vsel %vm102, %v343, %v344
      %v346 = vrot.slane %v336, 1
      %v347 = vrot.slane %v338, 1
      %v348 = vsel %vm102, %v346, %v347
      %v353 = vadd.f32 %v331, %v345
      %v354 = vadd.f32 %v332, %v348
      %v355 = vadd.f32 %v333, %v344
      %v356 = vadd.f32 %v334, %v347
      %v357 = vmul.f32 %v308, %v290
      %v358 = vmul.f32 %v308, %v291
      %v359 = vmul.f32 %v308, %v292
      %v360 = vmul.f32 %v308, %v293
      %v365 = vrot.slane %v357, 1
      %v366 = vrot.slane %v359, 1
      %v367 = vsel %vm102, %v365, %v366
      %v368 = vrot.slane %v358, 1
      %v369 = vrot.slane %v360, 1
      %v370 = vsel %vm102, %v368, %v369
      %v375 = vadd.f32 %v353, %v367
      %v376 = vadd.f32 %v354, %v370
      %v377 = vadd.f32 %v355, %v366
      %v378 = vadd.f32 %v356, %v369
      %v379 = vadd.f32 %v268, %v327
      %v380 = vadd.f32 %v269, %v328
      %v381 = vadd.f32 %v270, %v329
      %v382 = vadd.f32 %v271, %v330
      %v383 = vadd.f32 %v272, %v375
      %v384 = vadd.f32 %v273, %v376
      %v385 = vadd.f32 %v274, %v377
      %v386 = vadd.f32 %v275, %v378
      %v387 = vmax.f32 %v379, %v383
      %v388 = vmax.f32 %v380, %v384
      %v389 = vmax.f32 %v381, %v385
      %v390 = vmax.f32 %v382, %v386
      %v391 = vmul.f32 %v79, %v166
      %v392 = vmul.f32 %v79, %v167
      %v393 = vmul.f32 %v79, %v168
      %v394 = vmul.f32 %v79, %v169
      %v395 = vmul.f32 %v84, %v171
      %v396 = vmul.f32 %v84, %v172
      %v397 = vmul.f32 %v84, %v173
      %v398 = vmul.f32 %v84, %v174
      %v399 = vadd.f32 %v391, %v395
      %v400 = vadd.f32 %v392, %v396
      %v401 = vadd.f32 %v393, %v397
      %v402 = vadd.f32 %v394, %v398
      %v403 = vmul.f32 %v93, %v175
      %v404 = vmul.f32 %v93, %v176
      %v405 = vmul.f32 %v93, %v177
      %v406 = vmul.f32 %v93, %v178
      %v411 = vrot.slane %v403, 1
      %v412 = vrot.slane %v405, 1
      %v413 = vsel %vm102, %v411, %v412
      %v414 = vrot.slane %v404, 1
      %v415 = vrot.slane %v406, 1
      %v416 = vsel %vm102, %v414, %v415
      %v421 = vadd.f32 %v399, %v413
      %v422 = vadd.f32 %v400, %v416
      %v423 = vadd.f32 %v401, %v412
      %v424 = vadd.f32 %v402, %v415
      %v425 = vmul.f32 %v79, %v171
      %v426 = vmul.f32 %v79, %v172
      %v427 = vmul.f32 %v79, %v173
      %v428 = vmul.f32 %v79, %v174
      %v429 = vmul.f32 %v84, %v175
      %v430 = vmul.f32 %v84, %v176
      %v431 = vmul.f32 %v84, %v177
      %v432 = vmul.f32 %v84, %v178
      %v437 = vrot.slane %v429, 1
      %v438 = vrot.slane %v431, 1
      %v439 = vsel %vm102, %v437, %v438
      %v440 = vrot.slane %v430, 1
      %v441 = vrot.slane %v432, 1
      %v442 = vsel %vm102, %v440, %v441
      %v447 = vadd.f32 %v425, %v439
      %v448 = vadd.f32 %v426, %v442
      %v449 = vadd.f32 %v427, %v438
      %v450 = vadd.f32 %v428, %v441
      %v451 = vmul.f32 %v93, %v179
      %v452 = vmul.f32 %v93, %v180
      %v453 = vmul.f32 %v93, %v181
      %v454 = vmul.f32 %v93, %v182
      %v459 = vrot.slane %v451, 1
      %v460 = vrot.slane %v453, 1
      %v461 = vsel %vm102, %v459, %v460
      %v462 = vrot.slane %v452, 1
      %v463 = vrot.slane %v454, 1
      %v464 = vsel %vm102, %v462, %v463
      %v469 = vadd.f32 %v447, %v461
      %v470 = vadd.f32 %v448, %v464
      %v471 = vadd.f32 %v449, %v460
      %v472 = vadd.f32 %v450, %v463
      %v473 = vmul.f32 %v183, %v277
      %v474 = vmul.f32 %v183, %v278
      %v475 = vmul.f32 %v183, %v279
      %v476 = vmul.f32 %v183, %v280
      %v477 = vmul.f32 %v188, %v282
      %v478 = vmul.f32 %v188, %v283
      %v479 = vmul.f32 %v188, %v284
      %v480 = vmul.f32 %v188, %v285
      %v481 = vadd.f32 %v473, %v477
      %v482 = vadd.f32 %v474, %v478
      %v483 = vadd.f32 %v475, %v479
      %v484 = vadd.f32 %v476, %v480
      %v485 = vmul.f32 %v197, %v286
      %v486 = vmul.f32 %v197, %v287
      %v487 = vmul.f32 %v197, %v288
      %v488 = vmul.f32 %v197, %v289
      %v493 = vrot.slane %v485, 1
      %v494 = vrot.slane %v487, 1
      %v495 = vsel %vm102, %v493, %v494
      %v496 = vrot.slane %v486, 1
      %v497 = vrot.slane %v488, 1
      %v498 = vsel %vm102, %v496, %v497
      %v503 = vadd.f32 %v481, %v495
      %v504 = vadd.f32 %v482, %v498
      %v505 = vadd.f32 %v483, %v494
      %v506 = vadd.f32 %v484, %v497
      %v507 = vmul.f32 %v183, %v282
      %v508 = vmul.f32 %v183, %v283
      %v509 = vmul.f32 %v183, %v284
      %v510 = vmul.f32 %v183, %v285
      %v511 = vmul.f32 %v188, %v286
      %v512 = vmul.f32 %v188, %v287
      %v513 = vmul.f32 %v188, %v288
      %v514 = vmul.f32 %v188, %v289
      %v519 = vrot.slane %v511, 1
      %v520 = vrot.slane %v513, 1
      %v521 = vsel %vm102, %v519, %v520
      %v522 = vrot.slane %v512, 1
      %v523 = vrot.slane %v514, 1
      %v524 = vsel %vm102, %v522, %v523
      %v529 = vadd.f32 %v507, %v521
      %v530 = vadd.f32 %v508, %v524
      %v531 = vadd.f32 %v509, %v520
      %v532 = vadd.f32 %v510, %v523
      %v533 = vmul.f32 %v197, %v290
      %v534 = vmul.f32 %v197, %v291
      %v535 = vmul.f32 %v197, %v292
      %v536 = vmul.f32 %v197, %v293
      %v541 = vrot.slane %v533, 1
      %v542 = vrot.slane %v535, 1
      %v543 = vsel %vm102, %v541, %v542
      %v544 = vrot.slane %v534, 1
      %v545 = vrot.slane %v536, 1
      %v546 = vsel %vm102, %v544, %v545
      %v551 = vadd.f32 %v529, %v543
      %v552 = vadd.f32 %v530, %v546
      %v553 = vadd.f32 %v531, %v542
      %v554 = vadd.f32 %v532, %v545
      %v555 = vadd.f32 %v421, %v503
      %v556 = vadd.f32 %v422, %v504
      %v557 = vadd.f32 %v423, %v505
      %v558 = vadd.f32 %v424, %v506
      %v559 = vadd.f32 %v469, %v551
      %v560 = vadd.f32 %v470, %v552
      %v561 = vadd.f32 %v471, %v553
      %v562 = vadd.f32 %v472, %v554
      %s563 = scalar_lea.vmem %s0, 96
      %v564 = vld [vmem:[%s563] sm:$0xff]
      %v565 = vld [vmem:[%s563 + $0x8] sm:$0xff]
      %v566 = vld [vmem:[%s563 + $0x10] sm:$0x1f]
      %v567 = vld [vmem:[%s563 + $0x18] sm:$0x1f]
      %s568 = scalar_lea.vmem %s1, 96
      %v569 = vld [vmem:[%s568] sm:$0xff]
      %v570 = vld [vmem:[%s568 + $0x8] sm:$0xff]
      %v571 = vld [vmem:[%s568 + $0x10] sm:$0x1f]
      %v572 = vld [vmem:[%s568 + $0x18] sm:$0x1f]
      %v573 = vld [vmem:[%s563] sm:$0xfe]
      %v574 = vld [vmem:[%s563 + $0x8] sm:$0xfe]
      %v575 = vld [vmem:[%s563 + $0x10] sm:$0x3f]
      %v576 = vld [vmem:[%s563 + $0x18] sm:$0x3f]
      %v577 = vld [vmem:[%s568] sm:$0xfe]
      %v578 = vld [vmem:[%s568 + $0x8] sm:$0xfe]
      %v579 = vld [vmem:[%s568 + $0x10] sm:$0x3f]
      %v580 = vld [vmem:[%s568 + $0x18] sm:$0x3f]
      %v581 = vmul.f32 %v294, %v564
      %v582 = vmul.f32 %v294, %v565
      %v583 = vmul.f32 %v294, %v566
      %v584 = vmul.f32 %v294, %v567
      %v585 = vmul.f32 %v299, %v569
      %v586 = vmul.f32 %v299, %v570
      %v587 = vmul.f32 %v299, %v571
      %v588 = vmul.f32 %v299, %v572
      %v589 = vadd.f32 %v581, %v585
      %v590 = vadd.f32 %v582, %v586
      %v591 = vadd.f32 %v583, %v587
      %v592 = vadd.f32 %v584, %v588
      %v593 = vmul.f32 %v308, %v573
      %v594 = vmul.f32 %v308, %v574
      %v595 = vmul.f32 %v308, %v575
      %v596 = vmul.f32 %v308, %v576
      %v601 = vrot.slane %v593, 1
      %v602 = vrot.slane %v595, 1
      %v603 = vsel %vm102, %v601, %v602
      %v604 = vrot.slane %v594, 1
      %v605 = vrot.slane %v596, 1
      %v606 = vsel %vm102, %v604, %v605
      %v611 = vadd.f32 %v589, %v603
      %v612 = vadd.f32 %v590, %v606
      %v613 = vadd.f32 %v591, %v602
      %v614 = vadd.f32 %v592, %v605
      %v615 = vmul.f32 %v294, %v569
      %v616 = vmul.f32 %v294, %v570
      %v617 = vmul.f32 %v294, %v571
      %v618 = vmul.f32 %v294, %v572
      %v619 = vmul.f32 %v299, %v573
      %v620 = vmul.f32 %v299, %v574
      %v621 = vmul.f32 %v299, %v575
      %v622 = vmul.f32 %v299, %v576
      %v627 = vrot.slane %v619, 1
      %v628 = vrot.slane %v621, 1
      %v629 = vsel %vm102, %v627, %v628
      %v630 = vrot.slane %v620, 1
      %v631 = vrot.slane %v622, 1
      %v632 = vsel %vm102, %v630, %v631
      %v637 = vadd.f32 %v615, %v629
      %v638 = vadd.f32 %v616, %v632
      %v639 = vadd.f32 %v617, %v628
      %v640 = vadd.f32 %v618, %v631
      %v641 = vmul.f32 %v308, %v577
      %v642 = vmul.f32 %v308, %v578
      %v643 = vmul.f32 %v308, %v579
      %v644 = vmul.f32 %v308, %v580
      %v649 = vrot.slane %v641, 1
      %v650 = vrot.slane %v643, 1
      %v651 = vsel %vm102, %v649, %v650
      %v652 = vrot.slane %v642, 1
      %v653 = vrot.slane %v644, 1
      %v654 = vsel %vm102, %v652, %v653
      %v659 = vadd.f32 %v637, %v651
      %v660 = vadd.f32 %v638, %v654
      %v661 = vadd.f32 %v639, %v650
      %v662 = vadd.f32 %v640, %v653
      %v663 = vadd.f32 %v555, %v611
      %v664 = vadd.f32 %v556, %v612
      %v665 = vadd.f32 %v557, %v613
      %v666 = vadd.f32 %v558, %v614
      %v667 = vadd.f32 %v559, %v659
      %v668 = vadd.f32 %v560, %v660
      %v669 = vadd.f32 %v561, %v661
      %v670 = vadd.f32 %v562, %v662
      %v671 = vmax.f32 %v663, %v667
      %v672 = vmax.f32 %v664, %v668
      %v673 = vmax.f32 %v665, %v669
      %v674 = vmax.f32 %v666, %v670
      %v675 = vmax.f32 %v387, %v671
      %v676 = vmax.f32 %v388, %v672
      %v677 = vmax.f32 %v389, %v673
      %v678 = vmax.f32 %v390, %v674
      %v679 = vstv %s62
      %v680 = vadd.f32 %v675, %v679
      %v681 = vadd.f32 %v676, %v679
      %v682 = vadd.f32 %v677, %v679
      %v683 = vadd.f32 %v678, %v679
      %v684 = vmax.f32 %v680, 0.0
      %v685 = vmax.f32 %v681, 0.0
      %v686 = vmax.f32 %v682, 0.0
      %v687 = vmax.f32 %v683, 0.0
      %vm688 = vcmask 1044480
      %v689 = vsel %vm688, %v686, 0.0
      %v690 = vsel %vm688, %v687, 0.0
      %691 = vst [vmem:[#allocation2] sm:$0xff] %v684
      %692 = vst [vmem:[#allocation2 + $0x8] sm:$0xff] %v685
      %693 = vst [vmem:[#allocation2 + $0x10] sm:$0xff] %v689
      %694 = vst [vmem:[#allocation2 + $0x18] sm:$0xff] %v690
      %v695 = vld [vmem:[%s276] sm:$0xff]
      %v696 = vld [vmem:[%s276 + $0x8] sm:$0xff]
      %v697 = vld [vmem:[%s276 + $0x10] sm:$0x1f]
      %v698 = vld [vmem:[%s276 + $0x18] sm:$0x1f]
      %v699 = vld [vmem:[%s281] sm:$0xff]
      %v700 = vld [vmem:[%s281 + $0x8] sm:$0xff]
      %v701 = vld [vmem:[%s281 + $0x10] sm:$0x1f]
      %v702 = vld [vmem:[%s281 + $0x18] sm:$0x1f]
      %v703 = vld [vmem:[%s276] sm:$0xfe]
      %v704 = vld [vmem:[%s276 + $0x8] sm:$0xfe]
      %v705 = vld [vmem:[%s276 + $0x10] sm:$0x3f]
      %v706 = vld [vmem:[%s276 + $0x18] sm:$0x3f]
      %v707 = vld [vmem:[%s281] sm:$0xfe]
      %v708 = vld [vmem:[%s281 + $0x8] sm:$0xfe]
      %v709 = vld [vmem:[%s281 + $0x10] sm:$0x3f]
      %v710 = vld [vmem:[%s281 + $0x18] sm:$0x3f]
      %v711 = vmul.f32 %v79, %v695
      %v712 = vmul.f32 %v79, %v696
      %v713 = vmul.f32 %v79, %v697
      %v714 = vmul.f32 %v79, %v698
      %v715 = vmul.f32 %v84, %v699
      %v716 = vmul.f32 %v84, %v700
      %v717 = vmul.f32 %v84, %v701
      %v718 = vmul.f32 %v84, %v702
      %v719 = vadd.f32 %v711, %v715
      %v720 = vadd.f32 %v712, %v716
      %v721 = vadd.f32 %v713, %v717
      %v722 = vadd.f32 %v714, %v718
      %v723 = vmul.f32 %v93, %v703
      %v724 = vmul.f32 %v93, %v704
      %v725 = vmul.f32 %v93, %v705
      %v726 = vmul.f32 %v93, %v706
      %v731 = vrot.slane %v723, 1
      %v732 = vrot.slane %v725, 1
      %v733 = vsel %vm102, %v731, %v732
      %v734 = vrot.slane %v724, 1
      %v735 = vrot.slane %v726, 1
      %v736 = vsel %vm102, %v734, %v735
      %v741 = vadd.f32 %v719, %v733
      %v742 = vadd.f32 %v720, %v736
      %v743 = vadd.f32 %v721, %v732
      %v744 = vadd.f32 %v722, %v735
      %v745 = vmul.f32 %v79, %v699
      %v746 = vmul.f32 %v79, %v700
      %v747 = vmul.f32 %v79, %v701
      %v748 = vmul.f32 %v79, %v702
      %v749 = vmul.f32 %v84, %v703
      %v750 = vmul.f32 %v84, %v704
      %v751 = vmul.f32 %v84, %v705
      %v752 = vmul.f32 %v84, %v706
      %v757 = vrot.slane %v749, 1
      %v758 = vrot.slane %v751, 1
      %v759 = vsel %vm102, %v757, %v758
      %v760 = vrot.slane %v750, 1
      %v761 = vrot.slane %v752, 1
      %v762 = vsel %vm102, %v760, %v761
      %v767 = vadd.f32 %v745, %v759
      %v768 = vadd.f32 %v746, %v762
      %v769 = vadd.f32 %v747, %v758
      %v770 = vadd.f32 %v748, %v761
      %v771 = vmul.f32 %v93, %v707
      %v772 = vmul.f32 %v93, %v708
      %v773 = vmul.f32 %v93, %v709
      %v774 = vmul.f32 %v93, %v710
      %v779 = vrot.slane %v771, 1
      %v780 = vrot.slane %v773, 1
      %v781 = vsel %vm102, %v779, %v780
      %v782 = vrot.slane %v772, 1
      %v783 = vrot.slane %v774, 1
      %v784 = vsel %vm102, %v782, %v783
      %v789 = vadd.f32 %v767, %v781
      %v790 = vadd.f32 %v768, %v784
      %v791 = vadd.f32 %v769, %v780
      %v792 = vadd.f32 %v770, %v783
      %v793 = vld [vmem:[%s563] sm:$0xff]
      %v794 = vld [vmem:[%s563 + $0x8] sm:$0xff]
      %v795 = vld [vmem:[%s563 + $0x10] sm:$0x1f]
      %v796 = vld [vmem:[%s563 + $0x18] sm:$0x1f]
      %v797 = vld [vmem:[%s568] sm:$0xff]
      %v798 = vld [vmem:[%s568 + $0x8] sm:$0xff]
      %v799 = vld [vmem:[%s568 + $0x10] sm:$0x1f]
      %v800 = vld [vmem:[%s568 + $0x18] sm:$0x1f]
      %v801 = vld [vmem:[%s563] sm:$0xfe]
      %v802 = vld [vmem:[%s563 + $0x8] sm:$0xfe]
      %v803 = vld [vmem:[%s563 + $0x10] sm:$0x3f]
      %v804 = vld [vmem:[%s563 + $0x18] sm:$0x3f]
      %v805 = vld [vmem:[%s568] sm:$0xfe]
      %v806 = vld [vmem:[%s568 + $0x8] sm:$0xfe]
      %v807 = vld [vmem:[%s568 + $0x10] sm:$0x3f]
      %v808 = vld [vmem:[%s568 + $0x18] sm:$0x3f]
      %v809 = vmul.f32 %v183, %v793
      %v810 = vmul.f32 %v183, %v794
      %v811 = vmul.f32 %v183, %v795
      %v812 = vmul.f32 %v183, %v796
      %v813 = vmul.f32 %v188, %v797
      %v814 = vmul.f32 %v188, %v798
      %v815 = vmul.f32 %v188, %v799
      %v816 = vmul.f32 %v188, %v800
      %v817 = vadd.f32 %v809, %v813
      %v818 = vadd.f32 %v810, %v814
      %v819 = vadd.f32 %v811, %v815
      %v820 = vadd.f32 %v812, %v816
      %v821 = vmul.f32 %v197, %v801
      %v822 = vmul.f32 %v197, %v802
      %v823 = vmul.f32 %v197, %v803
      %v824 = vmul.f32 %v197, %v804
      %v829 = vrot.slane %v821, 1
      %v830 = vrot.slane %v823, 1
      %v831 = vsel %vm102, %v829, %v830
      %v832 = vrot.slane %v822, 1
      %v833 = vrot.slane %v824, 1
      %v834 = vsel %vm102, %v832, %v833
      %v839 = vadd.f32 %v817, %v831
      %v840 = vadd.f32 %v818, %v834
      %v841 = vadd.f32 %v819, %v830
      %v842 = vadd.f32 %v820, %v833
      %v843 = vmul.f32 %v183, %v797
      %v844 = vmul.f32 %v183, %v798
      %v845 = vmul.f32 %v183, %v799
      %v846 = vmul.f32 %v183, %v800
      %v847 = vmul.f32 %v188, %v801
      %v848 = vmul.f32 %v188, %v802
      %v849 = vmul.f32 %v188, %v803
      %v850 = vmul.f32 %v188, %v804
      %v855 = vrot.slane %v847, 1
      %v856 = vrot.slane %v849, 1
      %v857 = vsel %vm102, %v855, %v856
      %v858 = vrot.slane %v848, 1
      %v859 = vrot.slane %v850, 1
      %v860 = vsel %vm102, %v858, %v859
      %v865 = vadd.f32 %v843, %v857
      %v866 = vadd.f32 %v844, %v860
      %v867 = vadd.f32 %v845, %v856
      %v868 = vadd.f32 %v846, %v859
      %v869 = vmul.f32 %v197, %v805
      %v870 = vmul.f32 %v197, %v806
      %v871 = vmul.f32 %v197, %v807
      %v872 = vmul.f32 %v197, %v808
      %v877 = vrot.slane %v869, 1
      %v878 = vrot.slane %v871, 1
      %v879 = vsel %vm102, %v877, %v878
      %v880 = vrot.slane %v870, 1
      %v881 = vrot.slane %v872, 1
      %v882 = vsel %vm102, %v880, %v881
      %v887 = vadd.f32 %v865, %v879
      %v888 = vadd.f32 %v866, %v882
      %v889 = vadd.f32 %v867, %v878
      %v890 = vadd.f32 %v868, %v881
      %v891 = vadd.f32 %v741, %v839
      %v892 = vadd.f32 %v742, %v840
      %v893 = vadd.f32 %v743, %v841
      %v894 = vadd.f32 %v744, %v842
      %v895 = vadd.f32 %v789, %v887
      %v896 = vadd.f32 %v790, %v888
      %v897 = vadd.f32 %v791, %v889
      %v898 = vadd.f32 %v792, %v890
      %s899 = scalar_lea.vmem %s0, 128
      %v900 = vld [vmem:[%s899] sm:$0xff]
      %v901 = vld [vmem:[%s899 + $0x8] sm:$0xff]
      %v902 = vld [vmem:[%s899 + $0x10] sm:$0x1f]
      %v903 = vld [vmem:[%s899 + $0x18] sm:$0x1f]
      %s904 = scalar_lea.vmem %s1, 128
      %v905 = vld [vmem:[%s904] sm:$0xff]
      %v906 = vld [vmem:[%s904 + $0x8] sm:$0xff]
      %v907 = vld [vmem:[%s904 + $0x10] sm:$0x1f]
      %v908 = vld [vmem:[%s904 + $0x18] sm:$0x1f]
      %v909 = vld [vmem:[%s899] sm:$0xfe]
      %v910 = vld [vmem:[%s899 + $0x8] sm:$0xfe]
      %v911 = vld [vmem:[%s899 + $0x10] sm:$0x3f]
      %v912 = vld [vmem:[%s899 + $0x18] sm:$0x3f]
      %v913 = vld [vmem:[%s904] sm:$0xfe]
      %v914 = vld [vmem:[%s904 + $0x8] sm:$0xfe]
      %v915 = vld [vmem:[%s904 + $0x10] sm:$0x3f]
      %v916 = vld [vmem:[%s904 + $0x18] sm:$0x3f]
      %v917 = vmul.f32 %v294, %v900
      %v918 = vmul.f32 %v294, %v901
      %v919 = vmul.f32 %v294, %v902
      %v920 = vmul.f32 %v294, %v903
      %v921 = vmul.f32 %v299, %v905
      %v922 = vmul.f32 %v299, %v906
      %v923 = vmul.f32 %v299, %v907
      %v924 = vmul.f32 %v299, %v908
      %v925 = vadd.f32 %v917, %v921
      %v926 = vadd.f32 %v918, %v922
      %v927 = vadd.f32 %v919, %v923
      %v928 = vadd.f32 %v920, %v924
      %v929 = vmul.f32 %v308, %v909
      %v930 = vmul.f32 %v308, %v910
      %v931 = vmul.f32 %v308, %v911
      %v932 = vmul.f32 %v308, %v912
      %v937 = vrot.slane %v929, 1
      %v938 = vrot.slane %v931, 1
      %v939 = vsel %vm102, %v937, %v938
      %v940 = vrot.slane %v930, 1
      %v941 = vrot.slane %v932, 1
      %v942 = vsel %vm102, %v940, %v941
      %v947 = vadd.f32 %v925, %v939
      %v948 = vadd.f32 %v926, %v942
      %v949 = vadd.f32 %v927, %v938
      %v950 = vadd.f32 %v928, %v941
      %v951 = vmul.f32 %v294, %v905
      %v952 = vmul.f32 %v294, %v906
      %v953 = vmul.f32 %v294, %v907
      %v954 = vmul.f32 %v294, %v908
      %v955 = vmul.f32 %v299, %v909
      %v956 = vmul.f32 %v299, %v910
      %v957 = vmul.f32 %v299, %v911
      %v958 = vmul.f32 %v299, %v912
      %v963 = vrot.slane %v955, 1
      %v964 = vrot.slane %v957, 1
      %v965 = vsel %vm102, %v963, %v964
      %v966 = vrot.slane %v956, 1
      %v967 = vrot.slane %v958, 1
      %v968 = vsel %vm102, %v966, %v967
      %v973 = vadd.f32 %v951, %v965
      %v974 = vadd.f32 %v952, %v968
      %v975 = vadd.f32 %v953, %v964
      %v976 = vadd.f32 %v954, %v967
      %v977 = vmul.f32 %v308, %v913
      %v978 = vmul.f32 %v308, %v914
      %v979 = vmul.f32 %v308, %v915
      %v980 = vmul.f32 %v308, %v916
      %v985 = vrot.slane %v977, 1
      %v986 = vrot.slane %v979, 1
      %v987 = vsel %vm102, %v985, %v986
      %v988 = vrot.slane %v978, 1
      %v989 = vrot.slane %v980, 1
      %v990 = vsel %vm102, %v988, %v989
      %v995 = vadd.f32 %v973, %v987
      %v996 = vadd.f32 %v974, %v990
      %v997 = vadd.f32 %v975, %v986
      %v998 = vadd.f32 %v976, %v989
      %v999 = vadd.f32 %v891, %v947
      %v1000 = vadd.f32 %v892, %v948
      %v1001 = vadd.f32 %v893, %v949
      %v1002 = vadd.f32 %v894, %v950
      %v1003 = vadd.f32 %v895, %v995
      %v1004 = vadd.f32 %v896, %v996
      %v1005 = vadd.f32 %v897, %v997
      %v1006 = vadd.f32 %v898, %v998
      %v1007 = vmax.f32 %v999, %v1003
      %v1008 = vmax.f32 %v1000, %v1004
      %v1009 = vmax.f32 %v1001, %v1005
      %v1010 = vmax.f32 %v1002, %v1006
      %v1011 = vmul.f32 %v79, %v793
      %v1012 = vmul.f32 %v79, %v794
      %v1013 = vmul.f32 %v79, %v795
      %v1014 = vmul.f32 %v79, %v796
      %v1015 = vmul.f32 %v84, %v797
      %v1016 = vmul.f32 %v84, %v798
      %v1017 = vmul.f32 %v84, %v799
      %v1018 = vmul.f32 %v84, %v800
      %v1019 = vadd.f32 %v1011, %v1015
      %v1020 = vadd.f32 %v1012, %v1016
      %v1021 = vadd.f32 %v1013, %v1017
      %v1022 = vadd.f32 %v1014, %v1018
      %v1023 = vmul.f32 %v93, %v801
      %v1024 = vmul.f32 %v93, %v802
      %v1025 = vmul.f32 %v93, %v803
      %v1026 = vmul.f32 %v93, %v804
      %v1031 = vrot.slane %v1023, 1
      %v1032 = vrot.slane %v1025, 1
      %v1033 = vsel %vm102, %v1031, %v1032
      %v1034 = vrot.slane %v1024, 1
      %v1035 = vrot.slane %v1026, 1
      %v1036 = vsel %vm102, %v1034, %v1035
      %v1041 = vadd.f32 %v1019, %v1033
      %v1042 = vadd.f32 %v1020, %v1036
      %v1043 = vadd.f32 %v1021, %v1032
      %v1044 = vadd.f32 %v1022, %v1035
      %v1045 = vmul.f32 %v79, %v797
      %v1046 = vmul.f32 %v79, %v798
      %v1047 = vmul.f32 %v79, %v799
      %v1048 = vmul.f32 %v79, %v800
      %v1049 = vmul.f32 %v84, %v801
      %v1050 = vmul.f32 %v84, %v802
      %v1051 = vmul.f32 %v84, %v803
      %v1052 = vmul.f32 %v84, %v804
      %v1057 = vrot.slane %v1049, 1
      %v1058 = vrot.slane %v1051, 1
      %v1059 = vsel %vm102, %v1057, %v1058
      %v1060 = vrot.slane %v1050, 1
      %v1061 = vrot.slane %v1052, 1
      %v1062 = vsel %vm102, %v1060, %v1061
      %v1067 = vadd.f32 %v1045, %v1059
      %v1068 = vadd.f32 %v1046, %v1062
      %v1069 = vadd.f32 %v1047, %v1058
      %v1070 = vadd.f32 %v1048, %v1061
      %v1071 = vmul.f32 %v93, %v805
      %v1072 = vmul.f32 %v93, %v806
      %v1073 = vmul.f32 %v93, %v807
      %v1074 = vmul.f32 %v93, %v808
      %v1079 = vrot.slane %v1071, 1
      %v1080 = vrot.slane %v1073, 1
      %v1081 = vsel %vm102, %v1079, %v1080
      %v1082 = vrot.slane %v1072, 1
      %v1083 = vrot.slane %v1074, 1
      %v1084 = vsel %vm102, %v1082, %v1083
      %v1089 = vadd.f32 %v1067, %v1081
      %v1090 = vadd.f32 %v1068, %v1084
      %v1091 = vadd.f32 %v1069, %v1080
      %v1092 = vadd.f32 %v1070, %v1083
      %v1093 = vmul.f32 %v183, %v900
      %v1094 = vmul.f32 %v183, %v901
      %v1095 = vmul.f32 %v183, %v902
      %v1096 = vmul.f32 %v183, %v903
      %v1097 = vmul.f32 %v188, %v905
      %v1098 = vmul.f32 %v188, %v906
      %v1099 = vmul.f32 %v188, %v907
      %v1100 = vmul.f32 %v188, %v908
      %v1101 = vadd.f32 %v1093, %v1097
      %v1102 = vadd.f32 %v1094, %v1098
      %v1103 = vadd.f32 %v1095, %v1099
      %v1104 = vadd.f32 %v1096, %v1100
      %v1105 = vmul.f32 %v197, %v909
      %v1106 = vmul.f32 %v197, %v910
      %v1107 = vmul.f32 %v197, %v911
      %v1108 = vmul.f32 %v197, %v912
      %v1113 = vrot.slane %v1105, 1
      %v1114 = vrot.slane %v1107, 1
      %v1115 = vsel %vm102, %v1113, %v1114
      %v1116 = vrot.slane %v1106, 1
      %v1117 = vrot.slane %v1108, 1
      %v1118 = vsel %vm102, %v1116, %v1117
      %v1123 = vadd.f32 %v1101, %v1115
      %v1124 = vadd.f32 %v1102, %v1118
      %v1125 = vadd.f32 %v1103, %v1114
      %v1126 = vadd.f32 %v1104, %v1117
      %v1127 = vmul.f32 %v183, %v905
      %v1128 = vmul.f32 %v183, %v906
      %v1129 = vmul.f32 %v183, %v907
      %v1130 = vmul.f32 %v183, %v908
      %v1131 = vmul.f32 %v188, %v909
      %v1132 = vmul.f32 %v188, %v910
      %v1133 = vmul.f32 %v188, %v911
      %v1134 = vmul.f32 %v188, %v912
      %v1139 = vrot.slane %v1131, 1
      %v1140 = vrot.slane %v1133, 1
      %v1141 = vsel %vm102, %v1139, %v1140
      %v1142 = vrot.slane %v1132, 1
      %v1143 = vrot.slane %v1134, 1
      %v1144 = vsel %vm102, %v1142, %v1143
      %v1149 = vadd.f32 %v1127, %v1141
      %v1150 = vadd.f32 %v1128, %v1144
      %v1151 = vadd.f32 %v1129, %v1140
      %v1152 = vadd.f32 %v1130, %v1143
      %v1153 = vmul.f32 %v197, %v913
      %v1154 = vmul.f32 %v197, %v914
      %v1155 = vmul.f32 %v197, %v915
      %v1156 = vmul.f32 %v197, %v916
      %v1161 = vrot.slane %v1153, 1
      %v1162 = vrot.slane %v1155, 1
      %v1163 = vsel %vm102, %v1161, %v1162
      %v1164 = vrot.slane %v1154, 1
      %v1165 = vrot.slane %v1156, 1
      %v1166 = vsel %vm102, %v1164, %v1165
      %v1171 = vadd.f32 %v1149, %v1163
      %v1172 = vadd.f32 %v1150, %v1166
      %v1173 = vadd.f32 %v1151, %v1162
      %v1174 = vadd.f32 %v1152, %v1165
      %v1175 = vadd.f32 %v1041, %v1123
      %v1176 = vadd.f32 %v1042, %v1124
      %v1177 = vadd.f32 %v1043, %v1125
      %v1178 = vadd.f32 %v1044, %v1126
      %v1179 = vadd.f32 %v1089, %v1171
      %v1180 = vadd.f32 %v1090, %v1172
      %v1181 = vadd.f32 %v1091, %v1173
      %v1182 = vadd.f32 %v1092, %v1174
      %s1183 = scalar_lea.vmem %s0, 160
      %v1184 = vld [vmem:[%s1183] sm:$0xff]
      %v1185 = vld [vmem:[%s1183 + $0x8] sm:$0xff]
      %v1186 = vld [vmem:[%s1183 + $0x10] sm:$0x1f]
      %v1187 = vld [vmem:[%s1183 + $0x18] sm:$0x1f]
      %s1188 = scalar_lea.vmem %s1, 160
      %v1189 = vld [vmem:[%s1188] sm:$0xff]
      %v1190 = vld [vmem:[%s1188 + $0x8] sm:$0xff]
      %v1191 = vld [vmem:[%s1188 + $0x10] sm:$0x1f]
      %v1192 = vld [vmem:[%s1188 + $0x18] sm:$0x1f]
      %v1193 = vld [vmem:[%s1183] sm:$0xfe]
      %v1194 = vld [vmem:[%s1183 + $0x8] sm:$0xfe]
      %v1195 = vld [vmem:[%s1183 + $0x10] sm:$0x3f]
      %v1196 = vld [vmem:[%s1183 + $0x18] sm:$0x3f]
      %v1197 = vld [vmem:[%s1188] sm:$0xfe]
      %v1198 = vld [vmem:[%s1188 + $0x8] sm:$0xfe]
      %v1199 = vld [vmem:[%s1188 + $0x10] sm:$0x3f]
      %v1200 = vld [vmem:[%s1188 + $0x18] sm:$0x3f]
      %v1201 = vmul.f32 %v294, %v1184
      %v1202 = vmul.f32 %v294, %v1185
      %v1203 = vmul.f32 %v294, %v1186
      %v1204 = vmul.f32 %v294, %v1187
      %v1205 = vmul.f32 %v299, %v1189
      %v1206 = vmul.f32 %v299, %v1190
      %v1207 = vmul.f32 %v299, %v1191
      %v1208 = vmul.f32 %v299, %v1192
      %v1209 = vadd.f32 %v1201, %v1205
      %v1210 = vadd.f32 %v1202, %v1206
      %v1211 = vadd.f32 %v1203, %v1207
      %v1212 = vadd.f32 %v1204, %v1208
      %v1213 = vmul.f32 %v308, %v1193
      %v1214 = vmul.f32 %v308, %v1194
      %v1215 = vmul.f32 %v308, %v1195
      %v1216 = vmul.f32 %v308, %v1196
      %v1221 = vrot.slane %v1213, 1
      %v1222 = vrot.slane %v1215, 1
      %v1223 = vsel %vm102, %v1221, %v1222
      %v1224 = vrot.slane %v1214, 1
      %v1225 = vrot.slane %v1216, 1
      %v1226 = vsel %vm102, %v1224, %v1225
      %v1231 = vadd.f32 %v1209, %v1223
      %v1232 = vadd.f32 %v1210, %v1226
      %v1233 = vadd.f32 %v1211, %v1222
      %v1234 = vadd.f32 %v1212, %v1225
      %v1235 = vmul.f32 %v294, %v1189
      %v1236 = vmul.f32 %v294, %v1190
      %v1237 = vmul.f32 %v294, %v1191
      %v1238 = vmul.f32 %v294, %v1192
      %v1239 = vmul.f32 %v299, %v1193
      %v1240 = vmul.f32 %v299, %v1194
      %v1241 = vmul.f32 %v299, %v1195
      %v1242 = vmul.f32 %v299, %v1196
      %v1247 = vrot.slane %v1239, 1
      %v1248 = vrot.slane %v1241, 1
      %v1249 = vsel %vm102, %v1247, %v1248
      %v1250 = vrot.slane %v1240, 1
      %v1251 = vrot.slane %v1242, 1
      %v1252 = vsel %vm102, %v1250, %v1251
      %v1257 = vadd.f32 %v1235, %v1249
      %v1258 = vadd.f32 %v1236, %v1252
      %v1259 = vadd.f32 %v1237, %v1248
      %v1260 = vadd.f32 %v1238, %v1251
      %v1261 = vmul.f32 %v308, %v1197
      %v1262 = vmul.f32 %v308, %v1198
      %v1263 = vmul.f32 %v308, %v1199
      %v1264 = vmul.f32 %v308, %v1200
      %v1269 = vrot.slane %v1261, 1
      %v1270 = vrot.slane %v1263, 1
      %v1271 = vsel %vm102, %v1269, %v1270
      %v1272 = vrot.slane %v1262, 1
      %v1273 = vrot.slane %v1264, 1
      %v1274 = vsel %vm102, %v1272, %v1273
      %v1279 = vadd.f32 %v1257, %v1271
      %v1280 = vadd.f32 %v1258, %v1274
      %v1281 = vadd.f32 %v1259, %v1270
      %v1282 = vadd.f32 %v1260, %v1273
      %v1283 = vadd.f32 %v1175, %v1231
      %v1284 = vadd.f32 %v1176, %v1232
      %v1285 = vadd.f32 %v1177, %v1233
      %v1286 = vadd.f32 %v1178, %v1234
      %v1287 = vadd.f32 %v1179, %v1279
      %v1288 = vadd.f32 %v1180, %v1280
      %v1289 = vadd.f32 %v1181, %v1281
      %v1290 = vadd.f32 %v1182, %v1282
      %v1291 = vmax.f32 %v1283, %v1287
      %v1292 = vmax.f32 %v1284, %v1288
      %v1293 = vmax.f32 %v1285, %v1289
      %v1294 = vmax.f32 %v1286, %v1290
      %v1295 = vmax.f32 %v1007, %v1291
      %v1296 = vmax.f32 %v1008, %v1292
      %v1297 = vmax.f32 %v1009, %v1293
      %v1298 = vmax.f32 %v1010, %v1294
      %v1299 = vadd.f32 %v1295, %v679
      %v1300 = vadd.f32 %v1296, %v679
      %v1301 = vadd.f32 %v1297, %v679
      %v1302 = vadd.f32 %v1298, %v679
      %v1303 = vmax.f32 %v1299, 0.0
      %v1304 = vmax.f32 %v1300, 0.0
      %v1305 = vmax.f32 %v1301, 0.0
      %v1306 = vmax.f32 %v1302, 0.0
      %v1307 = vsel %vm688, %v1305, 0.0
      %v1308 = vsel %vm688, %v1306, 0.0
      %1309 = vst [vmem:[#allocation2 + $0x20] sm:$0xff] %v1303
      %1310 = vst [vmem:[#allocation2 + $0x28] sm:$0xff] %v1304
      %1311 = vst [vmem:[#allocation2 + $0x30] sm:$0xff] %v1307
      %1312 = vst [vmem:[#allocation2 + $0x38] sm:$0xff] %v1308
      %v1313 = vld [vmem:[%s899] sm:$0xff]
      %v1314 = vld [vmem:[%s899 + $0x8] sm:$0xff]
      %v1315 = vld [vmem:[%s899 + $0x10] sm:$0x1f]
      %v1316 = vld [vmem:[%s899 + $0x18] sm:$0x1f]
      %v1317 = vld [vmem:[%s904] sm:$0xff]
      %v1318 = vld [vmem:[%s904 + $0x8] sm:$0xff]
      %v1319 = vld [vmem:[%s904 + $0x10] sm:$0x1f]
      %v1320 = vld [vmem:[%s904 + $0x18] sm:$0x1f]
      %v1321 = vld [vmem:[%s899] sm:$0xfe]
      %v1322 = vld [vmem:[%s899 + $0x8] sm:$0xfe]
      %v1323 = vld [vmem:[%s899 + $0x10] sm:$0x3f]
      %v1324 = vld [vmem:[%s899 + $0x18] sm:$0x3f]
      %v1325 = vld [vmem:[%s904] sm:$0xfe]
      %v1326 = vld [vmem:[%s904 + $0x8] sm:$0xfe]
      %v1327 = vld [vmem:[%s904 + $0x10] sm:$0x3f]
      %v1328 = vld [vmem:[%s904 + $0x18] sm:$0x3f]
      %v1329 = vmul.f32 %v79, %v1313
      %v1330 = vmul.f32 %v79, %v1314
      %v1331 = vmul.f32 %v79, %v1315
      %v1332 = vmul.f32 %v79, %v1316
      %v1333 = vmul.f32 %v84, %v1317
      %v1334 = vmul.f32 %v84, %v1318
      %v1335 = vmul.f32 %v84, %v1319
      %v1336 = vmul.f32 %v84, %v1320
      %v1337 = vadd.f32 %v1329, %v1333
      %v1338 = vadd.f32 %v1330, %v1334
      %v1339 = vadd.f32 %v1331, %v1335
      %v1340 = vadd.f32 %v1332, %v1336
      %v1341 = vmul.f32 %v93, %v1321
      %v1342 = vmul.f32 %v93, %v1322
      %v1343 = vmul.f32 %v93, %v1323
      %v1344 = vmul.f32 %v93, %v1324
      %v1349 = vrot.slane %v1341, 1
      %v1350 = vrot.slane %v1343, 1
      %v1351 = vsel %vm102, %v1349, %v1350
      %v1352 = vrot.slane %v1342, 1
      %v1353 = vrot.slane %v1344, 1
      %v1354 = vsel %vm102, %v1352, %v1353
      %v1359 = vadd.f32 %v1337, %v1351
      %v1360 = vadd.f32 %v1338, %v1354
      %v1361 = vadd.f32 %v1339, %v1350
      %v1362 = vadd.f32 %v1340, %v1353
      %v1363 = vmul.f32 %v79, %v1317
      %v1364 = vmul.f32 %v79, %v1318
      %v1365 = vmul.f32 %v79, %v1319
      %v1366 = vmul.f32 %v79, %v1320
      %v1367 = vmul.f32 %v84, %v1321
      %v1368 = vmul.f32 %v84, %v1322
      %v1369 = vmul.f32 %v84, %v1323
      %v1370 = vmul.f32 %v84, %v1324
      %v1375 = vrot.slane %v1367, 1
      %v1376 = vrot.slane %v1369, 1
      %v1377 = vsel %vm102, %v1375, %v1376
      %v1378 = vrot.slane %v1368, 1
      %v1379 = vrot.slane %v1370, 1
      %v1380 = vsel %vm102, %v1378, %v1379
      %v1385 = vadd.f32 %v1363, %v1377
      %v1386 = vadd.f32 %v1364, %v1380
      %v1387 = vadd.f32 %v1365, %v1376
      %v1388 = vadd.f32 %v1366, %v1379
      %v1389 = vmul.f32 %v93, %v1325
      %v1390 = vmul.f32 %v93, %v1326
      %v1391 = vmul.f32 %v93, %v1327
      %v1392 = vmul.f32 %v93, %v1328
      %v1397 = vrot.slane %v1389, 1
      %v1398 = vrot.slane %v1391, 1
      %v1399 = vsel %vm102, %v1397, %v1398
      %v1400 = vrot.slane %v1390, 1
      %v1401 = vrot.slane %v1392, 1
      %v1402 = vsel %vm102, %v1400, %v1401
      %v1407 = vadd.f32 %v1385, %v1399
      %v1408 = vadd.f32 %v1386, %v1402
      %v1409 = vadd.f32 %v1387, %v1398
      %v1410 = vadd.f32 %v1388, %v1401
      %v1411 = vld [vmem:[%s1183] sm:$0xff]
      %v1412 = vld [vmem:[%s1183 + $0x8] sm:$0xff]
      %v1413 = vld [vmem:[%s1183 + $0x10] sm:$0x1f]
      %v1414 = vld [vmem:[%s1183 + $0x18] sm:$0x1f]
      %v1415 = vld [vmem:[%s1188] sm:$0xff]
      %v1416 = vld [vmem:[%s1188 + $0x8] sm:$0xff]
      %v1417 = vld [vmem:[%s1188 + $0x10] sm:$0x1f]
      %v1418 = vld [vmem:[%s1188 + $0x18] sm:$0x1f]
      %v1419 = vld [vmem:[%s1183] sm:$0xfe]
      %v1420 = vld [vmem:[%s1183 + $0x8] sm:$0xfe]
      %v1421 = vld [vmem:[%s1183 + $0x10] sm:$0x3f]
      %v1422 = vld [vmem:[%s1183 + $0x18] sm:$0x3f]
      %v1423 = vld [vmem:[%s1188] sm:$0xfe]
      %v1424 = vld [vmem:[%s1188 + $0x8] sm:$0xfe]
      %v1425 = vld [vmem:[%s1188 + $0x10] sm:$0x3f]
      %v1426 = vld [vmem:[%s1188 + $0x18] sm:$0x3f]
      %v1427 = vmul.f32 %v183, %v1411
      %v1428 = vmul.f32 %v183, %v1412
      %v1429 = vmul.f32 %v183, %v1413
      %v1430 = vmul.f32 %v183, %v1414
      %v1431 = vmul.f32 %v188, %v1415
      %v1432 = vmul.f32 %v188, %v1416
      %v1433 = vmul.f32 %v188, %v1417
      %v1434 = vmul.f32 %v188, %v1418
      %v1435 = vadd.f32 %v1427, %v1431
      %v1436 = vadd.f32 %v1428, %v1432
      %v1437 = vadd.f32 %v1429, %v1433
      %v1438 = vadd.f32 %v1430, %v1434
      %v1439 = vmul.f32 %v197, %v1419
      %v1440 = vmul.f32 %v197, %v1420
      %v1441 = vmul.f32 %v197, %v1421
      %v1442 = vmul.f32 %v197, %v1422
      %v1447 = vrot.slane %v1439, 1
      %v1448 = vrot.slane %v1441, 1
      %v1449 = vsel %vm102, %v1447, %v1448
      %v1450 = vrot.slane %v1440, 1
      %v1451 = vrot.slane %v1442, 1
      %v1452 = vsel %vm102, %v1450, %v1451
      %v1457 = vadd.f32 %v1435, %v1449
      %v1458 = vadd.f32 %v1436, %v1452
      %v1459 = vadd.f32 %v1437, %v1448
      %v1460 = vadd.f32 %v1438, %v1451
      %v1461 = vmul.f32 %v183, %v1415
      %v1462 = vmul.f32 %v183, %v1416
      %v1463 = vmul.f32 %v183, %v1417
      %v1464 = vmul.f32 %v183, %v1418
      %v1465 = vmul.f32 %v188, %v1419
      %v1466 = vmul.f32 %v188, %v1420
      %v1467 = vmul.f32 %v188, %v1421
      %v1468 = vmul.f32 %v188, %v1422
      %v1473 = vrot.slane %v1465, 1
      %v1474 = vrot.slane %v1467, 1
      %v1475 = vsel %vm102, %v1473, %v1474
      %v1476 = vrot.slane %v1466, 1
      %v1477 = vrot.slane %v1468, 1
      %v1478 = vsel %vm102, %v1476, %v1477
      %v1483 = vadd.f32 %v1461, %v1475
      %v1484 = vadd.f32 %v1462, %v1478
      %v1485 = vadd.f32 %v1463, %v1474
      %v1486 = vadd.f32 %v1464, %v1477
      %v1487 = vmul.f32 %v197, %v1423
      %v1488 = vmul.f32 %v197, %v1424
      %v1489 = vmul.f32 %v197, %v1425
      %v1490 = vmul.f32 %v197, %v1426
      %v1495 = vrot.slane %v1487, 1
      %v1496 = vrot.slane %v1489, 1
      %v1497 = vsel %vm102, %v1495, %v1496
      %v1498 = vrot.slane %v1488, 1
      %v1499 = vrot.slane %v1490, 1
      %v1500 = vsel %vm102, %v1498, %v1499
      %v1505 = vadd.f32 %v1483, %v1497
      %v1506 = vadd.f32 %v1484, %v1500
      %v1507 = vadd.f32 %v1485, %v1496
      %v1508 = vadd.f32 %v1486, %v1499
      %v1509 = vadd.f32 %v1359, %v1457
      %v1510 = vadd.f32 %v1360, %v1458
      %v1511 = vadd.f32 %v1361, %v1459
      %v1512 = vadd.f32 %v1362, %v1460
      %v1513 = vadd.f32 %v1407, %v1505
      %v1514 = vadd.f32 %v1408, %v1506
      %v1515 = vadd.f32 %v1409, %v1507
      %v1516 = vadd.f32 %v1410, %v1508
      %s1517 = scalar_lea.vmem %s0, 192
      %v1518 = vld [vmem:[%s1517] sm:$0xff]
      %v1519 = vld [vmem:[%s1517 + $0x8] sm:$0xff]
      %v1520 = vld [vmem:[%s1517 + $0x10] sm:$0x1f]
      %v1521 = vld [vmem:[%s1517 + $0x18] sm:$0x1f]
      %s1522 = scalar_lea.vmem %s1, 192
      %v1523 = vld [vmem:[%s1522] sm:$0xff]
      %v1524 = vld [vmem:[%s1522 + $0x8] sm:$0xff]
      %v1525 = vld [vmem:[%s1522 + $0x10] sm:$0x1f]
      %v1526 = vld [vmem:[%s1522 + $0x18] sm:$0x1f]
      %v1527 = vld [vmem:[%s1517] sm:$0xfe]
      %v1528 = vld [vmem:[%s1517 + $0x8] sm:$0xfe]
      %v1529 = vld [vmem:[%s1517 + $0x10] sm:$0x3f]
      %v1530 = vld [vmem:[%s1517 + $0x18] sm:$0x3f]
      %v1531 = vld [vmem:[%s1522] sm:$0xfe]
      %v1532 = vld [vmem:[%s1522 + $0x8] sm:$0xfe]
      %v1533 = vld [vmem:[%s1522 + $0x10] sm:$0x3f]
      %v1534 = vld [vmem:[%s1522 + $0x18] sm:$0x3f]
      %v1535 = vmul.f32 %v294, %v1518
      %v1536 = vmul.f32 %v294, %v1519
      %v1537 = vmul.f32 %v294, %v1520
      %v1538 = vmul.f32 %v294, %v1521
      %v1539 = vmul.f32 %v299, %v1523
      %v1540 = vmul.f32 %v299, %v1524
      %v1541 = vmul.f32 %v299, %v1525
      %v1542 = vmul.f32 %v299, %v1526
      %v1543 = vadd.f32 %v1535, %v1539
      %v1544 = vadd.f32 %v1536, %v1540
      %v1545 = vadd.f32 %v1537, %v1541
      %v1546 = vadd.f32 %v1538, %v1542
      %v1547 = vmul.f32 %v308, %v1527
      %v1548 = vmul.f32 %v308, %v1528
      %v1549 = vmul.f32 %v308, %v1529
      %v1550 = vmul.f32 %v308, %v1530
      %v1555 = vrot.slane %v1547, 1
      %v1556 = vrot.slane %v1549, 1
      %v1557 = vsel %vm102, %v1555, %v1556
      %v1558 = vrot.slane %v1548, 1
      %v1559 = vrot.slane %v1550, 1
      %v1560 = vsel %vm102, %v1558, %v1559
      %v1565 = vadd.f32 %v1543, %v1557
      %v1566 = vadd.f32 %v1544, %v1560
      %v1567 = vadd.f32 %v1545, %v1556
      %v1568 = vadd.f32 %v1546, %v1559
      %v1569 = vmul.f32 %v294, %v1523
      %v1570 = vmul.f32 %v294, %v1524
      %v1571 = vmul.f32 %v294, %v1525
      %v1572 = vmul.f32 %v294, %v1526
      %v1573 = vmul.f32 %v299, %v1527
      %v1574 = vmul.f32 %v299, %v1528
      %v1575 = vmul.f32 %v299, %v1529
      %v1576 = vmul.f32 %v299, %v1530
      %v1581 = vrot.slane %v1573, 1
      %v1582 = vrot.slane %v1575, 1
      %v1583 = vsel %vm102, %v1581, %v1582
      %v1584 = vrot.slane %v1574, 1
      %v1585 = vrot.slane %v1576, 1
      %v1586 = vsel %vm102, %v1584, %v1585
      %v1591 = vadd.f32 %v1569, %v1583
      %v1592 = vadd.f32 %v1570, %v1586
      %v1593 = vadd.f32 %v1571, %v1582
      %v1594 = vadd.f32 %v1572, %v1585
      %v1595 = vmul.f32 %v308, %v1531
      %v1596 = vmul.f32 %v308, %v1532
      %v1597 = vmul.f32 %v308, %v1533
      %v1598 = vmul.f32 %v308, %v1534
      %v1603 = vrot.slane %v1595, 1
      %v1604 = vrot.slane %v1597, 1
      %v1605 = vsel %vm102, %v1603, %v1604
      %v1606 = vrot.slane %v1596, 1
      %v1607 = vrot.slane %v1598, 1
      %v1608 = vsel %vm102, %v1606, %v1607
      %v1613 = vadd.f32 %v1591, %v1605
      %v1614 = vadd.f32 %v1592, %v1608
      %v1615 = vadd.f32 %v1593, %v1604
      %v1616 = vadd.f32 %v1594, %v1607
      %v1617 = vadd.f32 %v1509, %v1565
      %v1618 = vadd.f32 %v1510, %v1566
      %v1619 = vadd.f32 %v1511, %v1567
      %v1620 = vadd.f32 %v1512, %v1568
      %v1621 = vadd.f32 %v1513, %v1613
      %v1622 = vadd.f32 %v1514, %v1614
      %v1623 = vadd.f32 %v1515, %v1615
      %v1624 = vadd.f32 %v1516, %v1616
      %v1625 = vmax.f32 %v1617, %v1621
      %v1626 = vmax.f32 %v1618, %v1622
      %v1627 = vmax.f32 %v1619, %v1623
      %v1628 = vmax.f32 %v1620, %v1624
      %v1629 = vmul.f32 %v79, %v1411
      %v1630 = vmul.f32 %v79, %v1412
      %v1631 = vmul.f32 %v79, %v1413
      %v1632 = vmul.f32 %v79, %v1414
      %v1633 = vmul.f32 %v84, %v1415
      %v1634 = vmul.f32 %v84, %v1416
      %v1635 = vmul.f32 %v84, %v1417
      %v1636 = vmul.f32 %v84, %v1418
      %v1637 = vadd.f32 %v1629, %v1633
      %v1638 = vadd.f32 %v1630, %v1634
      %v1639 = vadd.f32 %v1631, %v1635
      %v1640 = vadd.f32 %v1632, %v1636
      %v1641 = vmul.f32 %v93, %v1419
      %v1642 = vmul.f32 %v93, %v1420
      %v1643 = vmul.f32 %v93, %v1421
      %v1644 = vmul.f32 %v93, %v1422
      %v1649 = vrot.slane %v1641, 1
      %v1650 = vrot.slane %v1643, 1
      %v1651 = vsel %vm102, %v1649, %v1650
      %v1652 = vrot.slane %v1642, 1
      %v1653 = vrot.slane %v1644, 1
      %v1654 = vsel %vm102, %v1652, %v1653
      %v1659 = vadd.f32 %v1637, %v1651
      %v1660 = vadd.f32 %v1638, %v1654
      %v1661 = vadd.f32 %v1639, %v1650
      %v1662 = vadd.f32 %v1640, %v1653
      %v1663 = vmul.f32 %v79, %v1415
      %v1664 = vmul.f32 %v79, %v1416
      %v1665 = vmul.f32 %v79, %v1417
      %v1666 = vmul.f32 %v79, %v1418
      %v1667 = vmul.f32 %v84, %v1419
      %v1668 = vmul.f32 %v84, %v1420
      %v1669 = vmul.f32 %v84, %v1421
      %v1670 = vmul.f32 %v84, %v1422
      %v1675 = vrot.slane %v1667, 1
      %v1676 = vrot.slane %v1669, 1
      %v1677 = vsel %vm102, %v1675, %v1676
      %v1678 = vrot.slane %v1668, 1
      %v1679 = vrot.slane %v1670, 1
      %v1680 = vsel %vm102, %v1678, %v1679
      %v1685 = vadd.f32 %v1663, %v1677
      %v1686 = vadd.f32 %v1664, %v1680
      %v1687 = vadd.f32 %v1665, %v1676
      %v1688 = vadd.f32 %v1666, %v1679
      %v1689 = vmul.f32 %v93, %v1423
      %v1690 = vmul.f32 %v93, %v1424
      %v1691 = vmul.f32 %v93, %v1425
      %v1692 = vmul.f32 %v93, %v1426
      %v1697 = vrot.slane %v1689, 1
      %v1698 = vrot.slane %v1691, 1
      %v1699 = vsel %vm102, %v1697, %v1698
      %v1700 = vrot.slane %v1690, 1
      %v1701 = vrot.slane %v1692, 1
      %v1702 = vsel %vm102, %v1700, %v1701
      %v1707 = vadd.f32 %v1685, %v1699
      %v1708 = vadd.f32 %v1686, %v1702
      %v1709 = vadd.f32 %v1687, %v1698
      %v1710 = vadd.f32 %v1688, %v1701
      %v1711 = vmul.f32 %v183, %v1518
      %v1712 = vmul.f32 %v183, %v1519
      %v1713 = vmul.f32 %v183, %v1520
      %v1714 = vmul.f32 %v183, %v1521
      %v1715 = vmul.f32 %v188, %v1523
      %v1716 = vmul.f32 %v188, %v1524
      %v1717 = vmul.f32 %v188, %v1525
      %v1718 = vmul.f32 %v188, %v1526
      %v1719 = vadd.f32 %v1711, %v1715
      %v1720 = vadd.f32 %v1712, %v1716
      %v1721 = vadd.f32 %v1713, %v1717
      %v1722 = vadd.f32 %v1714, %v1718
      %v1723 = vmul.f32 %v197, %v1527
      %v1724 = vmul.f32 %v197, %v1528
      %v1725 = vmul.f32 %v197, %v1529
      %v1726 = vmul.f32 %v197, %v1530
      %v1731 = vrot.slane %v1723, 1
      %v1732 = vrot.slane %v1725, 1
      %v1733 = vsel %vm102, %v1731, %v1732
      %v1734 = vrot.slane %v1724, 1
      %v1735 = vrot.slane %v1726, 1
      %v1736 = vsel %vm102, %v1734, %v1735
      %v1741 = vadd.f32 %v1719, %v1733
      %v1742 = vadd.f32 %v1720, %v1736
      %v1743 = vadd.f32 %v1721, %v1732
      %v1744 = vadd.f32 %v1722, %v1735
      %v1745 = vmul.f32 %v183, %v1523
      %v1746 = vmul.f32 %v183, %v1524
      %v1747 = vmul.f32 %v183, %v1525
      %v1748 = vmul.f32 %v183, %v1526
      %v1749 = vmul.f32 %v188, %v1527
      %v1750 = vmul.f32 %v188, %v1528
      %v1751 = vmul.f32 %v188, %v1529
      %v1752 = vmul.f32 %v188, %v1530
      %v1757 = vrot.slane %v1749, 1
      %v1758 = vrot.slane %v1751, 1
      %v1759 = vsel %vm102, %v1757, %v1758
      %v1760 = vrot.slane %v1750, 1
      %v1761 = vrot.slane %v1752, 1
      %v1762 = vsel %vm102, %v1760, %v1761
      %v1767 = vadd.f32 %v1745, %v1759
      %v1768 = vadd.f32 %v1746, %v1762
      %v1769 = vadd.f32 %v1747, %v1758
      %v1770 = vadd.f32 %v1748, %v1761
      %v1771 = vmul.f32 %v197, %v1531
      %v1772 = vmul.f32 %v197, %v1532
      %v1773 = vmul.f32 %v197, %v1533
      %v1774 = vmul.f32 %v197, %v1534
      %v1779 = vrot.slane %v1771, 1
      %v1780 = vrot.slane %v1773, 1
      %v1781 = vsel %vm102, %v1779, %v1780
      %v1782 = vrot.slane %v1772, 1
      %v1783 = vrot.slane %v1774, 1
      %v1784 = vsel %vm102, %v1782, %v1783
      %v1789 = vadd.f32 %v1767, %v1781
      %v1790 = vadd.f32 %v1768, %v1784
      %v1791 = vadd.f32 %v1769, %v1780
      %v1792 = vadd.f32 %v1770, %v1783
      %v1793 = vadd.f32 %v1659, %v1741
      %v1794 = vadd.f32 %v1660, %v1742
      %v1795 = vadd.f32 %v1661, %v1743
      %v1796 = vadd.f32 %v1662, %v1744
      %v1797 = vadd.f32 %v1707, %v1789
      %v1798 = vadd.f32 %v1708, %v1790
      %v1799 = vadd.f32 %v1709, %v1791
      %v1800 = vadd.f32 %v1710, %v1792
      %s1801 = scalar_lea.vmem %s0, 224
      %v1802 = vld [vmem:[%s1801] sm:$0xff]
      %v1803 = vld [vmem:[%s1801 + $0x8] sm:$0xff]
      %v1804 = vld [vmem:[%s1801 + $0x10] sm:$0x1f]
      %v1805 = vld [vmem:[%s1801 + $0x18] sm:$0x1f]
      %s1806 = scalar_lea.vmem %s1, 224
      %v1807 = vld [vmem:[%s1806] sm:$0xff]
      %v1808 = vld [vmem:[%s1806 + $0x8] sm:$0xff]
      %v1809 = vld [vmem:[%s1806 + $0x10] sm:$0x1f]
      %v1810 = vld [vmem:[%s1806 + $0x18] sm:$0x1f]
      %v1811 = vld [vmem:[%s1801] sm:$0xfe]
      %v1812 = vld [vmem:[%s1801 + $0x8] sm:$0xfe]
      %v1813 = vld [vmem:[%s1801 + $0x10] sm:$0x3f]
      %v1814 = vld [vmem:[%s1801 + $0x18] sm:$0x3f]
      %v1815 = vld [vmem:[%s1806] sm:$0xfe]
      %v1816 = vld [vmem:[%s1806 + $0x8] sm:$0xfe]
      %v1817 = vld [vmem:[%s1806 + $0x10] sm:$0x3f]
      %v1818 = vld [vmem:[%s1806 + $0x18] sm:$0x3f]
      %v1819 = vmul.f32 %v294, %v1802
      %v1820 = vmul.f32 %v294, %v1803
      %v1821 = vmul.f32 %v294, %v1804
      %v1822 = vmul.f32 %v294, %v1805
      %v1823 = vmul.f32 %v299, %v1807
      %v1824 = vmul.f32 %v299, %v1808
      %v1825 = vmul.f32 %v299, %v1809
      %v1826 = vmul.f32 %v299, %v1810
      %v1827 = vadd.f32 %v1819, %v1823
      %v1828 = vadd.f32 %v1820, %v1824
      %v1829 = vadd.f32 %v1821, %v1825
      %v1830 = vadd.f32 %v1822, %v1826
      %v1831 = vmul.f32 %v308, %v1811
      %v1832 = vmul.f32 %v308, %v1812
      %v1833 = vmul.f32 %v308, %v1813
      %v1834 = vmul.f32 %v308, %v1814
      %v1839 = vrot.slane %v1831, 1
      %v1840 = vrot.slane %v1833, 1
      %v1841 = vsel %vm102, %v1839, %v1840
      %v1842 = vrot.slane %v1832, 1
      %v1843 = vrot.slane %v1834, 1
      %v1844 = vsel %vm102, %v1842, %v1843
      %v1849 = vadd.f32 %v1827, %v1841
      %v1850 = vadd.f32 %v1828, %v1844
      %v1851 = vadd.f32 %v1829, %v1840
      %v1852 = vadd.f32 %v1830, %v1843
      %v1853 = vmul.f32 %v294, %v1807
      %v1854 = vmul.f32 %v294, %v1808
      %v1855 = vmul.f32 %v294, %v1809
      %v1856 = vmul.f32 %v294, %v1810
      %v1857 = vmul.f32 %v299, %v1811
      %v1858 = vmul.f32 %v299, %v1812
      %v1859 = vmul.f32 %v299, %v1813
      %v1860 = vmul.f32 %v299, %v1814
      %v1865 = vrot.slane %v1857, 1
      %v1866 = vrot.slane %v1859, 1
      %v1867 = vsel %vm102, %v1865, %v1866
      %v1868 = vrot.slane %v1858, 1
      %v1869 = vrot.slane %v1860, 1
      %v1870 = vsel %vm102, %v1868, %v1869
      %v1875 = vadd.f32 %v1853, %v1867
      %v1876 = vadd.f32 %v1854, %v1870
      %v1877 = vadd.f32 %v1855, %v1866
      %v1878 = vadd.f32 %v1856, %v1869
      %v1879 = vmul.f32 %v308, %v1815
      %v1880 = vmul.f32 %v308, %v1816
      %v1881 = vmul.f32 %v308, %v1817
      %v1882 = vmul.f32 %v308, %v1818
      %v1887 = vrot.slane %v1879, 1
      %v1888 = vrot.slane %v1881, 1
      %v1889 = vsel %vm102, %v1887, %v1888
      %v1890 = vrot.slane %v1880, 1
      %v1891 = vrot.slane %v1882, 1
      %v1892 = vsel %vm102, %v1890, %v1891
      %v1897 = vadd.f32 %v1875, %v1889
      %v1898 = vadd.f32 %v1876, %v1892
      %v1899 = vadd.f32 %v1877, %v1888
      %v1900 = vadd.f32 %v1878, %v1891
      %v1901 = vadd.f32 %v1793, %v1849
      %v1902 = vadd.f32 %v1794, %v1850
      %v1903 = vadd.f32 %v1795, %v1851
      %v1904 = vadd.f32 %v1796, %v1852
      %v1905 = vadd.f32 %v1797, %v1897
      %v1906 = vadd.f32 %v1798, %v1898
      %v1907 = vadd.f32 %v1799, %v1899
      %v1908 = vadd.f32 %v1800, %v1900
      %v1909 = vmax.f32 %v1901, %v1905
      %v1910 = vmax.f32 %v1902, %v1906
      %v1911 = vmax.f32 %v1903, %v1907
      %v1912 = vmax.f32 %v1904, %v1908
      %v1913 = vmax.f32 %v1625, %v1909
      %v1914 = vmax.f32 %v1626, %v1910
      %v1915 = vmax.f32 %v1627, %v1911
      %v1916 = vmax.f32 %v1628, %v1912
      %v1917 = vadd.f32 %v1913, %v679
      %v1918 = vadd.f32 %v1914, %v679
      %v1919 = vadd.f32 %v1915, %v679
      %v1920 = vadd.f32 %v1916, %v679
      %v1921 = vmax.f32 %v1917, 0.0
      %v1922 = vmax.f32 %v1918, 0.0
      %v1923 = vmax.f32 %v1919, 0.0
      %v1924 = vmax.f32 %v1920, 0.0
      %v1925 = vsel %vm688, %v1923, 0.0
      %v1926 = vsel %vm688, %v1924, 0.0
      %1927 = vst [vmem:[#allocation2 + $0x40] sm:$0xff] %v1921
      %1928 = vst [vmem:[#allocation2 + $0x48] sm:$0xff] %v1922
      %1929 = vst [vmem:[#allocation2 + $0x50] sm:$0xff] %v1925
      %1930 = vst [vmem:[#allocation2 + $0x58] sm:$0xff] %v1926
      %v1931 = vld [vmem:[%s1517] sm:$0xff]
      %v1932 = vld [vmem:[%s1517 + $0x8] sm:$0xff]
      %v1933 = vld [vmem:[%s1517 + $0x10] sm:$0x1f]
      %v1934 = vld [vmem:[%s1517 + $0x18] sm:$0x1f]
      %v1935 = vld [vmem:[%s1522] sm:$0xff]
      %v1936 = vld [vmem:[%s1522 + $0x8] sm:$0xff]
      %v1937 = vld [vmem:[%s1522 + $0x10] sm:$0x1f]
      %v1938 = vld [vmem:[%s1522 + $0x18] sm:$0x1f]
      %v1939 = vld [vmem:[%s1517] sm:$0xfe]
      %v1940 = vld [vmem:[%s1517 + $0x8] sm:$0xfe]
      %v1941 = vld [vmem:[%s1517 + $0x10] sm:$0x3f]
      %v1942 = vld [vmem:[%s1517 + $0x18] sm:$0x3f]
      %v1943 = vld [vmem:[%s1522] sm:$0xfe]
      %v1944 = vld [vmem:[%s1522 + $0x8] sm:$0xfe]
      %v1945 = vld [vmem:[%s1522 + $0x10] sm:$0x3f]
      %v1946 = vld [vmem:[%s1522 + $0x18] sm:$0x3f]
      %v1947 = vmul.f32 %v79, %v1931
      %v1948 = vmul.f32 %v79, %v1932
      %v1949 = vmul.f32 %v79, %v1933
      %v1950 = vmul.f32 %v79, %v1934
      %v1951 = vmul.f32 %v84, %v1935
      %v1952 = vmul.f32 %v84, %v1936
      %v1953 = vmul.f32 %v84, %v1937
      %v1954 = vmul.f32 %v84, %v1938
      %v1955 = vadd.f32 %v1947, %v1951
      %v1956 = vadd.f32 %v1948, %v1952
      %v1957 = vadd.f32 %v1949, %v1953
      %v1958 = vadd.f32 %v1950, %v1954
      %v1959 = vmul.f32 %v93, %v1939
      %v1960 = vmul.f32 %v93, %v1940
      %v1961 = vmul.f32 %v93, %v1941
      %v1962 = vmul.f32 %v93, %v1942
      %v1967 = vrot.slane %v1959, 1
      %v1968 = vrot.slane %v1961, 1
      %v1969 = vsel %vm102, %v1967, %v1968
      %v1970 = vrot.slane %v1960, 1
      %v1971 = vrot.slane %v1962, 1
      %v1972 = vsel %vm102, %v1970, %v1971
      %v1977 = vadd.f32 %v1955, %v1969
      %v1978 = vadd.f32 %v1956, %v1972
      %v1979 = vadd.f32 %v1957, %v1968
      %v1980 = vadd.f32 %v1958, %v1971
      %v1981 = vmul.f32 %v79, %v1935
      %v1982 = vmul.f32 %v79, %v1936
      %v1983 = vmul.f32 %v79, %v1937
      %v1984 = vmul.f32 %v79, %v1938
      %v1985 = vmul.f32 %v84, %v1939
      %v1986 = vmul.f32 %v84, %v1940
      %v1987 = vmul.f32 %v84, %v1941
      %v1988 = vmul.f32 %v84, %v1942
      %v1993 = vrot.slane %v1985, 1
      %v1994 = vrot.slane %v1987, 1
      %v1995 = vsel %vm102, %v1993, %v1994
      %v1996 = vrot.slane %v1986, 1
      %v1997 = vrot.slane %v1988, 1
      %v1998 = vsel %vm102, %v1996, %v1997
      %v2003 = vadd.f32 %v1981, %v1995
      %v2004 = vadd.f32 %v1982, %v1998
      %v2005 = vadd.f32 %v1983, %v1994
      %v2006 = vadd.f32 %v1984, %v1997
      %v2007 = vmul.f32 %v93, %v1943
      %v2008 = vmul.f32 %v93, %v1944
      %v2009 = vmul.f32 %v93, %v1945
      %v2010 = vmul.f32 %v93, %v1946
      %v2015 = vrot.slane %v2007, 1
      %v2016 = vrot.slane %v2009, 1
      %v2017 = vsel %vm102, %v2015, %v2016
      %v2018 = vrot.slane %v2008, 1
      %v2019 = vrot.slane %v2010, 1
      %v2020 = vsel %vm102, %v2018, %v2019
      %v2025 = vadd.f32 %v2003, %v2017
      %v2026 = vadd.f32 %v2004, %v2020
      %v2027 = vadd.f32 %v2005, %v2016
      %v2028 = vadd.f32 %v2006, %v2019
      %v2029 = vld [vmem:[%s1801] sm:$0xff]
      %v2030 = vld [vmem:[%s1801 + $0x8] sm:$0xff]
      %v2031 = vld [vmem:[%s1801 + $0x10] sm:$0x1f]
      %v2032 = vld [vmem:[%s1801 + $0x18] sm:$0x1f]
      %v2033 = vld [vmem:[%s1806] sm:$0xff]
      %v2034 = vld [vmem:[%s1806 + $0x8] sm:$0xff]
      %v2035 = vld [vmem:[%s1806 + $0x10] sm:$0x1f]
      %v2036 = vld [vmem:[%s1806 + $0x18] sm:$0x1f]
      %v2037 = vld [vmem:[%s1801] sm:$0xfe]
      %v2038 = vld [vmem:[%s1801 + $0x8] sm:$0xfe]
      %v2039 = vld [vmem:[%s1801 + $0x10] sm:$0x3f]
      %v2040 = vld [vmem:[%s1801 + $0x18] sm:$0x3f]
      %v2041 = vld [vmem:[%s1806] sm:$0xfe]
      %v2042 = vld [vmem:[%s1806 + $0x8] sm:$0xfe]
      %v2043 = vld [vmem:[%s1806 + $0x10] sm:$0x3f]
      %v2044 = vld [vmem:[%s1806 + $0x18] sm:$0x3f]
      %v2045 = vmul.f32 %v183, %v2029
      %v2046 = vmul.f32 %v183, %v2030
      %v2047 = vmul.f32 %v183, %v2031
      %v2048 = vmul.f32 %v183, %v2032
      %v2049 = vmul.f32 %v188, %v2033
      %v2050 = vmul.f32 %v188, %v2034
      %v2051 = vmul.f32 %v188, %v2035
      %v2052 = vmul.f32 %v188, %v2036
      %v2053 = vadd.f32 %v2045, %v2049
      %v2054 = vadd.f32 %v2046, %v2050
      %v2055 = vadd.f32 %v2047, %v2051
      %v2056 = vadd.f32 %v2048, %v2052
      %v2057 = vmul.f32 %v197, %v2037
      %v2058 = vmul.f32 %v197, %v2038
      %v2059 = vmul.f32 %v197, %v2039
      %v2060 = vmul.f32 %v197, %v2040
      %v2065 = vrot.slane %v2057, 1
      %v2066 = vrot.slane %v2059, 1
      %v2067 = vsel %vm102, %v2065, %v2066
      %v2068 = vrot.slane %v2058, 1
      %v2069 = vrot.slane %v2060, 1
      %v2070 = vsel %vm102, %v2068, %v2069
      %v2075 = vadd.f32 %v2053, %v2067
      %v2076 = vadd.f32 %v2054, %v2070
      %v2077 = vadd.f32 %v2055, %v2066
      %v2078 = vadd.f32 %v2056, %v2069
      %v2079 = vmul.f32 %v183, %v2033
      %v2080 = vmul.f32 %v183, %v2034
      %v2081 = vmul.f32 %v183, %v2035
      %v2082 = vmul.f32 %v183, %v2036
      %v2083 = vmul.f32 %v188, %v2037
      %v2084 = vmul.f32 %v188, %v2038
      %v2085 = vmul.f32 %v188, %v2039
      %v2086 = vmul.f32 %v188, %v2040
      %v2091 = vrot.slane %v2083, 1
      %v2092 = vrot.slane %v2085, 1
      %v2093 = vsel %vm102, %v2091, %v2092
      %v2094 = vrot.slane %v2084, 1
      %v2095 = vrot.slane %v2086, 1
      %v2096 = vsel %vm102, %v2094, %v2095
      %v2101 = vadd.f32 %v2079, %v2093
      %v2102 = vadd.f32 %v2080, %v2096
      %v2103 = vadd.f32 %v2081, %v2092
      %v2104 = vadd.f32 %v2082, %v2095
      %v2105 = vmul.f32 %v197, %v2041
      %v2106 = vmul.f32 %v197, %v2042
      %v2107 = vmul.f32 %v197, %v2043
      %v2108 = vmul.f32 %v197, %v2044
      %v2113 = vrot.slane %v2105, 1
      %v2114 = vrot.slane %v2107, 1
      %v2115 = vsel %vm102, %v2113, %v2114
      %v2116 = vrot.slane %v2106, 1
      %v2117 = vrot.slane %v2108, 1
      %v2118 = vsel %vm102, %v2116, %v2117
      %v2123 = vadd.f32 %v2101, %v2115
      %v2124 = vadd.f32 %v2102, %v2118
      %v2125 = vadd.f32 %v2103, %v2114
      %v2126 = vadd.f32 %v2104, %v2117
      %v2127 = vadd.f32 %v1977, %v2075
      %v2128 = vadd.f32 %v1978, %v2076
      %v2129 = vadd.f32 %v1979, %v2077
      %v2130 = vadd.f32 %v1980, %v2078
      %v2131 = vadd.f32 %v2025, %v2123
      %v2132 = vadd.f32 %v2026, %v2124
      %v2133 = vadd.f32 %v2027, %v2125
      %v2134 = vadd.f32 %v2028, %v2126
      %s2135 = scalar_lea.vmem %s0, 256
      %v2136 = vld [vmem:[%s2135] sm:$0xff]
      %v2137 = vld [vmem:[%s2135 + $0x8] sm:$0xff]
      %v2138 = vld [vmem:[%s2135 + $0x10] sm:$0x1f]
      %v2139 = vld [vmem:[%s2135 + $0x18] sm:$0x1f]
      %s2140 = scalar_lea.vmem %s1, 256
      %v2141 = vld [vmem:[%s2140] sm:$0xff]
      %v2142 = vld [vmem:[%s2140 + $0x8] sm:$0xff]
      %v2143 = vld [vmem:[%s2140 + $0x10] sm:$0x1f]
      %v2144 = vld [vmem:[%s2140 + $0x18] sm:$0x1f]
      %v2145 = vld [vmem:[%s2135] sm:$0xfe]
      %v2146 = vld [vmem:[%s2135 + $0x8] sm:$0xfe]
      %v2147 = vld [vmem:[%s2135 + $0x10] sm:$0x3f]
      %v2148 = vld [vmem:[%s2135 + $0x18] sm:$0x3f]
      %v2149 = vld [vmem:[%s2140] sm:$0xfe]
      %v2150 = vld [vmem:[%s2140 + $0x8] sm:$0xfe]
      %v2151 = vld [vmem:[%s2140 + $0x10] sm:$0x3f]
      %v2152 = vld [vmem:[%s2140 + $0x18] sm:$0x3f]
      %v2153 = vmul.f32 %v294, %v2136
      %v2154 = vmul.f32 %v294, %v2137
      %v2155 = vmul.f32 %v294, %v2138
      %v2156 = vmul.f32 %v294, %v2139
      %v2157 = vmul.f32 %v299, %v2141
      %v2158 = vmul.f32 %v299, %v2142
      %v2159 = vmul.f32 %v299, %v2143
      %v2160 = vmul.f32 %v299, %v2144
      %v2161 = vadd.f32 %v2153, %v2157
      %v2162 = vadd.f32 %v2154, %v2158
      %v2163 = vadd.f32 %v2155, %v2159
      %v2164 = vadd.f32 %v2156, %v2160
      %v2165 = vmul.f32 %v308, %v2145
      %v2166 = vmul.f32 %v308, %v2146
      %v2167 = vmul.f32 %v308, %v2147
      %v2168 = vmul.f32 %v308, %v2148
      %v2173 = vrot.slane %v2165, 1
      %v2174 = vrot.slane %v2167, 1
      %v2175 = vsel %vm102, %v2173, %v2174
      %v2176 = vrot.slane %v2166, 1
      %v2177 = vrot.slane %v2168, 1
      %v2178 = vsel %vm102, %v2176, %v2177
      %v2183 = vadd.f32 %v2161, %v2175
      %v2184 = vadd.f32 %v2162, %v2178
      %v2185 = vadd.f32 %v2163, %v2174
      %v2186 = vadd.f32 %v2164, %v2177
      %v2187 = vmul.f32 %v294, %v2141
      %v2188 = vmul.f32 %v294, %v2142
      %v2189 = vmul.f32 %v294, %v2143
      %v2190 = vmul.f32 %v294, %v2144
      %v2191 = vmul.f32 %v299, %v2145
      %v2192 = vmul.f32 %v299, %v2146
      %v2193 = vmul.f32 %v299, %v2147
      %v2194 = vmul.f32 %v299, %v2148
      %v2199 = vrot.slane %v2191, 1
      %v2200 = vrot.slane %v2193, 1
      %v2201 = vsel %vm102, %v2199, %v2200
      %v2202 = vrot.slane %v2192, 1
      %v2203 = vrot.slane %v2194, 1
      %v2204 = vsel %vm102, %v2202, %v2203
      %v2209 = vadd.f32 %v2187, %v2201
      %v2210 = vadd.f32 %v2188, %v2204
      %v2211 = vadd.f32 %v2189, %v2200
      %v2212 = vadd.f32 %v2190, %v2203
      %v2213 = vmul.f32 %v308, %v2149
      %v2214 = vmul.f32 %v308, %v2150
      %v2215 = vmul.f32 %v308, %v2151
      %v2216 = vmul.f32 %v308, %v2152
      %v2221 = vrot.slane %v2213, 1
      %v2222 = vrot.slane %v2215, 1
      %v2223 = vsel %vm102, %v2221, %v2222
      %v2224 = vrot.slane %v2214, 1
      %v2225 = vrot.slane %v2216, 1
      %v2226 = vsel %vm102, %v2224, %v2225
      %v2231 = vadd.f32 %v2209, %v2223
      %v2232 = vadd.f32 %v2210, %v2226
      %v2233 = vadd.f32 %v2211, %v2222
      %v2234 = vadd.f32 %v2212, %v2225
      %v2235 = vadd.f32 %v2127, %v2183
      %v2236 = vadd.f32 %v2128, %v2184
      %v2237 = vadd.f32 %v2129, %v2185
      %v2238 = vadd.f32 %v2130, %v2186
      %v2239 = vadd.f32 %v2131, %v2231
      %v2240 = vadd.f32 %v2132, %v2232
      %v2241 = vadd.f32 %v2133, %v2233
      %v2242 = vadd.f32 %v2134, %v2234
      %v2243 = vmax.f32 %v2235, %v2239
      %v2244 = vmax.f32 %v2236, %v2240
      %v2245 = vmax.f32 %v2237, %v2241
      %v2246 = vmax.f32 %v2238, %v2242
      %v2247 = vmul.f32 %v79, %v2029
      %v2248 = vmul.f32 %v79, %v2030
      %v2249 = vmul.f32 %v79, %v2031
      %v2250 = vmul.f32 %v79, %v2032
      %v2251 = vmul.f32 %v84, %v2033
      %v2252 = vmul.f32 %v84, %v2034
      %v2253 = vmul.f32 %v84, %v2035
      %v2254 = vmul.f32 %v84, %v2036
      %v2255 = vadd.f32 %v2247, %v2251
      %v2256 = vadd.f32 %v2248, %v2252
      %v2257 = vadd.f32 %v2249, %v2253
      %v2258 = vadd.f32 %v2250, %v2254
      %v2259 = vmul.f32 %v93, %v2037
      %v2260 = vmul.f32 %v93, %v2038
      %v2261 = vmul.f32 %v93, %v2039
      %v2262 = vmul.f32 %v93, %v2040
      %v2267 = vrot.slane %v2259, 1
      %v2268 = vrot.slane %v2261, 1
      %v2269 = vsel %vm102, %v2267, %v2268
      %v2270 = vrot.slane %v2260, 1
      %v2271 = vrot.slane %v2262, 1
      %v2272 = vsel %vm102, %v2270, %v2271
      %v2277 = vadd.f32 %v2255, %v2269
      %v2278 = vadd.f32 %v2256, %v2272
      %v2279 = vadd.f32 %v2257, %v2268
      %v2280 = vadd.f32 %v2258, %v2271
      %v2281 = vmul.f32 %v79, %v2033
      %v2282 = vmul.f32 %v79, %v2034
      %v2283 = vmul.f32 %v79, %v2035
      %v2284 = vmul.f32 %v79, %v2036
      %v2285 = vmul.f32 %v84, %v2037
      %v2286 = vmul.f32 %v84, %v2038
      %v2287 = vmul.f32 %v84, %v2039
      %v2288 = vmul.f32 %v84, %v2040
      %v2293 = vrot.slane %v2285, 1
      %v2294 = vrot.slane %v2287, 1
      %v2295 = vsel %vm102, %v2293, %v2294
      %v2296 = vrot.slane %v2286, 1
      %v2297 = vrot.slane %v2288, 1
      %v2298 = vsel %vm102, %v2296, %v2297
      %v2303 = vadd.f32 %v2281, %v2295
      %v2304 = vadd.f32 %v2282, %v2298
      %v2305 = vadd.f32 %v2283, %v2294
      %v2306 = vadd.f32 %v2284, %v2297
      %v2307 = vmul.f32 %v93, %v2041
      %v2308 = vmul.f32 %v93, %v2042
      %v2309 = vmul.f32 %v93, %v2043
      %v2310 = vmul.f32 %v93, %v2044
      %v2315 = vrot.slane %v2307, 1
      %v2316 = vrot.slane %v2309, 1
      %v2317 = vsel %vm102, %v2315, %v2316
      %v2318 = vrot.slane %v2308, 1
      %v2319 = vrot.slane %v2310, 1
      %v2320 = vsel %vm102, %v2318, %v2319
      %v2325 = vadd.f32 %v2303, %v2317
      %v2326 = vadd.f32 %v2304, %v2320
      %v2327 = vadd.f32 %v2305, %v2316
      %v2328 = vadd.f32 %v2306, %v2319
      %v2329 = vmul.f32 %v183, %v2136
      %v2330 = vmul.f32 %v183, %v2137
      %v2331 = vmul.f32 %v183, %v2138
      %v2332 = vmul.f32 %v183, %v2139
      %v2333 = vmul.f32 %v188, %v2141
      %v2334 = vmul.f32 %v188, %v2142
      %v2335 = vmul.f32 %v188, %v2143
      %v2336 = vmul.f32 %v188, %v2144
      %v2337 = vadd.f32 %v2329, %v2333
      %v2338 = vadd.f32 %v2330, %v2334
      %v2339 = vadd.f32 %v2331, %v2335
      %v2340 = vadd.f32 %v2332, %v2336
      %v2341 = vmul.f32 %v197, %v2145
      %v2342 = vmul.f32 %v197, %v2146
      %v2343 = vmul.f32 %v197, %v2147
      %v2344 = vmul.f32 %v197, %v2148
      %v2349 = vrot.slane %v2341, 1
      %v2350 = vrot.slane %v2343, 1
      %v2351 = vsel %vm102, %v2349, %v2350
      %v2352 = vrot.slane %v2342, 1
      %v2353 = vrot.slane %v2344, 1
      %v2354 = vsel %vm102, %v2352, %v2353
      %v2359 = vadd.f32 %v2337, %v2351
      %v2360 = vadd.f32 %v2338, %v2354
      %v2361 = vadd.f32 %v2339, %v2350
      %v2362 = vadd.f32 %v2340, %v2353
      %v2363 = vmul.f32 %v183, %v2141
      %v2364 = vmul.f32 %v183, %v2142
      %v2365 = vmul.f32 %v183, %v2143
      %v2366 = vmul.f32 %v183, %v2144
      %v2367 = vmul.f32 %v188, %v2145
      %v2368 = vmul.f32 %v188, %v2146
      %v2369 = vmul.f32 %v188, %v2147
      %v2370 = vmul.f32 %v188, %v2148
      %v2375 = vrot.slane %v2367, 1
      %v2376 = vrot.slane %v2369, 1
      %v2377 = vsel %vm102, %v2375, %v2376
      %v2378 = vrot.slane %v2368, 1
      %v2379 = vrot.slane %v2370, 1
      %v2380 = vsel %vm102, %v2378, %v2379
      %v2385 = vadd.f32 %v2363, %v2377
      %v2386 = vadd.f32 %v2364, %v2380
      %v2387 = vadd.f32 %v2365, %v2376
      %v2388 = vadd.f32 %v2366, %v2379
      %v2389 = vmul.f32 %v197, %v2149
      %v2390 = vmul.f32 %v197, %v2150
      %v2391 = vmul.f32 %v197, %v2151
      %v2392 = vmul.f32 %v197, %v2152
      %v2397 = vrot.slane %v2389, 1
      %v2398 = vrot.slane %v2391, 1
      %v2399 = vsel %vm102, %v2397, %v2398
      %v2400 = vrot.slane %v2390, 1
      %v2401 = vrot.slane %v2392, 1
      %v2402 = vsel %vm102, %v2400, %v2401
      %v2407 = vadd.f32 %v2385, %v2399
      %v2408 = vadd.f32 %v2386, %v2402
      %v2409 = vadd.f32 %v2387, %v2398
      %v2410 = vadd.f32 %v2388, %v2401
      %v2411 = vadd.f32 %v2277, %v2359
      %v2412 = vadd.f32 %v2278, %v2360
      %v2413 = vadd.f32 %v2279, %v2361
      %v2414 = vadd.f32 %v2280, %v2362
      %v2415 = vadd.f32 %v2325, %v2407
      %v2416 = vadd.f32 %v2326, %v2408
      %v2417 = vadd.f32 %v2327, %v2409
      %v2418 = vadd.f32 %v2328, %v2410
      %s2419 = scalar_lea.vmem %s0, 288
      %v2420 = vld [vmem:[%s2419] sm:$0xff]
      %v2421 = vld [vmem:[%s2419 + $0x8] sm:$0xff]
      %v2422 = vld [vmem:[%s2419 + $0x10] sm:$0x1f]
      %v2423 = vld [vmem:[%s2419 + $0x18] sm:$0x1f]
      %s2424 = scalar_lea.vmem %s1, 288
      %v2425 = vld [vmem:[%s2424] sm:$0xff]
      %v2426 = vld [vmem:[%s2424 + $0x8] sm:$0xff]
      %v2427 = vld [vmem:[%s2424 + $0x10] sm:$0x1f]
      %v2428 = vld [vmem:[%s2424 + $0x18] sm:$0x1f]
      %v2429 = vld [vmem:[%s2419] sm:$0xfe]
      %v2430 = vld [vmem:[%s2419 + $0x8] sm:$0xfe]
      %v2431 = vld [vmem:[%s2419 + $0x10] sm:$0x3f]
      %v2432 = vld [vmem:[%s2419 + $0x18] sm:$0x3f]
      %v2433 = vld [vmem:[%s2424] sm:$0xfe]
      %v2434 = vld [vmem:[%s2424 + $0x8] sm:$0xfe]
      %v2435 = vld [vmem:[%s2424 + $0x10] sm:$0x3f]
      %v2436 = vld [vmem:[%s2424 + $0x18] sm:$0x3f]
      %v2437 = vmul.f32 %v294, %v2420
      %v2438 = vmul.f32 %v294, %v2421
      %v2439 = vmul.f32 %v294, %v2422
      %v2440 = vmul.f32 %v294, %v2423
      %v2441 = vmul.f32 %v299, %v2425
      %v2442 = vmul.f32 %v299, %v2426
      %v2443 = vmul.f32 %v299, %v2427
      %v2444 = vmul.f32 %v299, %v2428
      %v2445 = vadd.f32 %v2437, %v2441
      %v2446 = vadd.f32 %v2438, %v2442
      %v2447 = vadd.f32 %v2439, %v2443
      %v2448 = vadd.f32 %v2440, %v2444
      %v2449 = vmul.f32 %v308, %v2429
      %v2450 = vmul.f32 %v308, %v2430
      %v2451 = vmul.f32 %v308, %v2431
      %v2452 = vmul.f32 %v308, %v2432
      %v2457 = vrot.slane %v2449, 1
      %v2458 = vrot.slane %v2451, 1
      %v2459 = vsel %vm102, %v2457, %v2458
      %v2460 = vrot.slane %v2450, 1
      %v2461 = vrot.slane %v2452, 1
      %v2462 = vsel %vm102, %v2460, %v2461
      %v2467 = vadd.f32 %v2445, %v2459
      %v2468 = vadd.f32 %v2446, %v2462
      %v2469 = vadd.f32 %v2447, %v2458
      %v2470 = vadd.f32 %v2448, %v2461
      %v2471 = vmul.f32 %v294, %v2425
      %v2472 = vmul.f32 %v294, %v2426
      %v2473 = vmul.f32 %v294, %v2427
      %v2474 = vmul.f32 %v294, %v2428
      %v2475 = vmul.f32 %v299, %v2429
      %v2476 = vmul.f32 %v299, %v2430
      %v2477 = vmul.f32 %v299, %v2431
      %v2478 = vmul.f32 %v299, %v2432
      %v2483 = vrot.slane %v2475, 1
      %v2484 = vrot.slane %v2477, 1
      %v2485 = vsel %vm102, %v2483, %v2484
      %v2486 = vrot.slane %v2476, 1
      %v2487 = vrot.slane %v2478, 1
      %v2488 = vsel %vm102, %v2486, %v2487
      %v2493 = vadd.f32 %v2471, %v2485
      %v2494 = vadd.f32 %v2472, %v2488
      %v2495 = vadd.f32 %v2473, %v2484
      %v2496 = vadd.f32 %v2474, %v2487
      %v2497 = vmul.f32 %v308, %v2433
      %v2498 = vmul.f32 %v308, %v2434
      %v2499 = vmul.f32 %v308, %v2435
      %v2500 = vmul.f32 %v308, %v2436
      %v2505 = vrot.slane %v2497, 1
      %v2506 = vrot.slane %v2499, 1
      %v2507 = vsel %vm102, %v2505, %v2506
      %v2508 = vrot.slane %v2498, 1
      %v2509 = vrot.slane %v2500, 1
      %v2510 = vsel %vm102, %v2508, %v2509
      %v2515 = vadd.f32 %v2493, %v2507
      %v2516 = vadd.f32 %v2494, %v2510
      %v2517 = vadd.f32 %v2495, %v2506
      %v2518 = vadd.f32 %v2496, %v2509
      %v2519 = vadd.f32 %v2411, %v2467
      %v2520 = vadd.f32 %v2412, %v2468
      %v2521 = vadd.f32 %v2413, %v2469
      %v2522 = vadd.f32 %v2414, %v2470
      %v2523 = vadd.f32 %v2415, %v2515
      %v2524 = vadd.f32 %v2416, %v2516
      %v2525 = vadd.f32 %v2417, %v2517
      %v2526 = vadd.f32 %v2418, %v2518
      %v2527 = vmax.f32 %v2519, %v2523
      %v2528 = vmax.f32 %v2520, %v2524
      %v2529 = vmax.f32 %v2521, %v2525
      %v2530 = vmax.f32 %v2522, %v2526
      %v2531 = vmax.f32 %v2243, %v2527
      %v2532 = vmax.f32 %v2244, %v2528
      %v2533 = vmax.f32 %v2245, %v2529
      %v2534 = vmax.f32 %v2246, %v2530
      %v2535 = vadd.f32 %v2531, %v679
      %v2536 = vadd.f32 %v2532, %v679
      %v2537 = vadd.f32 %v2533, %v679
      %v2538 = vadd.f32 %v2534, %v679
      %v2539 = vmax.f32 %v2535, 0.0
      %v2540 = vmax.f32 %v2536, 0.0
      %v2541 = vmax.f32 %v2537, 0.0
      %v2542 = vmax.f32 %v2538, 0.0
      %v2543 = vsel %vm688, %v2541, 0.0
      %v2544 = vsel %vm688, %v2542, 0.0
      %2545 = vst [vmem:[#allocation2 + $0x60] sm:$0xff] %v2539
      %2546 = vst [vmem:[#allocation2 + $0x68] sm:$0xff] %v2540
      %2547 = vst [vmem:[#allocation2 + $0x70] sm:$0xff] %v2543
      %2548 = vst [vmem:[#allocation2 + $0x78] sm:$0xff] %v2544
      %v2549 = vld [vmem:[%s2135] sm:$0xff]
      %v2550 = vld [vmem:[%s2135 + $0x8] sm:$0xff]
      %v2551 = vld [vmem:[%s2135 + $0x10] sm:$0x1f]
      %v2552 = vld [vmem:[%s2135 + $0x18] sm:$0x1f]
      %v2553 = vld [vmem:[%s2140] sm:$0xff]
      %v2554 = vld [vmem:[%s2140 + $0x8] sm:$0xff]
      %v2555 = vld [vmem:[%s2140 + $0x10] sm:$0x1f]
      %v2556 = vld [vmem:[%s2140 + $0x18] sm:$0x1f]
      %v2557 = vld [vmem:[%s2135] sm:$0xfe]
      %v2558 = vld [vmem:[%s2135 + $0x8] sm:$0xfe]
      %v2559 = vld [vmem:[%s2135 + $0x10] sm:$0x3f]
      %v2560 = vld [vmem:[%s2135 + $0x18] sm:$0x3f]
      %v2561 = vld [vmem:[%s2140] sm:$0xfe]
      %v2562 = vld [vmem:[%s2140 + $0x8] sm:$0xfe]
      %v2563 = vld [vmem:[%s2140 + $0x10] sm:$0x3f]
      %v2564 = vld [vmem:[%s2140 + $0x18] sm:$0x3f]
      %v2565 = vmul.f32 %v79, %v2549
      %v2566 = vmul.f32 %v79, %v2550
      %v2567 = vmul.f32 %v79, %v2551
      %v2568 = vmul.f32 %v79, %v2552
      %v2569 = vmul.f32 %v84, %v2553
      %v2570 = vmul.f32 %v84, %v2554
      %v2571 = vmul.f32 %v84, %v2555
      %v2572 = vmul.f32 %v84, %v2556
      %v2573 = vadd.f32 %v2565, %v2569
      %v2574 = vadd.f32 %v2566, %v2570
      %v2575 = vadd.f32 %v2567, %v2571
      %v2576 = vadd.f32 %v2568, %v2572
      %v2577 = vmul.f32 %v93, %v2557
      %v2578 = vmul.f32 %v93, %v2558
      %v2579 = vmul.f32 %v93, %v2559
      %v2580 = vmul.f32 %v93, %v2560
      %v2585 = vrot.slane %v2577, 1
      %v2586 = vrot.slane %v2579, 1
      %v2587 = vsel %vm102, %v2585, %v2586
      %v2588 = vrot.slane %v2578, 1
      %v2589 = vrot.slane %v2580, 1
      %v2590 = vsel %vm102, %v2588, %v2589
      %v2595 = vadd.f32 %v2573, %v2587
      %v2596 = vadd.f32 %v2574, %v2590
      %v2597 = vadd.f32 %v2575, %v2586
      %v2598 = vadd.f32 %v2576, %v2589
      %v2599 = vmul.f32 %v79, %v2553
      %v2600 = vmul.f32 %v79, %v2554
      %v2601 = vmul.f32 %v79, %v2555
      %v2602 = vmul.f32 %v79, %v2556
      %v2603 = vmul.f32 %v84, %v2557
      %v2604 = vmul.f32 %v84, %v2558
      %v2605 = vmul.f32 %v84, %v2559
      %v2606 = vmul.f32 %v84, %v2560
      %v2611 = vrot.slane %v2603, 1
      %v2612 = vrot.slane %v2605, 1
      %v2613 = vsel %vm102, %v2611, %v2612
      %v2614 = vrot.slane %v2604, 1
      %v2615 = vrot.slane %v2606, 1
      %v2616 = vsel %vm102, %v2614, %v2615
      %v2621 = vadd.f32 %v2599, %v2613
      %v2622 = vadd.f32 %v2600, %v2616
      %v2623 = vadd.f32 %v2601, %v2612
      %v2624 = vadd.f32 %v2602, %v2615
      %v2625 = vmul.f32 %v93, %v2561
      %v2626 = vmul.f32 %v93, %v2562
      %v2627 = vmul.f32 %v93, %v2563
      %v2628 = vmul.f32 %v93, %v2564
      %v2633 = vrot.slane %v2625, 1
      %v2634 = vrot.slane %v2627, 1
      %v2635 = vsel %vm102, %v2633, %v2634
      %v2636 = vrot.slane %v2626, 1
      %v2637 = vrot.slane %v2628, 1
      %v2638 = vsel %vm102, %v2636, %v2637
      %v2643 = vadd.f32 %v2621, %v2635
      %v2644 = vadd.f32 %v2622, %v2638
      %v2645 = vadd.f32 %v2623, %v2634
      %v2646 = vadd.f32 %v2624, %v2637
      %v2647 = vld [vmem:[%s2419] sm:$0xff]
      %v2648 = vld [vmem:[%s2419 + $0x8] sm:$0xff]
      %v2649 = vld [vmem:[%s2419 + $0x10] sm:$0x1f]
      %v2650 = vld [vmem:[%s2419 + $0x18] sm:$0x1f]
      %v2651 = vld [vmem:[%s2424] sm:$0xff]
      %v2652 = vld [vmem:[%s2424 + $0x8] sm:$0xff]
      %v2653 = vld [vmem:[%s2424 + $0x10] sm:$0x1f]
      %v2654 = vld [vmem:[%s2424 + $0x18] sm:$0x1f]
      %v2655 = vld [vmem:[%s2419] sm:$0xfe]
      %v2656 = vld [vmem:[%s2419 + $0x8] sm:$0xfe]
      %v2657 = vld [vmem:[%s2419 + $0x10] sm:$0x3f]
      %v2658 = vld [vmem:[%s2419 + $0x18] sm:$0x3f]
      %v2659 = vld [vmem:[%s2424] sm:$0xfe]
      %v2660 = vld [vmem:[%s2424 + $0x8] sm:$0xfe]
      %v2661 = vld [vmem:[%s2424 + $0x10] sm:$0x3f]
      %v2662 = vld [vmem:[%s2424 + $0x18] sm:$0x3f]
      %v2663 = vmul.f32 %v183, %v2647
      %v2664 = vmul.f32 %v183, %v2648
      %v2665 = vmul.f32 %v183, %v2649
      %v2666 = vmul.f32 %v183, %v2650
      %v2667 = vmul.f32 %v188, %v2651
      %v2668 = vmul.f32 %v188, %v2652
      %v2669 = vmul.f32 %v188, %v2653
      %v2670 = vmul.f32 %v188, %v2654
      %v2671 = vadd.f32 %v2663, %v2667
      %v2672 = vadd.f32 %v2664, %v2668
      %v2673 = vadd.f32 %v2665, %v2669
      %v2674 = vadd.f32 %v2666, %v2670
      %v2675 = vmul.f32 %v197, %v2655
      %v2676 = vmul.f32 %v197, %v2656
      %v2677 = vmul.f32 %v197, %v2657
      %v2678 = vmul.f32 %v197, %v2658
      %v2683 = vrot.slane %v2675, 1
      %v2684 = vrot.slane %v2677, 1
      %v2685 = vsel %vm102, %v2683, %v2684
      %v2686 = vrot.slane %v2676, 1
      %v2687 = vrot.slane %v2678, 1
      %v2688 = vsel %vm102, %v2686, %v2687
      %v2693 = vadd.f32 %v2671, %v2685
      %v2694 = vadd.f32 %v2672, %v2688
      %v2695 = vadd.f32 %v2673, %v2684
      %v2696 = vadd.f32 %v2674, %v2687
      %v2697 = vmul.f32 %v183, %v2651
      %v2698 = vmul.f32 %v183, %v2652
      %v2699 = vmul.f32 %v183, %v2653
      %v2700 = vmul.f32 %v183, %v2654
      %v2701 = vmul.f32 %v188, %v2655
      %v2702 = vmul.f32 %v188, %v2656
      %v2703 = vmul.f32 %v188, %v2657
      %v2704 = vmul.f32 %v188, %v2658
      %v2709 = vrot.slane %v2701, 1
      %v2710 = vrot.slane %v2703, 1
      %v2711 = vsel %vm102, %v2709, %v2710
      %v2712 = vrot.slane %v2702, 1
      %v2713 = vrot.slane %v2704, 1
      %v2714 = vsel %vm102, %v2712, %v2713
      %v2719 = vadd.f32 %v2697, %v2711
      %v2720 = vadd.f32 %v2698, %v2714
      %v2721 = vadd.f32 %v2699, %v2710
      %v2722 = vadd.f32 %v2700, %v2713
      %v2723 = vmul.f32 %v197, %v2659
      %v2724 = vmul.f32 %v197, %v2660
      %v2725 = vmul.f32 %v197, %v2661
      %v2726 = vmul.f32 %v197, %v2662
      %v2731 = vrot.slane %v2723, 1
      %v2732 = vrot.slane %v2725, 1
      %v2733 = vsel %vm102, %v2731, %v2732
      %v2734 = vrot.slane %v2724, 1
      %v2735 = vrot.slane %v2726, 1
      %v2736 = vsel %vm102, %v2734, %v2735
      %v2741 = vadd.f32 %v2719, %v2733
      %v2742 = vadd.f32 %v2720, %v2736
      %v2743 = vadd.f32 %v2721, %v2732
      %v2744 = vadd.f32 %v2722, %v2735
      %v2745 = vadd.f32 %v2595, %v2693
      %v2746 = vadd.f32 %v2596, %v2694
      %v2747 = vadd.f32 %v2597, %v2695
      %v2748 = vadd.f32 %v2598, %v2696
      %v2749 = vadd.f32 %v2643, %v2741
      %v2750 = vadd.f32 %v2644, %v2742
      %v2751 = vadd.f32 %v2645, %v2743
      %v2752 = vadd.f32 %v2646, %v2744
      %s2753 = scalar_lea.vmem %s0, 320
      %v2754 = vld [vmem:[%s2753] sm:$0xff]
      %v2755 = vld [vmem:[%s2753 + $0x8] sm:$0xff]
      %v2756 = vld [vmem:[%s2753 + $0x10] sm:$0x1f]
      %v2757 = vld [vmem:[%s2753 + $0x18] sm:$0x1f]
      %s2758 = scalar_lea.vmem %s1, 320
      %v2759 = vld [vmem:[%s2758] sm:$0xff]
      %v2760 = vld [vmem:[%s2758 + $0x8] sm:$0xff]
      %v2761 = vld [vmem:[%s2758 + $0x10] sm:$0x1f]
      %v2762 = vld [vmem:[%s2758 + $0x18] sm:$0x1f]
      %v2763 = vld [vmem:[%s2753] sm:$0xfe]
      %v2764 = vld [vmem:[%s2753 + $0x8] sm:$0xfe]
      %v2765 = vld [vmem:[%s2753 + $0x10] sm:$0x3f]
      %v2766 = vld [vmem:[%s2753 + $0x18] sm:$0x3f]
      %v2767 = vld [vmem:[%s2758] sm:$0xfe]
      %v2768 = vld [vmem:[%s2758 + $0x8] sm:$0xfe]
      %v2769 = vld [vmem:[%s2758 + $0x10] sm:$0x3f]
      %v2770 = vld [vmem:[%s2758 + $0x18] sm:$0x3f]
      %v2771 = vmul.f32 %v294, %v2754
      %v2772 = vmul.f32 %v294, %v2755
      %v2773 = vmul.f32 %v294, %v2756
      %v2774 = vmul.f32 %v294, %v2757
      %v2775 = vmul.f32 %v299, %v2759
      %v2776 = vmul.f32 %v299, %v2760
      %v2777 = vmul.f32 %v299, %v2761
      %v2778 = vmul.f32 %v299, %v2762
      %v2779 = vadd.f32 %v2771, %v2775
      %v2780 = vadd.f32 %v2772, %v2776
      %v2781 = vadd.f32 %v2773, %v2777
      %v2782 = vadd.f32 %v2774, %v2778
      %v2783 = vmul.f32 %v308, %v2763
      %v2784 = vmul.f32 %v308, %v2764
      %v2785 = vmul.f32 %v308, %v2765
      %v2786 = vmul.f32 %v308, %v2766
      %v2791 = vrot.slane %v2783, 1
      %v2792 = vrot.slane %v2785, 1
      %v2793 = vsel %vm102, %v2791, %v2792
      %v2794 = vrot.slane %v2784, 1
      %v2795 = vrot.slane %v2786, 1
      %v2796 = vsel %vm102, %v2794, %v2795
      %v2801 = vadd.f32 %v2779, %v2793
      %v2802 = vadd.f32 %v2780, %v2796
      %v2803 = vadd.f32 %v2781, %v2792
      %v2804 = vadd.f32 %v2782, %v2795
      %v2805 = vmul.f32 %v294, %v2759
      %v2806 = vmul.f32 %v294, %v2760
      %v2807 = vmul.f32 %v294, %v2761
      %v2808 = vmul.f32 %v294, %v2762
      %v2809 = vmul.f32 %v299, %v2763
      %v2810 = vmul.f32 %v299, %v2764
      %v2811 = vmul.f32 %v299, %v2765
      %v2812 = vmul.f32 %v299, %v2766
      %v2817 = vrot.slane %v2809, 1
      %v2818 = vrot.slane %v2811, 1
      %v2819 = vsel %vm102, %v2817, %v2818
      %v2820 = vrot.slane %v2810, 1
      %v2821 = vrot.slane %v2812, 1
      %v2822 = vsel %vm102, %v2820, %v2821
      %v2827 = vadd.f32 %v2805, %v2819
      %v2828 = vadd.f32 %v2806, %v2822
      %v2829 = vadd.f32 %v2807, %v2818
      %v2830 = vadd.f32 %v2808, %v2821
      %v2831 = vmul.f32 %v308, %v2767
      %v2832 = vmul.f32 %v308, %v2768
      %v2833 = vmul.f32 %v308, %v2769
      %v2834 = vmul.f32 %v308, %v2770
      %v2839 = vrot.slane %v2831, 1
      %v2840 = vrot.slane %v2833, 1
      %v2841 = vsel %vm102, %v2839, %v2840
      %v2842 = vrot.slane %v2832, 1
      %v2843 = vrot.slane %v2834, 1
      %v2844 = vsel %vm102, %v2842, %v2843
      %v2849 = vadd.f32 %v2827, %v2841
      %v2850 = vadd.f32 %v2828, %v2844
      %v2851 = vadd.f32 %v2829, %v2840
      %v2852 = vadd.f32 %v2830, %v2843
      %v2853 = vadd.f32 %v2745, %v2801
      %v2854 = vadd.f32 %v2746, %v2802
      %v2855 = vadd.f32 %v2747, %v2803
      %v2856 = vadd.f32 %v2748, %v2804
      %v2857 = vadd.f32 %v2749, %v2849
      %v2858 = vadd.f32 %v2750, %v2850
      %v2859 = vadd.f32 %v2751, %v2851
      %v2860 = vadd.f32 %v2752, %v2852
      %v2861 = vmax.f32 %v2853, %v2857
      %v2862 = vmax.f32 %v2854, %v2858
      %v2863 = vmax.f32 %v2855, %v2859
      %v2864 = vmax.f32 %v2856, %v2860
      %v2865 = vmul.f32 %v79, %v2647
      %v2866 = vmul.f32 %v79, %v2648
      %v2867 = vmul.f32 %v79, %v2649
      %v2868 = vmul.f32 %v79, %v2650
      %v2869 = vmul.f32 %v84, %v2651
      %v2870 = vmul.f32 %v84, %v2652
      %v2871 = vmul.f32 %v84, %v2653
      %v2872 = vmul.f32 %v84, %v2654
      %v2873 = vadd.f32 %v2865, %v2869
      %v2874 = vadd.f32 %v2866, %v2870
      %v2875 = vadd.f32 %v2867, %v2871
      %v2876 = vadd.f32 %v2868, %v2872
      %v2877 = vmul.f32 %v93, %v2655
      %v2878 = vmul.f32 %v93, %v2656
      %v2879 = vmul.f32 %v93, %v2657
      %v2880 = vmul.f32 %v93, %v2658
      %v2885 = vrot.slane %v2877, 1
      %v2886 = vrot.slane %v2879, 1
      %v2887 = vsel %vm102, %v2885, %v2886
      %v2888 = vrot.slane %v2878, 1
      %v2889 = vrot.slane %v2880, 1
      %v2890 = vsel %vm102, %v2888, %v2889
      %v2895 = vadd.f32 %v2873, %v2887
      %v2896 = vadd.f32 %v2874, %v2890
      %v2897 = vadd.f32 %v2875, %v2886
      %v2898 = vadd.f32 %v2876, %v2889
      %v2899 = vmul.f32 %v79, %v2651
      %v2900 = vmul.f32 %v79, %v2652
      %v2901 = vmul.f32 %v79, %v2653
      %v2902 = vmul.f32 %v79, %v2654
      %v2903 = vmul.f32 %v84, %v2655
      %v2904 = vmul.f32 %v84, %v2656
      %v2905 = vmul.f32 %v84, %v2657
      %v2906 = vmul.f32 %v84, %v2658
      %v2911 = vrot.slane %v2903, 1
      %v2912 = vrot.slane %v2905, 1
      %v2913 = vsel %vm102, %v2911, %v2912
      %v2914 = vrot.slane %v2904, 1
      %v2915 = vrot.slane %v2906, 1
      %v2916 = vsel %vm102, %v2914, %v2915
      %v2921 = vadd.f32 %v2899, %v2913
      %v2922 = vadd.f32 %v2900, %v2916
      %v2923 = vadd.f32 %v2901, %v2912
      %v2924 = vadd.f32 %v2902, %v2915
      %v2925 = vmul.f32 %v93, %v2659
      %v2926 = vmul.f32 %v93, %v2660
      %v2927 = vmul.f32 %v93, %v2661
      %v2928 = vmul.f32 %v93, %v2662
      %v2933 = vrot.slane %v2925, 1
      %v2934 = vrot.slane %v2927, 1
      %v2935 = vsel %vm102, %v2933, %v2934
      %v2936 = vrot.slane %v2926, 1
      %v2937 = vrot.slane %v2928, 1
      %v2938 = vsel %vm102, %v2936, %v2937
      %v2943 = vadd.f32 %v2921, %v2935
      %v2944 = vadd.f32 %v2922, %v2938
      %v2945 = vadd.f32 %v2923, %v2934
      %v2946 = vadd.f32 %v2924, %v2937
      %v2947 = vmul.f32 %v183, %v2754
      %v2948 = vmul.f32 %v183, %v2755
      %v2949 = vmul.f32 %v183, %v2756
      %v2950 = vmul.f32 %v183, %v2757
      %v2951 = vmul.f32 %v188, %v2759
      %v2952 = vmul.f32 %v188, %v2760
      %v2953 = vmul.f32 %v188, %v2761
      %v2954 = vmul.f32 %v188, %v2762
      %v2955 = vadd.f32 %v2947, %v2951
      %v2956 = vadd.f32 %v2948, %v2952
      %v2957 = vadd.f32 %v2949, %v2953
      %v2958 = vadd.f32 %v2950, %v2954
      %v2959 = vmul.f32 %v197, %v2763
      %v2960 = vmul.f32 %v197, %v2764
      %v2961 = vmul.f32 %v197, %v2765
      %v2962 = vmul.f32 %v197, %v2766
      %v2967 = vrot.slane %v2959, 1
      %v2968 = vrot.slane %v2961, 1
      %v2969 = vsel %vm102, %v2967, %v2968
      %v2970 = vrot.slane %v2960, 1
      %v2971 = vrot.slane %v2962, 1
      %v2972 = vsel %vm102, %v2970, %v2971
      %v2977 = vadd.f32 %v2955, %v2969
      %v2978 = vadd.f32 %v2956, %v2972
      %v2979 = vadd.f32 %v2957, %v2968
      %v2980 = vadd.f32 %v2958, %v2971
      %v2981 = vmul.f32 %v183, %v2759
      %v2982 = vmul.f32 %v183, %v2760
      %v2983 = vmul.f32 %v183, %v2761
      %v2984 = vmul.f32 %v183, %v2762
      %v2985 = vmul.f32 %v188, %v2763
      %v2986 = vmul.f32 %v188, %v2764
      %v2987 = vmul.f32 %v188, %v2765
      %v2988 = vmul.f32 %v188, %v2766
      %v2993 = vrot.slane %v2985, 1
      %v2994 = vrot.slane %v2987, 1
      %v2995 = vsel %vm102, %v2993, %v2994
      %v2996 = vrot.slane %v2986, 1
      %v2997 = vrot.slane %v2988, 1
      %v2998 = vsel %vm102, %v2996, %v2997
      %v3003 = vadd.f32 %v2981, %v2995
      %v3004 = vadd.f32 %v2982, %v2998
      %v3005 = vadd.f32 %v2983, %v2994
      %v3006 = vadd.f32 %v2984, %v2997
      %v3007 = vmul.f32 %v197, %v2767
      %v3008 = vmul.f32 %v197, %v2768
      %v3009 = vmul.f32 %v197, %v2769
      %v3010 = vmul.f32 %v197, %v2770
      %v3015 = vrot.slane %v3007, 1
      %v3016 = vrot.slane %v3009, 1
      %v3017 = vsel %vm102, %v3015, %v3016
      %v3018 = vrot.slane %v3008, 1
      %v3019 = vrot.slane %v3010, 1
      %v3020 = vsel %vm102, %v3018, %v3019
      %v3025 = vadd.f32 %v3003, %v3017
      %v3026 = vadd.f32 %v3004, %v3020
      %v3027 = vadd.f32 %v3005, %v3016
      %v3028 = vadd.f32 %v3006, %v3019
      %v3029 = vadd.f32 %v2895, %v2977
      %v3030 = vadd.f32 %v2896, %v2978
      %v3031 = vadd.f32 %v2897, %v2979
      %v3032 = vadd.f32 %v2898, %v2980
      %v3033 = vadd.f32 %v2943, %v3025
      %v3034 = vadd.f32 %v2944, %v3026
      %v3035 = vadd.f32 %v2945, %v3027
      %v3036 = vadd.f32 %v2946, %v3028
      %s3037 = scalar_lea.vmem %s0, 352
      %v3038 = vld [vmem:[%s3037] sm:$0xff]
      %v3039 = vld [vmem:[%s3037 + $0x8] sm:$0xff]
      %v3040 = vld [vmem:[%s3037 + $0x10] sm:$0x1f]
      %v3041 = vld [vmem:[%s3037 + $0x18] sm:$0x1f]
      %s3042 = scalar_lea.vmem %s1, 352
      %v3043 = vld [vmem:[%s3042] sm:$0xff]
      %v3044 = vld [vmem:[%s3042 + $0x8] sm:$0xff]
      %v3045 = vld [vmem:[%s3042 + $0x10] sm:$0x1f]
      %v3046 = vld [vmem:[%s3042 + $0x18] sm:$0x1f]
      %v3047 = vld [vmem:[%s3037] sm:$0xfe]
      %v3048 = vld [vmem:[%s3037 + $0x8] sm:$0xfe]
      %v3049 = vld [vmem:[%s3037 + $0x10] sm:$0x3f]
      %v3050 = vld [vmem:[%s3037 + $0x18] sm:$0x3f]
      %v3051 = vld [vmem:[%s3042] sm:$0xfe]
      %v3052 = vld [vmem:[%s3042 + $0x8] sm:$0xfe]
      %v3053 = vld [vmem:[%s3042 + $0x10] sm:$0x3f]
      %v3054 = vld [vmem:[%s3042 + $0x18] sm:$0x3f]
      %v3055 = vmul.f32 %v294, %v3038
      %v3056 = vmul.f32 %v294, %v3039
      %v3057 = vmul.f32 %v294, %v3040
      %v3058 = vmul.f32 %v294, %v3041
      %v3059 = vmul.f32 %v299, %v3043
      %v3060 = vmul.f32 %v299, %v3044
      %v3061 = vmul.f32 %v299, %v3045
      %v3062 = vmul.f32 %v299, %v3046
      %v3063 = vadd.f32 %v3055, %v3059
      %v3064 = vadd.f32 %v3056, %v3060
      %v3065 = vadd.f32 %v3057, %v3061
      %v3066 = vadd.f32 %v3058, %v3062
      %v3067 = vmul.f32 %v308, %v3047
      %v3068 = vmul.f32 %v308, %v3048
      %v3069 = vmul.f32 %v308, %v3049
      %v3070 = vmul.f32 %v308, %v3050
      %v3075 = vrot.slane %v3067, 1
      %v3076 = vrot.slane %v3069, 1
      %v3077 = vsel %vm102, %v3075, %v3076
      %v3078 = vrot.slane %v3068, 1
      %v3079 = vrot.slane %v3070, 1
      %v3080 = vsel %vm102, %v3078, %v3079
      %v3085 = vadd.f32 %v3063, %v3077
      %v3086 = vadd.f32 %v3064, %v3080
      %v3087 = vadd.f32 %v3065, %v3076
      %v3088 = vadd.f32 %v3066, %v3079
      %v3089 = vmul.f32 %v294, %v3043
      %v3090 = vmul.f32 %v294, %v3044
      %v3091 = vmul.f32 %v294, %v3045
      %v3092 = vmul.f32 %v294, %v3046
      %v3093 = vmul.f32 %v299, %v3047
      %v3094 = vmul.f32 %v299, %v3048
      %v3095 = vmul.f32 %v299, %v3049
      %v3096 = vmul.f32 %v299, %v3050
      %v3101 = vrot.slane %v3093, 1
      %v3102 = vrot.slane %v3095, 1
      %v3103 = vsel %vm102, %v3101, %v3102
      %v3104 = vrot.slane %v3094, 1
      %v3105 = vrot.slane %v3096, 1
      %v3106 = vsel %vm102, %v3104, %v3105
      %v3111 = vadd.f32 %v3089, %v3103
      %v3112 = vadd.f32 %v3090, %v3106
      %v3113 = vadd.f32 %v3091, %v3102
      %v3114 = vadd.f32 %v3092, %v3105
      %v3115 = vmul.f32 %v308, %v3051
      %v3116 = vmul.f32 %v308, %v3052
      %v3117 = vmul.f32 %v308, %v3053
      %v3118 = vmul.f32 %v308, %v3054
      %v3123 = vrot.slane %v3115, 1
      %v3124 = vrot.slane %v3117, 1
      %v3125 = vsel %vm102, %v3123, %v3124
      %v3126 = vrot.slane %v3116, 1
      %v3127 = vrot.slane %v3118, 1
      %v3128 = vsel %vm102, %v3126, %v3127
      %v3133 = vadd.f32 %v3111, %v3125
      %v3134 = vadd.f32 %v3112, %v3128
      %v3135 = vadd.f32 %v3113, %v3124
      %v3136 = vadd.f32 %v3114, %v3127
      %v3137 = vadd.f32 %v3029, %v3085
      %v3138 = vadd.f32 %v3030, %v3086
      %v3139 = vadd.f32 %v3031, %v3087
      %v3140 = vadd.f32 %v3032, %v3088
      %v3141 = vadd.f32 %v3033, %v3133
      %v3142 = vadd.f32 %v3034, %v3134
      %v3143 = vadd.f32 %v3035, %v3135
      %v3144 = vadd.f32 %v3036, %v3136
      %v3145 = vmax.f32 %v3137, %v3141
      %v3146 = vmax.f32 %v3138, %v3142
      %v3147 = vmax.f32 %v3139, %v3143
      %v3148 = vmax.f32 %v3140, %v3144
      %v3149 = vmax.f32 %v2861, %v3145
      %v3150 = vmax.f32 %v2862, %v3146
      %v3151 = vmax.f32 %v2863, %v3147
      %v3152 = vmax.f32 %v2864, %v3148
      %v3153 = vadd.f32 %v3149, %v679
      %v3154 = vadd.f32 %v3150, %v679
      %v3155 = vadd.f32 %v3151, %v679
      %v3156 = vadd.f32 %v3152, %v679
      %v3157 = vmax.f32 %v3153, 0.0
      %v3158 = vmax.f32 %v3154, 0.0
      %v3159 = vmax.f32 %v3155, 0.0
      %v3160 = vmax.f32 %v3156, 0.0
      %v3161 = vsel %vm688, %v3159, 0.0
      %v3162 = vsel %vm688, %v3160, 0.0
      %3163 = vst [vmem:[#allocation2 + $0x80] sm:$0xff] %v3157
      %3164 = vst [vmem:[#allocation2 + $0x88] sm:$0xff] %v3158
      %3165 = vst [vmem:[#allocation2 + $0x90] sm:$0xff] %v3161
      %3166 = vst [vmem:[#allocation2 + $0x98] sm:$0xff] %v3162
      %v3167 = vld [vmem:[%s2753] sm:$0xff]
      %v3168 = vld [vmem:[%s2753 + $0x8] sm:$0xff]
      %v3169 = vld [vmem:[%s2753 + $0x10] sm:$0x1f]
      %v3170 = vld [vmem:[%s2753 + $0x18] sm:$0x1f]
      %v3171 = vld [vmem:[%s2758] sm:$0xff]
      %v3172 = vld [vmem:[%s2758 + $0x8] sm:$0xff]
      %v3173 = vld [vmem:[%s2758 + $0x10] sm:$0x1f]
      %v3174 = vld [vmem:[%s2758 + $0x18] sm:$0x1f]
      %v3175 = vld [vmem:[%s2753] sm:$0xfe]
      %v3176 = vld [vmem:[%s2753 + $0x8] sm:$0xfe]
      %v3177 = vld [vmem:[%s2753 + $0x10] sm:$0x3f]
      %v3178 = vld [vmem:[%s2753 + $0x18] sm:$0x3f]
      %v3179 = vld [vmem:[%s2758] sm:$0xfe]
      %v3180 = vld [vmem:[%s2758 + $0x8] sm:$0xfe]
      %v3181 = vld [vmem:[%s2758 + $0x10] sm:$0x3f]
      %v3182 = vld [vmem:[%s2758 + $0x18] sm:$0x3f]
      %v3183 = vmul.f32 %v79, %v3167
      %v3184 = vmul.f32 %v79, %v3168
      %v3185 = vmul.f32 %v79, %v3169
      %v3186 = vmul.f32 %v79, %v3170
      %v3187 = vmul.f32 %v84, %v3171
      %v3188 = vmul.f32 %v84, %v3172
      %v3189 = vmul.f32 %v84, %v3173
      %v3190 = vmul.f32 %v84, %v3174
      %v3191 = vadd.f32 %v3183, %v3187
      %v3192 = vadd.f32 %v3184, %v3188
      %v3193 = vadd.f32 %v3185, %v3189
      %v3194 = vadd.f32 %v3186, %v3190
      %v3195 = vmul.f32 %v93, %v3175
      %v3196 = vmul.f32 %v93, %v3176
      %v3197 = vmul.f32 %v93, %v3177
      %v3198 = vmul.f32 %v93, %v3178
      %v3203 = vrot.slane %v3195, 1
      %v3204 = vrot.slane %v3197, 1
      %v3205 = vsel %vm102, %v3203, %v3204
      %v3206 = vrot.slane %v3196, 1
      %v3207 = vrot.slane %v3198, 1
      %v3208 = vsel %vm102, %v3206, %v3207
      %v3213 = vadd.f32 %v3191, %v3205
      %v3214 = vadd.f32 %v3192, %v3208
      %v3215 = vadd.f32 %v3193, %v3204
      %v3216 = vadd.f32 %v3194, %v3207
      %v3217 = vmul.f32 %v79, %v3171
      %v3218 = vmul.f32 %v79, %v3172
      %v3219 = vmul.f32 %v79, %v3173
      %v3220 = vmul.f32 %v79, %v3174
      %v3221 = vmul.f32 %v84, %v3175
      %v3222 = vmul.f32 %v84, %v3176
      %v3223 = vmul.f32 %v84, %v3177
      %v3224 = vmul.f32 %v84, %v3178
      %v3229 = vrot.slane %v3221, 1
      %v3230 = vrot.slane %v3223, 1
      %v3231 = vsel %vm102, %v3229, %v3230
      %v3232 = vrot.slane %v3222, 1
      %v3233 = vrot.slane %v3224, 1
      %v3234 = vsel %vm102, %v3232, %v3233
      %v3239 = vadd.f32 %v3217, %v3231
      %v3240 = vadd.f32 %v3218, %v3234
      %v3241 = vadd.f32 %v3219, %v3230
      %v3242 = vadd.f32 %v3220, %v3233
      %v3243 = vmul.f32 %v93, %v3179
      %v3244 = vmul.f32 %v93, %v3180
      %v3245 = vmul.f32 %v93, %v3181
      %v3246 = vmul.f32 %v93, %v3182
      %v3251 = vrot.slane %v3243, 1
      %v3252 = vrot.slane %v3245, 1
      %v3253 = vsel %vm102, %v3251, %v3252
      %v3254 = vrot.slane %v3244, 1
      %v3255 = vrot.slane %v3246, 1
      %v3256 = vsel %vm102, %v3254, %v3255
      %v3261 = vadd.f32 %v3239, %v3253
      %v3262 = vadd.f32 %v3240, %v3256
      %v3263 = vadd.f32 %v3241, %v3252
      %v3264 = vadd.f32 %v3242, %v3255
      %v3265 = vld [vmem:[%s3037] sm:$0xff]
      %v3266 = vld [vmem:[%s3037 + $0x8] sm:$0xff]
      %v3267 = vld [vmem:[%s3037 + $0x10] sm:$0x1f]
      %v3268 = vld [vmem:[%s3037 + $0x18] sm:$0x1f]
      %v3269 = vld [vmem:[%s3042] sm:$0xff]
      %v3270 = vld [vmem:[%s3042 + $0x8] sm:$0xff]
      %v3271 = vld [vmem:[%s3042 + $0x10] sm:$0x1f]
      %v3272 = vld [vmem:[%s3042 + $0x18] sm:$0x1f]
      %v3273 = vld [vmem:[%s3037] sm:$0xfe]
      %v3274 = vld [vmem:[%s3037 + $0x8] sm:$0xfe]
      %v3275 = vld [vmem:[%s3037 + $0x10] sm:$0x3f]
      %v3276 = vld [vmem:[%s3037 + $0x18] sm:$0x3f]
      %v3277 = vld [vmem:[%s3042] sm:$0xfe]
      %v3278 = vld [vmem:[%s3042 + $0x8] sm:$0xfe]
      %v3279 = vld [vmem:[%s3042 + $0x10] sm:$0x3f]
      %v3280 = vld [vmem:[%s3042 + $0x18] sm:$0x3f]
      %v3281 = vmul.f32 %v183, %v3265
      %v3282 = vmul.f32 %v183, %v3266
      %v3283 = vmul.f32 %v183, %v3267
      %v3284 = vmul.f32 %v183, %v3268
      %v3285 = vmul.f32 %v188, %v3269
      %v3286 = vmul.f32 %v188, %v3270
      %v3287 = vmul.f32 %v188, %v3271
      %v3288 = vmul.f32 %v188, %v3272
      %v3289 = vadd.f32 %v3281, %v3285
      %v3290 = vadd.f32 %v3282, %v3286
      %v3291 = vadd.f32 %v3283, %v3287
      %v3292 = vadd.f32 %v3284, %v3288
      %v3293 = vmul.f32 %v197, %v3273
      %v3294 = vmul.f32 %v197, %v3274
      %v3295 = vmul.f32 %v197, %v3275
      %v3296 = vmul.f32 %v197, %v3276
      %v3301 = vrot.slane %v3293, 1
      %v3302 = vrot.slane %v3295, 1
      %v3303 = vsel %vm102, %v3301, %v3302
      %v3304 = vrot.slane %v3294, 1
      %v3305 = vrot.slane %v3296, 1
      %v3306 = vsel %vm102, %v3304, %v3305
      %v3311 = vadd.f32 %v3289, %v3303
      %v3312 = vadd.f32 %v3290, %v3306
      %v3313 = vadd.f32 %v3291, %v3302
      %v3314 = vadd.f32 %v3292, %v3305
      %v3315 = vmul.f32 %v183, %v3269
      %v3316 = vmul.f32 %v183, %v3270
      %v3317 = vmul.f32 %v183, %v3271
      %v3318 = vmul.f32 %v183, %v3272
      %v3319 = vmul.f32 %v188, %v3273
      %v3320 = vmul.f32 %v188, %v3274
      %v3321 = vmul.f32 %v188, %v3275
      %v3322 = vmul.f32 %v188, %v3276
      %v3327 = vrot.slane %v3319, 1
      %v3328 = vrot.slane %v3321, 1
      %v3329 = vsel %vm102, %v3327, %v3328
      %v3330 = vrot.slane %v3320, 1
      %v3331 = vrot.slane %v3322, 1
      %v3332 = vsel %vm102, %v3330, %v3331
      %v3337 = vadd.f32 %v3315, %v3329
      %v3338 = vadd.f32 %v3316, %v3332
      %v3339 = vadd.f32 %v3317, %v3328
      %v3340 = vadd.f32 %v3318, %v3331
      %v3341 = vmul.f32 %v197, %v3277
      %v3342 = vmul.f32 %v197, %v3278
      %v3343 = vmul.f32 %v197, %v3279
      %v3344 = vmul.f32 %v197, %v3280
      %v3349 = vrot.slane %v3341, 1
      %v3350 = vrot.slane %v3343, 1
      %v3351 = vsel %vm102, %v3349, %v3350
      %v3352 = vrot.slane %v3342, 1
      %v3353 = vrot.slane %v3344, 1
      %v3354 = vsel %vm102, %v3352, %v3353
      %v3359 = vadd.f32 %v3337, %v3351
      %v3360 = vadd.f32 %v3338, %v3354
      %v3361 = vadd.f32 %v3339, %v3350
      %v3362 = vadd.f32 %v3340, %v3353
      %v3363 = vadd.f32 %v3213, %v3311
      %v3364 = vadd.f32 %v3214, %v3312
      %v3365 = vadd.f32 %v3215, %v3313
      %v3366 = vadd.f32 %v3216, %v3314
      %v3367 = vadd.f32 %v3261, %v3359
      %v3368 = vadd.f32 %v3262, %v3360
      %v3369 = vadd.f32 %v3263, %v3361
      %v3370 = vadd.f32 %v3264, %v3362
      %s3371 = scalar_lea.vmem %s0, 384
      %v3372 = vld [vmem:[%s3371] sm:$0xff]
      %v3373 = vld [vmem:[%s3371 + $0x8] sm:$0xff]
      %v3374 = vld [vmem:[%s3371 + $0x10] sm:$0x1f]
      %v3375 = vld [vmem:[%s3371 + $0x18] sm:$0x1f]
      %s3376 = scalar_lea.vmem %s1, 384
      %v3377 = vld [vmem:[%s3376] sm:$0xff]
      %v3378 = vld [vmem:[%s3376 + $0x8] sm:$0xff]
      %v3379 = vld [vmem:[%s3376 + $0x10] sm:$0x1f]
      %v3380 = vld [vmem:[%s3376 + $0x18] sm:$0x1f]
      %v3381 = vld [vmem:[%s3371] sm:$0xfe]
      %v3382 = vld [vmem:[%s3371 + $0x8] sm:$0xfe]
      %v3383 = vld [vmem:[%s3371 + $0x10] sm:$0x3f]
      %v3384 = vld [vmem:[%s3371 + $0x18] sm:$0x3f]
      %v3385 = vld [vmem:[%s3376] sm:$0xfe]
      %v3386 = vld [vmem:[%s3376 + $0x8] sm:$0xfe]
      %v3387 = vld [vmem:[%s3376 + $0x10] sm:$0x3f]
      %v3388 = vld [vmem:[%s3376 + $0x18] sm:$0x3f]
      %v3389 = vmul.f32 %v294, %v3372
      %v3390 = vmul.f32 %v294, %v3373
      %v3391 = vmul.f32 %v294, %v3374
      %v3392 = vmul.f32 %v294, %v3375
      %v3393 = vmul.f32 %v299, %v3377
      %v3394 = vmul.f32 %v299, %v3378
      %v3395 = vmul.f32 %v299, %v3379
      %v3396 = vmul.f32 %v299, %v3380
      %v3397 = vadd.f32 %v3389, %v3393
      %v3398 = vadd.f32 %v3390, %v3394
      %v3399 = vadd.f32 %v3391, %v3395
      %v3400 = vadd.f32 %v3392, %v3396
      %v3401 = vmul.f32 %v308, %v3381
      %v3402 = vmul.f32 %v308, %v3382
      %v3403 = vmul.f32 %v308, %v3383
      %v3404 = vmul.f32 %v308, %v3384
      %v3409 = vrot.slane %v3401, 1
      %v3410 = vrot.slane %v3403, 1
      %v3411 = vsel %vm102, %v3409, %v3410
      %v3412 = vrot.slane %v3402, 1
      %v3413 = vrot.slane %v3404, 1
      %v3414 = vsel %vm102, %v3412, %v3413
      %v3419 = vadd.f32 %v3397, %v3411
      %v3420 = vadd.f32 %v3398, %v3414
      %v3421 = vadd.f32 %v3399, %v3410
      %v3422 = vadd.f32 %v3400, %v3413
      %v3423 = vmul.f32 %v294, %v3377
      %v3424 = vmul.f32 %v294, %v3378
      %v3425 = vmul.f32 %v294, %v3379
      %v3426 = vmul.f32 %v294, %v3380
      %v3427 = vmul.f32 %v299, %v3381
      %v3428 = vmul.f32 %v299, %v3382
      %v3429 = vmul.f32 %v299, %v3383
      %v3430 = vmul.f32 %v299, %v3384
      %v3435 = vrot.slane %v3427, 1
      %v3436 = vrot.slane %v3429, 1
      %v3437 = vsel %vm102, %v3435, %v3436
      %v3438 = vrot.slane %v3428, 1
      %v3439 = vrot.slane %v3430, 1
      %v3440 = vsel %vm102, %v3438, %v3439
      %v3445 = vadd.f32 %v3423, %v3437
      %v3446 = vadd.f32 %v3424, %v3440
      %v3447 = vadd.f32 %v3425, %v3436
      %v3448 = vadd.f32 %v3426, %v3439
      %v3449 = vmul.f32 %v308, %v3385
      %v3450 = vmul.f32 %v308, %v3386
      %v3451 = vmul.f32 %v308, %v3387
      %v3452 = vmul.f32 %v308, %v3388
      %v3457 = vrot.slane %v3449, 1
      %v3458 = vrot.slane %v3451, 1
      %v3459 = vsel %vm102, %v3457, %v3458
      %v3460 = vrot.slane %v3450, 1
      %v3461 = vrot.slane %v3452, 1
      %v3462 = vsel %vm102, %v3460, %v3461
      %v3467 = vadd.f32 %v3445, %v3459
      %v3468 = vadd.f32 %v3446, %v3462
      %v3469 = vadd.f32 %v3447, %v3458
      %v3470 = vadd.f32 %v3448, %v3461
      %v3471 = vadd.f32 %v3363, %v3419
      %v3472 = vadd.f32 %v3364, %v3420
      %v3473 = vadd.f32 %v3365, %v3421
      %v3474 = vadd.f32 %v3366, %v3422
      %v3475 = vadd.f32 %v3367, %v3467
      %v3476 = vadd.f32 %v3368, %v3468
      %v3477 = vadd.f32 %v3369, %v3469
      %v3478 = vadd.f32 %v3370, %v3470
      %v3479 = vmax.f32 %v3471, %v3475
      %v3480 = vmax.f32 %v3472, %v3476
      %v3481 = vmax.f32 %v3473, %v3477
      %v3482 = vmax.f32 %v3474, %v3478
      %v3483 = vmul.f32 %v79, %v3265
      %v3484 = vmul.f32 %v79, %v3266
      %v3485 = vmul.f32 %v79, %v3267
      %v3486 = vmul.f32 %v79, %v3268
      %v3487 = vmul.f32 %v84, %v3269
      %v3488 = vmul.f32 %v84, %v3270
      %v3489 = vmul.f32 %v84, %v3271
      %v3490 = vmul.f32 %v84, %v3272
      %v3491 = vadd.f32 %v3483, %v3487
      %v3492 = vadd.f32 %v3484, %v3488
      %v3493 = vadd.f32 %v3485, %v3489
      %v3494 = vadd.f32 %v3486, %v3490
      %v3495 = vmul.f32 %v93, %v3273
      %v3496 = vmul.f32 %v93, %v3274
      %v3497 = vmul.f32 %v93, %v3275
      %v3498 = vmul.f32 %v93, %v3276
      %v3503 = vrot.slane %v3495, 1
      %v3504 = vrot.slane %v3497, 1
      %v3505 = vsel %vm102, %v3503, %v3504
      %v3506 = vrot.slane %v3496, 1
      %v3507 = vrot.slane %v3498, 1
      %v3508 = vsel %vm102, %v3506, %v3507
      %v3513 = vadd.f32 %v3491, %v3505
      %v3514 = vadd.f32 %v3492, %v3508
      %v3515 = vadd.f32 %v3493, %v3504
      %v3516 = vadd.f32 %v3494, %v3507
      %v3517 = vmul.f32 %v79, %v3269
      %v3518 = vmul.f32 %v79, %v3270
      %v3519 = vmul.f32 %v79, %v3271
      %v3520 = vmul.f32 %v79, %v3272
      %v3521 = vmul.f32 %v84, %v3273
      %v3522 = vmul.f32 %v84, %v3274
      %v3523 = vmul.f32 %v84, %v3275
      %v3524 = vmul.f32 %v84, %v3276
      %v3529 = vrot.slane %v3521, 1
      %v3530 = vrot.slane %v3523, 1
      %v3531 = vsel %vm102, %v3529, %v3530
      %v3532 = vrot.slane %v3522, 1
      %v3533 = vrot.slane %v3524, 1
      %v3534 = vsel %vm102, %v3532, %v3533
      %v3539 = vadd.f32 %v3517, %v3531
      %v3540 = vadd.f32 %v3518, %v3534
      %v3541 = vadd.f32 %v3519, %v3530
      %v3542 = vadd.f32 %v3520, %v3533
      %v3543 = vmul.f32 %v93, %v3277
      %v3544 = vmul.f32 %v93, %v3278
      %v3545 = vmul.f32 %v93, %v3279
      %v3546 = vmul.f32 %v93, %v3280
      %v3551 = vrot.slane %v3543, 1
      %v3552 = vrot.slane %v3545, 1
      %v3553 = vsel %vm102, %v3551, %v3552
      %v3554 = vrot.slane %v3544, 1
      %v3555 = vrot.slane %v3546, 1
      %v3556 = vsel %vm102, %v3554, %v3555
      %v3561 = vadd.f32 %v3539, %v3553
      %v3562 = vadd.f32 %v3540, %v3556
      %v3563 = vadd.f32 %v3541, %v3552
      %v3564 = vadd.f32 %v3542, %v3555
      %v3565 = vmul.f32 %v183, %v3372
      %v3566 = vmul.f32 %v183, %v3373
      %v3567 = vmul.f32 %v183, %v3374
      %v3568 = vmul.f32 %v183, %v3375
      %v3569 = vmul.f32 %v188, %v3377
      %v3570 = vmul.f32 %v188, %v3378
      %v3571 = vmul.f32 %v188, %v3379
      %v3572 = vmul.f32 %v188, %v3380
      %v3573 = vadd.f32 %v3565, %v3569
      %v3574 = vadd.f32 %v3566, %v3570
      %v3575 = vadd.f32 %v3567, %v3571
      %v3576 = vadd.f32 %v3568, %v3572
      %v3577 = vmul.f32 %v197, %v3381
      %v3578 = vmul.f32 %v197, %v3382
      %v3579 = vmul.f32 %v197, %v3383
      %v3580 = vmul.f32 %v197, %v3384
      %v3585 = vrot.slane %v3577, 1
      %v3586 = vrot.slane %v3579, 1
      %v3587 = vsel %vm102, %v3585, %v3586
      %v3588 = vrot.slane %v3578, 1
      %v3589 = vrot.slane %v3580, 1
      %v3590 = vsel %vm102, %v3588, %v3589
      %v3595 = vadd.f32 %v3573, %v3587
      %v3596 = vadd.f32 %v3574, %v3590
      %v3597 = vadd.f32 %v3575, %v3586
      %v3598 = vadd.f32 %v3576, %v3589
      %v3599 = vmul.f32 %v183, %v3377
      %v3600 = vmul.f32 %v183, %v3378
      %v3601 = vmul.f32 %v183, %v3379
      %v3602 = vmul.f32 %v183, %v3380
      %v3603 = vmul.f32 %v188, %v3381
      %v3604 = vmul.f32 %v188, %v3382
      %v3605 = vmul.f32 %v188, %v3383
      %v3606 = vmul.f32 %v188, %v3384
      %v3611 = vrot.slane %v3603, 1
      %v3612 = vrot.slane %v3605, 1
      %v3613 = vsel %vm102, %v3611, %v3612
      %v3614 = vrot.slane %v3604, 1
      %v3615 = vrot.slane %v3606, 1
      %v3616 = vsel %vm102, %v3614, %v3615
      %v3621 = vadd.f32 %v3599, %v3613
      %v3622 = vadd.f32 %v3600, %v3616
      %v3623 = vadd.f32 %v3601, %v3612
      %v3624 = vadd.f32 %v3602, %v3615
      %v3625 = vmul.f32 %v197, %v3385
      %v3626 = vmul.f32 %v197, %v3386
      %v3627 = vmul.f32 %v197, %v3387
      %v3628 = vmul.f32 %v197, %v3388
      %v3633 = vrot.slane %v3625, 1
      %v3634 = vrot.slane %v3627, 1
      %v3635 = vsel %vm102, %v3633, %v3634
      %v3636 = vrot.slane %v3626, 1
      %v3637 = vrot.slane %v3628, 1
      %v3638 = vsel %vm102, %v3636, %v3637
      %v3643 = vadd.f32 %v3621, %v3635
      %v3644 = vadd.f32 %v3622, %v3638
      %v3645 = vadd.f32 %v3623, %v3634
      %v3646 = vadd.f32 %v3624, %v3637
      %v3647 = vadd.f32 %v3513, %v3595
      %v3648 = vadd.f32 %v3514, %v3596
      %v3649 = vadd.f32 %v3515, %v3597
      %v3650 = vadd.f32 %v3516, %v3598
      %v3651 = vadd.f32 %v3561, %v3643
      %v3652 = vadd.f32 %v3562, %v3644
      %v3653 = vadd.f32 %v3563, %v3645
      %v3654 = vadd.f32 %v3564, %v3646
      %s3655 = scalar_lea.vmem %s0, 416
      %v3656 = vld [vmem:[%s3655] sm:$0xff]
      %v3657 = vld [vmem:[%s3655 + $0x8] sm:$0xff]
      %v3658 = vld [vmem:[%s3655 + $0x10] sm:$0x1f]
      %v3659 = vld [vmem:[%s3655 + $0x18] sm:$0x1f]
      %s3660 = scalar_lea.vmem %s1, 416
      %v3661 = vld [vmem:[%s3660] sm:$0xff]
      %v3662 = vld [vmem:[%s3660 + $0x8] sm:$0xff]
      %v3663 = vld [vmem:[%s3660 + $0x10] sm:$0x1f]
      %v3664 = vld [vmem:[%s3660 + $0x18] sm:$0x1f]
      %v3665 = vld [vmem:[%s3655] sm:$0xfe]
      %v3666 = vld [vmem:[%s3655 + $0x8] sm:$0xfe]
      %v3667 = vld [vmem:[%s3655 + $0x10] sm:$0x3f]
      %v3668 = vld [vmem:[%s3655 + $0x18] sm:$0x3f]
      %v3669 = vld [vmem:[%s3660] sm:$0xfe]
      %v3670 = vld [vmem:[%s3660 + $0x8] sm:$0xfe]
      %v3671 = vld [vmem:[%s3660 + $0x10] sm:$0x3f]
      %v3672 = vld [vmem:[%s3660 + $0x18] sm:$0x3f]
      %v3673 = vmul.f32 %v294, %v3656
      %v3674 = vmul.f32 %v294, %v3657
      %v3675 = vmul.f32 %v294, %v3658
      %v3676 = vmul.f32 %v294, %v3659
      %v3677 = vmul.f32 %v299, %v3661
      %v3678 = vmul.f32 %v299, %v3662
      %v3679 = vmul.f32 %v299, %v3663
      %v3680 = vmul.f32 %v299, %v3664
      %v3681 = vadd.f32 %v3673, %v3677
      %v3682 = vadd.f32 %v3674, %v3678
      %v3683 = vadd.f32 %v3675, %v3679
      %v3684 = vadd.f32 %v3676, %v3680
      %v3685 = vmul.f32 %v308, %v3665
      %v3686 = vmul.f32 %v308, %v3666
      %v3687 = vmul.f32 %v308, %v3667
      %v3688 = vmul.f32 %v308, %v3668
      %v3693 = vrot.slane %v3685, 1
      %v3694 = vrot.slane %v3687, 1
      %v3695 = vsel %vm102, %v3693, %v3694
      %v3696 = vrot.slane %v3686, 1
      %v3697 = vrot.slane %v3688, 1
      %v3698 = vsel %vm102, %v3696, %v3697
      %v3703 = vadd.f32 %v3681, %v3695
      %v3704 = vadd.f32 %v3682, %v3698
      %v3705 = vadd.f32 %v3683, %v3694
      %v3706 = vadd.f32 %v3684, %v3697
      %v3707 = vmul.f32 %v294, %v3661
      %v3708 = vmul.f32 %v294, %v3662
      %v3709 = vmul.f32 %v294, %v3663
      %v3710 = vmul.f32 %v294, %v3664
      %v3711 = vmul.f32 %v299, %v3665
      %v3712 = vmul.f32 %v299, %v3666
      %v3713 = vmul.f32 %v299, %v3667
      %v3714 = vmul.f32 %v299, %v3668
      %v3719 = vrot.slane %v3711, 1
      %v3720 = vrot.slane %v3713, 1
      %v3721 = vsel %vm102, %v3719, %v3720
      %v3722 = vrot.slane %v3712, 1
      %v3723 = vrot.slane %v3714, 1
      %v3724 = vsel %vm102, %v3722, %v3723
      %v3729 = vadd.f32 %v3707, %v3721
      %v3730 = vadd.f32 %v3708, %v3724
      %v3731 = vadd.f32 %v3709, %v3720
      %v3732 = vadd.f32 %v3710, %v3723
      %v3733 = vmul.f32 %v308, %v3669
      %v3734 = vmul.f32 %v308, %v3670
      %v3735 = vmul.f32 %v308, %v3671
      %v3736 = vmul.f32 %v308, %v3672
      %v3741 = vrot.slane %v3733, 1
      %v3742 = vrot.slane %v3735, 1
      %v3743 = vsel %vm102, %v3741, %v3742
      %v3744 = vrot.slane %v3734, 1
      %v3745 = vrot.slane %v3736, 1
      %v3746 = vsel %vm102, %v3744, %v3745
      %v3751 = vadd.f32 %v3729, %v3743
      %v3752 = vadd.f32 %v3730, %v3746
      %v3753 = vadd.f32 %v3731, %v3742
      %v3754 = vadd.f32 %v3732, %v3745
      %v3755 = vadd.f32 %v3647, %v3703
      %v3756 = vadd.f32 %v3648, %v3704
      %v3757 = vadd.f32 %v3649, %v3705
      %v3758 = vadd.f32 %v3650, %v3706
      %v3759 = vadd.f32 %v3651, %v3751
      %v3760 = vadd.f32 %v3652, %v3752
      %v3761 = vadd.f32 %v3653, %v3753
      %v3762 = vadd.f32 %v3654, %v3754
      %v3763 = vmax.f32 %v3755, %v3759
      %v3764 = vmax.f32 %v3756, %v3760
      %v3765 = vmax.f32 %v3757, %v3761
      %v3766 = vmax.f32 %v3758, %v3762
      %v3767 = vmax.f32 %v3479, %v3763
      %v3768 = vmax.f32 %v3480, %v3764
      %v3769 = vmax.f32 %v3481, %v3765
      %v3770 = vmax.f32 %v3482, %v3766
      %v3771 = vadd.f32 %v3767, %v679
      %v3772 = vadd.f32 %v3768, %v679
      %v3773 = vadd.f32 %v3769, %v679
      %v3774 = vadd.f32 %v3770, %v679
      %v3775 = vmax.f32 %v3771, 0.0
      %v3776 = vmax.f32 %v3772, 0.0
      %v3777 = vmax.f32 %v3773, 0.0
      %v3778 = vmax.f32 %v3774, 0.0
      %v3779 = vsel %vm688, %v3777, 0.0
      %v3780 = vsel %vm688, %v3778, 0.0
      %3781 = vst [vmem:[#allocation2 + $0xa0] sm:$0xff] %v3775
      %3782 = vst [vmem:[#allocation2 + $0xa8] sm:$0xff] %v3776
      %3783 = vst [vmem:[#allocation2 + $0xb0] sm:$0xff] %v3779
      %3784 = vst [vmem:[#allocation2 + $0xb8] sm:$0xff] %v3780
      %v3785 = vld [vmem:[%s3371] sm:$0xff]
      %v3786 = vld [vmem:[%s3371 + $0x8] sm:$0xff]
      %v3787 = vld [vmem:[%s3371 + $0x10] sm:$0x1f]
      %v3788 = vld [vmem:[%s3371 + $0x18] sm:$0x1f]
      %v3789 = vld [vmem:[%s3376] sm:$0xff]
      %v3790 = vld [vmem:[%s3376 + $0x8] sm:$0xff]
      %v3791 = vld [vmem:[%s3376 + $0x10] sm:$0x1f]
      %v3792 = vld [vmem:[%s3376 + $0x18] sm:$0x1f]
      %v3793 = vld [vmem:[%s3371] sm:$0xfe]
      %v3794 = vld [vmem:[%s3371 + $0x8] sm:$0xfe]
      %v3795 = vld [vmem:[%s3371 + $0x10] sm:$0x3f]
      %v3796 = vld [vmem:[%s3371 + $0x18] sm:$0x3f]
      %v3797 = vld [vmem:[%s3376] sm:$0xfe]
      %v3798 = vld [vmem:[%s3376 + $0x8] sm:$0xfe]
      %v3799 = vld [vmem:[%s3376 + $0x10] sm:$0x3f]
      %v3800 = vld [vmem:[%s3376 + $0x18] sm:$0x3f]
      %v3801 = vmul.f32 %v79, %v3785
      %v3802 = vmul.f32 %v79, %v3786
      %v3803 = vmul.f32 %v79, %v3787
      %v3804 = vmul.f32 %v79, %v3788
      %v3805 = vmul.f32 %v84, %v3789
      %v3806 = vmul.f32 %v84, %v3790
      %v3807 = vmul.f32 %v84, %v3791
      %v3808 = vmul.f32 %v84, %v3792
      %v3809 = vadd.f32 %v3801, %v3805
      %v3810 = vadd.f32 %v3802, %v3806
      %v3811 = vadd.f32 %v3803, %v3807
      %v3812 = vadd.f32 %v3804, %v3808
      %v3813 = vmul.f32 %v93, %v3793
      %v3814 = vmul.f32 %v93, %v3794
      %v3815 = vmul.f32 %v93, %v3795
      %v3816 = vmul.f32 %v93, %v3796
      %v3821 = vrot.slane %v3813, 1
      %v3822 = vrot.slane %v3815, 1
      %v3823 = vsel %vm102, %v3821, %v3822
      %v3824 = vrot.slane %v3814, 1
      %v3825 = vrot.slane %v3816, 1
      %v3826 = vsel %vm102, %v3824, %v3825
      %v3831 = vadd.f32 %v3809, %v3823
      %v3832 = vadd.f32 %v3810, %v3826
      %v3833 = vadd.f32 %v3811, %v3822
      %v3834 = vadd.f32 %v3812, %v3825
      %v3835 = vmul.f32 %v79, %v3789
      %v3836 = vmul.f32 %v79, %v3790
      %v3837 = vmul.f32 %v79, %v3791
      %v3838 = vmul.f32 %v79, %v3792
      %v3839 = vmul.f32 %v84, %v3793
      %v3840 = vmul.f32 %v84, %v3794
      %v3841 = vmul.f32 %v84, %v3795
      %v3842 = vmul.f32 %v84, %v3796
      %v3847 = vrot.slane %v3839, 1
      %v3848 = vrot.slane %v3841, 1
      %v3849 = vsel %vm102, %v3847, %v3848
      %v3850 = vrot.slane %v3840, 1
      %v3851 = vrot.slane %v3842, 1
      %v3852 = vsel %vm102, %v3850, %v3851
      %v3857 = vadd.f32 %v3835, %v3849
      %v3858 = vadd.f32 %v3836, %v3852
      %v3859 = vadd.f32 %v3837, %v3848
      %v3860 = vadd.f32 %v3838, %v3851
      %v3861 = vmul.f32 %v93, %v3797
      %v3862 = vmul.f32 %v93, %v3798
      %v3863 = vmul.f32 %v93, %v3799
      %v3864 = vmul.f32 %v93, %v3800
      %v3869 = vrot.slane %v3861, 1
      %v3870 = vrot.slane %v3863, 1
      %v3871 = vsel %vm102, %v3869, %v3870
      %v3872 = vrot.slane %v3862, 1
      %v3873 = vrot.slane %v3864, 1
      %v3874 = vsel %vm102, %v3872, %v3873
      %v3879 = vadd.f32 %v3857, %v3871
      %v3880 = vadd.f32 %v3858, %v3874
      %v3881 = vadd.f32 %v3859, %v3870
      %v3882 = vadd.f32 %v3860, %v3873
      %v3883 = vld [vmem:[%s3655] sm:$0xff]
      %v3884 = vld [vmem:[%s3655 + $0x8] sm:$0xff]
      %v3885 = vld [vmem:[%s3655 + $0x10] sm:$0x1f]
      %v3886 = vld [vmem:[%s3655 + $0x18] sm:$0x1f]
      %v3887 = vld [vmem:[%s3660] sm:$0xff]
      %v3888 = vld [vmem:[%s3660 + $0x8] sm:$0xff]
      %v3889 = vld [vmem:[%s3660 + $0x10] sm:$0x1f]
      %v3890 = vld [vmem:[%s3660 + $0x18] sm:$0x1f]
      %v3891 = vld [vmem:[%s3655] sm:$0xfe]
      %v3892 = vld [vmem:[%s3655 + $0x8] sm:$0xfe]
      %v3893 = vld [vmem:[%s3655 + $0x10] sm:$0x3f]
      %v3894 = vld [vmem:[%s3655 + $0x18] sm:$0x3f]
      %v3895 = vld [vmem:[%s3660] sm:$0xfe]
      %v3896 = vld [vmem:[%s3660 + $0x8] sm:$0xfe]
      %v3897 = vld [vmem:[%s3660 + $0x10] sm:$0x3f]
      %v3898 = vld [vmem:[%s3660 + $0x18] sm:$0x3f]
      %v3899 = vmul.f32 %v183, %v3883
      %v3900 = vmul.f32 %v183, %v3884
      %v3901 = vmul.f32 %v183, %v3885
      %v3902 = vmul.f32 %v183, %v3886
      %v3903 = vmul.f32 %v188, %v3887
      %v3904 = vmul.f32 %v188, %v3888
      %v3905 = vmul.f32 %v188, %v3889
      %v3906 = vmul.f32 %v188, %v3890
      %v3907 = vadd.f32 %v3899, %v3903
      %v3908 = vadd.f32 %v3900, %v3904
      %v3909 = vadd.f32 %v3901, %v3905
      %v3910 = vadd.f32 %v3902, %v3906
      %v3911 = vmul.f32 %v197, %v3891
      %v3912 = vmul.f32 %v197, %v3892
      %v3913 = vmul.f32 %v197, %v3893
      %v3914 = vmul.f32 %v197, %v3894
      %v3919 = vrot.slane %v3911, 1
      %v3920 = vrot.slane %v3913, 1
      %v3921 = vsel %vm102, %v3919, %v3920
      %v3922 = vrot.slane %v3912, 1
      %v3923 = vrot.slane %v3914, 1
      %v3924 = vsel %vm102, %v3922, %v3923
      %v3929 = vadd.f32 %v3907, %v3921
      %v3930 = vadd.f32 %v3908, %v3924
      %v3931 = vadd.f32 %v3909, %v3920
      %v3932 = vadd.f32 %v3910, %v3923
      %v3933 = vmul.f32 %v183, %v3887
      %v3934 = vmul.f32 %v183, %v3888
      %v3935 = vmul.f32 %v183, %v3889
      %v3936 = vmul.f32 %v183, %v3890
      %v3937 = vmul.f32 %v188, %v3891
      %v3938 = vmul.f32 %v188, %v3892
      %v3939 = vmul.f32 %v188, %v3893
      %v3940 = vmul.f32 %v188, %v3894
      %v3945 = vrot.slane %v3937, 1
      %v3946 = vrot.slane %v3939, 1
      %v3947 = vsel %vm102, %v3945, %v3946
      %v3948 = vrot.slane %v3938, 1
      %v3949 = vrot.slane %v3940, 1
      %v3950 = vsel %vm102, %v3948, %v3949
      %v3955 = vadd.f32 %v3933, %v3947
      %v3956 = vadd.f32 %v3934, %v3950
      %v3957 = vadd.f32 %v3935, %v3946
      %v3958 = vadd.f32 %v3936, %v3949
      %v3959 = vmul.f32 %v197, %v3895
      %v3960 = vmul.f32 %v197, %v3896
      %v3961 = vmul.f32 %v197, %v3897
      %v3962 = vmul.f32 %v197, %v3898
      %v3967 = vrot.slane %v3959, 1
      %v3968 = vrot.slane %v3961, 1
      %v3969 = vsel %vm102, %v3967, %v3968
      %v3970 = vrot.slane %v3960, 1
      %v3971 = vrot.slane %v3962, 1
      %v3972 = vsel %vm102, %v3970, %v3971
      %v3977 = vadd.f32 %v3955, %v3969
      %v3978 = vadd.f32 %v3956, %v3972
      %v3979 = vadd.f32 %v3957, %v3968
      %v3980 = vadd.f32 %v3958, %v3971
      %v3981 = vadd.f32 %v3831, %v3929
      %v3982 = vadd.f32 %v3832, %v3930
      %v3983 = vadd.f32 %v3833, %v3931
      %v3984 = vadd.f32 %v3834, %v3932
      %v3985 = vadd.f32 %v3879, %v3977
      %v3986 = vadd.f32 %v3880, %v3978
      %v3987 = vadd.f32 %v3881, %v3979
      %v3988 = vadd.f32 %v3882, %v3980
      %s3989 = scalar_lea.vmem %s0, 448
      %v3990 = vld [vmem:[%s3989] sm:$0xff]
      %v3991 = vld [vmem:[%s3989 + $0x8] sm:$0xff]
      %v3992 = vld [vmem:[%s3989 + $0x10] sm:$0x1f]
      %v3993 = vld [vmem:[%s3989 + $0x18] sm:$0x1f]
      %s3994 = scalar_lea.vmem %s1, 448
      %v3995 = vld [vmem:[%s3994] sm:$0xff]
      %v3996 = vld [vmem:[%s3994 + $0x8] sm:$0xff]
      %v3997 = vld [vmem:[%s3994 + $0x10] sm:$0x1f]
      %v3998 = vld [vmem:[%s3994 + $0x18] sm:$0x1f]
      %v3999 = vld [vmem:[%s3989] sm:$0xfe]
      %v4000 = vld [vmem:[%s3989 + $0x8] sm:$0xfe]
      %v4001 = vld [vmem:[%s3989 + $0x10] sm:$0x3f]
      %v4002 = vld [vmem:[%s3989 + $0x18] sm:$0x3f]
      %v4003 = vld [vmem:[%s3994] sm:$0xfe]
      %v4004 = vld [vmem:[%s3994 + $0x8] sm:$0xfe]
      %v4005 = vld [vmem:[%s3994 + $0x10] sm:$0x3f]
      %v4006 = vld [vmem:[%s3994 + $0x18] sm:$0x3f]
      %v4007 = vmul.f32 %v294, %v3990
      %v4008 = vmul.f32 %v294, %v3991
      %v4009 = vmul.f32 %v294, %v3992
      %v4010 = vmul.f32 %v294, %v3993
      %v4011 = vmul.f32 %v299, %v3995
      %v4012 = vmul.f32 %v299, %v3996
      %v4013 = vmul.f32 %v299, %v3997
      %v4014 = vmul.f32 %v299, %v3998
      %v4015 = vadd.f32 %v4007, %v4011
      %v4016 = vadd.f32 %v4008, %v4012
      %v4017 = vadd.f32 %v4009, %v4013
      %v4018 = vadd.f32 %v4010, %v4014
      %v4019 = vmul.f32 %v308, %v3999
      %v4020 = vmul.f32 %v308, %v4000
      %v4021 = vmul.f32 %v308, %v4001
      %v4022 = vmul.f32 %v308, %v4002
      %v4027 = vrot.slane %v4019, 1
      %v4028 = vrot.slane %v4021, 1
      %v4029 = vsel %vm102, %v4027, %v4028
      %v4030 = vrot.slane %v4020, 1
      %v4031 = vrot.slane %v4022, 1
      %v4032 = vsel %vm102, %v4030, %v4031
      %v4037 = vadd.f32 %v4015, %v4029
      %v4038 = vadd.f32 %v4016, %v4032
      %v4039 = vadd.f32 %v4017, %v4028
      %v4040 = vadd.f32 %v4018, %v4031
      %v4041 = vmul.f32 %v294, %v3995
      %v4042 = vmul.f32 %v294, %v3996
      %v4043 = vmul.f32 %v294, %v3997
      %v4044 = vmul.f32 %v294, %v3998
      %v4045 = vmul.f32 %v299, %v3999
      %v4046 = vmul.f32 %v299, %v4000
      %v4047 = vmul.f32 %v299, %v4001
      %v4048 = vmul.f32 %v299, %v4002
      %v4053 = vrot.slane %v4045, 1
      %v4054 = vrot.slane %v4047, 1
      %v4055 = vsel %vm102, %v4053, %v4054
      %v4056 = vrot.slane %v4046, 1
      %v4057 = vrot.slane %v4048, 1
      %v4058 = vsel %vm102, %v4056, %v4057
      %v4063 = vadd.f32 %v4041, %v4055
      %v4064 = vadd.f32 %v4042, %v4058
      %v4065 = vadd.f32 %v4043, %v4054
      %v4066 = vadd.f32 %v4044, %v4057
      %v4067 = vmul.f32 %v308, %v4003
      %v4068 = vmul.f32 %v308, %v4004
      %v4069 = vmul.f32 %v308, %v4005
      %v4070 = vmul.f32 %v308, %v4006
      %v4075 = vrot.slane %v4067, 1
      %v4076 = vrot.slane %v4069, 1
      %v4077 = vsel %vm102, %v4075, %v4076
      %v4078 = vrot.slane %v4068, 1
      %v4079 = vrot.slane %v4070, 1
      %v4080 = vsel %vm102, %v4078, %v4079
      %v4085 = vadd.f32 %v4063, %v4077
      %v4086 = vadd.f32 %v4064, %v4080
      %v4087 = vadd.f32 %v4065, %v4076
      %v4088 = vadd.f32 %v4066, %v4079
      %v4089 = vadd.f32 %v3981, %v4037
      %v4090 = vadd.f32 %v3982, %v4038
      %v4091 = vadd.f32 %v3983, %v4039
      %v4092 = vadd.f32 %v3984, %v4040
      %v4093 = vadd.f32 %v3985, %v4085
      %v4094 = vadd.f32 %v3986, %v4086
      %v4095 = vadd.f32 %v3987, %v4087
      %v4096 = vadd.f32 %v3988, %v4088
      %v4097 = vmax.f32 %v4089, %v4093
      %v4098 = vmax.f32 %v4090, %v4094
      %v4099 = vmax.f32 %v4091, %v4095
      %v4100 = vmax.f32 %v4092, %v4096
      %v4101 = vmul.f32 %v79, %v3883
      %v4102 = vmul.f32 %v79, %v3884
      %v4103 = vmul.f32 %v79, %v3885
      %v4104 = vmul.f32 %v79, %v3886
      %v4105 = vmul.f32 %v84, %v3887
      %v4106 = vmul.f32 %v84, %v3888
      %v4107 = vmul.f32 %v84, %v3889
      %v4108 = vmul.f32 %v84, %v3890
      %v4109 = vadd.f32 %v4101, %v4105
      %v4110 = vadd.f32 %v4102, %v4106
      %v4111 = vadd.f32 %v4103, %v4107
      %v4112 = vadd.f32 %v4104, %v4108
      %v4113 = vmul.f32 %v93, %v3891
      %v4114 = vmul.f32 %v93, %v3892
      %v4115 = vmul.f32 %v93, %v3893
      %v4116 = vmul.f32 %v93, %v3894
      %v4121 = vrot.slane %v4113, 1
      %v4122 = vrot.slane %v4115, 1
      %v4123 = vsel %vm102, %v4121, %v4122
      %v4124 = vrot.slane %v4114, 1
      %v4125 = vrot.slane %v4116, 1
      %v4126 = vsel %vm102, %v4124, %v4125
      %v4131 = vadd.f32 %v4109, %v4123
      %v4132 = vadd.f32 %v4110, %v4126
      %v4133 = vadd.f32 %v4111, %v4122
      %v4134 = vadd.f32 %v4112, %v4125
      %v4135 = vmul.f32 %v79, %v3887
      %v4136 = vmul.f32 %v79, %v3888
      %v4137 = vmul.f32 %v79, %v3889
      %v4138 = vmul.f32 %v79, %v3890
      %v4139 = vmul.f32 %v84, %v3891
      %v4140 = vmul.f32 %v84, %v3892
      %v4141 = vmul.f32 %v84, %v3893
      %v4142 = vmul.f32 %v84, %v3894
      %v4147 = vrot.slane %v4139, 1
      %v4148 = vrot.slane %v4141, 1
      %v4149 = vsel %vm102, %v4147, %v4148
      %v4150 = vrot.slane %v4140, 1
      %v4151 = vrot.slane %v4142, 1
      %v4152 = vsel %vm102, %v4150, %v4151
      %v4157 = vadd.f32 %v4135, %v4149
      %v4158 = vadd.f32 %v4136, %v4152
      %v4159 = vadd.f32 %v4137, %v4148
      %v4160 = vadd.f32 %v4138, %v4151
      %v4161 = vmul.f32 %v93, %v3895
      %v4162 = vmul.f32 %v93, %v3896
      %v4163 = vmul.f32 %v93, %v3897
      %v4164 = vmul.f32 %v93, %v3898
      %v4169 = vrot.slane %v4161, 1
      %v4170 = vrot.slane %v4163, 1
      %v4171 = vsel %vm102, %v4169, %v4170
      %v4172 = vrot.slane %v4162, 1
      %v4173 = vrot.slane %v4164, 1
      %v4174 = vsel %vm102, %v4172, %v4173
      %v4179 = vadd.f32 %v4157, %v4171
      %v4180 = vadd.f32 %v4158, %v4174
      %v4181 = vadd.f32 %v4159, %v4170
      %v4182 = vadd.f32 %v4160, %v4173
      %v4183 = vmul.f32 %v183, %v3990
      %v4184 = vmul.f32 %v183, %v3991
      %v4185 = vmul.f32 %v183, %v3992
      %v4186 = vmul.f32 %v183, %v3993
      %v4187 = vmul.f32 %v188, %v3995
      %v4188 = vmul.f32 %v188, %v3996
      %v4189 = vmul.f32 %v188, %v3997
      %v4190 = vmul.f32 %v188, %v3998
      %v4191 = vadd.f32 %v4183, %v4187
      %v4192 = vadd.f32 %v4184, %v4188
      %v4193 = vadd.f32 %v4185, %v4189
      %v4194 = vadd.f32 %v4186, %v4190
      %v4195 = vmul.f32 %v197, %v3999
      %v4196 = vmul.f32 %v197, %v4000
      %v4197 = vmul.f32 %v197, %v4001
      %v4198 = vmul.f32 %v197, %v4002
      %v4203 = vrot.slane %v4195, 1
      %v4204 = vrot.slane %v4197, 1
      %v4205 = vsel %vm102, %v4203, %v4204
      %v4206 = vrot.slane %v4196, 1
      %v4207 = vrot.slane %v4198, 1
      %v4208 = vsel %vm102, %v4206, %v4207
      %v4213 = vadd.f32 %v4191, %v4205
      %v4214 = vadd.f32 %v4192, %v4208
      %v4215 = vadd.f32 %v4193, %v4204
      %v4216 = vadd.f32 %v4194, %v4207
      %v4217 = vmul.f32 %v183, %v3995
      %v4218 = vmul.f32 %v183, %v3996
      %v4219 = vmul.f32 %v183, %v3997
      %v4220 = vmul.f32 %v183, %v3998
      %v4221 = vmul.f32 %v188, %v3999
      %v4222 = vmul.f32 %v188, %v4000
      %v4223 = vmul.f32 %v188, %v4001
      %v4224 = vmul.f32 %v188, %v4002
      %v4229 = vrot.slane %v4221, 1
      %v4230 = vrot.slane %v4223, 1
      %v4231 = vsel %vm102, %v4229, %v4230
      %v4232 = vrot.slane %v4222, 1
      %v4233 = vrot.slane %v4224, 1
      %v4234 = vsel %vm102, %v4232, %v4233
      %v4239 = vadd.f32 %v4217, %v4231
      %v4240 = vadd.f32 %v4218, %v4234
      %v4241 = vadd.f32 %v4219, %v4230
      %v4242 = vadd.f32 %v4220, %v4233
      %v4243 = vmul.f32 %v197, %v4003
      %v4244 = vmul.f32 %v197, %v4004
      %v4245 = vmul.f32 %v197, %v4005
      %v4246 = vmul.f32 %v197, %v4006
      %v4251 = vrot.slane %v4243, 1
      %v4252 = vrot.slane %v4245, 1
      %v4253 = vsel %vm102, %v4251, %v4252
      %v4254 = vrot.slane %v4244, 1
      %v4255 = vrot.slane %v4246, 1
      %v4256 = vsel %vm102, %v4254, %v4255
      %v4261 = vadd.f32 %v4239, %v4253
      %v4262 = vadd.f32 %v4240, %v4256
      %v4263 = vadd.f32 %v4241, %v4252
      %v4264 = vadd.f32 %v4242, %v4255
      %v4265 = vadd.f32 %v4131, %v4213
      %v4266 = vadd.f32 %v4132, %v4214
      %v4267 = vadd.f32 %v4133, %v4215
      %v4268 = vadd.f32 %v4134, %v4216
      %v4269 = vadd.f32 %v4179, %v4261
      %v4270 = vadd.f32 %v4180, %v4262
      %v4271 = vadd.f32 %v4181, %v4263
      %v4272 = vadd.f32 %v4182, %v4264
      %s4273 = scalar_lea.vmem %s0, 480
      %v4274 = vld [vmem:[%s4273] sm:$0xff]
      %v4275 = vld [vmem:[%s4273 + $0x8] sm:$0xff]
      %v4276 = vld [vmem:[%s4273 + $0x10] sm:$0x1f]
      %v4277 = vld [vmem:[%s4273 + $0x18] sm:$0x1f]
      %s4278 = scalar_lea.vmem %s1, 480
      %v4279 = vld [vmem:[%s4278] sm:$0xff]
      %v4280 = vld [vmem:[%s4278 + $0x8] sm:$0xff]
      %v4281 = vld [vmem:[%s4278 + $0x10] sm:$0x1f]
      %v4282 = vld [vmem:[%s4278 + $0x18] sm:$0x1f]
      %v4283 = vld [vmem:[%s4273] sm:$0xfe]
      %v4284 = vld [vmem:[%s4273 + $0x8] sm:$0xfe]
      %v4285 = vld [vmem:[%s4273 + $0x10] sm:$0x3f]
      %v4286 = vld [vmem:[%s4273 + $0x18] sm:$0x3f]
      %v4287 = vld [vmem:[%s4278] sm:$0xfe]
      %v4288 = vld [vmem:[%s4278 + $0x8] sm:$0xfe]
      %v4289 = vld [vmem:[%s4278 + $0x10] sm:$0x3f]
      %v4290 = vld [vmem:[%s4278 + $0x18] sm:$0x3f]
      %v4291 = vmul.f32 %v294, %v4274
      %v4292 = vmul.f32 %v294, %v4275
      %v4293 = vmul.f32 %v294, %v4276
      %v4294 = vmul.f32 %v294, %v4277
      %v4295 = vmul.f32 %v299, %v4279
      %v4296 = vmul.f32 %v299, %v4280
      %v4297 = vmul.f32 %v299, %v4281
      %v4298 = vmul.f32 %v299, %v4282
      %v4299 = vadd.f32 %v4291, %v4295
      %v4300 = vadd.f32 %v4292, %v4296
      %v4301 = vadd.f32 %v4293, %v4297
      %v4302 = vadd.f32 %v4294, %v4298
      %v4303 = vmul.f32 %v308, %v4283
      %v4304 = vmul.f32 %v308, %v4284
      %v4305 = vmul.f32 %v308, %v4285
      %v4306 = vmul.f32 %v308, %v4286
      %v4311 = vrot.slane %v4303, 1
      %v4312 = vrot.slane %v4305, 1
      %v4313 = vsel %vm102, %v4311, %v4312
      %v4314 = vrot.slane %v4304, 1
      %v4315 = vrot.slane %v4306, 1
      %v4316 = vsel %vm102, %v4314, %v4315
      %v4321 = vadd.f32 %v4299, %v4313
      %v4322 = vadd.f32 %v4300, %v4316
      %v4323 = vadd.f32 %v4301, %v4312
      %v4324 = vadd.f32 %v4302, %v4315
      %v4325 = vmul.f32 %v294, %v4279
      %v4326 = vmul.f32 %v294, %v4280
      %v4327 = vmul.f32 %v294, %v4281
      %v4328 = vmul.f32 %v294, %v4282
      %v4329 = vmul.f32 %v299, %v4283
      %v4330 = vmul.f32 %v299, %v4284
      %v4331 = vmul.f32 %v299, %v4285
      %v4332 = vmul.f32 %v299, %v4286
      %v4337 = vrot.slane %v4329, 1
      %v4338 = vrot.slane %v4331, 1
      %v4339 = vsel %vm102, %v4337, %v4338
      %v4340 = vrot.slane %v4330, 1
      %v4341 = vrot.slane %v4332, 1
      %v4342 = vsel %vm102, %v4340, %v4341
      %v4347 = vadd.f32 %v4325, %v4339
      %v4348 = vadd.f32 %v4326, %v4342
      %v4349 = vadd.f32 %v4327, %v4338
      %v4350 = vadd.f32 %v4328, %v4341
      %v4351 = vmul.f32 %v308, %v4287
      %v4352 = vmul.f32 %v308, %v4288
      %v4353 = vmul.f32 %v308, %v4289
      %v4354 = vmul.f32 %v308, %v4290
      %v4359 = vrot.slane %v4351, 1
      %v4360 = vrot.slane %v4353, 1
      %v4361 = vsel %vm102, %v4359, %v4360
      %v4362 = vrot.slane %v4352, 1
      %v4363 = vrot.slane %v4354, 1
      %v4364 = vsel %vm102, %v4362, %v4363
      %v4369 = vadd.f32 %v4347, %v4361
      %v4370 = vadd.f32 %v4348, %v4364
      %v4371 = vadd.f32 %v4349, %v4360
      %v4372 = vadd.f32 %v4350, %v4363
      %v4373 = vadd.f32 %v4265, %v4321
      %v4374 = vadd.f32 %v4266, %v4322
      %v4375 = vadd.f32 %v4267, %v4323
      %v4376 = vadd.f32 %v4268, %v4324
      %v4377 = vadd.f32 %v4269, %v4369
      %v4378 = vadd.f32 %v4270, %v4370
      %v4379 = vadd.f32 %v4271, %v4371
      %v4380 = vadd.f32 %v4272, %v4372
      %v4381 = vmax.f32 %v4373, %v4377
      %v4382 = vmax.f32 %v4374, %v4378
      %v4383 = vmax.f32 %v4375, %v4379
      %v4384 = vmax.f32 %v4376, %v4380
      %v4385 = vmax.f32 %v4097, %v4381
      %v4386 = vmax.f32 %v4098, %v4382
      %v4387 = vmax.f32 %v4099, %v4383
      %v4388 = vmax.f32 %v4100, %v4384
      %v4389 = vadd.f32 %v4385, %v679
      %v4390 = vadd.f32 %v4386, %v679
      %v4391 = vadd.f32 %v4387, %v679
      %v4392 = vadd.f32 %v4388, %v679
      %v4393 = vmax.f32 %v4389, 0.0
      %v4394 = vmax.f32 %v4390, 0.0
      %v4395 = vmax.f32 %v4391, 0.0
      %v4396 = vmax.f32 %v4392, 0.0
      %v4397 = vsel %vm688, %v4395, 0.0
      %v4398 = vsel %vm688, %v4396, 0.0
      %4399 = vst [vmem:[#allocation2 + $0xc0] sm:$0xff] %v4393
      %4400 = vst [vmem:[#allocation2 + $0xc8] sm:$0xff] %v4394
      %4401 = vst [vmem:[#allocation2 + $0xd0] sm:$0xff] %v4397
      %4402 = vst [vmem:[#allocation2 + $0xd8] sm:$0xff] %v4398
      %v4403 = vld [vmem:[%s3989] sm:$0xff]
      %v4404 = vld [vmem:[%s3989 + $0x8] sm:$0xff]
      %v4405 = vld [vmem:[%s3989 + $0x10] sm:$0x1f]
      %v4406 = vld [vmem:[%s3989 + $0x18] sm:$0x1f]
      %v4407 = vld [vmem:[%s3994] sm:$0xff]
      %v4408 = vld [vmem:[%s3994 + $0x8] sm:$0xff]
      %v4409 = vld [vmem:[%s3994 + $0x10] sm:$0x1f]
      %v4410 = vld [vmem:[%s3994 + $0x18] sm:$0x1f]
      %v4411 = vld [vmem:[%s3989] sm:$0xfe]
      %v4412 = vld [vmem:[%s3989 + $0x8] sm:$0xfe]
      %v4413 = vld [vmem:[%s3989 + $0x10] sm:$0x3f]
      %v4414 = vld [vmem:[%s3989 + $0x18] sm:$0x3f]
      %v4415 = vld [vmem:[%s3994] sm:$0xfe]
      %v4416 = vld [vmem:[%s3994 + $0x8] sm:$0xfe]
      %v4417 = vld [vmem:[%s3994 + $0x10] sm:$0x3f]
      %v4418 = vld [vmem:[%s3994 + $0x18] sm:$0x3f]
      %v4419 = vmul.f32 %v79, %v4403
      %v4420 = vmul.f32 %v79, %v4404
      %v4421 = vmul.f32 %v79, %v4405
      %v4422 = vmul.f32 %v79, %v4406
      %v4423 = vmul.f32 %v84, %v4407
      %v4424 = vmul.f32 %v84, %v4408
      %v4425 = vmul.f32 %v84, %v4409
      %v4426 = vmul.f32 %v84, %v4410
      %v4427 = vadd.f32 %v4419, %v4423
      %v4428 = vadd.f32 %v4420, %v4424
      %v4429 = vadd.f32 %v4421, %v4425
      %v4430 = vadd.f32 %v4422, %v4426
      %v4431 = vmul.f32 %v93, %v4411
      %v4432 = vmul.f32 %v93, %v4412
      %v4433 = vmul.f32 %v93, %v4413
      %v4434 = vmul.f32 %v93, %v4414
      %v4439 = vrot.slane %v4431, 1
      %v4440 = vrot.slane %v4433, 1
      %v4441 = vsel %vm102, %v4439, %v4440
      %v4442 = vrot.slane %v4432, 1
      %v4443 = vrot.slane %v4434, 1
      %v4444 = vsel %vm102, %v4442, %v4443
      %v4449 = vadd.f32 %v4427, %v4441
      %v4450 = vadd.f32 %v4428, %v4444
      %v4451 = vadd.f32 %v4429, %v4440
      %v4452 = vadd.f32 %v4430, %v4443
      %v4453 = vmul.f32 %v79, %v4407
      %v4454 = vmul.f32 %v79, %v4408
      %v4455 = vmul.f32 %v79, %v4409
      %v4456 = vmul.f32 %v79, %v4410
      %v4457 = vmul.f32 %v84, %v4411
      %v4458 = vmul.f32 %v84, %v4412
      %v4459 = vmul.f32 %v84, %v4413
      %v4460 = vmul.f32 %v84, %v4414
      %v4465 = vrot.slane %v4457, 1
      %v4466 = vrot.slane %v4459, 1
      %v4467 = vsel %vm102, %v4465, %v4466
      %v4468 = vrot.slane %v4458, 1
      %v4469 = vrot.slane %v4460, 1
      %v4470 = vsel %vm102, %v4468, %v4469
      %v4475 = vadd.f32 %v4453, %v4467
      %v4476 = vadd.f32 %v4454, %v4470
      %v4477 = vadd.f32 %v4455, %v4466
      %v4478 = vadd.f32 %v4456, %v4469
      %v4479 = vmul.f32 %v93, %v4415
      %v4480 = vmul.f32 %v93, %v4416
      %v4481 = vmul.f32 %v93, %v4417
      %v4482 = vmul.f32 %v93, %v4418
      %v4487 = vrot.slane %v4479, 1
      %v4488 = vrot.slane %v4481, 1
      %v4489 = vsel %vm102, %v4487, %v4488
      %v4490 = vrot.slane %v4480, 1
      %v4491 = vrot.slane %v4482, 1
      %v4492 = vsel %vm102, %v4490, %v4491
      %v4497 = vadd.f32 %v4475, %v4489
      %v4498 = vadd.f32 %v4476, %v4492
      %v4499 = vadd.f32 %v4477, %v4488
      %v4500 = vadd.f32 %v4478, %v4491
      %v4501 = vld [vmem:[%s4273] sm:$0xff]
      %v4502 = vld [vmem:[%s4273 + $0x8] sm:$0xff]
      %v4503 = vld [vmem:[%s4273 + $0x10] sm:$0x1f]
      %v4504 = vld [vmem:[%s4273 + $0x18] sm:$0x1f]
      %v4505 = vld [vmem:[%s4278] sm:$0xff]
      %v4506 = vld [vmem:[%s4278 + $0x8] sm:$0xff]
      %v4507 = vld [vmem:[%s4278 + $0x10] sm:$0x1f]
      %v4508 = vld [vmem:[%s4278 + $0x18] sm:$0x1f]
      %v4509 = vld [vmem:[%s4273] sm:$0xfe]
      %v4510 = vld [vmem:[%s4273 + $0x8] sm:$0xfe]
      %v4511 = vld [vmem:[%s4273 + $0x10] sm:$0x3f]
      %v4512 = vld [vmem:[%s4273 + $0x18] sm:$0x3f]
      %v4513 = vld [vmem:[%s4278] sm:$0xfe]
      %v4514 = vld [vmem:[%s4278 + $0x8] sm:$0xfe]
      %v4515 = vld [vmem:[%s4278 + $0x10] sm:$0x3f]
      %v4516 = vld [vmem:[%s4278 + $0x18] sm:$0x3f]
      %v4517 = vmul.f32 %v183, %v4501
      %v4518 = vmul.f32 %v183, %v4502
      %v4519 = vmul.f32 %v183, %v4503
      %v4520 = vmul.f32 %v183, %v4504
      %v4521 = vmul.f32 %v188, %v4505
      %v4522 = vmul.f32 %v188, %v4506
      %v4523 = vmul.f32 %v188, %v4507
      %v4524 = vmul.f32 %v188, %v4508
      %v4525 = vadd.f32 %v4517, %v4521
      %v4526 = vadd.f32 %v4518, %v4522
      %v4527 = vadd.f32 %v4519, %v4523
      %v4528 = vadd.f32 %v4520, %v4524
      %v4529 = vmul.f32 %v197, %v4509
      %v4530 = vmul.f32 %v197, %v4510
      %v4531 = vmul.f32 %v197, %v4511
      %v4532 = vmul.f32 %v197, %v4512
      %v4537 = vrot.slane %v4529, 1
      %v4538 = vrot.slane %v4531, 1
      %v4539 = vsel %vm102, %v4537, %v4538
      %v4540 = vrot.slane %v4530, 1
      %v4541 = vrot.slane %v4532, 1
      %v4542 = vsel %vm102, %v4540, %v4541
      %v4547 = vadd.f32 %v4525, %v4539
      %v4548 = vadd.f32 %v4526, %v4542
      %v4549 = vadd.f32 %v4527, %v4538
      %v4550 = vadd.f32 %v4528, %v4541
      %v4551 = vmul.f32 %v183, %v4505
      %v4552 = vmul.f32 %v183, %v4506
      %v4553 = vmul.f32 %v183, %v4507
      %v4554 = vmul.f32 %v183, %v4508
      %v4555 = vmul.f32 %v188, %v4509
      %v4556 = vmul.f32 %v188, %v4510
      %v4557 = vmul.f32 %v188, %v4511
      %v4558 = vmul.f32 %v188, %v4512
      %v4563 = vrot.slane %v4555, 1
      %v4564 = vrot.slane %v4557, 1
      %v4565 = vsel %vm102, %v4563, %v4564
      %v4566 = vrot.slane %v4556, 1
      %v4567 = vrot.slane %v4558, 1
      %v4568 = vsel %vm102, %v4566, %v4567
      %v4573 = vadd.f32 %v4551, %v4565
      %v4574 = vadd.f32 %v4552, %v4568
      %v4575 = vadd.f32 %v4553, %v4564
      %v4576 = vadd.f32 %v4554, %v4567
      %v4577 = vmul.f32 %v197, %v4513
      %v4578 = vmul.f32 %v197, %v4514
      %v4579 = vmul.f32 %v197, %v4515
      %v4580 = vmul.f32 %v197, %v4516
      %v4585 = vrot.slane %v4577, 1
      %v4586 = vrot.slane %v4579, 1
      %v4587 = vsel %vm102, %v4585, %v4586
      %v4588 = vrot.slane %v4578, 1
      %v4589 = vrot.slane %v4580, 1
      %v4590 = vsel %vm102, %v4588, %v4589
      %v4595 = vadd.f32 %v4573, %v4587
      %v4596 = vadd.f32 %v4574, %v4590
      %v4597 = vadd.f32 %v4575, %v4586
      %v4598 = vadd.f32 %v4576, %v4589
      %v4599 = vadd.f32 %v4449, %v4547
      %v4600 = vadd.f32 %v4450, %v4548
      %v4601 = vadd.f32 %v4451, %v4549
      %v4602 = vadd.f32 %v4452, %v4550
      %v4603 = vadd.f32 %v4497, %v4595
      %v4604 = vadd.f32 %v4498, %v4596
      %v4605 = vadd.f32 %v4499, %v4597
      %v4606 = vadd.f32 %v4500, %v4598
      %s4607 = scalar_lea.vmem %s0, 512
      %v4608 = vld [vmem:[%s4607] sm:$0xff]
      %v4609 = vld [vmem:[%s4607 + $0x8] sm:$0xff]
      %v4610 = vld [vmem:[%s4607 + $0x10] sm:$0x1f]
      %v4611 = vld [vmem:[%s4607 + $0x18] sm:$0x1f]
      %s4612 = scalar_lea.vmem %s1, 512
      %v4613 = vld [vmem:[%s4612] sm:$0xff]
      %v4614 = vld [vmem:[%s4612 + $0x8] sm:$0xff]
      %v4615 = vld [vmem:[%s4612 + $0x10] sm:$0x1f]
      %v4616 = vld [vmem:[%s4612 + $0x18] sm:$0x1f]
      %v4617 = vld [vmem:[%s4607] sm:$0xfe]
      %v4618 = vld [vmem:[%s4607 + $0x8] sm:$0xfe]
      %v4619 = vld [vmem:[%s4607 + $0x10] sm:$0x3f]
      %v4620 = vld [vmem:[%s4607 + $0x18] sm:$0x3f]
      %v4621 = vld [vmem:[%s4612] sm:$0xfe]
      %v4622 = vld [vmem:[%s4612 + $0x8] sm:$0xfe]
      %v4623 = vld [vmem:[%s4612 + $0x10] sm:$0x3f]
      %v4624 = vld [vmem:[%s4612 + $0x18] sm:$0x3f]
      %v4625 = vmul.f32 %v294, %v4608
      %v4626 = vmul.f32 %v294, %v4609
      %v4627 = vmul.f32 %v294, %v4610
      %v4628 = vmul.f32 %v294, %v4611
      %v4629 = vmul.f32 %v299, %v4613
      %v4630 = vmul.f32 %v299, %v4614
      %v4631 = vmul.f32 %v299, %v4615
      %v4632 = vmul.f32 %v299, %v4616
      %v4633 = vadd.f32 %v4625, %v4629
      %v4634 = vadd.f32 %v4626, %v4630
      %v4635 = vadd.f32 %v4627, %v4631
      %v4636 = vadd.f32 %v4628, %v4632
      %v4637 = vmul.f32 %v308, %v4617
      %v4638 = vmul.f32 %v308, %v4618
      %v4639 = vmul.f32 %v308, %v4619
      %v4640 = vmul.f32 %v308, %v4620
      %v4645 = vrot.slane %v4637, 1
      %v4646 = vrot.slane %v4639, 1
      %v4647 = vsel %vm102, %v4645, %v4646
      %v4648 = vrot.slane %v4638, 1
      %v4649 = vrot.slane %v4640, 1
      %v4650 = vsel %vm102, %v4648, %v4649
      %v4655 = vadd.f32 %v4633, %v4647
      %v4656 = vadd.f32 %v4634, %v4650
      %v4657 = vadd.f32 %v4635, %v4646
      %v4658 = vadd.f32 %v4636, %v4649
      %v4659 = vmul.f32 %v294, %v4613
      %v4660 = vmul.f32 %v294, %v4614
      %v4661 = vmul.f32 %v294, %v4615
      %v4662 = vmul.f32 %v294, %v4616
      %v4663 = vmul.f32 %v299, %v4617
      %v4664 = vmul.f32 %v299, %v4618
      %v4665 = vmul.f32 %v299, %v4619
      %v4666 = vmul.f32 %v299, %v4620
      %v4671 = vrot.slane %v4663, 1
      %v4672 = vrot.slane %v4665, 1
      %v4673 = vsel %vm102, %v4671, %v4672
      %v4674 = vrot.slane %v4664, 1
      %v4675 = vrot.slane %v4666, 1
      %v4676 = vsel %vm102, %v4674, %v4675
      %v4681 = vadd.f32 %v4659, %v4673
      %v4682 = vadd.f32 %v4660, %v4676
      %v4683 = vadd.f32 %v4661, %v4672
      %v4684 = vadd.f32 %v4662, %v4675
      %v4685 = vmul.f32 %v308, %v4621
      %v4686 = vmul.f32 %v308, %v4622
      %v4687 = vmul.f32 %v308, %v4623
      %v4688 = vmul.f32 %v308, %v4624
      %v4693 = vrot.slane %v4685, 1
      %v4694 = vrot.slane %v4687, 1
      %v4695 = vsel %vm102, %v4693, %v4694
      %v4696 = vrot.slane %v4686, 1
      %v4697 = vrot.slane %v4688, 1
      %v4698 = vsel %vm102, %v4696, %v4697
      %v4703 = vadd.f32 %v4681, %v4695
      %v4704 = vadd.f32 %v4682, %v4698
      %v4705 = vadd.f32 %v4683, %v4694
      %v4706 = vadd.f32 %v4684, %v4697
      %v4707 = vadd.f32 %v4599, %v4655
      %v4708 = vadd.f32 %v4600, %v4656
      %v4709 = vadd.f32 %v4601, %v4657
      %v4710 = vadd.f32 %v4602, %v4658
      %v4711 = vadd.f32 %v4603, %v4703
      %v4712 = vadd.f32 %v4604, %v4704
      %v4713 = vadd.f32 %v4605, %v4705
      %v4714 = vadd.f32 %v4606, %v4706
      %v4715 = vmax.f32 %v4707, %v4711
      %v4716 = vmax.f32 %v4708, %v4712
      %v4717 = vmax.f32 %v4709, %v4713
      %v4718 = vmax.f32 %v4710, %v4714
      %v4719 = vmul.f32 %v79, %v4501
      %v4720 = vmul.f32 %v79, %v4502
      %v4721 = vmul.f32 %v79, %v4503
      %v4722 = vmul.f32 %v79, %v4504
      %v4723 = vmul.f32 %v84, %v4505
      %v4724 = vmul.f32 %v84, %v4506
      %v4725 = vmul.f32 %v84, %v4507
      %v4726 = vmul.f32 %v84, %v4508
      %v4727 = vadd.f32 %v4719, %v4723
      %v4728 = vadd.f32 %v4720, %v4724
      %v4729 = vadd.f32 %v4721, %v4725
      %v4730 = vadd.f32 %v4722, %v4726
      %v4731 = vmul.f32 %v93, %v4509
      %v4732 = vmul.f32 %v93, %v4510
      %v4733 = vmul.f32 %v93, %v4511
      %v4734 = vmul.f32 %v93, %v4512
      %v4739 = vrot.slane %v4731, 1
      %v4740 = vrot.slane %v4733, 1
      %v4741 = vsel %vm102, %v4739, %v4740
      %v4742 = vrot.slane %v4732, 1
      %v4743 = vrot.slane %v4734, 1
      %v4744 = vsel %vm102, %v4742, %v4743
      %v4749 = vadd.f32 %v4727, %v4741
      %v4750 = vadd.f32 %v4728, %v4744
      %v4751 = vadd.f32 %v4729, %v4740
      %v4752 = vadd.f32 %v4730, %v4743
      %v4753 = vmul.f32 %v79, %v4505
      %v4754 = vmul.f32 %v79, %v4506
      %v4755 = vmul.f32 %v79, %v4507
      %v4756 = vmul.f32 %v79, %v4508
      %v4757 = vmul.f32 %v84, %v4509
      %v4758 = vmul.f32 %v84, %v4510
      %v4759 = vmul.f32 %v84, %v4511
      %v4760 = vmul.f32 %v84, %v4512
      %v4765 = vrot.slane %v4757, 1
      %v4766 = vrot.slane %v4759, 1
      %v4767 = vsel %vm102, %v4765, %v4766
      %v4768 = vrot.slane %v4758, 1
      %v4769 = vrot.slane %v4760, 1
      %v4770 = vsel %vm102, %v4768, %v4769
      %v4775 = vadd.f32 %v4753, %v4767
      %v4776 = vadd.f32 %v4754, %v4770
      %v4777 = vadd.f32 %v4755, %v4766
      %v4778 = vadd.f32 %v4756, %v4769
      %v4779 = vmul.f32 %v93, %v4513
      %v4780 = vmul.f32 %v93, %v4514
      %v4781 = vmul.f32 %v93, %v4515
      %v4782 = vmul.f32 %v93, %v4516
      %v4787 = vrot.slane %v4779, 1
      %v4788 = vrot.slane %v4781, 1
      %v4789 = vsel %vm102, %v4787, %v4788
      %v4790 = vrot.slane %v4780, 1
      %v4791 = vrot.slane %v4782, 1
      %v4792 = vsel %vm102, %v4790, %v4791
      %v4797 = vadd.f32 %v4775, %v4789
      %v4798 = vadd.f32 %v4776, %v4792
      %v4799 = vadd.f32 %v4777, %v4788
      %v4800 = vadd.f32 %v4778, %v4791
      %v4801 = vmul.f32 %v183, %v4608
      %v4802 = vmul.f32 %v183, %v4609
      %v4803 = vmul.f32 %v183, %v4610
      %v4804 = vmul.f32 %v183, %v4611
      %v4805 = vmul.f32 %v188, %v4613
      %v4806 = vmul.f32 %v188, %v4614
      %v4807 = vmul.f32 %v188, %v4615
      %v4808 = vmul.f32 %v188, %v4616
      %v4809 = vadd.f32 %v4801, %v4805
      %v4810 = vadd.f32 %v4802, %v4806
      %v4811 = vadd.f32 %v4803, %v4807
      %v4812 = vadd.f32 %v4804, %v4808
      %v4813 = vmul.f32 %v197, %v4617
      %v4814 = vmul.f32 %v197, %v4618
      %v4815 = vmul.f32 %v197, %v4619
      %v4816 = vmul.f32 %v197, %v4620
      %v4821 = vrot.slane %v4813, 1
      %v4822 = vrot.slane %v4815, 1
      %v4823 = vsel %vm102, %v4821, %v4822
      %v4824 = vrot.slane %v4814, 1
      %v4825 = vrot.slane %v4816, 1
      %v4826 = vsel %vm102, %v4824, %v4825
      %v4831 = vadd.f32 %v4809, %v4823
      %v4832 = vadd.f32 %v4810, %v4826
      %v4833 = vadd.f32 %v4811, %v4822
      %v4834 = vadd.f32 %v4812, %v4825
      %v4835 = vmul.f32 %v183, %v4613
      %v4836 = vmul.f32 %v183, %v4614
      %v4837 = vmul.f32 %v183, %v4615
      %v4838 = vmul.f32 %v183, %v4616
      %v4839 = vmul.f32 %v188, %v4617
      %v4840 = vmul.f32 %v188, %v4618
      %v4841 = vmul.f32 %v188, %v4619
      %v4842 = vmul.f32 %v188, %v4620
      %v4847 = vrot.slane %v4839, 1
      %v4848 = vrot.slane %v4841, 1
      %v4849 = vsel %vm102, %v4847, %v4848
      %v4850 = vrot.slane %v4840, 1
      %v4851 = vrot.slane %v4842, 1
      %v4852 = vsel %vm102, %v4850, %v4851
      %v4857 = vadd.f32 %v4835, %v4849
      %v4858 = vadd.f32 %v4836, %v4852
      %v4859 = vadd.f32 %v4837, %v4848
      %v4860 = vadd.f32 %v4838, %v4851
      %v4861 = vmul.f32 %v197, %v4621
      %v4862 = vmul.f32 %v197, %v4622
      %v4863 = vmul.f32 %v197, %v4623
      %v4864 = vmul.f32 %v197, %v4624
      %v4869 = vrot.slane %v4861, 1
      %v4870 = vrot.slane %v4863, 1
      %v4871 = vsel %vm102, %v4869, %v4870
      %v4872 = vrot.slane %v4862, 1
      %v4873 = vrot.slane %v4864, 1
      %v4874 = vsel %vm102, %v4872, %v4873
      %v4879 = vadd.f32 %v4857, %v4871
      %v4880 = vadd.f32 %v4858, %v4874
      %v4881 = vadd.f32 %v4859, %v4870
      %v4882 = vadd.f32 %v4860, %v4873
      %v4883 = vadd.f32 %v4749, %v4831
      %v4884 = vadd.f32 %v4750, %v4832
      %v4885 = vadd.f32 %v4751, %v4833
      %v4886 = vadd.f32 %v4752, %v4834
      %v4887 = vadd.f32 %v4797, %v4879
      %v4888 = vadd.f32 %v4798, %v4880
      %v4889 = vadd.f32 %v4799, %v4881
      %v4890 = vadd.f32 %v4800, %v4882
      %s4891 = scalar_lea.vmem %s0, 544
      %v4892 = vld [vmem:[%s4891] sm:$0xff]
      %v4893 = vld [vmem:[%s4891 + $0x8] sm:$0xff]
      %v4894 = vld [vmem:[%s4891 + $0x10] sm:$0x1f]
      %v4895 = vld [vmem:[%s4891 + $0x18] sm:$0x1f]
      %s4896 = scalar_lea.vmem %s1, 544
      %v4897 = vld [vmem:[%s4896] sm:$0xff]
      %v4898 = vld [vmem:[%s4896 + $0x8] sm:$0xff]
      %v4899 = vld [vmem:[%s4896 + $0x10] sm:$0x1f]
      %v4900 = vld [vmem:[%s4896 + $0x18] sm:$0x1f]
      %v4901 = vld [vmem:[%s4891] sm:$0xfe]
      %v4902 = vld [vmem:[%s4891 + $0x8] sm:$0xfe]
      %v4903 = vld [vmem:[%s4891 + $0x10] sm:$0x3f]
      %v4904 = vld [vmem:[%s4891 + $0x18] sm:$0x3f]
      %v4905 = vld [vmem:[%s4896] sm:$0xfe]
      %v4906 = vld [vmem:[%s4896 + $0x8] sm:$0xfe]
      %v4907 = vld [vmem:[%s4896 + $0x10] sm:$0x3f]
      %v4908 = vld [vmem:[%s4896 + $0x18] sm:$0x3f]
      %v4909 = vmul.f32 %v294, %v4892
      %v4910 = vmul.f32 %v294, %v4893
      %v4911 = vmul.f32 %v294, %v4894
      %v4912 = vmul.f32 %v294, %v4895
      %v4913 = vmul.f32 %v299, %v4897
      %v4914 = vmul.f32 %v299, %v4898
      %v4915 = vmul.f32 %v299, %v4899
      %v4916 = vmul.f32 %v299, %v4900
      %v4917 = vadd.f32 %v4909, %v4913
      %v4918 = vadd.f32 %v4910, %v4914
      %v4919 = vadd.f32 %v4911, %v4915
      %v4920 = vadd.f32 %v4912, %v4916
      %v4921 = vmul.f32 %v308, %v4901
      %v4922 = vmul.f32 %v308, %v4902
      %v4923 = vmul.f32 %v308, %v4903
      %v4924 = vmul.f32 %v308, %v4904
      %v4929 = vrot.slane %v4921, 1
      %v4930 = vrot.slane %v4923, 1
      %v4931 = vsel %vm102, %v4929, %v4930
      %v4932 = vrot.slane %v4922, 1
      %v4933 = vrot.slane %v4924, 1
      %v4934 = vsel %vm102, %v4932, %v4933
      %v4939 = vadd.f32 %v4917, %v4931
      %v4940 = vadd.f32 %v4918, %v4934
      %v4941 = vadd.f32 %v4919, %v4930
      %v4942 = vadd.f32 %v4920, %v4933
      %v4943 = vmul.f32 %v294, %v4897
      %v4944 = vmul.f32 %v294, %v4898
      %v4945 = vmul.f32 %v294, %v4899
      %v4946 = vmul.f32 %v294, %v4900
      %v4947 = vmul.f32 %v299, %v4901
      %v4948 = vmul.f32 %v299, %v4902
      %v4949 = vmul.f32 %v299, %v4903
      %v4950 = vmul.f32 %v299, %v4904
      %v4955 = vrot.slane %v4947, 1
      %v4956 = vrot.slane %v4949, 1
      %v4957 = vsel %vm102, %v4955, %v4956
      %v4958 = vrot.slane %v4948, 1
      %v4959 = vrot.slane %v4950, 1
      %v4960 = vsel %vm102, %v4958, %v4959
      %v4965 = vadd.f32 %v4943, %v4957
      %v4966 = vadd.f32 %v4944, %v4960
      %v4967 = vadd.f32 %v4945, %v4956
      %v4968 = vadd.f32 %v4946, %v4959
      %v4969 = vmul.f32 %v308, %v4905
      %v4970 = vmul.f32 %v308, %v4906
      %v4971 = vmul.f32 %v308, %v4907
      %v4972 = vmul.f32 %v308, %v4908
      %v4977 = vrot.slane %v4969, 1
      %v4978 = vrot.slane %v4971, 1
      %v4979 = vsel %vm102, %v4977, %v4978
      %v4980 = vrot.slane %v4970, 1
      %v4981 = vrot.slane %v4972, 1
      %v4982 = vsel %vm102, %v4980, %v4981
      %v4987 = vadd.f32 %v4965, %v4979
      %v4988 = vadd.f32 %v4966, %v4982
      %v4989 = vadd.f32 %v4967, %v4978
      %v4990 = vadd.f32 %v4968, %v4981
      %v4991 = vadd.f32 %v4883, %v4939
      %v4992 = vadd.f32 %v4884, %v4940
      %v4993 = vadd.f32 %v4885, %v4941
      %v4994 = vadd.f32 %v4886, %v4942
      %v4995 = vadd.f32 %v4887, %v4987
      %v4996 = vadd.f32 %v4888, %v4988
      %v4997 = vadd.f32 %v4889, %v4989
      %v4998 = vadd.f32 %v4890, %v4990
      %v4999 = vmax.f32 %v4991, %v4995
      %v5000 = vmax.f32 %v4992, %v4996
      %v5001 = vmax.f32 %v4993, %v4997
      %v5002 = vmax.f32 %v4994, %v4998
      %v5003 = vmax.f32 %v4715, %v4999
      %v5004 = vmax.f32 %v4716, %v5000
      %v5005 = vmax.f32 %v4717, %v5001
      %v5006 = vmax.f32 %v4718, %v5002
      %v5007 = vadd.f32 %v5003, %v679
      %v5008 = vadd.f32 %v5004, %v679
      %v5009 = vadd.f32 %v5005, %v679
      %v5010 = vadd.f32 %v5006, %v679
      %v5011 = vmax.f32 %v5007, 0.0
      %v5012 = vmax.f32 %v5008, 0.0
      %v5013 = vmax.f32 %v5009, 0.0
      %v5014 = vmax.f32 %v5010, 0.0
      %v5015 = vsel %vm688, %v5013, 0.0
      %v5016 = vsel %vm688, %v5014, 0.0
      %5017 = vst [vmem:[#allocation2 + $0xe0] sm:$0xff] %v5011
      %5018 = vst [vmem:[#allocation2 + $0xe8] sm:$0xff] %v5012
      %5019 = vst [vmem:[#allocation2 + $0xf0] sm:$0xff] %v5015
      %5020 = vst [vmem:[#allocation2 + $0xf8] sm:$0xff] %v5016
      %v5021 = vld [vmem:[%s4607] sm:$0xff]
      %v5022 = vld [vmem:[%s4607 + $0x8] sm:$0xff]
      %v5023 = vld [vmem:[%s4607 + $0x10] sm:$0x1f]
      %v5024 = vld [vmem:[%s4607 + $0x18] sm:$0x1f]
      %v5025 = vld [vmem:[%s4612] sm:$0xff]
      %v5026 = vld [vmem:[%s4612 + $0x8] sm:$0xff]
      %v5027 = vld [vmem:[%s4612 + $0x10] sm:$0x1f]
      %v5028 = vld [vmem:[%s4612 + $0x18] sm:$0x1f]
      %v5029 = vld [vmem:[%s4607] sm:$0xfe]
      %v5030 = vld [vmem:[%s4607 + $0x8] sm:$0xfe]
      %v5031 = vld [vmem:[%s4607 + $0x10] sm:$0x3f]
      %v5032 = vld [vmem:[%s4607 + $0x18] sm:$0x3f]
      %v5033 = vld [vmem:[%s4612] sm:$0xfe]
      %v5034 = vld [vmem:[%s4612 + $0x8] sm:$0xfe]
      %v5035 = vld [vmem:[%s4612 + $0x10] sm:$0x3f]
      %v5036 = vld [vmem:[%s4612 + $0x18] sm:$0x3f]
      %v5037 = vmul.f32 %v79, %v5021
      %v5038 = vmul.f32 %v79, %v5022
      %v5039 = vmul.f32 %v79, %v5023
      %v5040 = vmul.f32 %v79, %v5024
      %v5041 = vmul.f32 %v84, %v5025
      %v5042 = vmul.f32 %v84, %v5026
      %v5043 = vmul.f32 %v84, %v5027
      %v5044 = vmul.f32 %v84, %v5028
      %v5045 = vadd.f32 %v5037, %v5041
      %v5046 = vadd.f32 %v5038, %v5042
      %v5047 = vadd.f32 %v5039, %v5043
      %v5048 = vadd.f32 %v5040, %v5044
      %v5049 = vmul.f32 %v93, %v5029
      %v5050 = vmul.f32 %v93, %v5030
      %v5051 = vmul.f32 %v93, %v5031
      %v5052 = vmul.f32 %v93, %v5032
      %v5057 = vrot.slane %v5049, 1
      %v5058 = vrot.slane %v5051, 1
      %v5059 = vsel %vm102, %v5057, %v5058
      %v5060 = vrot.slane %v5050, 1
      %v5061 = vrot.slane %v5052, 1
      %v5062 = vsel %vm102, %v5060, %v5061
      %v5067 = vadd.f32 %v5045, %v5059
      %v5068 = vadd.f32 %v5046, %v5062
      %v5069 = vadd.f32 %v5047, %v5058
      %v5070 = vadd.f32 %v5048, %v5061
      %v5071 = vmul.f32 %v79, %v5025
      %v5072 = vmul.f32 %v79, %v5026
      %v5073 = vmul.f32 %v79, %v5027
      %v5074 = vmul.f32 %v79, %v5028
      %v5075 = vmul.f32 %v84, %v5029
      %v5076 = vmul.f32 %v84, %v5030
      %v5077 = vmul.f32 %v84, %v5031
      %v5078 = vmul.f32 %v84, %v5032
      %v5083 = vrot.slane %v5075, 1
      %v5084 = vrot.slane %v5077, 1
      %v5085 = vsel %vm102, %v5083, %v5084
      %v5086 = vrot.slane %v5076, 1
      %v5087 = vrot.slane %v5078, 1
      %v5088 = vsel %vm102, %v5086, %v5087
      %v5093 = vadd.f32 %v5071, %v5085
      %v5094 = vadd.f32 %v5072, %v5088
      %v5095 = vadd.f32 %v5073, %v5084
      %v5096 = vadd.f32 %v5074, %v5087
      %v5097 = vmul.f32 %v93, %v5033
      %v5098 = vmul.f32 %v93, %v5034
      %v5099 = vmul.f32 %v93, %v5035
      %v5100 = vmul.f32 %v93, %v5036
      %v5105 = vrot.slane %v5097, 1
      %v5106 = vrot.slane %v5099, 1
      %v5107 = vsel %vm102, %v5105, %v5106
      %v5108 = vrot.slane %v5098, 1
      %v5109 = vrot.slane %v5100, 1
      %v5110 = vsel %vm102, %v5108, %v5109
      %v5115 = vadd.f32 %v5093, %v5107
      %v5116 = vadd.f32 %v5094, %v5110
      %v5117 = vadd.f32 %v5095, %v5106
      %v5118 = vadd.f32 %v5096, %v5109
      %v5119 = vld [vmem:[%s4891] sm:$0xff]
      %v5120 = vld [vmem:[%s4891 + $0x8] sm:$0xff]
      %v5121 = vld [vmem:[%s4891 + $0x10] sm:$0x1f]
      %v5122 = vld [vmem:[%s4891 + $0x18] sm:$0x1f]
      %v5123 = vld [vmem:[%s4896] sm:$0xff]
      %v5124 = vld [vmem:[%s4896 + $0x8] sm:$0xff]
      %v5125 = vld [vmem:[%s4896 + $0x10] sm:$0x1f]
      %v5126 = vld [vmem:[%s4896 + $0x18] sm:$0x1f]
      %v5127 = vld [vmem:[%s4891] sm:$0xfe]
      %v5128 = vld [vmem:[%s4891 + $0x8] sm:$0xfe]
      %v5129 = vld [vmem:[%s4891 + $0x10] sm:$0x3f]
      %v5130 = vld [vmem:[%s4891 + $0x18] sm:$0x3f]
      %v5131 = vld [vmem:[%s4896] sm:$0xfe]
      %v5132 = vld [vmem:[%s4896 + $0x8] sm:$0xfe]
      %v5133 = vld [vmem:[%s4896 + $0x10] sm:$0x3f]
      %v5134 = vld [vmem:[%s4896 + $0x18] sm:$0x3f]
      %v5135 = vmul.f32 %v183, %v5119
      %v5136 = vmul.f32 %v183, %v5120
      %v5137 = vmul.f32 %v183, %v5121
      %v5138 = vmul.f32 %v183, %v5122
      %v5139 = vmul.f32 %v188, %v5123
      %v5140 = vmul.f32 %v188, %v5124
      %v5141 = vmul.f32 %v188, %v5125
      %v5142 = vmul.f32 %v188, %v5126
      %v5143 = vadd.f32 %v5135, %v5139
      %v5144 = vadd.f32 %v5136, %v5140
      %v5145 = vadd.f32 %v5137, %v5141
      %v5146 = vadd.f32 %v5138, %v5142
      %v5147 = vmul.f32 %v197, %v5127
      %v5148 = vmul.f32 %v197, %v5128
      %v5149 = vmul.f32 %v197, %v5129
      %v5150 = vmul.f32 %v197, %v5130
      %v5155 = vrot.slane %v5147, 1
      %v5156 = vrot.slane %v5149, 1
      %v5157 = vsel %vm102, %v5155, %v5156
      %v5158 = vrot.slane %v5148, 1
      %v5159 = vrot.slane %v5150, 1
      %v5160 = vsel %vm102, %v5158, %v5159
      %v5165 = vadd.f32 %v5143, %v5157
      %v5166 = vadd.f32 %v5144, %v5160
      %v5167 = vadd.f32 %v5145, %v5156
      %v5168 = vadd.f32 %v5146, %v5159
      %v5169 = vmul.f32 %v183, %v5123
      %v5170 = vmul.f32 %v183, %v5124
      %v5171 = vmul.f32 %v183, %v5125
      %v5172 = vmul.f32 %v183, %v5126
      %v5173 = vmul.f32 %v188, %v5127
      %v5174 = vmul.f32 %v188, %v5128
      %v5175 = vmul.f32 %v188, %v5129
      %v5176 = vmul.f32 %v188, %v5130
      %v5181 = vrot.slane %v5173, 1
      %v5182 = vrot.slane %v5175, 1
      %v5183 = vsel %vm102, %v5181, %v5182
      %v5184 = vrot.slane %v5174, 1
      %v5185 = vrot.slane %v5176, 1
      %v5186 = vsel %vm102, %v5184, %v5185
      %v5191 = vadd.f32 %v5169, %v5183
      %v5192 = vadd.f32 %v5170, %v5186
      %v5193 = vadd.f32 %v5171, %v5182
      %v5194 = vadd.f32 %v5172, %v5185
      %v5195 = vmul.f32 %v197, %v5131
      %v5196 = vmul.f32 %v197, %v5132
      %v5197 = vmul.f32 %v197, %v5133
      %v5198 = vmul.f32 %v197, %v5134
      %v5203 = vrot.slane %v5195, 1
      %v5204 = vrot.slane %v5197, 1
      %v5205 = vsel %vm102, %v5203, %v5204
      %v5206 = vrot.slane %v5196, 1
      %v5207 = vrot.slane %v5198, 1
      %v5208 = vsel %vm102, %v5206, %v5207
      %v5213 = vadd.f32 %v5191, %v5205
      %v5214 = vadd.f32 %v5192, %v5208
      %v5215 = vadd.f32 %v5193, %v5204
      %v5216 = vadd.f32 %v5194, %v5207
      %v5217 = vadd.f32 %v5067, %v5165
      %v5218 = vadd.f32 %v5068, %v5166
      %v5219 = vadd.f32 %v5069, %v5167
      %v5220 = vadd.f32 %v5070, %v5168
      %v5221 = vadd.f32 %v5115, %v5213
      %v5222 = vadd.f32 %v5116, %v5214
      %v5223 = vadd.f32 %v5117, %v5215
      %v5224 = vadd.f32 %v5118, %v5216
      %s5225 = scalar_lea.vmem %s0, 576
      %v5226 = vld [vmem:[%s5225] sm:$0xff]
      %v5227 = vld [vmem:[%s5225 + $0x8] sm:$0xff]
      %v5228 = vld [vmem:[%s5225 + $0x10] sm:$0x1f]
      %v5229 = vld [vmem:[%s5225 + $0x18] sm:$0x1f]
      %s5230 = scalar_lea.vmem %s1, 576
      %v5231 = vld [vmem:[%s5230] sm:$0xff]
      %v5232 = vld [vmem:[%s5230 + $0x8] sm:$0xff]
      %v5233 = vld [vmem:[%s5230 + $0x10] sm:$0x1f]
      %v5234 = vld [vmem:[%s5230 + $0x18] sm:$0x1f]
      %v5235 = vld [vmem:[%s5225] sm:$0xfe]
      %v5236 = vld [vmem:[%s5225 + $0x8] sm:$0xfe]
      %v5237 = vld [vmem:[%s5225 + $0x10] sm:$0x3f]
      %v5238 = vld [vmem:[%s5225 + $0x18] sm:$0x3f]
      %v5239 = vld [vmem:[%s5230] sm:$0xfe]
      %v5240 = vld [vmem:[%s5230 + $0x8] sm:$0xfe]
      %v5241 = vld [vmem:[%s5230 + $0x10] sm:$0x3f]
      %v5242 = vld [vmem:[%s5230 + $0x18] sm:$0x3f]
      %v5243 = vmul.f32 %v294, %v5226
      %v5244 = vmul.f32 %v294, %v5227
      %v5245 = vmul.f32 %v294, %v5228
      %v5246 = vmul.f32 %v294, %v5229
      %v5247 = vmul.f32 %v299, %v5231
      %v5248 = vmul.f32 %v299, %v5232
      %v5249 = vmul.f32 %v299, %v5233
      %v5250 = vmul.f32 %v299, %v5234
      %v5251 = vadd.f32 %v5243, %v5247
      %v5252 = vadd.f32 %v5244, %v5248
      %v5253 = vadd.f32 %v5245, %v5249
      %v5254 = vadd.f32 %v5246, %v5250
      %v5255 = vmul.f32 %v308, %v5235
      %v5256 = vmul.f32 %v308, %v5236
      %v5257 = vmul.f32 %v308, %v5237
      %v5258 = vmul.f32 %v308, %v5238
      %v5263 = vrot.slane %v5255, 1
      %v5264 = vrot.slane %v5257, 1
      %v5265 = vsel %vm102, %v5263, %v5264
      %v5266 = vrot.slane %v5256, 1
      %v5267 = vrot.slane %v5258, 1
      %v5268 = vsel %vm102, %v5266, %v5267
      %v5273 = vadd.f32 %v5251, %v5265
      %v5274 = vadd.f32 %v5252, %v5268
      %v5275 = vadd.f32 %v5253, %v5264
      %v5276 = vadd.f32 %v5254, %v5267
      %v5277 = vmul.f32 %v294, %v5231
      %v5278 = vmul.f32 %v294, %v5232
      %v5279 = vmul.f32 %v294, %v5233
      %v5280 = vmul.f32 %v294, %v5234
      %v5281 = vmul.f32 %v299, %v5235
      %v5282 = vmul.f32 %v299, %v5236
      %v5283 = vmul.f32 %v299, %v5237
      %v5284 = vmul.f32 %v299, %v5238
      %v5289 = vrot.slane %v5281, 1
      %v5290 = vrot.slane %v5283, 1
      %v5291 = vsel %vm102, %v5289, %v5290
      %v5292 = vrot.slane %v5282, 1
      %v5293 = vrot.slane %v5284, 1
      %v5294 = vsel %vm102, %v5292, %v5293
      %v5299 = vadd.f32 %v5277, %v5291
      %v5300 = vadd.f32 %v5278, %v5294
      %v5301 = vadd.f32 %v5279, %v5290
      %v5302 = vadd.f32 %v5280, %v5293
      %v5303 = vmul.f32 %v308, %v5239
      %v5304 = vmul.f32 %v308, %v5240
      %v5305 = vmul.f32 %v308, %v5241
      %v5306 = vmul.f32 %v308, %v5242
      %v5311 = vrot.slane %v5303, 1
      %v5312 = vrot.slane %v5305, 1
      %v5313 = vsel %vm102, %v5311, %v5312
      %v5314 = vrot.slane %v5304, 1
      %v5315 = vrot.slane %v5306, 1
      %v5316 = vsel %vm102, %v5314, %v5315
      %v5321 = vadd.f32 %v5299, %v5313
      %v5322 = vadd.f32 %v5300, %v5316
      %v5323 = vadd.f32 %v5301, %v5312
      %v5324 = vadd.f32 %v5302, %v5315
      %v5325 = vadd.f32 %v5217, %v5273
      %v5326 = vadd.f32 %v5218, %v5274
      %v5327 = vadd.f32 %v5219, %v5275
      %v5328 = vadd.f32 %v5220, %v5276
      %v5329 = vadd.f32 %v5221, %v5321
      %v5330 = vadd.f32 %v5222, %v5322
      %v5331 = vadd.f32 %v5223, %v5323
      %v5332 = vadd.f32 %v5224, %v5324
      %v5333 = vmax.f32 %v5325, %v5329
      %v5334 = vmax.f32 %v5326, %v5330
      %v5335 = vmax.f32 %v5327, %v5331
      %v5336 = vmax.f32 %v5328, %v5332
      %v5337 = vmul.f32 %v79, %v5119
      %v5338 = vmul.f32 %v79, %v5120
      %v5339 = vmul.f32 %v79, %v5121
      %v5340 = vmul.f32 %v79, %v5122
      %v5341 = vmul.f32 %v84, %v5123
      %v5342 = vmul.f32 %v84, %v5124
      %v5343 = vmul.f32 %v84, %v5125
      %v5344 = vmul.f32 %v84, %v5126
      %v5345 = vadd.f32 %v5337, %v5341
      %v5346 = vadd.f32 %v5338, %v5342
      %v5347 = vadd.f32 %v5339, %v5343
      %v5348 = vadd.f32 %v5340, %v5344
      %v5349 = vmul.f32 %v93, %v5127
      %v5350 = vmul.f32 %v93, %v5128
      %v5351 = vmul.f32 %v93, %v5129
      %v5352 = vmul.f32 %v93, %v5130
      %v5357 = vrot.slane %v5349, 1
      %v5358 = vrot.slane %v5351, 1
      %v5359 = vsel %vm102, %v5357, %v5358
      %v5360 = vrot.slane %v5350, 1
      %v5361 = vrot.slane %v5352, 1
      %v5362 = vsel %vm102, %v5360, %v5361
      %v5367 = vadd.f32 %v5345, %v5359
      %v5368 = vadd.f32 %v5346, %v5362
      %v5369 = vadd.f32 %v5347, %v5358
      %v5370 = vadd.f32 %v5348, %v5361
      %v5371 = vmul.f32 %v79, %v5123
      %v5372 = vmul.f32 %v79, %v5124
      %v5373 = vmul.f32 %v79, %v5125
      %v5374 = vmul.f32 %v79, %v5126
      %v5375 = vmul.f32 %v84, %v5127
      %v5376 = vmul.f32 %v84, %v5128
      %v5377 = vmul.f32 %v84, %v5129
      %v5378 = vmul.f32 %v84, %v5130
      %v5383 = vrot.slane %v5375, 1
      %v5384 = vrot.slane %v5377, 1
      %v5385 = vsel %vm102, %v5383, %v5384
      %v5386 = vrot.slane %v5376, 1
      %v5387 = vrot.slane %v5378, 1
      %v5388 = vsel %vm102, %v5386, %v5387
      %v5393 = vadd.f32 %v5371, %v5385
      %v5394 = vadd.f32 %v5372, %v5388
      %v5395 = vadd.f32 %v5373, %v5384
      %v5396 = vadd.f32 %v5374, %v5387
      %v5397 = vmul.f32 %v93, %v5131
      %v5398 = vmul.f32 %v93, %v5132
      %v5399 = vmul.f32 %v93, %v5133
      %v5400 = vmul.f32 %v93, %v5134
      %v5405 = vrot.slane %v5397, 1
      %v5406 = vrot.slane %v5399, 1
      %v5407 = vsel %vm102, %v5405, %v5406
      %v5408 = vrot.slane %v5398, 1
      %v5409 = vrot.slane %v5400, 1
      %v5410 = vsel %vm102, %v5408, %v5409
      %v5415 = vadd.f32 %v5393, %v5407
      %v5416 = vadd.f32 %v5394, %v5410
      %v5417 = vadd.f32 %v5395, %v5406
      %v5418 = vadd.f32 %v5396, %v5409
      %v5419 = vmul.f32 %v183, %v5226
      %v5420 = vmul.f32 %v183, %v5227
      %v5421 = vmul.f32 %v183, %v5228
      %v5422 = vmul.f32 %v183, %v5229
      %v5423 = vmul.f32 %v188, %v5231
      %v5424 = vmul.f32 %v188, %v5232
      %v5425 = vmul.f32 %v188, %v5233
      %v5426 = vmul.f32 %v188, %v5234
      %v5427 = vadd.f32 %v5419, %v5423
      %v5428 = vadd.f32 %v5420, %v5424
      %v5429 = vadd.f32 %v5421, %v5425
      %v5430 = vadd.f32 %v5422, %v5426
      %v5431 = vmul.f32 %v197, %v5235
      %v5432 = vmul.f32 %v197, %v5236
      %v5433 = vmul.f32 %v197, %v5237
      %v5434 = vmul.f32 %v197, %v5238
      %v5439 = vrot.slane %v5431, 1
      %v5440 = vrot.slane %v5433, 1
      %v5441 = vsel %vm102, %v5439, %v5440
      %v5442 = vrot.slane %v5432, 1
      %v5443 = vrot.slane %v5434, 1
      %v5444 = vsel %vm102, %v5442, %v5443
      %v5449 = vadd.f32 %v5427, %v5441
      %v5450 = vadd.f32 %v5428, %v5444
      %v5451 = vadd.f32 %v5429, %v5440
      %v5452 = vadd.f32 %v5430, %v5443
      %v5453 = vmul.f32 %v183, %v5231
      %v5454 = vmul.f32 %v183, %v5232
      %v5455 = vmul.f32 %v183, %v5233
      %v5456 = vmul.f32 %v183, %v5234
      %v5457 = vmul.f32 %v188, %v5235
      %v5458 = vmul.f32 %v188, %v5236
      %v5459 = vmul.f32 %v188, %v5237
      %v5460 = vmul.f32 %v188, %v5238
      %v5465 = vrot.slane %v5457, 1
      %v5466 = vrot.slane %v5459, 1
      %v5467 = vsel %vm102, %v5465, %v5466
      %v5468 = vrot.slane %v5458, 1
      %v5469 = vrot.slane %v5460, 1
      %v5470 = vsel %vm102, %v5468, %v5469
      %v5475 = vadd.f32 %v5453, %v5467
      %v5476 = vadd.f32 %v5454, %v5470
      %v5477 = vadd.f32 %v5455, %v5466
      %v5478 = vadd.f32 %v5456, %v5469
      %v5479 = vmul.f32 %v197, %v5239
      %v5480 = vmul.f32 %v197, %v5240
      %v5481 = vmul.f32 %v197, %v5241
      %v5482 = vmul.f32 %v197, %v5242
      %v5487 = vrot.slane %v5479, 1
      %v5488 = vrot.slane %v5481, 1
      %v5489 = vsel %vm102, %v5487, %v5488
      %v5490 = vrot.slane %v5480, 1
      %v5491 = vrot.slane %v5482, 1
      %v5492 = vsel %vm102, %v5490, %v5491
      %v5497 = vadd.f32 %v5475, %v5489
      %v5498 = vadd.f32 %v5476, %v5492
      %v5499 = vadd.f32 %v5477, %v5488
      %v5500 = vadd.f32 %v5478, %v5491
      %v5501 = vadd.f32 %v5367, %v5449
      %v5502 = vadd.f32 %v5368, %v5450
      %v5503 = vadd.f32 %v5369, %v5451
      %v5504 = vadd.f32 %v5370, %v5452
      %v5505 = vadd.f32 %v5415, %v5497
      %v5506 = vadd.f32 %v5416, %v5498
      %v5507 = vadd.f32 %v5417, %v5499
      %v5508 = vadd.f32 %v5418, %v5500
      %s5509 = scalar_lea.vmem %s0, 608
      %v5510 = vld [vmem:[%s5509] sm:$0xff]
      %v5511 = vld [vmem:[%s5509 + $0x8] sm:$0xff]
      %v5512 = vld [vmem:[%s5509 + $0x10] sm:$0x1f]
      %v5513 = vld [vmem:[%s5509 + $0x18] sm:$0x1f]
      %s5514 = scalar_lea.vmem %s1, 608
      %v5515 = vld [vmem:[%s5514] sm:$0xff]
      %v5516 = vld [vmem:[%s5514 + $0x8] sm:$0xff]
      %v5517 = vld [vmem:[%s5514 + $0x10] sm:$0x1f]
      %v5518 = vld [vmem:[%s5514 + $0x18] sm:$0x1f]
      %v5519 = vld [vmem:[%s5509] sm:$0xfe]
      %v5520 = vld [vmem:[%s5509 + $0x8] sm:$0xfe]
      %v5521 = vld [vmem:[%s5509 + $0x10] sm:$0x3f]
      %v5522 = vld [vmem:[%s5509 + $0x18] sm:$0x3f]
      %v5523 = vld [vmem:[%s5514] sm:$0xfe]
      %v5524 = vld [vmem:[%s5514 + $0x8] sm:$0xfe]
      %v5525 = vld [vmem:[%s5514 + $0x10] sm:$0x3f]
      %v5526 = vld [vmem:[%s5514 + $0x18] sm:$0x3f]
      %v5527 = vmul.f32 %v294, %v5510
      %v5528 = vmul.f32 %v294, %v5511
      %v5529 = vmul.f32 %v294, %v5512
      %v5530 = vmul.f32 %v294, %v5513
      %v5531 = vmul.f32 %v299, %v5515
      %v5532 = vmul.f32 %v299, %v5516
      %v5533 = vmul.f32 %v299, %v5517
      %v5534 = vmul.f32 %v299, %v5518
      %v5535 = vadd.f32 %v5527, %v5531
      %v5536 = vadd.f32 %v5528, %v5532
      %v5537 = vadd.f32 %v5529, %v5533
      %v5538 = vadd.f32 %v5530, %v5534
      %v5539 = vmul.f32 %v308, %v5519
      %v5540 = vmul.f32 %v308, %v5520
      %v5541 = vmul.f32 %v308, %v5521
      %v5542 = vmul.f32 %v308, %v5522
      %v5547 = vrot.slane %v5539, 1
      %v5548 = vrot.slane %v5541, 1
      %v5549 = vsel %vm102, %v5547, %v5548
      %v5550 = vrot.slane %v5540, 1
      %v5551 = vrot.slane %v5542, 1
      %v5552 = vsel %vm102, %v5550, %v5551
      %v5557 = vadd.f32 %v5535, %v5549
      %v5558 = vadd.f32 %v5536, %v5552
      %v5559 = vadd.f32 %v5537, %v5548
      %v5560 = vadd.f32 %v5538, %v5551
      %v5561 = vmul.f32 %v294, %v5515
      %v5562 = vmul.f32 %v294, %v5516
      %v5563 = vmul.f32 %v294, %v5517
      %v5564 = vmul.f32 %v294, %v5518
      %v5565 = vmul.f32 %v299, %v5519
      %v5566 = vmul.f32 %v299, %v5520
      %v5567 = vmul.f32 %v299, %v5521
      %v5568 = vmul.f32 %v299, %v5522
      %v5573 = vrot.slane %v5565, 1
      %v5574 = vrot.slane %v5567, 1
      %v5575 = vsel %vm102, %v5573, %v5574
      %v5576 = vrot.slane %v5566, 1
      %v5577 = vrot.slane %v5568, 1
      %v5578 = vsel %vm102, %v5576, %v5577
      %v5583 = vadd.f32 %v5561, %v5575
      %v5584 = vadd.f32 %v5562, %v5578
      %v5585 = vadd.f32 %v5563, %v5574
      %v5586 = vadd.f32 %v5564, %v5577
      %v5587 = vmul.f32 %v308, %v5523
      %v5588 = vmul.f32 %v308, %v5524
      %v5589 = vmul.f32 %v308, %v5525
      %v5590 = vmul.f32 %v308, %v5526
      %v5595 = vrot.slane %v5587, 1
      %v5596 = vrot.slane %v5589, 1
      %v5597 = vsel %vm102, %v5595, %v5596
      %v5598 = vrot.slane %v5588, 1
      %v5599 = vrot.slane %v5590, 1
      %v5600 = vsel %vm102, %v5598, %v5599
      %v5605 = vadd.f32 %v5583, %v5597
      %v5606 = vadd.f32 %v5584, %v5600
      %v5607 = vadd.f32 %v5585, %v5596
      %v5608 = vadd.f32 %v5586, %v5599
      %v5609 = vadd.f32 %v5501, %v5557
      %v5610 = vadd.f32 %v5502, %v5558
      %v5611 = vadd.f32 %v5503, %v5559
      %v5612 = vadd.f32 %v5504, %v5560
      %v5613 = vadd.f32 %v5505, %v5605
      %v5614 = vadd.f32 %v5506, %v5606
      %v5615 = vadd.f32 %v5507, %v5607
      %v5616 = vadd.f32 %v5508, %v5608
      %v5617 = vmax.f32 %v5609, %v5613
      %v5618 = vmax.f32 %v5610, %v5614
      %v5619 = vmax.f32 %v5611, %v5615
      %v5620 = vmax.f32 %v5612, %v5616
      %v5621 = vmax.f32 %v5333, %v5617
      %v5622 = vmax.f32 %v5334, %v5618
      %v5623 = vmax.f32 %v5335, %v5619
      %v5624 = vmax.f32 %v5336, %v5620
      %v5625 = vadd.f32 %v5621, %v679
      %v5626 = vadd.f32 %v5622, %v679
      %v5627 = vadd.f32 %v5623, %v679
      %v5628 = vadd.f32 %v5624, %v679
      %v5629 = vmax.f32 %v5625, 0.0
      %v5630 = vmax.f32 %v5626, 0.0
      %v5631 = vmax.f32 %v5627, 0.0
      %v5632 = vmax.f32 %v5628, 0.0
      %v5633 = vsel %vm688, %v5631, 0.0
      %v5634 = vsel %vm688, %v5632, 0.0
      %5635 = vst [vmem:[#allocation2 + $0x100] sm:$0xff] %v5629
      %5636 = vst [vmem:[#allocation2 + $0x108] sm:$0xff] %v5630
      %5637 = vst [vmem:[#allocation2 + $0x110] sm:$0xff] %v5633
      %5638 = vst [vmem:[#allocation2 + $0x118] sm:$0xff] %v5634
      %v5639 = vld [vmem:[%s5225] sm:$0xff]
      %v5640 = vld [vmem:[%s5225 + $0x8] sm:$0xff]
      %v5641 = vld [vmem:[%s5225 + $0x10] sm:$0x1f]
      %v5642 = vld [vmem:[%s5225 + $0x18] sm:$0x1f]
      %v5643 = vld [vmem:[%s5230] sm:$0xff]
      %v5644 = vld [vmem:[%s5230 + $0x8] sm:$0xff]
      %v5645 = vld [vmem:[%s5230 + $0x10] sm:$0x1f]
      %v5646 = vld [vmem:[%s5230 + $0x18] sm:$0x1f]
      %v5647 = vld [vmem:[%s5225] sm:$0xfe]
      %v5648 = vld [vmem:[%s5225 + $0x8] sm:$0xfe]
      %v5649 = vld [vmem:[%s5225 + $0x10] sm:$0x3f]
      %v5650 = vld [vmem:[%s5225 + $0x18] sm:$0x3f]
      %v5651 = vld [vmem:[%s5230] sm:$0xfe]
      %v5652 = vld [vmem:[%s5230 + $0x8] sm:$0xfe]
      %v5653 = vld [vmem:[%s5230 + $0x10] sm:$0x3f]
      %v5654 = vld [vmem:[%s5230 + $0x18] sm:$0x3f]
      %v5655 = vmul.f32 %v79, %v5639
      %v5656 = vmul.f32 %v79, %v5640
      %v5657 = vmul.f32 %v79, %v5641
      %v5658 = vmul.f32 %v79, %v5642
      %v5659 = vmul.f32 %v84, %v5643
      %v5660 = vmul.f32 %v84, %v5644
      %v5661 = vmul.f32 %v84, %v5645
      %v5662 = vmul.f32 %v84, %v5646
      %v5663 = vadd.f32 %v5655, %v5659
      %v5664 = vadd.f32 %v5656, %v5660
      %v5665 = vadd.f32 %v5657, %v5661
      %v5666 = vadd.f32 %v5658, %v5662
      %v5667 = vmul.f32 %v93, %v5647
      %v5668 = vmul.f32 %v93, %v5648
      %v5669 = vmul.f32 %v93, %v5649
      %v5670 = vmul.f32 %v93, %v5650
      %v5675 = vrot.slane %v5667, 1
      %v5676 = vrot.slane %v5669, 1
      %v5677 = vsel %vm102, %v5675, %v5676
      %v5678 = vrot.slane %v5668, 1
      %v5679 = vrot.slane %v5670, 1
      %v5680 = vsel %vm102, %v5678, %v5679
      %v5685 = vadd.f32 %v5663, %v5677
      %v5686 = vadd.f32 %v5664, %v5680
      %v5687 = vadd.f32 %v5665, %v5676
      %v5688 = vadd.f32 %v5666, %v5679
      %v5689 = vmul.f32 %v79, %v5643
      %v5690 = vmul.f32 %v79, %v5644
      %v5691 = vmul.f32 %v79, %v5645
      %v5692 = vmul.f32 %v79, %v5646
      %v5693 = vmul.f32 %v84, %v5647
      %v5694 = vmul.f32 %v84, %v5648
      %v5695 = vmul.f32 %v84, %v5649
      %v5696 = vmul.f32 %v84, %v5650
      %v5701 = vrot.slane %v5693, 1
      %v5702 = vrot.slane %v5695, 1
      %v5703 = vsel %vm102, %v5701, %v5702
      %v5704 = vrot.slane %v5694, 1
      %v5705 = vrot.slane %v5696, 1
      %v5706 = vsel %vm102, %v5704, %v5705
      %v5711 = vadd.f32 %v5689, %v5703
      %v5712 = vadd.f32 %v5690, %v5706
      %v5713 = vadd.f32 %v5691, %v5702
      %v5714 = vadd.f32 %v5692, %v5705
      %v5715 = vmul.f32 %v93, %v5651
      %v5716 = vmul.f32 %v93, %v5652
      %v5717 = vmul.f32 %v93, %v5653
      %v5718 = vmul.f32 %v93, %v5654
      %v5723 = vrot.slane %v5715, 1
      %v5724 = vrot.slane %v5717, 1
      %v5725 = vsel %vm102, %v5723, %v5724
      %v5726 = vrot.slane %v5716, 1
      %v5727 = vrot.slane %v5718, 1
      %v5728 = vsel %vm102, %v5726, %v5727
      %v5733 = vadd.f32 %v5711, %v5725
      %v5734 = vadd.f32 %v5712, %v5728
      %v5735 = vadd.f32 %v5713, %v5724
      %v5736 = vadd.f32 %v5714, %v5727
      %v5737 = vld [vmem:[%s5509] sm:$0xff]
      %v5738 = vld [vmem:[%s5509 + $0x8] sm:$0xff]
      %v5739 = vld [vmem:[%s5509 + $0x10] sm:$0x1f]
      %v5740 = vld [vmem:[%s5509 + $0x18] sm:$0x1f]
      %v5741 = vld [vmem:[%s5514] sm:$0xff]
      %v5742 = vld [vmem:[%s5514 + $0x8] sm:$0xff]
      %v5743 = vld [vmem:[%s5514 + $0x10] sm:$0x1f]
      %v5744 = vld [vmem:[%s5514 + $0x18] sm:$0x1f]
      %v5745 = vld [vmem:[%s5509] sm:$0xfe]
      %v5746 = vld [vmem:[%s5509 + $0x8] sm:$0xfe]
      %v5747 = vld [vmem:[%s5509 + $0x10] sm:$0x3f]
      %v5748 = vld [vmem:[%s5509 + $0x18] sm:$0x3f]
      %v5749 = vld [vmem:[%s5514] sm:$0xfe]
      %v5750 = vld [vmem:[%s5514 + $0x8] sm:$0xfe]
      %v5751 = vld [vmem:[%s5514 + $0x10] sm:$0x3f]
      %v5752 = vld [vmem:[%s5514 + $0x18] sm:$0x3f]
      %v5753 = vmul.f32 %v183, %v5737
      %v5754 = vmul.f32 %v183, %v5738
      %v5755 = vmul.f32 %v183, %v5739
      %v5756 = vmul.f32 %v183, %v5740
      %v5757 = vmul.f32 %v188, %v5741
      %v5758 = vmul.f32 %v188, %v5742
      %v5759 = vmul.f32 %v188, %v5743
      %v5760 = vmul.f32 %v188, %v5744
      %v5761 = vadd.f32 %v5753, %v5757
      %v5762 = vadd.f32 %v5754, %v5758
      %v5763 = vadd.f32 %v5755, %v5759
      %v5764 = vadd.f32 %v5756, %v5760
      %v5765 = vmul.f32 %v197, %v5745
      %v5766 = vmul.f32 %v197, %v5746
      %v5767 = vmul.f32 %v197, %v5747
      %v5768 = vmul.f32 %v197, %v5748
      %v5773 = vrot.slane %v5765, 1
      %v5774 = vrot.slane %v5767, 1
      %v5775 = vsel %vm102, %v5773, %v5774
      %v5776 = vrot.slane %v5766, 1
      %v5777 = vrot.slane %v5768, 1
      %v5778 = vsel %vm102, %v5776, %v5777
      %v5783 = vadd.f32 %v5761, %v5775
      %v5784 = vadd.f32 %v5762, %v5778
      %v5785 = vadd.f32 %v5763, %v5774
      %v5786 = vadd.f32 %v5764, %v5777
      %v5787 = vmul.f32 %v183, %v5741
      %v5788 = vmul.f32 %v183, %v5742
      %v5789 = vmul.f32 %v183, %v5743
      %v5790 = vmul.f32 %v183, %v5744
      %v5791 = vmul.f32 %v188, %v5745
      %v5792 = vmul.f32 %v188, %v5746
      %v5793 = vmul.f32 %v188, %v5747
      %v5794 = vmul.f32 %v188, %v5748
      %v5799 = vrot.slane %v5791, 1
      %v5800 = vrot.slane %v5793, 1
      %v5801 = vsel %vm102, %v5799, %v5800
      %v5802 = vrot.slane %v5792, 1
      %v5803 = vrot.slane %v5794, 1
      %v5804 = vsel %vm102, %v5802, %v5803
      %v5809 = vadd.f32 %v5787, %v5801
      %v5810 = vadd.f32 %v5788, %v5804
      %v5811 = vadd.f32 %v5789, %v5800
      %v5812 = vadd.f32 %v5790, %v5803
      %v5813 = vmul.f32 %v197, %v5749
      %v5814 = vmul.f32 %v197, %v5750
      %v5815 = vmul.f32 %v197, %v5751
      %v5816 = vmul.f32 %v197, %v5752
      %v5821 = vrot.slane %v5813, 1
      %v5822 = vrot.slane %v5815, 1
      %v5823 = vsel %vm102, %v5821, %v5822
      %v5824 = vrot.slane %v5814, 1
      %v5825 = vrot.slane %v5816, 1
      %v5826 = vsel %vm102, %v5824, %v5825
      %v5831 = vadd.f32 %v5809, %v5823
      %v5832 = vadd.f32 %v5810, %v5826
      %v5833 = vadd.f32 %v5811, %v5822
      %v5834 = vadd.f32 %v5812, %v5825
      %v5835 = vadd.f32 %v5685, %v5783
      %v5836 = vadd.f32 %v5686, %v5784
      %v5837 = vadd.f32 %v5687, %v5785
      %v5838 = vadd.f32 %v5688, %v5786
      %v5839 = vadd.f32 %v5733, %v5831
      %v5840 = vadd.f32 %v5734, %v5832
      %v5841 = vadd.f32 %v5735, %v5833
      %v5842 = vadd.f32 %v5736, %v5834
      %s5843 = scalar_lea.vmem %s0, 640
      %v5844 = vld [vmem:[%s5843] sm:$0xff]
      %v5845 = vld [vmem:[%s5843 + $0x8] sm:$0xff]
      %v5846 = vld [vmem:[%s5843 + $0x10] sm:$0x1f]
      %v5847 = vld [vmem:[%s5843 + $0x18] sm:$0x1f]
      %s5848 = scalar_lea.vmem %s1, 640
      %v5849 = vld [vmem:[%s5848] sm:$0xff]
      %v5850 = vld [vmem:[%s5848 + $0x8] sm:$0xff]
      %v5851 = vld [vmem:[%s5848 + $0x10] sm:$0x1f]
      %v5852 = vld [vmem:[%s5848 + $0x18] sm:$0x1f]
      %v5853 = vld [vmem:[%s5843] sm:$0xfe]
      %v5854 = vld [vmem:[%s5843 + $0x8] sm:$0xfe]
      %v5855 = vld [vmem:[%s5843 + $0x10] sm:$0x3f]
      %v5856 = vld [vmem:[%s5843 + $0x18] sm:$0x3f]
      %v5857 = vld [vmem:[%s5848] sm:$0xfe]
      %v5858 = vld [vmem:[%s5848 + $0x8] sm:$0xfe]
      %v5859 = vld [vmem:[%s5848 + $0x10] sm:$0x3f]
      %v5860 = vld [vmem:[%s5848 + $0x18] sm:$0x3f]
      %v5861 = vmul.f32 %v294, %v5844
      %v5862 = vmul.f32 %v294, %v5845
      %v5863 = vmul.f32 %v294, %v5846
      %v5864 = vmul.f32 %v294, %v5847
      %v5865 = vmul.f32 %v299, %v5849
      %v5866 = vmul.f32 %v299, %v5850
      %v5867 = vmul.f32 %v299, %v5851
      %v5868 = vmul.f32 %v299, %v5852
      %v5869 = vadd.f32 %v5861, %v5865
      %v5870 = vadd.f32 %v5862, %v5866
      %v5871 = vadd.f32 %v5863, %v5867
      %v5872 = vadd.f32 %v5864, %v5868
      %v5873 = vmul.f32 %v308, %v5853
      %v5874 = vmul.f32 %v308, %v5854
      %v5875 = vmul.f32 %v308, %v5855
      %v5876 = vmul.f32 %v308, %v5856
      %v5881 = vrot.slane %v5873, 1
      %v5882 = vrot.slane %v5875, 1
      %v5883 = vsel %vm102, %v5881, %v5882
      %v5884 = vrot.slane %v5874, 1
      %v5885 = vrot.slane %v5876, 1
      %v5886 = vsel %vm102, %v5884, %v5885
      %v5891 = vadd.f32 %v5869, %v5883
      %v5892 = vadd.f32 %v5870, %v5886
      %v5893 = vadd.f32 %v5871, %v5882
      %v5894 = vadd.f32 %v5872, %v5885
      %v5895 = vmul.f32 %v294, %v5849
      %v5896 = vmul.f32 %v294, %v5850
      %v5897 = vmul.f32 %v294, %v5851
      %v5898 = vmul.f32 %v294, %v5852
      %v5899 = vmul.f32 %v299, %v5853
      %v5900 = vmul.f32 %v299, %v5854
      %v5901 = vmul.f32 %v299, %v5855
      %v5902 = vmul.f32 %v299, %v5856
      %v5907 = vrot.slane %v5899, 1
      %v5908 = vrot.slane %v5901, 1
      %v5909 = vsel %vm102, %v5907, %v5908
      %v5910 = vrot.slane %v5900, 1
      %v5911 = vrot.slane %v5902, 1
      %v5912 = vsel %vm102, %v5910, %v5911
      %v5917 = vadd.f32 %v5895, %v5909
      %v5918 = vadd.f32 %v5896, %v5912
      %v5919 = vadd.f32 %v5897, %v5908
      %v5920 = vadd.f32 %v5898, %v5911
      %v5921 = vmul.f32 %v308, %v5857
      %v5922 = vmul.f32 %v308, %v5858
      %v5923 = vmul.f32 %v308, %v5859
      %v5924 = vmul.f32 %v308, %v5860
      %v5929 = vrot.slane %v5921, 1
      %v5930 = vrot.slane %v5923, 1
      %v5931 = vsel %vm102, %v5929, %v5930
      %v5932 = vrot.slane %v5922, 1
      %v5933 = vrot.slane %v5924, 1
      %v5934 = vsel %vm102, %v5932, %v5933
      %v5939 = vadd.f32 %v5917, %v5931
      %v5940 = vadd.f32 %v5918, %v5934
      %v5941 = vadd.f32 %v5919, %v5930
      %v5942 = vadd.f32 %v5920, %v5933
      %v5943 = vadd.f32 %v5835, %v5891
      %v5944 = vadd.f32 %v5836, %v5892
      %v5945 = vadd.f32 %v5837, %v5893
      %v5946 = vadd.f32 %v5838, %v5894
      %v5947 = vadd.f32 %v5839, %v5939
      %v5948 = vadd.f32 %v5840, %v5940
      %v5949 = vadd.f32 %v5841, %v5941
      %v5950 = vadd.f32 %v5842, %v5942
      %v5951 = vmax.f32 %v5943, %v5947
      %v5952 = vmax.f32 %v5944, %v5948
      %v5953 = vmax.f32 %v5945, %v5949
      %v5954 = vmax.f32 %v5946, %v5950
      %v5955 = vmul.f32 %v79, %v5737
      %v5956 = vmul.f32 %v79, %v5738
      %v5957 = vmul.f32 %v79, %v5739
      %v5958 = vmul.f32 %v79, %v5740
      %v5959 = vmul.f32 %v84, %v5741
      %v5960 = vmul.f32 %v84, %v5742
      %v5961 = vmul.f32 %v84, %v5743
      %v5962 = vmul.f32 %v84, %v5744
      %v5963 = vadd.f32 %v5955, %v5959
      %v5964 = vadd.f32 %v5956, %v5960
      %v5965 = vadd.f32 %v5957, %v5961
      %v5966 = vadd.f32 %v5958, %v5962
      %v5967 = vmul.f32 %v93, %v5745
      %v5968 = vmul.f32 %v93, %v5746
      %v5969 = vmul.f32 %v93, %v5747
      %v5970 = vmul.f32 %v93, %v5748
      %v5975 = vrot.slane %v5967, 1
      %v5976 = vrot.slane %v5969, 1
      %v5977 = vsel %vm102, %v5975, %v5976
      %v5978 = vrot.slane %v5968, 1
      %v5979 = vrot.slane %v5970, 1
      %v5980 = vsel %vm102, %v5978, %v5979
      %v5985 = vadd.f32 %v5963, %v5977
      %v5986 = vadd.f32 %v5964, %v5980
      %v5987 = vadd.f32 %v5965, %v5976
      %v5988 = vadd.f32 %v5966, %v5979
      %v5989 = vmul.f32 %v79, %v5741
      %v5990 = vmul.f32 %v79, %v5742
      %v5991 = vmul.f32 %v79, %v5743
      %v5992 = vmul.f32 %v79, %v5744
      %v5993 = vmul.f32 %v84, %v5745
      %v5994 = vmul.f32 %v84, %v5746
      %v5995 = vmul.f32 %v84, %v5747
      %v5996 = vmul.f32 %v84, %v5748
      %v6001 = vrot.slane %v5993, 1
      %v6002 = vrot.slane %v5995, 1
      %v6003 = vsel %vm102, %v6001, %v6002
      %v6004 = vrot.slane %v5994, 1
      %v6005 = vrot.slane %v5996, 1
      %v6006 = vsel %vm102, %v6004, %v6005
      %v6011 = vadd.f32 %v5989, %v6003
      %v6012 = vadd.f32 %v5990, %v6006
      %v6013 = vadd.f32 %v5991, %v6002
      %v6014 = vadd.f32 %v5992, %v6005
      %v6015 = vmul.f32 %v93, %v5749
      %v6016 = vmul.f32 %v93, %v5750
      %v6017 = vmul.f32 %v93, %v5751
      %v6018 = vmul.f32 %v93, %v5752
      %v6023 = vrot.slane %v6015, 1
      %v6024 = vrot.slane %v6017, 1
      %v6025 = vsel %vm102, %v6023, %v6024
      %v6026 = vrot.slane %v6016, 1
      %v6027 = vrot.slane %v6018, 1
      %v6028 = vsel %vm102, %v6026, %v6027
      %v6033 = vadd.f32 %v6011, %v6025
      %v6034 = vadd.f32 %v6012, %v6028
      %v6035 = vadd.f32 %v6013, %v6024
      %v6036 = vadd.f32 %v6014, %v6027
      %v6037 = vmul.f32 %v183, %v5844
      %v6038 = vmul.f32 %v183, %v5845
      %v6039 = vmul.f32 %v183, %v5846
      %v6040 = vmul.f32 %v183, %v5847
      %v6041 = vmul.f32 %v188, %v5849
      %v6042 = vmul.f32 %v188, %v5850
      %v6043 = vmul.f32 %v188, %v5851
      %v6044 = vmul.f32 %v188, %v5852
      %v6045 = vadd.f32 %v6037, %v6041
      %v6046 = vadd.f32 %v6038, %v6042
      %v6047 = vadd.f32 %v6039, %v6043
      %v6048 = vadd.f32 %v6040, %v6044
      %v6049 = vmul.f32 %v197, %v5853
      %v6050 = vmul.f32 %v197, %v5854
      %v6051 = vmul.f32 %v197, %v5855
      %v6052 = vmul.f32 %v197, %v5856
      %v6057 = vrot.slane %v6049, 1
      %v6058 = vrot.slane %v6051, 1
      %v6059 = vsel %vm102, %v6057, %v6058
      %v6060 = vrot.slane %v6050, 1
      %v6061 = vrot.slane %v6052, 1
      %v6062 = vsel %vm102, %v6060, %v6061
      %v6067 = vadd.f32 %v6045, %v6059
      %v6068 = vadd.f32 %v6046, %v6062
      %v6069 = vadd.f32 %v6047, %v6058
      %v6070 = vadd.f32 %v6048, %v6061
      %v6071 = vmul.f32 %v183, %v5849
      %v6072 = vmul.f32 %v183, %v5850
      %v6073 = vmul.f32 %v183, %v5851
      %v6074 = vmul.f32 %v183, %v5852
      %v6075 = vmul.f32 %v188, %v5853
      %v6076 = vmul.f32 %v188, %v5854
      %v6077 = vmul.f32 %v188, %v5855
      %v6078 = vmul.f32 %v188, %v5856
      %v6083 = vrot.slane %v6075, 1
      %v6084 = vrot.slane %v6077, 1
      %v6085 = vsel %vm102, %v6083, %v6084
      %v6086 = vrot.slane %v6076, 1
      %v6087 = vrot.slane %v6078, 1
      %v6088 = vsel %vm102, %v6086, %v6087
      %v6093 = vadd.f32 %v6071, %v6085
      %v6094 = vadd.f32 %v6072, %v6088
      %v6095 = vadd.f32 %v6073, %v6084
      %v6096 = vadd.f32 %v6074, %v6087
      %v6097 = vmul.f32 %v197, %v5857
      %v6098 = vmul.f32 %v197, %v5858
      %v6099 = vmul.f32 %v197, %v5859
      %v6100 = vmul.f32 %v197, %v5860
      %v6105 = vrot.slane %v6097, 1
      %v6106 = vrot.slane %v6099, 1
      %v6107 = vsel %vm102, %v6105, %v6106
      %v6108 = vrot.slane %v6098, 1
      %v6109 = vrot.slane %v6100, 1
      %v6110 = vsel %vm102, %v6108, %v6109
      %v6115 = vadd.f32 %v6093, %v6107
      %v6116 = vadd.f32 %v6094, %v6110
      %v6117 = vadd.f32 %v6095, %v6106
      %v6118 = vadd.f32 %v6096, %v6109
      %v6119 = vadd.f32 %v5985, %v6067
      %v6120 = vadd.f32 %v5986, %v6068
      %v6121 = vadd.f32 %v5987, %v6069
      %v6122 = vadd.f32 %v5988, %v6070
      %v6123 = vadd.f32 %v6033, %v6115
      %v6124 = vadd.f32 %v6034, %v6116
      %v6125 = vadd.f32 %v6035, %v6117
      %v6126 = vadd.f32 %v6036, %v6118
      %s6127 = scalar_lea.vmem %s0, 672
      %v6128 = vld [vmem:[%s6127] sm:$0xff]
      %v6129 = vld [vmem:[%s6127 + $0x8] sm:$0xff]
      %v6130 = vld [vmem:[%s6127 + $0x10] sm:$0x1f]
      %v6131 = vld [vmem:[%s6127 + $0x18] sm:$0x1f]
      %s6132 = scalar_lea.vmem %s1, 672
      %v6133 = vld [vmem:[%s6132] sm:$0xff]
      %v6134 = vld [vmem:[%s6132 + $0x8] sm:$0xff]
      %v6135 = vld [vmem:[%s6132 + $0x10] sm:$0x1f]
      %v6136 = vld [vmem:[%s6132 + $0x18] sm:$0x1f]
      %v6137 = vld [vmem:[%s6127] sm:$0xfe]
      %v6138 = vld [vmem:[%s6127 + $0x8] sm:$0xfe]
      %v6139 = vld [vmem:[%s6127 + $0x10] sm:$0x3f]
      %v6140 = vld [vmem:[%s6127 + $0x18] sm:$0x3f]
      %v6141 = vld [vmem:[%s6132] sm:$0xfe]
      %v6142 = vld [vmem:[%s6132 + $0x8] sm:$0xfe]
      %v6143 = vld [vmem:[%s6132 + $0x10] sm:$0x3f]
      %v6144 = vld [vmem:[%s6132 + $0x18] sm:$0x3f]
      %v6145 = vmul.f32 %v294, %v6128
      %v6146 = vmul.f32 %v294, %v6129
      %v6147 = vmul.f32 %v294, %v6130
      %v6148 = vmul.f32 %v294, %v6131
      %v6149 = vmul.f32 %v299, %v6133
      %v6150 = vmul.f32 %v299, %v6134
      %v6151 = vmul.f32 %v299, %v6135
      %v6152 = vmul.f32 %v299, %v6136
      %v6153 = vadd.f32 %v6145, %v6149
      %v6154 = vadd.f32 %v6146, %v6150
      %v6155 = vadd.f32 %v6147, %v6151
      %v6156 = vadd.f32 %v6148, %v6152
      %v6157 = vmul.f32 %v308, %v6137
      %v6158 = vmul.f32 %v308, %v6138
      %v6159 = vmul.f32 %v308, %v6139
      %v6160 = vmul.f32 %v308, %v6140
      %v6165 = vrot.slane %v6157, 1
      %v6166 = vrot.slane %v6159, 1
      %v6167 = vsel %vm102, %v6165, %v6166
      %v6168 = vrot.slane %v6158, 1
      %v6169 = vrot.slane %v6160, 1
      %v6170 = vsel %vm102, %v6168, %v6169
      %v6175 = vadd.f32 %v6153, %v6167
      %v6176 = vadd.f32 %v6154, %v6170
      %v6177 = vadd.f32 %v6155, %v6166
      %v6178 = vadd.f32 %v6156, %v6169
      %v6179 = vmul.f32 %v294, %v6133
      %v6180 = vmul.f32 %v294, %v6134
      %v6181 = vmul.f32 %v294, %v6135
      %v6182 = vmul.f32 %v294, %v6136
      %v6183 = vmul.f32 %v299, %v6137
      %v6184 = vmul.f32 %v299, %v6138
      %v6185 = vmul.f32 %v299, %v6139
      %v6186 = vmul.f32 %v299, %v6140
      %v6191 = vrot.slane %v6183, 1
      %v6192 = vrot.slane %v6185, 1
      %v6193 = vsel %vm102, %v6191, %v6192
      %v6194 = vrot.slane %v6184, 1
      %v6195 = vrot.slane %v6186, 1
      %v6196 = vsel %vm102, %v6194, %v6195
      %v6201 = vadd.f32 %v6179, %v6193
      %v6202 = vadd.f32 %v6180, %v6196
      %v6203 = vadd.f32 %v6181, %v6192
      %v6204 = vadd.f32 %v6182, %v6195
      %v6205 = vmul.f32 %v308, %v6141
      %v6206 = vmul.f32 %v308, %v6142
      %v6207 = vmul.f32 %v308, %v6143
      %v6208 = vmul.f32 %v308, %v6144
      %v6213 = vrot.slane %v6205, 1
      %v6214 = vrot.slane %v6207, 1
      %v6215 = vsel %vm102, %v6213, %v6214
      %v6216 = vrot.slane %v6206, 1
      %v6217 = vrot.slane %v6208, 1
      %v6218 = vsel %vm102, %v6216, %v6217
      %v6223 = vadd.f32 %v6201, %v6215
      %v6224 = vadd.f32 %v6202, %v6218
      %v6225 = vadd.f32 %v6203, %v6214
      %v6226 = vadd.f32 %v6204, %v6217
      %v6227 = vadd.f32 %v6119, %v6175
      %v6228 = vadd.f32 %v6120, %v6176
      %v6229 = vadd.f32 %v6121, %v6177
      %v6230 = vadd.f32 %v6122, %v6178
      %v6231 = vadd.f32 %v6123, %v6223
      %v6232 = vadd.f32 %v6124, %v6224
      %v6233 = vadd.f32 %v6125, %v6225
      %v6234 = vadd.f32 %v6126, %v6226
      %v6235 = vmax.f32 %v6227, %v6231
      %v6236 = vmax.f32 %v6228, %v6232
      %v6237 = vmax.f32 %v6229, %v6233
      %v6238 = vmax.f32 %v6230, %v6234
      %v6239 = vmax.f32 %v5951, %v6235
      %v6240 = vmax.f32 %v5952, %v6236
      %v6241 = vmax.f32 %v5953, %v6237
      %v6242 = vmax.f32 %v5954, %v6238
      %v6243 = vadd.f32 %v6239, %v679
      %v6244 = vadd.f32 %v6240, %v679
      %v6245 = vadd.f32 %v6241, %v679
      %v6246 = vadd.f32 %v6242, %v679
      %v6247 = vmax.f32 %v6243, 0.0
      %v6248 = vmax.f32 %v6244, 0.0
      %v6249 = vmax.f32 %v6245, 0.0
      %v6250 = vmax.f32 %v6246, 0.0
      %v6251 = vsel %vm688, %v6249, 0.0
      %v6252 = vsel %vm688, %v6250, 0.0
      %6253 = vst [vmem:[#allocation2 + $0x120] sm:$0xff] %v6247
      %6254 = vst [vmem:[#allocation2 + $0x128] sm:$0xff] %v6248
      %6255 = vst [vmem:[#allocation2 + $0x130] sm:$0xff] %v6251
      %6256 = vst [vmem:[#allocation2 + $0x138] sm:$0xff] %v6252
      %v6257 = vld [vmem:[%s5843] sm:$0xff]
      %v6258 = vld [vmem:[%s5843 + $0x8] sm:$0xff]
      %v6259 = vld [vmem:[%s5843 + $0x10] sm:$0x1f]
      %v6260 = vld [vmem:[%s5843 + $0x18] sm:$0x1f]
      %v6261 = vld [vmem:[%s5848] sm:$0xff]
      %v6262 = vld [vmem:[%s5848 + $0x8] sm:$0xff]
      %v6263 = vld [vmem:[%s5848 + $0x10] sm:$0x1f]
      %v6264 = vld [vmem:[%s5848 + $0x18] sm:$0x1f]
      %v6265 = vld [vmem:[%s5843] sm:$0xfe]
      %v6266 = vld [vmem:[%s5843 + $0x8] sm:$0xfe]
      %v6267 = vld [vmem:[%s5843 + $0x10] sm:$0x3f]
      %v6268 = vld [vmem:[%s5843 + $0x18] sm:$0x3f]
      %v6269 = vld [vmem:[%s5848] sm:$0xfe]
      %v6270 = vld [vmem:[%s5848 + $0x8] sm:$0xfe]
      %v6271 = vld [vmem:[%s5848 + $0x10] sm:$0x3f]
      %v6272 = vld [vmem:[%s5848 + $0x18] sm:$0x3f]
      %v6273 = vmul.f32 %v79, %v6257
      %v6274 = vmul.f32 %v79, %v6258
      %v6275 = vmul.f32 %v79, %v6259
      %v6276 = vmul.f32 %v79, %v6260
      %v6277 = vmul.f32 %v84, %v6261
      %v6278 = vmul.f32 %v84, %v6262
      %v6279 = vmul.f32 %v84, %v6263
      %v6280 = vmul.f32 %v84, %v6264
      %v6281 = vadd.f32 %v6273, %v6277
      %v6282 = vadd.f32 %v6274, %v6278
      %v6283 = vadd.f32 %v6275, %v6279
      %v6284 = vadd.f32 %v6276, %v6280
      %v6285 = vmul.f32 %v93, %v6265
      %v6286 = vmul.f32 %v93, %v6266
      %v6287 = vmul.f32 %v93, %v6267
      %v6288 = vmul.f32 %v93, %v6268
      %v6293 = vrot.slane %v6285, 1
      %v6294 = vrot.slane %v6287, 1
      %v6295 = vsel %vm102, %v6293, %v6294
      %v6296 = vrot.slane %v6286, 1
      %v6297 = vrot.slane %v6288, 1
      %v6298 = vsel %vm102, %v6296, %v6297
      %v6303 = vadd.f32 %v6281, %v6295
      %v6304 = vadd.f32 %v6282, %v6298
      %v6305 = vadd.f32 %v6283, %v6294
      %v6306 = vadd.f32 %v6284, %v6297
      %v6307 = vmul.f32 %v79, %v6261
      %v6308 = vmul.f32 %v79, %v6262
      %v6309 = vmul.f32 %v79, %v6263
      %v6310 = vmul.f32 %v79, %v6264
      %v6311 = vmul.f32 %v84, %v6265
      %v6312 = vmul.f32 %v84, %v6266
      %v6313 = vmul.f32 %v84, %v6267
      %v6314 = vmul.f32 %v84, %v6268
      %v6319 = vrot.slane %v6311, 1
      %v6320 = vrot.slane %v6313, 1
      %v6321 = vsel %vm102, %v6319, %v6320
      %v6322 = vrot.slane %v6312, 1
      %v6323 = vrot.slane %v6314, 1
      %v6324 = vsel %vm102, %v6322, %v6323
      %v6329 = vadd.f32 %v6307, %v6321
      %v6330 = vadd.f32 %v6308, %v6324
      %v6331 = vadd.f32 %v6309, %v6320
      %v6332 = vadd.f32 %v6310, %v6323
      %v6333 = vmul.f32 %v93, %v6269
      %v6334 = vmul.f32 %v93, %v6270
      %v6335 = vmul.f32 %v93, %v6271
      %v6336 = vmul.f32 %v93, %v6272
      %v6341 = vrot.slane %v6333, 1
      %v6342 = vrot.slane %v6335, 1
      %v6343 = vsel %vm102, %v6341, %v6342
      %v6344 = vrot.slane %v6334, 1
      %v6345 = vrot.slane %v6336, 1
      %v6346 = vsel %vm102, %v6344, %v6345
      %v6351 = vadd.f32 %v6329, %v6343
      %v6352 = vadd.f32 %v6330, %v6346
      %v6353 = vadd.f32 %v6331, %v6342
      %v6354 = vadd.f32 %v6332, %v6345
      %v6355 = vld [vmem:[%s6127] sm:$0xff]
      %v6356 = vld [vmem:[%s6127 + $0x8] sm:$0xff]
      %v6357 = vld [vmem:[%s6127 + $0x10] sm:$0x1f]
      %v6358 = vld [vmem:[%s6127 + $0x18] sm:$0x1f]
      %v6359 = vld [vmem:[%s6132] sm:$0xff]
      %v6360 = vld [vmem:[%s6132 + $0x8] sm:$0xff]
      %v6361 = vld [vmem:[%s6132 + $0x10] sm:$0x1f]
      %v6362 = vld [vmem:[%s6132 + $0x18] sm:$0x1f]
      %v6363 = vld [vmem:[%s6127] sm:$0xfe]
      %v6364 = vld [vmem:[%s6127 + $0x8] sm:$0xfe]
      %v6365 = vld [vmem:[%s6127 + $0x10] sm:$0x3f]
      %v6366 = vld [vmem:[%s6127 + $0x18] sm:$0x3f]
      %v6367 = vld [vmem:[%s6132] sm:$0xfe]
      %v6368 = vld [vmem:[%s6132 + $0x8] sm:$0xfe]
      %v6369 = vld [vmem:[%s6132 + $0x10] sm:$0x3f]
      %v6370 = vld [vmem:[%s6132 + $0x18] sm:$0x3f]
      %v6371 = vmul.f32 %v183, %v6355
      %v6372 = vmul.f32 %v183, %v6356
      %v6373 = vmul.f32 %v183, %v6357
      %v6374 = vmul.f32 %v183, %v6358
      %v6375 = vmul.f32 %v188, %v6359
      %v6376 = vmul.f32 %v188, %v6360
      %v6377 = vmul.f32 %v188, %v6361
      %v6378 = vmul.f32 %v188, %v6362
      %v6379 = vadd.f32 %v6371, %v6375
      %v6380 = vadd.f32 %v6372, %v6376
      %v6381 = vadd.f32 %v6373, %v6377
      %v6382 = vadd.f32 %v6374, %v6378
      %v6383 = vmul.f32 %v197, %v6363
      %v6384 = vmul.f32 %v197, %v6364
      %v6385 = vmul.f32 %v197, %v6365
      %v6386 = vmul.f32 %v197, %v6366
      %v6391 = vrot.slane %v6383, 1
      %v6392 = vrot.slane %v6385, 1
      %v6393 = vsel %vm102, %v6391, %v6392
      %v6394 = vrot.slane %v6384, 1
      %v6395 = vrot.slane %v6386, 1
      %v6396 = vsel %vm102, %v6394, %v6395
      %v6401 = vadd.f32 %v6379, %v6393
      %v6402 = vadd.f32 %v6380, %v6396
      %v6403 = vadd.f32 %v6381, %v6392
      %v6404 = vadd.f32 %v6382, %v6395
      %v6405 = vmul.f32 %v183, %v6359
      %v6406 = vmul.f32 %v183, %v6360
      %v6407 = vmul.f32 %v183, %v6361
      %v6408 = vmul.f32 %v183, %v6362
      %v6409 = vmul.f32 %v188, %v6363
      %v6410 = vmul.f32 %v188, %v6364
      %v6411 = vmul.f32 %v188, %v6365
      %v6412 = vmul.f32 %v188, %v6366
      %v6417 = vrot.slane %v6409, 1
      %v6418 = vrot.slane %v6411, 1
      %v6419 = vsel %vm102, %v6417, %v6418
      %v6420 = vrot.slane %v6410, 1
      %v6421 = vrot.slane %v6412, 1
      %v6422 = vsel %vm102, %v6420, %v6421
      %v6427 = vadd.f32 %v6405, %v6419
      %v6428 = vadd.f32 %v6406, %v6422
      %v6429 = vadd.f32 %v6407, %v6418
      %v6430 = vadd.f32 %v6408, %v6421
      %v6431 = vmul.f32 %v197, %v6367
      %v6432 = vmul.f32 %v197, %v6368
      %v6433 = vmul.f32 %v197, %v6369
      %v6434 = vmul.f32 %v197, %v6370
      %v6439 = vrot.slane %v6431, 1
      %v6440 = vrot.slane %v6433, 1
      %v6441 = vsel %vm102, %v6439, %v6440
      %v6442 = vrot.slane %v6432, 1
      %v6443 = vrot.slane %v6434, 1
      %v6444 = vsel %vm102, %v6442, %v6443
      %v6449 = vadd.f32 %v6427, %v6441
      %v6450 = vadd.f32 %v6428, %v6444
      %v6451 = vadd.f32 %v6429, %v6440
      %v6452 = vadd.f32 %v6430, %v6443
      %v6453 = vadd.f32 %v6303, %v6401
      %v6454 = vadd.f32 %v6304, %v6402
      %v6455 = vadd.f32 %v6305, %v6403
      %v6456 = vadd.f32 %v6306, %v6404
      %v6457 = vadd.f32 %v6351, %v6449
      %v6458 = vadd.f32 %v6352, %v6450
      %v6459 = vadd.f32 %v6353, %v6451
      %v6460 = vadd.f32 %v6354, %v6452
      %s6461 = scalar_lea.vmem %s0, 704
      %v6462 = vld [vmem:[%s6461] sm:$0xff]
      %v6463 = vld [vmem:[%s6461 + $0x8] sm:$0xff]
      %v6464 = vld [vmem:[%s6461 + $0x10] sm:$0x1f]
      %v6465 = vld [vmem:[%s6461 + $0x18] sm:$0x1f]
      %s6466 = scalar_lea.vmem %s1, 704
      %v6467 = vld [vmem:[%s6466] sm:$0xff]
      %v6468 = vld [vmem:[%s6466 + $0x8] sm:$0xff]
      %v6469 = vld [vmem:[%s6466 + $0x10] sm:$0x1f]
      %v6470 = vld [vmem:[%s6466 + $0x18] sm:$0x1f]
      %v6471 = vld [vmem:[%s6461] sm:$0xfe]
      %v6472 = vld [vmem:[%s6461 + $0x8] sm:$0xfe]
      %v6473 = vld [vmem:[%s6461 + $0x10] sm:$0x3f]
      %v6474 = vld [vmem:[%s6461 + $0x18] sm:$0x3f]
      %v6475 = vld [vmem:[%s6466] sm:$0xfe]
      %v6476 = vld [vmem:[%s6466 + $0x8] sm:$0xfe]
      %v6477 = vld [vmem:[%s6466 + $0x10] sm:$0x3f]
      %v6478 = vld [vmem:[%s6466 + $0x18] sm:$0x3f]
      %v6479 = vmul.f32 %v294, %v6462
      %v6480 = vmul.f32 %v294, %v6463
      %v6481 = vmul.f32 %v294, %v6464
      %v6482 = vmul.f32 %v294, %v6465
      %v6483 = vmul.f32 %v299, %v6467
      %v6484 = vmul.f32 %v299, %v6468
      %v6485 = vmul.f32 %v299, %v6469
      %v6486 = vmul.f32 %v299, %v6470
      %v6487 = vadd.f32 %v6479, %v6483
      %v6488 = vadd.f32 %v6480, %v6484
      %v6489 = vadd.f32 %v6481, %v6485
      %v6490 = vadd.f32 %v6482, %v6486
      %v6491 = vmul.f32 %v308, %v6471
      %v6492 = vmul.f32 %v308, %v6472
      %v6493 = vmul.f32 %v308, %v6473
      %v6494 = vmul.f32 %v308, %v6474
      %v6499 = vrot.slane %v6491, 1
      %v6500 = vrot.slane %v6493, 1
      %v6501 = vsel %vm102, %v6499, %v6500
      %v6502 = vrot.slane %v6492, 1
      %v6503 = vrot.slane %v6494, 1
      %v6504 = vsel %vm102, %v6502, %v6503
      %v6509 = vadd.f32 %v6487, %v6501
      %v6510 = vadd.f32 %v6488, %v6504
      %v6511 = vadd.f32 %v6489, %v6500
      %v6512 = vadd.f32 %v6490, %v6503
      %v6513 = vmul.f32 %v294, %v6467
      %v6514 = vmul.f32 %v294, %v6468
      %v6515 = vmul.f32 %v294, %v6469
      %v6516 = vmul.f32 %v294, %v6470
      %v6517 = vmul.f32 %v299, %v6471
      %v6518 = vmul.f32 %v299, %v6472
      %v6519 = vmul.f32 %v299, %v6473
      %v6520 = vmul.f32 %v299, %v6474
      %v6525 = vrot.slane %v6517, 1
      %v6526 = vrot.slane %v6519, 1
      %v6527 = vsel %vm102, %v6525, %v6526
      %v6528 = vrot.slane %v6518, 1
      %v6529 = vrot.slane %v6520, 1
      %v6530 = vsel %vm102, %v6528, %v6529
      %v6535 = vadd.f32 %v6513, %v6527
      %v6536 = vadd.f32 %v6514, %v6530
      %v6537 = vadd.f32 %v6515, %v6526
      %v6538 = vadd.f32 %v6516, %v6529
      %v6539 = vmul.f32 %v308, %v6475
      %v6540 = vmul.f32 %v308, %v6476
      %v6541 = vmul.f32 %v308, %v6477
      %v6542 = vmul.f32 %v308, %v6478
      %v6547 = vrot.slane %v6539, 1
      %v6548 = vrot.slane %v6541, 1
      %v6549 = vsel %vm102, %v6547, %v6548
      %v6550 = vrot.slane %v6540, 1
      %v6551 = vrot.slane %v6542, 1
      %v6552 = vsel %vm102, %v6550, %v6551
      %v6557 = vadd.f32 %v6535, %v6549
      %v6558 = vadd.f32 %v6536, %v6552
      %v6559 = vadd.f32 %v6537, %v6548
      %v6560 = vadd.f32 %v6538, %v6551
      %v6561 = vadd.f32 %v6453, %v6509
      %v6562 = vadd.f32 %v6454, %v6510
      %v6563 = vadd.f32 %v6455, %v6511
      %v6564 = vadd.f32 %v6456, %v6512
      %v6565 = vadd.f32 %v6457, %v6557
      %v6566 = vadd.f32 %v6458, %v6558
      %v6567 = vadd.f32 %v6459, %v6559
      %v6568 = vadd.f32 %v6460, %v6560
      %v6569 = vmax.f32 %v6561, %v6565
      %v6570 = vmax.f32 %v6562, %v6566
      %v6571 = vmax.f32 %v6563, %v6567
      %v6572 = vmax.f32 %v6564, %v6568
      %v6573 = vmul.f32 %v79, %v6355
      %v6574 = vmul.f32 %v79, %v6356
      %v6575 = vmul.f32 %v79, %v6357
      %v6576 = vmul.f32 %v79, %v6358
      %v6577 = vmul.f32 %v84, %v6359
      %v6578 = vmul.f32 %v84, %v6360
      %v6579 = vmul.f32 %v84, %v6361
      %v6580 = vmul.f32 %v84, %v6362
      %v6581 = vadd.f32 %v6573, %v6577
      %v6582 = vadd.f32 %v6574, %v6578
      %v6583 = vadd.f32 %v6575, %v6579
      %v6584 = vadd.f32 %v6576, %v6580
      %v6585 = vmul.f32 %v93, %v6363
      %v6586 = vmul.f32 %v93, %v6364
      %v6587 = vmul.f32 %v93, %v6365
      %v6588 = vmul.f32 %v93, %v6366
      %v6593 = vrot.slane %v6585, 1
      %v6594 = vrot.slane %v6587, 1
      %v6595 = vsel %vm102, %v6593, %v6594
      %v6596 = vrot.slane %v6586, 1
      %v6597 = vrot.slane %v6588, 1
      %v6598 = vsel %vm102, %v6596, %v6597
      %v6603 = vadd.f32 %v6581, %v6595
      %v6604 = vadd.f32 %v6582, %v6598
      %v6605 = vadd.f32 %v6583, %v6594
      %v6606 = vadd.f32 %v6584, %v6597
      %v6607 = vmul.f32 %v79, %v6359
      %v6608 = vmul.f32 %v79, %v6360
      %v6609 = vmul.f32 %v79, %v6361
      %v6610 = vmul.f32 %v79, %v6362
      %v6611 = vmul.f32 %v84, %v6363
      %v6612 = vmul.f32 %v84, %v6364
      %v6613 = vmul.f32 %v84, %v6365
      %v6614 = vmul.f32 %v84, %v6366
      %v6619 = vrot.slane %v6611, 1
      %v6620 = vrot.slane %v6613, 1
      %v6621 = vsel %vm102, %v6619, %v6620
      %v6622 = vrot.slane %v6612, 1
      %v6623 = vrot.slane %v6614, 1
      %v6624 = vsel %vm102, %v6622, %v6623
      %v6629 = vadd.f32 %v6607, %v6621
      %v6630 = vadd.f32 %v6608, %v6624
      %v6631 = vadd.f32 %v6609, %v6620
      %v6632 = vadd.f32 %v6610, %v6623
      %v6633 = vmul.f32 %v93, %v6367
      %v6634 = vmul.f32 %v93, %v6368
      %v6635 = vmul.f32 %v93, %v6369
      %v6636 = vmul.f32 %v93, %v6370
      %v6641 = vrot.slane %v6633, 1
      %v6642 = vrot.slane %v6635, 1
      %v6643 = vsel %vm102, %v6641, %v6642
      %v6644 = vrot.slane %v6634, 1
      %v6645 = vrot.slane %v6636, 1
      %v6646 = vsel %vm102, %v6644, %v6645
      %v6651 = vadd.f32 %v6629, %v6643
      %v6652 = vadd.f32 %v6630, %v6646
      %v6653 = vadd.f32 %v6631, %v6642
      %v6654 = vadd.f32 %v6632, %v6645
      %v6655 = vmul.f32 %v183, %v6462
      %v6656 = vmul.f32 %v183, %v6463
      %v6657 = vmul.f32 %v183, %v6464
      %v6658 = vmul.f32 %v183, %v6465
      %v6659 = vmul.f32 %v188, %v6467
      %v6660 = vmul.f32 %v188, %v6468
      %v6661 = vmul.f32 %v188, %v6469
      %v6662 = vmul.f32 %v188, %v6470
      %v6663 = vadd.f32 %v6655, %v6659
      %v6664 = vadd.f32 %v6656, %v6660
      %v6665 = vadd.f32 %v6657, %v6661
      %v6666 = vadd.f32 %v6658, %v6662
      %v6667 = vmul.f32 %v197, %v6471
      %v6668 = vmul.f32 %v197, %v6472
      %v6669 = vmul.f32 %v197, %v6473
      %v6670 = vmul.f32 %v197, %v6474
      %v6675 = vrot.slane %v6667, 1
      %v6676 = vrot.slane %v6669, 1
      %v6677 = vsel %vm102, %v6675, %v6676
      %v6678 = vrot.slane %v6668, 1
      %v6679 = vrot.slane %v6670, 1
      %v6680 = vsel %vm102, %v6678, %v6679
      %v6685 = vadd.f32 %v6663, %v6677
      %v6686 = vadd.f32 %v6664, %v6680
      %v6687 = vadd.f32 %v6665, %v6676
      %v6688 = vadd.f32 %v6666, %v6679
      %v6689 = vmul.f32 %v183, %v6467
      %v6690 = vmul.f32 %v183, %v6468
      %v6691 = vmul.f32 %v183, %v6469
      %v6692 = vmul.f32 %v183, %v6470
      %v6693 = vmul.f32 %v188, %v6471
      %v6694 = vmul.f32 %v188, %v6472
      %v6695 = vmul.f32 %v188, %v6473
      %v6696 = vmul.f32 %v188, %v6474
      %v6701 = vrot.slane %v6693, 1
      %v6702 = vrot.slane %v6695, 1
      %v6703 = vsel %vm102, %v6701, %v6702
      %v6704 = vrot.slane %v6694, 1
      %v6705 = vrot.slane %v6696, 1
      %v6706 = vsel %vm102, %v6704, %v6705
      %v6711 = vadd.f32 %v6689, %v6703
      %v6712 = vadd.f32 %v6690, %v6706
      %v6713 = vadd.f32 %v6691, %v6702
      %v6714 = vadd.f32 %v6692, %v6705
      %v6715 = vmul.f32 %v197, %v6475
      %v6716 = vmul.f32 %v197, %v6476
      %v6717 = vmul.f32 %v197, %v6477
      %v6718 = vmul.f32 %v197, %v6478
      %v6723 = vrot.slane %v6715, 1
      %v6724 = vrot.slane %v6717, 1
      %v6725 = vsel %vm102, %v6723, %v6724
      %v6726 = vrot.slane %v6716, 1
      %v6727 = vrot.slane %v6718, 1
      %v6728 = vsel %vm102, %v6726, %v6727
      %v6733 = vadd.f32 %v6711, %v6725
      %v6734 = vadd.f32 %v6712, %v6728
      %v6735 = vadd.f32 %v6713, %v6724
      %v6736 = vadd.f32 %v6714, %v6727
      %v6737 = vadd.f32 %v6603, %v6685
      %v6738 = vadd.f32 %v6604, %v6686
      %v6739 = vadd.f32 %v6605, %v6687
      %v6740 = vadd.f32 %v6606, %v6688
      %v6741 = vadd.f32 %v6651, %v6733
      %v6742 = vadd.f32 %v6652, %v6734
      %v6743 = vadd.f32 %v6653, %v6735
      %v6744 = vadd.f32 %v6654, %v6736
      %s6745 = scalar_lea.vmem %s0, 736
      %v6746 = vld [vmem:[%s6745] sm:$0xff]
      %v6747 = vld [vmem:[%s6745 + $0x8] sm:$0xff]
      %v6748 = vld [vmem:[%s6745 + $0x10] sm:$0x1f]
      %v6749 = vld [vmem:[%s6745 + $0x18] sm:$0x1f]
      %s6750 = scalar_lea.vmem %s1, 736
      %v6751 = vld [vmem:[%s6750] sm:$0xff]
      %v6752 = vld [vmem:[%s6750 + $0x8] sm:$0xff]
      %v6753 = vld [vmem:[%s6750 + $0x10] sm:$0x1f]
      %v6754 = vld [vmem:[%s6750 + $0x18] sm:$0x1f]
      %v6755 = vld [vmem:[%s6745] sm:$0xfe]
      %v6756 = vld [vmem:[%s6745 + $0x8] sm:$0xfe]
      %v6757 = vld [vmem:[%s6745 + $0x10] sm:$0x3f]
      %v6758 = vld [vmem:[%s6745 + $0x18] sm:$0x3f]
      %v6759 = vld [vmem:[%s6750] sm:$0xfe]
      %v6760 = vld [vmem:[%s6750 + $0x8] sm:$0xfe]
      %v6761 = vld [vmem:[%s6750 + $0x10] sm:$0x3f]
      %v6762 = vld [vmem:[%s6750 + $0x18] sm:$0x3f]
      %v6763 = vmul.f32 %v294, %v6746
      %v6764 = vmul.f32 %v294, %v6747
      %v6765 = vmul.f32 %v294, %v6748
      %v6766 = vmul.f32 %v294, %v6749
      %v6767 = vmul.f32 %v299, %v6751
      %v6768 = vmul.f32 %v299, %v6752
      %v6769 = vmul.f32 %v299, %v6753
      %v6770 = vmul.f32 %v299, %v6754
      %v6771 = vadd.f32 %v6763, %v6767
      %v6772 = vadd.f32 %v6764, %v6768
      %v6773 = vadd.f32 %v6765, %v6769
      %v6774 = vadd.f32 %v6766, %v6770
      %v6775 = vmul.f32 %v308, %v6755
      %v6776 = vmul.f32 %v308, %v6756
      %v6777 = vmul.f32 %v308, %v6757
      %v6778 = vmul.f32 %v308, %v6758
      %v6783 = vrot.slane %v6775, 1
      %v6784 = vrot.slane %v6777, 1
      %v6785 = vsel %vm102, %v6783, %v6784
      %v6786 = vrot.slane %v6776, 1
      %v6787 = vrot.slane %v6778, 1
      %v6788 = vsel %vm102, %v6786, %v6787
      %v6793 = vadd.f32 %v6771, %v6785
      %v6794 = vadd.f32 %v6772, %v6788
      %v6795 = vadd.f32 %v6773, %v6784
      %v6796 = vadd.f32 %v6774, %v6787
      %v6797 = vmul.f32 %v294, %v6751
      %v6798 = vmul.f32 %v294, %v6752
      %v6799 = vmul.f32 %v294, %v6753
      %v6800 = vmul.f32 %v294, %v6754
      %v6801 = vmul.f32 %v299, %v6755
      %v6802 = vmul.f32 %v299, %v6756
      %v6803 = vmul.f32 %v299, %v6757
      %v6804 = vmul.f32 %v299, %v6758
      %v6809 = vrot.slane %v6801, 1
      %v6810 = vrot.slane %v6803, 1
      %v6811 = vsel %vm102, %v6809, %v6810
      %v6812 = vrot.slane %v6802, 1
      %v6813 = vrot.slane %v6804, 1
      %v6814 = vsel %vm102, %v6812, %v6813
      %v6819 = vadd.f32 %v6797, %v6811
      %v6820 = vadd.f32 %v6798, %v6814
      %v6821 = vadd.f32 %v6799, %v6810
      %v6822 = vadd.f32 %v6800, %v6813
      %v6823 = vmul.f32 %v308, %v6759
      %v6824 = vmul.f32 %v308, %v6760
      %v6825 = vmul.f32 %v308, %v6761
      %v6826 = vmul.f32 %v308, %v6762
      %v6831 = vrot.slane %v6823, 1
      %v6832 = vrot.slane %v6825, 1
      %v6833 = vsel %vm102, %v6831, %v6832
      %v6834 = vrot.slane %v6824, 1
      %v6835 = vrot.slane %v6826, 1
      %v6836 = vsel %vm102, %v6834, %v6835
      %v6841 = vadd.f32 %v6819, %v6833
      %v6842 = vadd.f32 %v6820, %v6836
      %v6843 = vadd.f32 %v6821, %v6832
      %v6844 = vadd.f32 %v6822, %v6835
      %v6845 = vadd.f32 %v6737, %v6793
      %v6846 = vadd.f32 %v6738, %v6794
      %v6847 = vadd.f32 %v6739, %v6795
      %v6848 = vadd.f32 %v6740, %v6796
      %v6849 = vadd.f32 %v6741, %v6841
      %v6850 = vadd.f32 %v6742, %v6842
      %v6851 = vadd.f32 %v6743, %v6843
      %v6852 = vadd.f32 %v6744, %v6844
      %v6853 = vmax.f32 %v6845, %v6849
      %v6854 = vmax.f32 %v6846, %v6850
      %v6855 = vmax.f32 %v6847, %v6851
      %v6856 = vmax.f32 %v6848, %v6852
      %v6857 = vmax.f32 %v6569, %v6853
      %v6858 = vmax.f32 %v6570, %v6854
      %v6859 = vmax.f32 %v6571, %v6855
      %v6860 = vmax.f32 %v6572, %v6856
      %v6861 = vadd.f32 %v6857, %v679
      %v6862 = vadd.f32 %v6858, %v679
      %v6863 = vadd.f32 %v6859, %v679
      %v6864 = vadd.f32 %v6860, %v679
      %v6865 = vmax.f32 %v6861, 0.0
      %v6866 = vmax.f32 %v6862, 0.0
      %v6867 = vmax.f32 %v6863, 0.0
      %v6868 = vmax.f32 %v6864, 0.0
      %v6869 = vsel %vm688, %v6867, 0.0
      %v6870 = vsel %vm688, %v6868, 0.0
      %6871 = vst [vmem:[#allocation2 + $0x140] sm:$0xff] %v6865
      %6872 = vst [vmem:[#allocation2 + $0x148] sm:$0xff] %v6866
      %6873 = vst [vmem:[#allocation2 + $0x150] sm:$0xff] %v6869
      %6874 = vst [vmem:[#allocation2 + $0x158] sm:$0xff] %v6870
      %v6875 = vld [vmem:[%s6461] sm:$0xff]
      %v6876 = vld [vmem:[%s6461 + $0x8] sm:$0xff]
      %v6877 = vld [vmem:[%s6461 + $0x10] sm:$0x1f]
      %v6878 = vld [vmem:[%s6461 + $0x18] sm:$0x1f]
      %v6879 = vld [vmem:[%s6466] sm:$0xff]
      %v6880 = vld [vmem:[%s6466 + $0x8] sm:$0xff]
      %v6881 = vld [vmem:[%s6466 + $0x10] sm:$0x1f]
      %v6882 = vld [vmem:[%s6466 + $0x18] sm:$0x1f]
      %v6883 = vld [vmem:[%s6461] sm:$0xfe]
      %v6884 = vld [vmem:[%s6461 + $0x8] sm:$0xfe]
      %v6885 = vld [vmem:[%s6461 + $0x10] sm:$0x3f]
      %v6886 = vld [vmem:[%s6461 + $0x18] sm:$0x3f]
      %v6887 = vld [vmem:[%s6466] sm:$0xfe]
      %v6888 = vld [vmem:[%s6466 + $0x8] sm:$0xfe]
      %v6889 = vld [vmem:[%s6466 + $0x10] sm:$0x3f]
      %v6890 = vld [vmem:[%s6466 + $0x18] sm:$0x3f]
      %v6891 = vmul.f32 %v79, %v6875
      %v6892 = vmul.f32 %v79, %v6876
      %v6893 = vmul.f32 %v79, %v6877
      %v6894 = vmul.f32 %v79, %v6878
      %v6895 = vmul.f32 %v84, %v6879
      %v6896 = vmul.f32 %v84, %v6880
      %v6897 = vmul.f32 %v84, %v6881
      %v6898 = vmul.f32 %v84, %v6882
      %v6899 = vadd.f32 %v6891, %v6895
      %v6900 = vadd.f32 %v6892, %v6896
      %v6901 = vadd.f32 %v6893, %v6897
      %v6902 = vadd.f32 %v6894, %v6898
      %v6903 = vmul.f32 %v93, %v6883
      %v6904 = vmul.f32 %v93, %v6884
      %v6905 = vmul.f32 %v93, %v6885
      %v6906 = vmul.f32 %v93, %v6886
      %v6911 = vrot.slane %v6903, 1
      %v6912 = vrot.slane %v6905, 1
      %v6913 = vsel %vm102, %v6911, %v6912
      %v6914 = vrot.slane %v6904, 1
      %v6915 = vrot.slane %v6906, 1
      %v6916 = vsel %vm102, %v6914, %v6915
      %v6921 = vadd.f32 %v6899, %v6913
      %v6922 = vadd.f32 %v6900, %v6916
      %v6923 = vadd.f32 %v6901, %v6912
      %v6924 = vadd.f32 %v6902, %v6915
      %v6925 = vmul.f32 %v79, %v6879
      %v6926 = vmul.f32 %v79, %v6880
      %v6927 = vmul.f32 %v79, %v6881
      %v6928 = vmul.f32 %v79, %v6882
      %v6929 = vmul.f32 %v84, %v6883
      %v6930 = vmul.f32 %v84, %v6884
      %v6931 = vmul.f32 %v84, %v6885
      %v6932 = vmul.f32 %v84, %v6886
      %v6937 = vrot.slane %v6929, 1
      %v6938 = vrot.slane %v6931, 1
      %v6939 = vsel %vm102, %v6937, %v6938
      %v6940 = vrot.slane %v6930, 1
      %v6941 = vrot.slane %v6932, 1
      %v6942 = vsel %vm102, %v6940, %v6941
      %v6947 = vadd.f32 %v6925, %v6939
      %v6948 = vadd.f32 %v6926, %v6942
      %v6949 = vadd.f32 %v6927, %v6938
      %v6950 = vadd.f32 %v6928, %v6941
      %v6951 = vmul.f32 %v93, %v6887
      %v6952 = vmul.f32 %v93, %v6888
      %v6953 = vmul.f32 %v93, %v6889
      %v6954 = vmul.f32 %v93, %v6890
      %v6959 = vrot.slane %v6951, 1
      %v6960 = vrot.slane %v6953, 1
      %v6961 = vsel %vm102, %v6959, %v6960
      %v6962 = vrot.slane %v6952, 1
      %v6963 = vrot.slane %v6954, 1
      %v6964 = vsel %vm102, %v6962, %v6963
      %v6969 = vadd.f32 %v6947, %v6961
      %v6970 = vadd.f32 %v6948, %v6964
      %v6971 = vadd.f32 %v6949, %v6960
      %v6972 = vadd.f32 %v6950, %v6963
      %v6973 = vld [vmem:[%s6745] sm:$0xff]
      %v6974 = vld [vmem:[%s6745 + $0x8] sm:$0xff]
      %v6975 = vld [vmem:[%s6745 + $0x10] sm:$0x1f]
      %v6976 = vld [vmem:[%s6745 + $0x18] sm:$0x1f]
      %v6977 = vld [vmem:[%s6750] sm:$0xff]
      %v6978 = vld [vmem:[%s6750 + $0x8] sm:$0xff]
      %v6979 = vld [vmem:[%s6750 + $0x10] sm:$0x1f]
      %v6980 = vld [vmem:[%s6750 + $0x18] sm:$0x1f]
      %v6981 = vld [vmem:[%s6745] sm:$0xfe]
      %v6982 = vld [vmem:[%s6745 + $0x8] sm:$0xfe]
      %v6983 = vld [vmem:[%s6745 + $0x10] sm:$0x3f]
      %v6984 = vld [vmem:[%s6745 + $0x18] sm:$0x3f]
      %v6985 = vld [vmem:[%s6750] sm:$0xfe]
      %v6986 = vld [vmem:[%s6750 + $0x8] sm:$0xfe]
      %v6987 = vld [vmem:[%s6750 + $0x10] sm:$0x3f]
      %v6988 = vld [vmem:[%s6750 + $0x18] sm:$0x3f]
      %v6989 = vmul.f32 %v183, %v6973
      %v6990 = vmul.f32 %v183, %v6974
      %v6991 = vmul.f32 %v183, %v6975
      %v6992 = vmul.f32 %v183, %v6976
      %v6993 = vmul.f32 %v188, %v6977
      %v6994 = vmul.f32 %v188, %v6978
      %v6995 = vmul.f32 %v188, %v6979
      %v6996 = vmul.f32 %v188, %v6980
      %v6997 = vadd.f32 %v6989, %v6993
      %v6998 = vadd.f32 %v6990, %v6994
      %v6999 = vadd.f32 %v6991, %v6995
      %v7000 = vadd.f32 %v6992, %v6996
      %v7001 = vmul.f32 %v197, %v6981
      %v7002 = vmul.f32 %v197, %v6982
      %v7003 = vmul.f32 %v197, %v6983
      %v7004 = vmul.f32 %v197, %v6984
      %v7009 = vrot.slane %v7001, 1
      %v7010 = vrot.slane %v7003, 1
      %v7011 = vsel %vm102, %v7009, %v7010
      %v7012 = vrot.slane %v7002, 1
      %v7013 = vrot.slane %v7004, 1
      %v7014 = vsel %vm102, %v7012, %v7013
      %v7019 = vadd.f32 %v6997, %v7011
      %v7020 = vadd.f32 %v6998, %v7014
      %v7021 = vadd.f32 %v6999, %v7010
      %v7022 = vadd.f32 %v7000, %v7013
      %v7023 = vmul.f32 %v183, %v6977
      %v7024 = vmul.f32 %v183, %v6978
      %v7025 = vmul.f32 %v183, %v6979
      %v7026 = vmul.f32 %v183, %v6980
      %v7027 = vmul.f32 %v188, %v6981
      %v7028 = vmul.f32 %v188, %v6982
      %v7029 = vmul.f32 %v188, %v6983
      %v7030 = vmul.f32 %v188, %v6984
      %v7035 = vrot.slane %v7027, 1
      %v7036 = vrot.slane %v7029, 1
      %v7037 = vsel %vm102, %v7035, %v7036
      %v7038 = vrot.slane %v7028, 1
      %v7039 = vrot.slane %v7030, 1
      %v7040 = vsel %vm102, %v7038, %v7039
      %v7045 = vadd.f32 %v7023, %v7037
      %v7046 = vadd.f32 %v7024, %v7040
      %v7047 = vadd.f32 %v7025, %v7036
      %v7048 = vadd.f32 %v7026, %v7039
      %v7049 = vmul.f32 %v197, %v6985
      %v7050 = vmul.f32 %v197, %v6986
      %v7051 = vmul.f32 %v197, %v6987
      %v7052 = vmul.f32 %v197, %v6988
      %v7057 = vrot.slane %v7049, 1
      %v7058 = vrot.slane %v7051, 1
      %v7059 = vsel %vm102, %v7057, %v7058
      %v7060 = vrot.slane %v7050, 1
      %v7061 = vrot.slane %v7052, 1
      %v7062 = vsel %vm102, %v7060, %v7061
      %v7067 = vadd.f32 %v7045, %v7059
      %v7068 = vadd.f32 %v7046, %v7062
      %v7069 = vadd.f32 %v7047, %v7058
      %v7070 = vadd.f32 %v7048, %v7061
      %v7071 = vadd.f32 %v6921, %v7019
      %v7072 = vadd.f32 %v6922, %v7020
      %v7073 = vadd.f32 %v6923, %v7021
      %v7074 = vadd.f32 %v6924, %v7022
      %v7075 = vadd.f32 %v6969, %v7067
      %v7076 = vadd.f32 %v6970, %v7068
      %v7077 = vadd.f32 %v6971, %v7069
      %v7078 = vadd.f32 %v6972, %v7070
      %s7079 = scalar_lea.vmem %s0, 768
      %v7080 = vld [vmem:[%s7079] sm:$0xff]
      %v7081 = vld [vmem:[%s7079 + $0x8] sm:$0xff]
      %v7082 = vld [vmem:[%s7079 + $0x10] sm:$0x1f]
      %v7083 = vld [vmem:[%s7079 + $0x18] sm:$0x1f]
      %s7084 = scalar_lea.vmem %s1, 768
      %v7085 = vld [vmem:[%s7084] sm:$0xff]
      %v7086 = vld [vmem:[%s7084 + $0x8] sm:$0xff]
      %v7087 = vld [vmem:[%s7084 + $0x10] sm:$0x1f]
      %v7088 = vld [vmem:[%s7084 + $0x18] sm:$0x1f]
      %v7089 = vld [vmem:[%s7079] sm:$0xfe]
      %v7090 = vld [vmem:[%s7079 + $0x8] sm:$0xfe]
      %v7091 = vld [vmem:[%s7079 + $0x10] sm:$0x3f]
      %v7092 = vld [vmem:[%s7079 + $0x18] sm:$0x3f]
      %v7093 = vld [vmem:[%s7084] sm:$0xfe]
      %v7094 = vld [vmem:[%s7084 + $0x8] sm:$0xfe]
      %v7095 = vld [vmem:[%s7084 + $0x10] sm:$0x3f]
      %v7096 = vld [vmem:[%s7084 + $0x18] sm:$0x3f]
      %v7097 = vmul.f32 %v294, %v7080
      %v7098 = vmul.f32 %v294, %v7081
      %v7099 = vmul.f32 %v294, %v7082
      %v7100 = vmul.f32 %v294, %v7083
      %v7101 = vmul.f32 %v299, %v7085
      %v7102 = vmul.f32 %v299, %v7086
      %v7103 = vmul.f32 %v299, %v7087
      %v7104 = vmul.f32 %v299, %v7088
      %v7105 = vadd.f32 %v7097, %v7101
      %v7106 = vadd.f32 %v7098, %v7102
      %v7107 = vadd.f32 %v7099, %v7103
      %v7108 = vadd.f32 %v7100, %v7104
      %v7109 = vmul.f32 %v308, %v7089
      %v7110 = vmul.f32 %v308, %v7090
      %v7111 = vmul.f32 %v308, %v7091
      %v7112 = vmul.f32 %v308, %v7092
      %v7117 = vrot.slane %v7109, 1
      %v7118 = vrot.slane %v7111, 1
      %v7119 = vsel %vm102, %v7117, %v7118
      %v7120 = vrot.slane %v7110, 1
      %v7121 = vrot.slane %v7112, 1
      %v7122 = vsel %vm102, %v7120, %v7121
      %v7127 = vadd.f32 %v7105, %v7119
      %v7128 = vadd.f32 %v7106, %v7122
      %v7129 = vadd.f32 %v7107, %v7118
      %v7130 = vadd.f32 %v7108, %v7121
      %v7131 = vmul.f32 %v294, %v7085
      %v7132 = vmul.f32 %v294, %v7086
      %v7133 = vmul.f32 %v294, %v7087
      %v7134 = vmul.f32 %v294, %v7088
      %v7135 = vmul.f32 %v299, %v7089
      %v7136 = vmul.f32 %v299, %v7090
      %v7137 = vmul.f32 %v299, %v7091
      %v7138 = vmul.f32 %v299, %v7092
      %v7143 = vrot.slane %v7135, 1
      %v7144 = vrot.slane %v7137, 1
      %v7145 = vsel %vm102, %v7143, %v7144
      %v7146 = vrot.slane %v7136, 1
      %v7147 = vrot.slane %v7138, 1
      %v7148 = vsel %vm102, %v7146, %v7147
      %v7153 = vadd.f32 %v7131, %v7145
      %v7154 = vadd.f32 %v7132, %v7148
      %v7155 = vadd.f32 %v7133, %v7144
      %v7156 = vadd.f32 %v7134, %v7147
      %v7157 = vmul.f32 %v308, %v7093
      %v7158 = vmul.f32 %v308, %v7094
      %v7159 = vmul.f32 %v308, %v7095
      %v7160 = vmul.f32 %v308, %v7096
      %v7165 = vrot.slane %v7157, 1
      %v7166 = vrot.slane %v7159, 1
      %v7167 = vsel %vm102, %v7165, %v7166
      %v7168 = vrot.slane %v7158, 1
      %v7169 = vrot.slane %v7160, 1
      %v7170 = vsel %vm102, %v7168, %v7169
      %v7175 = vadd.f32 %v7153, %v7167
      %v7176 = vadd.f32 %v7154, %v7170
      %v7177 = vadd.f32 %v7155, %v7166
      %v7178 = vadd.f32 %v7156, %v7169
      %v7179 = vadd.f32 %v7071, %v7127
      %v7180 = vadd.f32 %v7072, %v7128
      %v7181 = vadd.f32 %v7073, %v7129
      %v7182 = vadd.f32 %v7074, %v7130
      %v7183 = vadd.f32 %v7075, %v7175
      %v7184 = vadd.f32 %v7076, %v7176
      %v7185 = vadd.f32 %v7077, %v7177
      %v7186 = vadd.f32 %v7078, %v7178
      %v7187 = vmax.f32 %v7179, %v7183
      %v7188 = vmax.f32 %v7180, %v7184
      %v7189 = vmax.f32 %v7181, %v7185
      %v7190 = vmax.f32 %v7182, %v7186
      %v7191 = vmul.f32 %v79, %v6973
      %v7192 = vmul.f32 %v79, %v6974
      %v7193 = vmul.f32 %v79, %v6975
      %v7194 = vmul.f32 %v79, %v6976
      %v7195 = vmul.f32 %v84, %v6977
      %v7196 = vmul.f32 %v84, %v6978
      %v7197 = vmul.f32 %v84, %v6979
      %v7198 = vmul.f32 %v84, %v6980
      %v7199 = vadd.f32 %v7191, %v7195
      %v7200 = vadd.f32 %v7192, %v7196
      %v7201 = vadd.f32 %v7193, %v7197
      %v7202 = vadd.f32 %v7194, %v7198
      %v7203 = vmul.f32 %v93, %v6981
      %v7204 = vmul.f32 %v93, %v6982
      %v7205 = vmul.f32 %v93, %v6983
      %v7206 = vmul.f32 %v93, %v6984
      %v7211 = vrot.slane %v7203, 1
      %v7212 = vrot.slane %v7205, 1
      %v7213 = vsel %vm102, %v7211, %v7212
      %v7214 = vrot.slane %v7204, 1
      %v7215 = vrot.slane %v7206, 1
      %v7216 = vsel %vm102, %v7214, %v7215
      %v7221 = vadd.f32 %v7199, %v7213
      %v7222 = vadd.f32 %v7200, %v7216
      %v7223 = vadd.f32 %v7201, %v7212
      %v7224 = vadd.f32 %v7202, %v7215
      %v7225 = vmul.f32 %v79, %v6977
      %v7226 = vmul.f32 %v79, %v6978
      %v7227 = vmul.f32 %v79, %v6979
      %v7228 = vmul.f32 %v79, %v6980
      %v7229 = vmul.f32 %v84, %v6981
      %v7230 = vmul.f32 %v84, %v6982
      %v7231 = vmul.f32 %v84, %v6983
      %v7232 = vmul.f32 %v84, %v6984
      %v7237 = vrot.slane %v7229, 1
      %v7238 = vrot.slane %v7231, 1
      %v7239 = vsel %vm102, %v7237, %v7238
      %v7240 = vrot.slane %v7230, 1
      %v7241 = vrot.slane %v7232, 1
      %v7242 = vsel %vm102, %v7240, %v7241
      %v7247 = vadd.f32 %v7225, %v7239
      %v7248 = vadd.f32 %v7226, %v7242
      %v7249 = vadd.f32 %v7227, %v7238
      %v7250 = vadd.f32 %v7228, %v7241
      %v7251 = vmul.f32 %v93, %v6985
      %v7252 = vmul.f32 %v93, %v6986
      %v7253 = vmul.f32 %v93, %v6987
      %v7254 = vmul.f32 %v93, %v6988
      %v7259 = vrot.slane %v7251, 1
      %v7260 = vrot.slane %v7253, 1
      %v7261 = vsel %vm102, %v7259, %v7260
      %v7262 = vrot.slane %v7252, 1
      %v7263 = vrot.slane %v7254, 1
      %v7264 = vsel %vm102, %v7262, %v7263
      %v7269 = vadd.f32 %v7247, %v7261
      %v7270 = vadd.f32 %v7248, %v7264
      %v7271 = vadd.f32 %v7249, %v7260
      %v7272 = vadd.f32 %v7250, %v7263
      %v7273 = vmul.f32 %v183, %v7080
      %v7274 = vmul.f32 %v183, %v7081
      %v7275 = vmul.f32 %v183, %v7082
      %v7276 = vmul.f32 %v183, %v7083
      %v7277 = vmul.f32 %v188, %v7085
      %v7278 = vmul.f32 %v188, %v7086
      %v7279 = vmul.f32 %v188, %v7087
      %v7280 = vmul.f32 %v188, %v7088
      %v7281 = vadd.f32 %v7273, %v7277
      %v7282 = vadd.f32 %v7274, %v7278
      %v7283 = vadd.f32 %v7275, %v7279
      %v7284 = vadd.f32 %v7276, %v7280
      %v7285 = vmul.f32 %v197, %v7089
      %v7286 = vmul.f32 %v197, %v7090
      %v7287 = vmul.f32 %v197, %v7091
      %v7288 = vmul.f32 %v197, %v7092
      %v7293 = vrot.slane %v7285, 1
      %v7294 = vrot.slane %v7287, 1
      %v7295 = vsel %vm102, %v7293, %v7294
      %v7296 = vrot.slane %v7286, 1
      %v7297 = vrot.slane %v7288, 1
      %v7298 = vsel %vm102, %v7296, %v7297
      %v7303 = vadd.f32 %v7281, %v7295
      %v7304 = vadd.f32 %v7282, %v7298
      %v7305 = vadd.f32 %v7283, %v7294
      %v7306 = vadd.f32 %v7284, %v7297
      %v7307 = vmul.f32 %v183, %v7085
      %v7308 = vmul.f32 %v183, %v7086
      %v7309 = vmul.f32 %v183, %v7087
      %v7310 = vmul.f32 %v183, %v7088
      %v7311 = vmul.f32 %v188, %v7089
      %v7312 = vmul.f32 %v188, %v7090
      %v7313 = vmul.f32 %v188, %v7091
      %v7314 = vmul.f32 %v188, %v7092
      %v7319 = vrot.slane %v7311, 1
      %v7320 = vrot.slane %v7313, 1
      %v7321 = vsel %vm102, %v7319, %v7320
      %v7322 = vrot.slane %v7312, 1
      %v7323 = vrot.slane %v7314, 1
      %v7324 = vsel %vm102, %v7322, %v7323
      %v7329 = vadd.f32 %v7307, %v7321
      %v7330 = vadd.f32 %v7308, %v7324
      %v7331 = vadd.f32 %v7309, %v7320
      %v7332 = vadd.f32 %v7310, %v7323
      %v7333 = vmul.f32 %v197, %v7093
      %v7334 = vmul.f32 %v197, %v7094
      %v7335 = vmul.f32 %v197, %v7095
      %v7336 = vmul.f32 %v197, %v7096
      %v7341 = vrot.slane %v7333, 1
      %v7342 = vrot.slane %v7335, 1
      %v7343 = vsel %vm102, %v7341, %v7342
      %v7344 = vrot.slane %v7334, 1
      %v7345 = vrot.slane %v7336, 1
      %v7346 = vsel %vm102, %v7344, %v7345
      %v7351 = vadd.f32 %v7329, %v7343
      %v7352 = vadd.f32 %v7330, %v7346
      %v7353 = vadd.f32 %v7331, %v7342
      %v7354 = vadd.f32 %v7332, %v7345
      %v7355 = vadd.f32 %v7221, %v7303
      %v7356 = vadd.f32 %v7222, %v7304
      %v7357 = vadd.f32 %v7223, %v7305
      %v7358 = vadd.f32 %v7224, %v7306
      %v7359 = vadd.f32 %v7269, %v7351
      %v7360 = vadd.f32 %v7270, %v7352
      %v7361 = vadd.f32 %v7271, %v7353
      %v7362 = vadd.f32 %v7272, %v7354
      %s7363 = scalar_lea.vmem %s0, 800
      %v7364 = vld [vmem:[%s7363] sm:$0xff]
      %v7365 = vld [vmem:[%s7363 + $0x8] sm:$0xff]
      %v7366 = vld [vmem:[%s7363 + $0x10] sm:$0x1f]
      %v7367 = vld [vmem:[%s7363 + $0x18] sm:$0x1f]
      %s7368 = scalar_lea.vmem %s1, 800
      %v7369 = vld [vmem:[%s7368] sm:$0xff]
      %v7370 = vld [vmem:[%s7368 + $0x8] sm:$0xff]
      %v7371 = vld [vmem:[%s7368 + $0x10] sm:$0x1f]
      %v7372 = vld [vmem:[%s7368 + $0x18] sm:$0x1f]
      %v7373 = vld [vmem:[%s7363] sm:$0xfe]
      %v7374 = vld [vmem:[%s7363 + $0x8] sm:$0xfe]
      %v7375 = vld [vmem:[%s7363 + $0x10] sm:$0x3f]
      %v7376 = vld [vmem:[%s7363 + $0x18] sm:$0x3f]
      %v7377 = vld [vmem:[%s7368] sm:$0xfe]
      %v7378 = vld [vmem:[%s7368 + $0x8] sm:$0xfe]
      %v7379 = vld [vmem:[%s7368 + $0x10] sm:$0x3f]
      %v7380 = vld [vmem:[%s7368 + $0x18] sm:$0x3f]
      %v7381 = vmul.f32 %v294, %v7364
      %v7382 = vmul.f32 %v294, %v7365
      %v7383 = vmul.f32 %v294, %v7366
      %v7384 = vmul.f32 %v294, %v7367
      %v7385 = vmul.f32 %v299, %v7369
      %v7386 = vmul.f32 %v299, %v7370
      %v7387 = vmul.f32 %v299, %v7371
      %v7388 = vmul.f32 %v299, %v7372
      %v7389 = vadd.f32 %v7381, %v7385
      %v7390 = vadd.f32 %v7382, %v7386
      %v7391 = vadd.f32 %v7383, %v7387
      %v7392 = vadd.f32 %v7384, %v7388
      %v7393 = vmul.f32 %v308, %v7373
      %v7394 = vmul.f32 %v308, %v7374
      %v7395 = vmul.f32 %v308, %v7375
      %v7396 = vmul.f32 %v308, %v7376
      %v7401 = vrot.slane %v7393, 1
      %v7402 = vrot.slane %v7395, 1
      %v7403 = vsel %vm102, %v7401, %v7402
      %v7404 = vrot.slane %v7394, 1
      %v7405 = vrot.slane %v7396, 1
      %v7406 = vsel %vm102, %v7404, %v7405
      %v7411 = vadd.f32 %v7389, %v7403
      %v7412 = vadd.f32 %v7390, %v7406
      %v7413 = vadd.f32 %v7391, %v7402
      %v7414 = vadd.f32 %v7392, %v7405
      %v7415 = vmul.f32 %v294, %v7369
      %v7416 = vmul.f32 %v294, %v7370
      %v7417 = vmul.f32 %v294, %v7371
      %v7418 = vmul.f32 %v294, %v7372
      %v7419 = vmul.f32 %v299, %v7373
      %v7420 = vmul.f32 %v299, %v7374
      %v7421 = vmul.f32 %v299, %v7375
      %v7422 = vmul.f32 %v299, %v7376
      %v7427 = vrot.slane %v7419, 1
      %v7428 = vrot.slane %v7421, 1
      %v7429 = vsel %vm102, %v7427, %v7428
      %v7430 = vrot.slane %v7420, 1
      %v7431 = vrot.slane %v7422, 1
      %v7432 = vsel %vm102, %v7430, %v7431
      %v7437 = vadd.f32 %v7415, %v7429
      %v7438 = vadd.f32 %v7416, %v7432
      %v7439 = vadd.f32 %v7417, %v7428
      %v7440 = vadd.f32 %v7418, %v7431
      %v7441 = vmul.f32 %v308, %v7377
      %v7442 = vmul.f32 %v308, %v7378
      %v7443 = vmul.f32 %v308, %v7379
      %v7444 = vmul.f32 %v308, %v7380
      %v7449 = vrot.slane %v7441, 1
      %v7450 = vrot.slane %v7443, 1
      %v7451 = vsel %vm102, %v7449, %v7450
      %v7452 = vrot.slane %v7442, 1
      %v7453 = vrot.slane %v7444, 1
      %v7454 = vsel %vm102, %v7452, %v7453
      %v7459 = vadd.f32 %v7437, %v7451
      %v7460 = vadd.f32 %v7438, %v7454
      %v7461 = vadd.f32 %v7439, %v7450
      %v7462 = vadd.f32 %v7440, %v7453
      %v7463 = vadd.f32 %v7355, %v7411
      %v7464 = vadd.f32 %v7356, %v7412
      %v7465 = vadd.f32 %v7357, %v7413
      %v7466 = vadd.f32 %v7358, %v7414
      %v7467 = vadd.f32 %v7359, %v7459
      %v7468 = vadd.f32 %v7360, %v7460
      %v7469 = vadd.f32 %v7361, %v7461
      %v7470 = vadd.f32 %v7362, %v7462
      %v7471 = vmax.f32 %v7463, %v7467
      %v7472 = vmax.f32 %v7464, %v7468
      %v7473 = vmax.f32 %v7465, %v7469
      %v7474 = vmax.f32 %v7466, %v7470
      %v7475 = vmax.f32 %v7187, %v7471
      %v7476 = vmax.f32 %v7188, %v7472
      %v7477 = vmax.f32 %v7189, %v7473
      %v7478 = vmax.f32 %v7190, %v7474
      %v7479 = vadd.f32 %v7475, %v679
      %v7480 = vadd.f32 %v7476, %v679
      %v7481 = vadd.f32 %v7477, %v679
      %v7482 = vadd.f32 %v7478, %v679
      %v7483 = vmax.f32 %v7479, 0.0
      %v7484 = vmax.f32 %v7480, 0.0
      %v7485 = vmax.f32 %v7481, 0.0
      %v7486 = vmax.f32 %v7482, 0.0
      %v7487 = vsel %vm688, %v7485, 0.0
      %v7488 = vsel %vm688, %v7486, 0.0
      %7489 = vst [vmem:[#allocation2 + $0x160] sm:$0xff] %v7483
      %7490 = vst [vmem:[#allocation2 + $0x168] sm:$0xff] %v7484
      %7491 = vst [vmem:[#allocation2 + $0x170] sm:$0xff] %v7487
      %7492 = vst [vmem:[#allocation2 + $0x178] sm:$0xff] %v7488
      %v7493 = vld [vmem:[%s7079] sm:$0xff]
      %v7494 = vld [vmem:[%s7079 + $0x8] sm:$0xff]
      %v7495 = vld [vmem:[%s7079 + $0x10] sm:$0x1f]
      %v7496 = vld [vmem:[%s7079 + $0x18] sm:$0x1f]
      %v7497 = vld [vmem:[%s7084] sm:$0xff]
      %v7498 = vld [vmem:[%s7084 + $0x8] sm:$0xff]
      %v7499 = vld [vmem:[%s7084 + $0x10] sm:$0x1f]
      %v7500 = vld [vmem:[%s7084 + $0x18] sm:$0x1f]
      %v7501 = vld [vmem:[%s7079] sm:$0xfe]
      %v7502 = vld [vmem:[%s7079 + $0x8] sm:$0xfe]
      %v7503 = vld [vmem:[%s7079 + $0x10] sm:$0x3f]
      %v7504 = vld [vmem:[%s7079 + $0x18] sm:$0x3f]
      %v7505 = vld [vmem:[%s7084] sm:$0xfe]
      %v7506 = vld [vmem:[%s7084 + $0x8] sm:$0xfe]
      %v7507 = vld [vmem:[%s7084 + $0x10] sm:$0x3f]
      %v7508 = vld [vmem:[%s7084 + $0x18] sm:$0x3f]
      %v7509 = vmul.f32 %v79, %v7493
      %v7510 = vmul.f32 %v79, %v7494
      %v7511 = vmul.f32 %v79, %v7495
      %v7512 = vmul.f32 %v79, %v7496
      %v7513 = vmul.f32 %v84, %v7497
      %v7514 = vmul.f32 %v84, %v7498
      %v7515 = vmul.f32 %v84, %v7499
      %v7516 = vmul.f32 %v84, %v7500
      %v7517 = vadd.f32 %v7509, %v7513
      %v7518 = vadd.f32 %v7510, %v7514
      %v7519 = vadd.f32 %v7511, %v7515
      %v7520 = vadd.f32 %v7512, %v7516
      %v7521 = vmul.f32 %v93, %v7501
      %v7522 = vmul.f32 %v93, %v7502
      %v7523 = vmul.f32 %v93, %v7503
      %v7524 = vmul.f32 %v93, %v7504
      %v7529 = vrot.slane %v7521, 1
      %v7530 = vrot.slane %v7523, 1
      %v7531 = vsel %vm102, %v7529, %v7530
      %v7532 = vrot.slane %v7522, 1
      %v7533 = vrot.slane %v7524, 1
      %v7534 = vsel %vm102, %v7532, %v7533
      %v7539 = vadd.f32 %v7517, %v7531
      %v7540 = vadd.f32 %v7518, %v7534
      %v7541 = vadd.f32 %v7519, %v7530
      %v7542 = vadd.f32 %v7520, %v7533
      %v7543 = vmul.f32 %v79, %v7497
      %v7544 = vmul.f32 %v79, %v7498
      %v7545 = vmul.f32 %v79, %v7499
      %v7546 = vmul.f32 %v79, %v7500
      %v7547 = vmul.f32 %v84, %v7501
      %v7548 = vmul.f32 %v84, %v7502
      %v7549 = vmul.f32 %v84, %v7503
      %v7550 = vmul.f32 %v84, %v7504
      %v7555 = vrot.slane %v7547, 1
      %v7556 = vrot.slane %v7549, 1
      %v7557 = vsel %vm102, %v7555, %v7556
      %v7558 = vrot.slane %v7548, 1
      %v7559 = vrot.slane %v7550, 1
      %v7560 = vsel %vm102, %v7558, %v7559
      %v7565 = vadd.f32 %v7543, %v7557
      %v7566 = vadd.f32 %v7544, %v7560
      %v7567 = vadd.f32 %v7545, %v7556
      %v7568 = vadd.f32 %v7546, %v7559
      %v7569 = vmul.f32 %v93, %v7505
      %v7570 = vmul.f32 %v93, %v7506
      %v7571 = vmul.f32 %v93, %v7507
      %v7572 = vmul.f32 %v93, %v7508
      %v7577 = vrot.slane %v7569, 1
      %v7578 = vrot.slane %v7571, 1
      %v7579 = vsel %vm102, %v7577, %v7578
      %v7580 = vrot.slane %v7570, 1
      %v7581 = vrot.slane %v7572, 1
      %v7582 = vsel %vm102, %v7580, %v7581
      %v7587 = vadd.f32 %v7565, %v7579
      %v7588 = vadd.f32 %v7566, %v7582
      %v7589 = vadd.f32 %v7567, %v7578
      %v7590 = vadd.f32 %v7568, %v7581
      %v7591 = vld [vmem:[%s7363] sm:$0xff]
      %v7592 = vld [vmem:[%s7363 + $0x8] sm:$0xff]
      %v7593 = vld [vmem:[%s7363 + $0x10] sm:$0x1f]
      %v7594 = vld [vmem:[%s7363 + $0x18] sm:$0x1f]
      %v7595 = vld [vmem:[%s7368] sm:$0xff]
      %v7596 = vld [vmem:[%s7368 + $0x8] sm:$0xff]
      %v7597 = vld [vmem:[%s7368 + $0x10] sm:$0x1f]
      %v7598 = vld [vmem:[%s7368 + $0x18] sm:$0x1f]
      %v7599 = vld [vmem:[%s7363] sm:$0xfe]
      %v7600 = vld [vmem:[%s7363 + $0x8] sm:$0xfe]
      %v7601 = vld [vmem:[%s7363 + $0x10] sm:$0x3f]
      %v7602 = vld [vmem:[%s7363 + $0x18] sm:$0x3f]
      %v7603 = vld [vmem:[%s7368] sm:$0xfe]
      %v7604 = vld [vmem:[%s7368 + $0x8] sm:$0xfe]
      %v7605 = vld [vmem:[%s7368 + $0x10] sm:$0x3f]
      %v7606 = vld [vmem:[%s7368 + $0x18] sm:$0x3f]
      %v7607 = vmul.f32 %v183, %v7591
      %v7608 = vmul.f32 %v183, %v7592
      %v7609 = vmul.f32 %v183, %v7593
      %v7610 = vmul.f32 %v183, %v7594
      %v7611 = vmul.f32 %v188, %v7595
      %v7612 = vmul.f32 %v188, %v7596
      %v7613 = vmul.f32 %v188, %v7597
      %v7614 = vmul.f32 %v188, %v7598
      %v7615 = vadd.f32 %v7607, %v7611
      %v7616 = vadd.f32 %v7608, %v7612
      %v7617 = vadd.f32 %v7609, %v7613
      %v7618 = vadd.f32 %v7610, %v7614
      %v7619 = vmul.f32 %v197, %v7599
      %v7620 = vmul.f32 %v197, %v7600
      %v7621 = vmul.f32 %v197, %v7601
      %v7622 = vmul.f32 %v197, %v7602
      %v7627 = vrot.slane %v7619, 1
      %v7628 = vrot.slane %v7621, 1
      %v7629 = vsel %vm102, %v7627, %v7628
      %v7630 = vrot.slane %v7620, 1
      %v7631 = vrot.slane %v7622, 1
      %v7632 = vsel %vm102, %v7630, %v7631
      %v7637 = vadd.f32 %v7615, %v7629
      %v7638 = vadd.f32 %v7616, %v7632
      %v7639 = vadd.f32 %v7617, %v7628
      %v7640 = vadd.f32 %v7618, %v7631
      %v7641 = vmul.f32 %v183, %v7595
      %v7642 = vmul.f32 %v183, %v7596
      %v7643 = vmul.f32 %v183, %v7597
      %v7644 = vmul.f32 %v183, %v7598
      %v7645 = vmul.f32 %v188, %v7599
      %v7646 = vmul.f32 %v188, %v7600
      %v7647 = vmul.f32 %v188, %v7601
      %v7648 = vmul.f32 %v188, %v7602
      %v7653 = vrot.slane %v7645, 1
      %v7654 = vrot.slane %v7647, 1
      %v7655 = vsel %vm102, %v7653, %v7654
      %v7656 = vrot.slane %v7646, 1
      %v7657 = vrot.slane %v7648, 1
      %v7658 = vsel %vm102, %v7656, %v7657
      %v7663 = vadd.f32 %v7641, %v7655
      %v7664 = vadd.f32 %v7642, %v7658
      %v7665 = vadd.f32 %v7643, %v7654
      %v7666 = vadd.f32 %v7644, %v7657
      %v7667 = vmul.f32 %v197, %v7603
      %v7668 = vmul.f32 %v197, %v7604
      %v7669 = vmul.f32 %v197, %v7605
      %v7670 = vmul.f32 %v197, %v7606
      %v7675 = vrot.slane %v7667, 1
      %v7676 = vrot.slane %v7669, 1
      %v7677 = vsel %vm102, %v7675, %v7676
      %v7678 = vrot.slane %v7668, 1
      %v7679 = vrot.slane %v7670, 1
      %v7680 = vsel %vm102, %v7678, %v7679
      %v7685 = vadd.f32 %v7663, %v7677
      %v7686 = vadd.f32 %v7664, %v7680
      %v7687 = vadd.f32 %v7665, %v7676
      %v7688 = vadd.f32 %v7666, %v7679
      %v7689 = vadd.f32 %v7539, %v7637
      %v7690 = vadd.f32 %v7540, %v7638
      %v7691 = vadd.f32 %v7541, %v7639
      %v7692 = vadd.f32 %v7542, %v7640
      %v7693 = vadd.f32 %v7587, %v7685
      %v7694 = vadd.f32 %v7588, %v7686
      %v7695 = vadd.f32 %v7589, %v7687
      %v7696 = vadd.f32 %v7590, %v7688
      %s7697 = scalar_lea.vmem %s0, 832
      %v7698 = vld [vmem:[%s7697] sm:$0xff]
      %v7699 = vld [vmem:[%s7697 + $0x8] sm:$0xff]
      %v7700 = vld [vmem:[%s7697 + $0x10] sm:$0x1f]
      %v7701 = vld [vmem:[%s7697 + $0x18] sm:$0x1f]
      %s7702 = scalar_lea.vmem %s1, 832
      %v7703 = vld [vmem:[%s7702] sm:$0xff]
      %v7704 = vld [vmem:[%s7702 + $0x8] sm:$0xff]
      %v7705 = vld [vmem:[%s7702 + $0x10] sm:$0x1f]
      %v7706 = vld [vmem:[%s7702 + $0x18] sm:$0x1f]
      %v7707 = vld [vmem:[%s7697] sm:$0xfe]
      %v7708 = vld [vmem:[%s7697 + $0x8] sm:$0xfe]
      %v7709 = vld [vmem:[%s7697 + $0x10] sm:$0x3f]
      %v7710 = vld [vmem:[%s7697 + $0x18] sm:$0x3f]
      %v7711 = vld [vmem:[%s7702] sm:$0xfe]
      %v7712 = vld [vmem:[%s7702 + $0x8] sm:$0xfe]
      %v7713 = vld [vmem:[%s7702 + $0x10] sm:$0x3f]
      %v7714 = vld [vmem:[%s7702 + $0x18] sm:$0x3f]
      %v7715 = vmul.f32 %v294, %v7698
      %v7716 = vmul.f32 %v294, %v7699
      %v7717 = vmul.f32 %v294, %v7700
      %v7718 = vmul.f32 %v294, %v7701
      %v7719 = vmul.f32 %v299, %v7703
      %v7720 = vmul.f32 %v299, %v7704
      %v7721 = vmul.f32 %v299, %v7705
      %v7722 = vmul.f32 %v299, %v7706
      %v7723 = vadd.f32 %v7715, %v7719
      %v7724 = vadd.f32 %v7716, %v7720
      %v7725 = vadd.f32 %v7717, %v7721
      %v7726 = vadd.f32 %v7718, %v7722
      %v7727 = vmul.f32 %v308, %v7707
      %v7728 = vmul.f32 %v308, %v7708
      %v7729 = vmul.f32 %v308, %v7709
      %v7730 = vmul.f32 %v308, %v7710
      %v7735 = vrot.slane %v7727, 1
      %v7736 = vrot.slane %v7729, 1
      %v7737 = vsel %vm102, %v7735, %v7736
      %v7738 = vrot.slane %v7728, 1
      %v7739 = vrot.slane %v7730, 1
      %v7740 = vsel %vm102, %v7738, %v7739
      %v7745 = vadd.f32 %v7723, %v7737
      %v7746 = vadd.f32 %v7724, %v7740
      %v7747 = vadd.f32 %v7725, %v7736
      %v7748 = vadd.f32 %v7726, %v7739
      %v7749 = vmul.f32 %v294, %v7703
      %v7750 = vmul.f32 %v294, %v7704
      %v7751 = vmul.f32 %v294, %v7705
      %v7752 = vmul.f32 %v294, %v7706
      %v7753 = vmul.f32 %v299, %v7707
      %v7754 = vmul.f32 %v299, %v7708
      %v7755 = vmul.f32 %v299, %v7709
      %v7756 = vmul.f32 %v299, %v7710
      %v7761 = vrot.slane %v7753, 1
      %v7762 = vrot.slane %v7755, 1
      %v7763 = vsel %vm102, %v7761, %v7762
      %v7764 = vrot.slane %v7754, 1
      %v7765 = vrot.slane %v7756, 1
      %v7766 = vsel %vm102, %v7764, %v7765
      %v7771 = vadd.f32 %v7749, %v7763
      %v7772 = vadd.f32 %v7750, %v7766
      %v7773 = vadd.f32 %v7751, %v7762
      %v7774 = vadd.f32 %v7752, %v7765
      %v7775 = vmul.f32 %v308, %v7711
      %v7776 = vmul.f32 %v308, %v7712
      %v7777 = vmul.f32 %v308, %v7713
      %v7778 = vmul.f32 %v308, %v7714
      %v7783 = vrot.slane %v7775, 1
      %v7784 = vrot.slane %v7777, 1
      %v7785 = vsel %vm102, %v7783, %v7784
      %v7786 = vrot.slane %v7776, 1
      %v7787 = vrot.slane %v7778, 1
      %v7788 = vsel %vm102, %v7786, %v7787
      %v7793 = vadd.f32 %v7771, %v7785
      %v7794 = vadd.f32 %v7772, %v7788
      %v7795 = vadd.f32 %v7773, %v7784
      %v7796 = vadd.f32 %v7774, %v7787
      %v7797 = vadd.f32 %v7689, %v7745
      %v7798 = vadd.f32 %v7690, %v7746
      %v7799 = vadd.f32 %v7691, %v7747
      %v7800 = vadd.f32 %v7692, %v7748
      %v7801 = vadd.f32 %v7693, %v7793
      %v7802 = vadd.f32 %v7694, %v7794
      %v7803 = vadd.f32 %v7695, %v7795
      %v7804 = vadd.f32 %v7696, %v7796
      %v7805 = vmax.f32 %v7797, %v7801
      %v7806 = vmax.f32 %v7798, %v7802
      %v7807 = vmax.f32 %v7799, %v7803
      %v7808 = vmax.f32 %v7800, %v7804
      %v7809 = vmul.f32 %v79, %v7591
      %v7810 = vmul.f32 %v79, %v7592
      %v7811 = vmul.f32 %v79, %v7593
      %v7812 = vmul.f32 %v79, %v7594
      %v7813 = vmul.f32 %v84, %v7595
      %v7814 = vmul.f32 %v84, %v7596
      %v7815 = vmul.f32 %v84, %v7597
      %v7816 = vmul.f32 %v84, %v7598
      %v7817 = vadd.f32 %v7809, %v7813
      %v7818 = vadd.f32 %v7810, %v7814
      %v7819 = vadd.f32 %v7811, %v7815
      %v7820 = vadd.f32 %v7812, %v7816
      %v7821 = vmul.f32 %v93, %v7599
      %v7822 = vmul.f32 %v93, %v7600
      %v7823 = vmul.f32 %v93, %v7601
      %v7824 = vmul.f32 %v93, %v7602
      %v7829 = vrot.slane %v7821, 1
      %v7830 = vrot.slane %v7823, 1
      %v7831 = vsel %vm102, %v7829, %v7830
      %v7832 = vrot.slane %v7822, 1
      %v7833 = vrot.slane %v7824, 1
      %v7834 = vsel %vm102, %v7832, %v7833
      %v7839 = vadd.f32 %v7817, %v7831
      %v7840 = vadd.f32 %v7818, %v7834
      %v7841 = vadd.f32 %v7819, %v7830
      %v7842 = vadd.f32 %v7820, %v7833
      %v7843 = vmul.f32 %v79, %v7595
      %v7844 = vmul.f32 %v79, %v7596
      %v7845 = vmul.f32 %v79, %v7597
      %v7846 = vmul.f32 %v79, %v7598
      %v7847 = vmul.f32 %v84, %v7599
      %v7848 = vmul.f32 %v84, %v7600
      %v7849 = vmul.f32 %v84, %v7601
      %v7850 = vmul.f32 %v84, %v7602
      %v7855 = vrot.slane %v7847, 1
      %v7856 = vrot.slane %v7849, 1
      %v7857 = vsel %vm102, %v7855, %v7856
      %v7858 = vrot.slane %v7848, 1
      %v7859 = vrot.slane %v7850, 1
      %v7860 = vsel %vm102, %v7858, %v7859
      %v7865 = vadd.f32 %v7843, %v7857
      %v7866 = vadd.f32 %v7844, %v7860
      %v7867 = vadd.f32 %v7845, %v7856
      %v7868 = vadd.f32 %v7846, %v7859
      %v7869 = vmul.f32 %v93, %v7603
      %v7870 = vmul.f32 %v93, %v7604
      %v7871 = vmul.f32 %v93, %v7605
      %v7872 = vmul.f32 %v93, %v7606
      %v7877 = vrot.slane %v7869, 1
      %v7878 = vrot.slane %v7871, 1
      %v7879 = vsel %vm102, %v7877, %v7878
      %v7880 = vrot.slane %v7870, 1
      %v7881 = vrot.slane %v7872, 1
      %v7882 = vsel %vm102, %v7880, %v7881
      %v7887 = vadd.f32 %v7865, %v7879
      %v7888 = vadd.f32 %v7866, %v7882
      %v7889 = vadd.f32 %v7867, %v7878
      %v7890 = vadd.f32 %v7868, %v7881
      %v7891 = vmul.f32 %v183, %v7698
      %v7892 = vmul.f32 %v183, %v7699
      %v7893 = vmul.f32 %v183, %v7700
      %v7894 = vmul.f32 %v183, %v7701
      %v7895 = vmul.f32 %v188, %v7703
      %v7896 = vmul.f32 %v188, %v7704
      %v7897 = vmul.f32 %v188, %v7705
      %v7898 = vmul.f32 %v188, %v7706
      %v7899 = vadd.f32 %v7891, %v7895
      %v7900 = vadd.f32 %v7892, %v7896
      %v7901 = vadd.f32 %v7893, %v7897
      %v7902 = vadd.f32 %v7894, %v7898
      %v7903 = vmul.f32 %v197, %v7707
      %v7904 = vmul.f32 %v197, %v7708
      %v7905 = vmul.f32 %v197, %v7709
      %v7906 = vmul.f32 %v197, %v7710
      %v7911 = vrot.slane %v7903, 1
      %v7912 = vrot.slane %v7905, 1
      %v7913 = vsel %vm102, %v7911, %v7912
      %v7914 = vrot.slane %v7904, 1
      %v7915 = vrot.slane %v7906, 1
      %v7916 = vsel %vm102, %v7914, %v7915
      %v7921 = vadd.f32 %v7899, %v7913
      %v7922 = vadd.f32 %v7900, %v7916
      %v7923 = vadd.f32 %v7901, %v7912
      %v7924 = vadd.f32 %v7902, %v7915
      %v7925 = vmul.f32 %v183, %v7703
      %v7926 = vmul.f32 %v183, %v7704
      %v7927 = vmul.f32 %v183, %v7705
      %v7928 = vmul.f32 %v183, %v7706
      %v7929 = vmul.f32 %v188, %v7707
      %v7930 = vmul.f32 %v188, %v7708
      %v7931 = vmul.f32 %v188, %v7709
      %v7932 = vmul.f32 %v188, %v7710
      %v7937 = vrot.slane %v7929, 1
      %v7938 = vrot.slane %v7931, 1
      %v7939 = vsel %vm102, %v7937, %v7938
      %v7940 = vrot.slane %v7930, 1
      %v7941 = vrot.slane %v7932, 1
      %v7942 = vsel %vm102, %v7940, %v7941
      %v7947 = vadd.f32 %v7925, %v7939
      %v7948 = vadd.f32 %v7926, %v7942
      %v7949 = vadd.f32 %v7927, %v7938
      %v7950 = vadd.f32 %v7928, %v7941
      %v7951 = vmul.f32 %v197, %v7711
      %v7952 = vmul.f32 %v197, %v7712
      %v7953 = vmul.f32 %v197, %v7713
      %v7954 = vmul.f32 %v197, %v7714
      %v7959 = vrot.slane %v7951, 1
      %v7960 = vrot.slane %v7953, 1
      %v7961 = vsel %vm102, %v7959, %v7960
      %v7962 = vrot.slane %v7952, 1
      %v7963 = vrot.slane %v7954, 1
      %v7964 = vsel %vm102, %v7962, %v7963
      %v7969 = vadd.f32 %v7947, %v7961
      %v7970 = vadd.f32 %v7948, %v7964
      %v7971 = vadd.f32 %v7949, %v7960
      %v7972 = vadd.f32 %v7950, %v7963
      %v7973 = vadd.f32 %v7839, %v7921
      %v7974 = vadd.f32 %v7840, %v7922
      %v7975 = vadd.f32 %v7841, %v7923
      %v7976 = vadd.f32 %v7842, %v7924
      %v7977 = vadd.f32 %v7887, %v7969
      %v7978 = vadd.f32 %v7888, %v7970
      %v7979 = vadd.f32 %v7889, %v7971
      %v7980 = vadd.f32 %v7890, %v7972
      %s7981 = scalar_lea.vmem %s0, 864
      %v7982 = vld [vmem:[%s7981] sm:$0xff]
      %v7983 = vld [vmem:[%s7981 + $0x8] sm:$0xff]
      %v7984 = vld [vmem:[%s7981 + $0x10] sm:$0x1f]
      %v7985 = vld [vmem:[%s7981 + $0x18] sm:$0x1f]
      %s7986 = scalar_lea.vmem %s1, 864
      %v7987 = vld [vmem:[%s7986] sm:$0xff]
      %v7988 = vld [vmem:[%s7986 + $0x8] sm:$0xff]
      %v7989 = vld [vmem:[%s7986 + $0x10] sm:$0x1f]
      %v7990 = vld [vmem:[%s7986 + $0x18] sm:$0x1f]
      %v7991 = vld [vmem:[%s7981] sm:$0xfe]
      %v7992 = vld [vmem:[%s7981 + $0x8] sm:$0xfe]
      %v7993 = vld [vmem:[%s7981 + $0x10] sm:$0x3f]
      %v7994 = vld [vmem:[%s7981 + $0x18] sm:$0x3f]
      %v7995 = vld [vmem:[%s7986] sm:$0xfe]
      %v7996 = vld [vmem:[%s7986 + $0x8] sm:$0xfe]
      %v7997 = vld [vmem:[%s7986 + $0x10] sm:$0x3f]
      %v7998 = vld [vmem:[%s7986 + $0x18] sm:$0x3f]
      %v7999 = vmul.f32 %v294, %v7982
      %v8000 = vmul.f32 %v294, %v7983
      %v8001 = vmul.f32 %v294, %v7984
      %v8002 = vmul.f32 %v294, %v7985
      %v8003 = vmul.f32 %v299, %v7987
      %v8004 = vmul.f32 %v299, %v7988
      %v8005 = vmul.f32 %v299, %v7989
      %v8006 = vmul.f32 %v299, %v7990
      %v8007 = vadd.f32 %v7999, %v8003
      %v8008 = vadd.f32 %v8000, %v8004
      %v8009 = vadd.f32 %v8001, %v8005
      %v8010 = vadd.f32 %v8002, %v8006
      %v8011 = vmul.f32 %v308, %v7991
      %v8012 = vmul.f32 %v308, %v7992
      %v8013 = vmul.f32 %v308, %v7993
      %v8014 = vmul.f32 %v308, %v7994
      %v8019 = vrot.slane %v8011, 1
      %v8020 = vrot.slane %v8013, 1
      %v8021 = vsel %vm102, %v8019, %v8020
      %v8022 = vrot.slane %v8012, 1
      %v8023 = vrot.slane %v8014, 1
      %v8024 = vsel %vm102, %v8022, %v8023
      %v8029 = vadd.f32 %v8007, %v8021
      %v8030 = vadd.f32 %v8008, %v8024
      %v8031 = vadd.f32 %v8009, %v8020
      %v8032 = vadd.f32 %v8010, %v8023
      %v8033 = vmul.f32 %v294, %v7987
      %v8034 = vmul.f32 %v294, %v7988
      %v8035 = vmul.f32 %v294, %v7989
      %v8036 = vmul.f32 %v294, %v7990
      %v8037 = vmul.f32 %v299, %v7991
      %v8038 = vmul.f32 %v299, %v7992
      %v8039 = vmul.f32 %v299, %v7993
      %v8040 = vmul.f32 %v299, %v7994
      %v8045 = vrot.slane %v8037, 1
      %v8046 = vrot.slane %v8039, 1
      %v8047 = vsel %vm102, %v8045, %v8046
      %v8048 = vrot.slane %v8038, 1
      %v8049 = vrot.slane %v8040, 1
      %v8050 = vsel %vm102, %v8048, %v8049
      %v8055 = vadd.f32 %v8033, %v8047
      %v8056 = vadd.f32 %v8034, %v8050
      %v8057 = vadd.f32 %v8035, %v8046
      %v8058 = vadd.f32 %v8036, %v8049
      %v8059 = vmul.f32 %v308, %v7995
      %v8060 = vmul.f32 %v308, %v7996
      %v8061 = vmul.f32 %v308, %v7997
      %v8062 = vmul.f32 %v308, %v7998
      %v8067 = vrot.slane %v8059, 1
      %v8068 = vrot.slane %v8061, 1
      %v8069 = vsel %vm102, %v8067, %v8068
      %v8070 = vrot.slane %v8060, 1
      %v8071 = vrot.slane %v8062, 1
      %v8072 = vsel %vm102, %v8070, %v8071
      %v8077 = vadd.f32 %v8055, %v8069
      %v8078 = vadd.f32 %v8056, %v8072
      %v8079 = vadd.f32 %v8057, %v8068
      %v8080 = vadd.f32 %v8058, %v8071
      %v8081 = vadd.f32 %v7973, %v8029
      %v8082 = vadd.f32 %v7974, %v8030
      %v8083 = vadd.f32 %v7975, %v8031
      %v8084 = vadd.f32 %v7976, %v8032
      %v8085 = vadd.f32 %v7977, %v8077
      %v8086 = vadd.f32 %v7978, %v8078
      %v8087 = vadd.f32 %v7979, %v8079
      %v8088 = vadd.f32 %v7980, %v8080
      %v8089 = vmax.f32 %v8081, %v8085
      %v8090 = vmax.f32 %v8082, %v8086
      %v8091 = vmax.f32 %v8083, %v8087
      %v8092 = vmax.f32 %v8084, %v8088
      %v8093 = vmax.f32 %v7805, %v8089
      %v8094 = vmax.f32 %v7806, %v8090
      %v8095 = vmax.f32 %v7807, %v8091
      %v8096 = vmax.f32 %v7808, %v8092
      %v8097 = vadd.f32 %v8093, %v679
      %v8098 = vadd.f32 %v8094, %v679
      %v8099 = vadd.f32 %v8095, %v679
      %v8100 = vadd.f32 %v8096, %v679
      %v8101 = vmax.f32 %v8097, 0.0
      %v8102 = vmax.f32 %v8098, 0.0
      %v8103 = vmax.f32 %v8099, 0.0
      %v8104 = vmax.f32 %v8100, 0.0
      %v8105 = vsel %vm688, %v8103, 0.0
      %v8106 = vsel %vm688, %v8104, 0.0
      %8107 = vst [vmem:[#allocation2 + $0x180] sm:$0xff] %v8101
      %8108 = vst [vmem:[#allocation2 + $0x188] sm:$0xff] %v8102
      %8109 = vst [vmem:[#allocation2 + $0x190] sm:$0xff] %v8105
      %8110 = vst [vmem:[#allocation2 + $0x198] sm:$0xff] %v8106
      %s8111 = smul.u32 %s34, 4
      %s8112 = smul.addr %s8111, 8
      %s8113 = scalar_lea.vmem %s3, %s8112
      %v8114 = vld [vmem:[%s8113] sm:$0xff]
      %v8115 = vld [vmem:[%s8113 + $0x8] sm:$0xff]
      %v8116 = vld [vmem:[%s8113 + $0x10] sm:$0x3]
      %v8117 = vld [vmem:[%s8113 + $0x18] sm:$0x3]
      %v8118 = vld [vmem:[#allocation2] sm:$0xff]
      %v8119 = vld [vmem:[#allocation2 + $0x8] sm:$0xff]
      %v8120 = vld [vmem:[#allocation2 + $0x10] sm:$0xff]
      %v8121 = vld [vmem:[#allocation2 + $0x18] sm:$0xff]
      %v8122 = vld [vmem:[#allocation2 + $0x20] sm:$0xff]
      %v8123 = vld [vmem:[#allocation2 + $0x28] sm:$0xff]
      %v8124 = vld [vmem:[#allocation2 + $0x30] sm:$0xff]
      %v8125 = vld [vmem:[#allocation2 + $0x38] sm:$0xff]
      %v8126 = vld [vmem:[#allocation2 + $0x40] sm:$0xff]
      %v8127 = vld [vmem:[#allocation2 + $0x48] sm:$0xff]
      %v8128 = vld [vmem:[#allocation2 + $0x50] sm:$0xff]
      %v8129 = vld [vmem:[#allocation2 + $0x58] sm:$0xff]
      %v8130 = vld [vmem:[#allocation2 + $0x60] sm:$0xff]
      %v8131 = vld [vmem:[#allocation2 + $0x68] sm:$0xff]
      %v8132 = vld [vmem:[#allocation2 + $0x70] sm:$0xff]
      %v8133 = vld [vmem:[#allocation2 + $0x78] sm:$0xff]
      %v8134 = vld [vmem:[#allocation2 + $0x80] sm:$0xff]
      %v8135 = vld [vmem:[#allocation2 + $0x88] sm:$0xff]
      %v8136 = vld [vmem:[#allocation2 + $0x90] sm:$0xff]
      %v8137 = vld [vmem:[#allocation2 + $0x98] sm:$0xff]
      %v8138 = vld [vmem:[#allocation2 + $0xa0] sm:$0xff]
      %v8139 = vld [vmem:[#allocation2 + $0xa8] sm:$0xff]
      %v8140 = vld [vmem:[#allocation2 + $0xb0] sm:$0xff]
      %v8141 = vld [vmem:[#allocation2 + $0xb8] sm:$0xff]
      %v8142 = vld [vmem:[#allocation2 + $0xc0] sm:$0xff]
      %v8143 = vld [vmem:[#allocation2 + $0xc8] sm:$0xff]
      %v8144 = vld [vmem:[#allocation2 + $0xd0] sm:$0xff]
      %v8145 = vld [vmem:[#allocation2 + $0xd8] sm:$0xff]
      %v8146 = vld [vmem:[#allocation2 + $0xe0] sm:$0xff]
      %v8147 = vld [vmem:[#allocation2 + $0xe8] sm:$0xff]
      %v8148 = vld [vmem:[#allocation2 + $0xf0] sm:$0xff]
      %v8149 = vld [vmem:[#allocation2 + $0xf8] sm:$0xff]
      %v8150 = vld [vmem:[#allocation2 + $0x100] sm:$0xff]
      %v8151 = vld [vmem:[#allocation2 + $0x108] sm:$0xff]
      %v8152 = vld [vmem:[#allocation2 + $0x110] sm:$0xff]
      %v8153 = vld [vmem:[#allocation2 + $0x118] sm:$0xff]
      %v8154 = vld [vmem:[#allocation2 + $0x120] sm:$0xff]
      %v8155 = vld [vmem:[#allocation2 + $0x128] sm:$0xff]
      %v8156 = vld [vmem:[#allocation2 + $0x130] sm:$0xff]
      %v8157 = vld [vmem:[#allocation2 + $0x138] sm:$0xff]
      %v8158 = vld [vmem:[#allocation2 + $0x140] sm:$0xff]
      %v8159 = vld [vmem:[#allocation2 + $0x148] sm:$0xff]
      %v8160 = vld [vmem:[#allocation2 + $0x150] sm:$0xff]
      %v8161 = vld [vmem:[#allocation2 + $0x158] sm:$0xff]
      %v8162 = vld [vmem:[#allocation2 + $0x160] sm:$0xff]
      %v8163 = vld [vmem:[#allocation2 + $0x168] sm:$0xff]
      %v8164 = vld [vmem:[#allocation2 + $0x170] sm:$0xff]
      %v8165 = vld [vmem:[#allocation2 + $0x178] sm:$0xff]
      %v8166 = vld [vmem:[#allocation2 + $0x180] sm:$0xff]
      %v8167 = vld [vmem:[#allocation2 + $0x188] sm:$0xff]
      %v8168 = vld [vmem:[#allocation2 + $0x190] sm:$0xff]
      %v8169 = vld [vmem:[#allocation2 + $0x198] sm:$0xff]
      %vm8170 = vcmask 654336
      %v8172 = vsel %vm8170, %v8115, 0
      %v8175 = vsel %vm8170, %v8117, 0
      %8177 = vmatprep.subr.mxu0 %v8149
      %8178 = vmatpush1.msra.mxu0 %v8148
      %8179 = vmatprep.subr.mxu0 %v8147
      %8180 = vmatpush1.msra.mxu0 %v8146
      %8181 = vmatprep.subr.mxu0 %v8145
      %8182 = vmatpush1.msra.mxu0 %v8144
      %8183 = vmatprep.subr.mxu0 %v8143
      %8184 = vmatpush1.msra.mxu0 %v8142
      %8185 = vmatprep.subr.mxu0 %v8141
      %8186 = vmatpush1.msra.mxu0 %v8140
      %8187 = vmatprep.subr.mxu0 %v8139
      %8188 = vmatpush1.msra.mxu0 %v8138
      %8189 = vmatprep.subr.mxu0 %v8137
      %8190 = vmatpush1.msra.mxu0 %v8136
      %8191 = vmatprep.subr.mxu0 %v8135
      %8192 = vmatpush1.msra.mxu0 %v8134
      %8193 = vmatprep.subr.mxu0 %v8133
      %8194 = vmatpush1.msra.mxu0 %v8132
      %8195 = vmatprep.subr.mxu0 %v8131
      %8196 = vmatpush1.msra.mxu0 %v8130
      %8197 = vmatprep.subr.mxu0 %v8129
      %8198 = vmatpush1.msra.mxu0 %v8128
      %8199 = vmatprep.subr.mxu0 %v8127
      %8200 = vmatpush1.msra.mxu0 %v8126
      %8201 = vmatprep.subr.mxu0 %v8125
      %8202 = vmatpush1.msra.mxu0 %v8124
      %8203 = vmatprep.subr.mxu0 %v8123
      %8204 = vmatpush1.msra.mxu0 %v8122
      %8205 = vmatprep.subr.mxu0 %v8121
      %8206 = vmatpush1.msra.mxu0 %v8120
      %8207 = vmatprep.subr.mxu0 %v8119
      %8208 = vmatpush1.msra.mxu0 %v8118
      %8209 = vmatprep.subr.mxu0 0.0
      %8210 = vmatpush2.msra.mxu0 0.0
      %8211 = vmatprep.subr.mxu0 0.0
      %8212 = vmatpush2.msra.mxu0 0.0
      %8213 = vmatprep.subr.mxu0 0.0
      %8214 = vmatpush2.msra.mxu0 0.0
      %8215 = vmatprep.subr.mxu0 0.0
      %8216 = vmatpush2.msra.mxu0 0.0
      %8217 = vmatprep.subr.mxu0 0.0
      %8218 = vmatpush2.msra.mxu0 0.0
      %8219 = vmatprep.subr.mxu0 0.0
      %8220 = vmatpush2.msra.mxu0 0.0
      %8221 = vmatprep.subr.mxu0 %v8169
      %8222 = vmatpush2.msra.mxu0 %v8168
      %8223 = vmatprep.subr.mxu0 %v8167
      %8224 = vmatpush2.msra.mxu0 %v8166
      %8225 = vmatprep.subr.mxu0 %v8165
      %8226 = vmatpush2.msra.mxu0 %v8164
      %8227 = vmatprep.subr.mxu0 %v8163
      %8228 = vmatpush2.msra.mxu0 %v8162
      %8229 = vmatprep.subr.mxu0 %v8161
      %8230 = vmatpush2.msra.mxu0 %v8160
      %8231 = vmatprep.subr.mxu0 %v8159
      %8232 = vmatpush2.msra.mxu0 %v8158
      %8233 = vmatprep.subr.mxu0 %v8157
      %8234 = vmatpush2.msra.mxu0 %v8156
      %8235 = vmatprep.subr.mxu0 %v8155
      %8236 = vmatpush2.msra.mxu0 %v8154
      %8237 = vmatprep.subr.mxu0 %v8153
      %8238 = vmatpush2.msra.mxu0 %v8152
      %8239 = vmatprep.subr.mxu0 %v8151
      %8240 = vmatpush2.msra.mxu0 %v8150
      %8241 = vmatprep.mubr.f32.mxu0 %v8172
      %8242 = vmatmul.mubr.f32.gmra.mxu0 %v8114
      %v8243 = vpop.f32.mrf.mxu0
      %v8244 = vadd.f32 0.0, %v8243
      %v8245 = vpop.f32.mrf.mxu0
      %v8246 = vadd.f32 0.0, %v8245
      %8247 = vmatprep.mubr.f32.mxu0 %v8175
      %8248 = vmatmul.mubr.f32.gmra.mxu0 %v8116
      %v8249 = vpop.f32.mrf.mxu0
      %v8250 = vadd.f32 0.0, %v8249
      %v8251 = vpop.f32.mrf.mxu0
      %v8252 = vadd.f32 0.0, %v8251
      %8253 = vdwg.mxu0
      %v8254 = vadd.f32 %v39, %v8244
      %v8255 = vadd.f32 %v40, %v8246
      %v8256 = vadd.f32 %v41, %v8250
      %v8257 = vadd.f32 %v42, %v8252
    $region30: #{simple_cnn_forward.1} parent=1 // loop_footer
      %s38 = sadd.s32 1, %s34
    $region31: #{simple_cnn_forward.1} parent=1 // loop_footer_branch
      %33 = sbr.rel target = $region27
    $region32: #{simple_cnn_forward.1} parent=1 // loop_exit
      _
    %v8258 = vld [vmem:[%s4] sm:$0xff]
    %v8259 = vld [vmem:[%s4 + $0x8] sm:$0x3]
    %8261 = vset.pattern.permute.xlu0 0
    %8262 = vperm.xlu0 %8261, %v8258
    %v8263 = vpop.permute.xlu0 %8262
    %8266 = vset.pattern.permute.xlu0 0
    %8267 = vperm.xlu0 %8266, %v8259
    %v8268 = vpop.permute.xlu0 %8267
    %v8270 = vadd.f32 %v39, %v8263
    %v8271 = vadd.f32 %v40, %v8263
    %v8272 = vadd.f32 %v41, %v8268
    %v8273 = vadd.f32 %v42, %v8268
    %8274 = vst [vmem:[%s5] sm:$0xff] %v8270
    %8275 = vst [vmem:[%s5 + $0x8] sm:$0xff] %v8271
    %8276 = vst [vmem:[%s5 + $0x10] sm:$0x3] %v8272
    %8277 = vst [vmem:[%s5 + $0x18] sm:$0x3] %v8273
    // Predicated region
    $region33: #{simple_cnn_forward.1} parent=1 // pred_check
      _
    $region34: #{simple_cnn_forward.1} parent=1 // pred_check_branch
      %8279 = sbr.rel (0) target = $region36
    $region35: #{simple_cnn_forward.1} parent=1 // pred_region
      _
    $region36: #{simple_cnn_forward.1} parent=1 // pred_fallthru
      _
    // Predicated region
    $region37: #{simple_cnn_forward.1} parent=1 // pred_check
      _
    $region38: #{simple_cnn_forward.1} parent=1 // pred_check_branch
      %8281 = sbr.rel (0) target = $region40
    $region39: #{simple_cnn_forward.1} parent=1 // pred_region
      _
    $region40: #{simple_cnn_forward.1} parent=1 // pred_fallthru
      _
    %8282 = vsyncpa [#allocation4], 1

</llo_original>
